<compile_context>
chip_gen: v7x
topology: tpu7x:2x2x1
jax: 0.10.0
libtpu: 0.0.40
codegen_flags: <defaults>
</compile_context>

<pallas_src>
import functools

import numpy as np

import jax
import jax.numpy as jnp
from jax.experimental import pallas as pl
from jax.experimental.pallas import tpu as pltpu

EPS = 1e-5

_VMEM = pl.BlockSpec(memory_space=pltpu.MemorySpace.VMEM)


# ----------------------------------------------------------------------------
# Fused Inception kernel
# ----------------------------------------------------------------------------
def _inception_kernel(x_ref, m_ref,
                      w1_ref, g1_ref, b1_ref,          # fused 1x1 (b1|b2a|b3a)
                      w2_ref, g2_ref, b2_ref,          # branch2 3x3
                      w3b_ref, g3b_ref, b3b_ref,       # branch3 3x3 (first)
                      w3c_ref, g3c_ref, b3c_ref,       # branch3 3x3 (second)
                      w4_ref, g4_ref, b4_ref,          # branch4 1x1 after pool
                      o_ref, *, width, n1x1, n3x3red, n5x5red):
    x = x_ref[...]          # (Cin, R)  channel-major, R = B*H*W
    masks = m_ref[...]      # (9, R)    1.0 where tap is in-bounds, else 0.0
    r = x.shape[1]

    def bn_relu(y, gamma, beta):
        # Training-mode BN per channel (= per row) over the R lanes, one pass.
        inv_r = jnp.float32(1.0 / y.shape[1])
        mean = jnp.sum(y, axis=1, keepdims=True) * inv_r
        var = jnp.sum(y * y, axis=1, keepdims=True) * inv_r - mean * mean
        var = jnp.maximum(var, 0.0)
        scale = gamma * jax.lax.rsqrt(var + EPS)      # (C, 1)
        shift = beta - mean * scale                   # (C, 1)
        return jnp.maximum(y * scale + shift, 0.0)

    def conv3x3(xin, w_ref):
        # xin: (Cin, R); w_ref: (9, Cout, Cin), tap t = kh*3 + kw.
        cout = w_ref.shape[1]
        acc = jnp.zeros((cout, r), jnp.float32)
        for t in range(9):
            oh, ow = t // 3 - 1, t % 3 - 1
            s = oh * width + ow
            xs = xin if s == 0 else pltpu.roll(xin, (-s) % r, axis=1)
            if not (oh == 0 and ow == 0):
                xs = xs * masks[t:t + 1]              # zero-padding semantics
            acc = acc + jnp.dot(w_ref[t], xs, preferred_element_type=jnp.float32)
        return acc

    # --- branches 1/2/3: fused 1x1 convs over the shared input x -------------
    y1x1 = bn_relu(jnp.dot(w1_ref[...], x, preferred_element_type=jnp.float32),
                   g1_ref[...], b1_ref[...])          # (n1x1+n3x3red+n5x5red, R)
    y1 = y1x1[:n1x1]
    t2 = y1x1[n1x1:n1x1 + n3x3red]
    t3 = y1x1[n1x1 + n3x3red:n1x1 + n3x3red + n5x5red]

    # --- branch 2: 1x1 -> 3x3 -------------------------------------------------
    y2 = bn_relu(conv3x3(t2, w2_ref), g2_ref[...], b2_ref[...])

    # --- branch 3: 1x1 -> 3x3 -> 3x3 -------------------------------------------
    u = bn_relu(conv3x3(t3, w3b_ref), g3b_ref[...], b3b_ref[...])
    y3 = bn_relu(conv3x3(u, w3c_ref), g3c_ref[...], b3c_ref[...])

    # --- branch 4: 3x3 maxpool (s1, p1) -> 1x1 ---------------------------------
    pooled = x
    for t in range(9):
        oh, ow = t // 3 - 1, t % 3 - 1
        if oh == 0 and ow == 0:
            continue
        s = oh * width + ow
        xs = pltpu.roll(x, (-s) % r, axis=1)
        xs = jnp.where(masks[t:t + 1] > 0.5, xs, jnp.float32(-jnp.inf))
        pooled = jnp.maximum(pooled, xs)
    y4 = bn_relu(jnp.dot(w4_ref[...], pooled, preferred_element_type=jnp.float32),
                 g4_ref[...], b4_ref[...])

    # --- channel concat, single lane-dense store -------------------------------
    o_ref[...] = jnp.concatenate([y1, y2, y3, y4], axis=0)


# ----------------------------------------------------------------------------
# Host-side helpers
# ----------------------------------------------------------------------------
def _tap_masks(batch, height, width):
    """(9, B*H*W) validity masks for a 3x3, pad=1, stride=1 window."""
    hh = np.arange(height)[:, None]
    ww = np.arange(width)[None, :]
    rows = []
    for t in range(9):
        oh, ow = t // 3 - 1, t % 3 - 1
        m = ((hh + oh >= 0) & (hh + oh < height)
             & (ww + ow >= 0) & (ww + ow < width)).astype(np.float32)
        rows.append(np.tile(m.reshape(1, -1), (batch, 1)).reshape(-1))
    return jnp.asarray(np.stack(rows, axis=0))


def _col(p):
    return p["gamma"].reshape(-1, 1), p["beta"].reshape(-1, 1)


@jax.jit
def inception_forward(params, x_nchw):
    B, Cin, H, W = x_nchw.shape
    R = B * H * W

    p1, p2a, p2b = params["b1"], params["b2a"], params["b2b"]
    p3a, p3b, p3c = params["b3a"], params["b3b"], params["b3c"]
    p4 = params["b4"]

    n1x1 = p1["w"].shape[0]
    n3x3red = p2a["w"].shape[0]
    n3x3 = p2b["w"].shape[1]
    n5x5red = p3a["w"].shape[0]
    n5x5 = p3c["w"].shape[1]
    pool_planes = p4["w"].shape[0]
    c_total = n1x1 + n3x3 + n5x5 + pool_planes

    # NCHW -> channel-major (Cin, B*H*W): spatial dim becomes the lane dim.
    x_cr = jnp.transpose(x_nchw, (1, 0, 2, 3)).reshape(Cin, R)
    masks = _tap_masks(B, H, W)

    # Fuse the three 1x1 convs that read x (b1, b2-reduce, b3-reduce).
    w1 = jnp.concatenate([p1["w"], p2a["w"], p3a["w"]], axis=0)
    g1 = jnp.concatenate([p1["gamma"], p2a["gamma"], p3a["gamma"]]).reshape(-1, 1)
    be1 = jnp.concatenate([p1["beta"], p2a["beta"], p3a["beta"]]).reshape(-1, 1)

    g2, be2 = _col(p2b)
    g3b, be3b = _col(p3b)
    g3c, be3c = _col(p3c)
    g4, be4 = _col(p4)

    kernel = functools.partial(_inception_kernel, width=W, n1x1=n1x1,
                               n3x3red=n3x3red, n5x5red=n5x5red)
    out_cr = pl.pallas_call(
        kernel,
        out_shape=jax.ShapeDtypeStruct((c_total, R), jnp.float32),
        in_specs=[_VMEM] * 17,
        out_specs=_VMEM,
    )(x_cr, masks,
      w1, g1, be1,
      p2b["w"], g2, be2,
      p3b["w"], g3b, be3b,
      p3c["w"], g3c, be3c,
      p4["w"], g4, be4)

    # (Ctot, B*H*W) -> NCHW
    return out_cr.reshape(c_total, B, H, W).transpose(1, 0, 2, 3)


# ----------------------------------------------------------------------------
# Parameter construction (deterministic, PyTorch-default-like)
# ----------------------------------------------------------------------------
def _make_conv1x1_params(key, cin, cout):
    kw, kb = jax.random.split(key)
    # w layout: (Cout, Cin).  Conv bias is generated to mirror nn.Conv2d but is
    # not applied in the kernel: training-mode BN mean subtraction cancels it.
    return dict(
        w=jax.random.normal(kw, (cout, cin), jnp.float32) * 0.1,
        b=jax.random.normal(kb, (cout,), jnp.float32) * 0.1,
        gamma=jnp.ones((cout,), jnp.float32),
        beta=jnp.zeros((cout,), jnp.float32),
    )


def _make_conv3x3_params(key, cin, cout):
    kw, kb = jax.random.split(key)
    # w layout: (9, Cout, Cin), tap index t = kh*3 + kw.
    return dict(
        w=jax.random.normal(kw, (9, cout, cin), jnp.float32) * 0.1,
        b=jax.random.normal(kb, (cout,), jnp.float32) * 0.1,
        gamma=jnp.ones((cout,), jnp.float32),
        beta=jnp.zeros((cout,), jnp.float32),
    )


def init_inception_params(key, in_planes, n1x1, n3x3red, n3x3,
                          n5x5red, n5x5, pool_planes):
    keys = jax.random.split(key, 7)
    return dict(
        b1=_make_conv1x1_params(keys[0], in_planes, n1x1),
        b2a=_make_conv1x1_params(keys[1], in_planes, n3x3red),
        b2b=_make_conv3x3_params(keys[2], n3x3red, n3x3),
        b3a=_make_conv1x1_params(keys[3], in_planes, n5x5red),
        b3b=_make_conv3x3_params(keys[4], n5x5red, n5x5),
        b3c=_make_conv3x3_params(keys[5], n5x5, n5x5),
        b4=_make_conv1x1_params(keys[6], in_planes, pool_planes),
    )


if __name__ == "__main__":
    B, in_planes, H, W = 2, 4, 16, 16
    n1x1, n3x3red, n3x3, n5x5red, n5x5, pool_planes = 8, 4, 8, 4, 8, 8

    key = jax.random.PRNGKey(0)
    k_x, k_p = jax.random.split(key)
    x = jax.random.normal(k_x, (B, in_planes, H, W), jnp.float32)
    params = init_inception_params(k_p, in_planes, n1x1, n3x3red, n3x3,
                                   n5x5red, n5x5, pool_planes)

    out = inception_forward(params, x)
    out = jax.block_until_ready(out)

    expected_c = n1x1 + n3x3 + n5x5 + pool_planes
    assert out.shape == (B, expected_c, H, W), out.shape
    assert bool(jnp.all(jnp.isfinite(out)))
    print("KERNEL_OK")
</pallas_src>

<mosaic_0001>
module attributes {stable_mosaic.version = 11 : i64} {
  func.func @_inception_kernel(%arg0: memref<4x512xf32, #tpu.memory_space<vmem>>, %arg1: memref<9x512xf32, #tpu.memory_space<vmem>>, %arg2: memref<16x4xf32, #tpu.memory_space<vmem>>, %arg3: memref<16x1xf32, #tpu.memory_space<vmem>>, %arg4: memref<16x1xf32, #tpu.memory_space<vmem>>, %arg5: memref<9x8x4xf32, #tpu.memory_space<vmem>>, %arg6: memref<8x1xf32, #tpu.memory_space<vmem>>, %arg7: memref<8x1xf32, #tpu.memory_space<vmem>>, %arg8: memref<9x8x4xf32, #tpu.memory_space<vmem>>, %arg9: memref<8x1xf32, #tpu.memory_space<vmem>>, %arg10: memref<8x1xf32, #tpu.memory_space<vmem>>, %arg11: memref<9x8x8xf32, #tpu.memory_space<vmem>>, %arg12: memref<8x1xf32, #tpu.memory_space<vmem>>, %arg13: memref<8x1xf32, #tpu.memory_space<vmem>>, %arg14: memref<8x4xf32, #tpu.memory_space<vmem>>, %arg15: memref<8x1xf32, #tpu.memory_space<vmem>>, %arg16: memref<8x1xf32, #tpu.memory_space<vmem>>, %arg17: memref<32x512xf32, #tpu.memory_space<vmem>>) attributes {dimension_semantics = [], scalar_prefetch = 0 : i64, scratch_operands = 0 : i64, tpu.core_type = #tpu.core_type<tc>} {
    %c0 = arith.constant 0 : index
    %c0_0 = arith.constant 0 : index
    %0 = vector.load %arg0[%c0, %c0_0] : memref<4x512xf32, #tpu.memory_space<vmem>>, vector<4x512xf32>
    %c0_1 = arith.constant 0 : index
    %c0_2 = arith.constant 0 : index
    %1 = vector.load %arg1[%c0_1, %c0_2] : memref<9x512xf32, #tpu.memory_space<vmem>>, vector<9x512xf32>
    %c0_3 = arith.constant 0 : index
    %c0_4 = arith.constant 0 : index
    %2 = vector.load %arg2[%c0_3, %c0_4] : memref<16x4xf32, #tpu.memory_space<vmem>>, vector<16x4xf32>
    %cst = arith.constant dense<0.000000e+00> : vector<16x512xf32>
    %3 = tpu.matmul %2, %0, %cst {dimension_numbers = #tpu.dot_dimension_numbers<[1], [0], [0], [1], [0, 0, 1, 1], [], []>} : vector<16x4xf32>, vector<4x512xf32>, vector<16x512xf32> -> vector<16x512xf32>
    %c0_5 = arith.constant 0 : index
    %c0_6 = arith.constant 0 : index
    %4 = vector.load %arg3[%c0_5, %c0_6] : memref<16x1xf32, #tpu.memory_space<vmem>>, vector<16x1xf32>
    %c0_7 = arith.constant 0 : index
    %c0_8 = arith.constant 0 : index
    %5 = vector.load %arg4[%c0_7, %c0_8] : memref<16x1xf32, #tpu.memory_space<vmem>>, vector<16x1xf32>
    %cst_9 = arith.constant dense<0.000000e+00> : vector<16xf32>
    %6 = vector.multi_reduction <add>, %3, %cst_9 [1] : vector<16x512xf32> to vector<16xf32>
    %7 = vector.shape_cast %6 : vector<16xf32> to vector<16x1xf32>
    %cst_10 = arith.constant 0.001953125 : f32
    %8 = vector.broadcast %cst_10 : f32 to vector<16x1xf32>
    %9 = arith.mulf %7, %8 : vector<16x1xf32>
    %10 = arith.mulf %3, %3 : vector<16x512xf32>
    %cst_11 = arith.constant dense<0.000000e+00> : vector<16xf32>
    %11 = vector.multi_reduction <add>, %10, %cst_11 [1] : vector<16x512xf32> to vector<16xf32>
    %12 = vector.shape_cast %11 : vector<16xf32> to vector<16x1xf32>
    %cst_12 = arith.constant 0.001953125 : f32
    %13 = vector.broadcast %cst_12 : f32 to vector<16x1xf32>
    %14 = arith.mulf %12, %13 : vector<16x1xf32>
    %15 = arith.mulf %9, %9 : vector<16x1xf32>
    %16 = arith.subf %14, %15 : vector<16x1xf32>
    %cst_13 = arith.constant 0.000000e+00 : f32
    %17 = vector.broadcast %cst_13 : f32 to vector<16x1xf32>
    %18 = arith.maximumf %16, %17 : vector<16x1xf32>
    %cst_14 = arith.constant 9.99999974E-6 : f32
    %19 = vector.broadcast %cst_14 : f32 to vector<16x1xf32>
    %20 = arith.addf %18, %19 : vector<16x1xf32>
    %21 = math.rsqrt %20 : vector<16x1xf32>
    %22 = arith.mulf %4, %21 : vector<16x1xf32>
    %23 = arith.mulf %9, %22 : vector<16x1xf32>
    %24 = arith.subf %5, %23 : vector<16x1xf32>
    %25 = vector.broadcast %22 : vector<16x1xf32> to vector<16x512xf32>
    %26 = arith.mulf %3, %25 : vector<16x512xf32>
    %27 = vector.broadcast %24 : vector<16x1xf32> to vector<16x512xf32>
    %28 = arith.addf %26, %27 : vector<16x512xf32>
    %cst_15 = arith.constant 0.000000e+00 : f32
    %29 = vector.broadcast %cst_15 : f32 to vector<16x512xf32>
    %30 = arith.maximumf %28, %29 : vector<16x512xf32>
    %31 = vector.extract_strided_slice %30 {offsets = [0, 0], sizes = [8, 512], strides = [1, 1]} : vector<16x512xf32> to vector<8x512xf32>
    %32 = vector.extract_strided_slice %30 {offsets = [8, 0], sizes = [4, 512], strides = [1, 1]} : vector<16x512xf32> to vector<4x512xf32>
    %33 = vector.extract_strided_slice %30 {offsets = [12, 0], sizes = [4, 512], strides = [1, 1]} : vector<16x512xf32> to vector<4x512xf32>
    %cst_16 = arith.constant 0.000000e+00 : f32
    %34 = vector.broadcast %cst_16 : f32 to vector<8x512xf32>
    %c17_i32 = arith.constant 17 : i32
    %35 = tpu.dynamic_rotate %32 by %c17_i32 dim 1 : vector<4x512xf32>, i32 -> vector<4x512xf32>
    %36 = vector.extract_strided_slice %1 {offsets = [0, 0], sizes = [1, 512], strides = [1, 1]} : vector<9x512xf32> to vector<1x512xf32>
    %37 = vector.broadcast %36 : vector<1x512xf32> to vector<4x512xf32>
    %38 = arith.mulf %35, %37 : vector<4x512xf32>
    %c0_17 = arith.constant 0 : index
    %c0_18 = arith.constant 0 : index
    %c0_19 = arith.constant 0 : index
    %39 = vector.load %arg5[%c0_17, %c0_18, %c0_19] : memref<9x8x4xf32, #tpu.memory_space<vmem>>, vector<1x8x4xf32>
    %40 = vector.shape_cast %39 : vector<1x8x4xf32> to vector<8x4xf32>
    %cst_20 = arith.constant dense<0.000000e+00> : vector<8x512xf32>
    %41 = tpu.matmul %40, %38, %cst_20 {dimension_numbers = #tpu.dot_dimension_numbers<[1], [0], [0], [1], [0, 0, 1, 1], [], []>} : vector<8x4xf32>, vector<4x512xf32>, vector<8x512xf32> -> vector<8x512xf32>
    %42 = arith.addf %34, %41 : vector<8x512xf32>
    %c16_i32 = arith.constant 16 : i32
    %43 = tpu.dynamic_rotate %32 by %c16_i32 dim 1 : vector<4x512xf32>, i32 -> vector<4x512xf32>
    %44 = vector.extract_strided_slice %1 {offsets = [1, 0], sizes = [1, 512], strides = [1, 1]} : vector<9x512xf32> to vector<1x512xf32>
    %45 = vector.broadcast %44 : vector<1x512xf32> to vector<4x512xf32>
    %46 = arith.mulf %43, %45 : vector<4x512xf32>
    %c1 = arith.constant 1 : index
    %c0_21 = arith.constant 0 : index
    %c0_22 = arith.constant 0 : index
    %47 = vector.load %arg5[%c1, %c0_21, %c0_22] : memref<9x8x4xf32, #tpu.memory_space<vmem>>, vector<1x8x4xf32>
    %48 = vector.shape_cast %47 : vector<1x8x4xf32> to vector<8x4xf32>
    %cst_23 = arith.constant dense<0.000000e+00> : vector<8x512xf32>
    %49 = tpu.matmul %48, %46, %cst_23 {dimension_numbers = #tpu.dot_dimension_numbers<[1], [0], [0], [1], [0, 0, 1, 1], [], []>} : vector<8x4xf32>, vector<4x512xf32>, vector<8x512xf32> -> vector<8x512xf32>
    %50 = arith.addf %42, %49 : vector<8x512xf32>
    %c15_i32 = arith.constant 15 : i32
    %51 = tpu.dynamic_rotate %32 by %c15_i32 dim 1 : vector<4x512xf32>, i32 -> vector<4x512xf32>
    %52 = vector.extract_strided_slice %1 {offsets = [2, 0], sizes = [1, 512], strides = [1, 1]} : vector<9x512xf32> to vector<1x512xf32>
    %53 = vector.broadcast %52 : vector<1x512xf32> to vector<4x512xf32>
    %54 = arith.mulf %51, %53 : vector<4x512xf32>
    %c2 = arith.constant 2 : index
    %c0_24 = arith.constant 0 : index
    %c0_25 = arith.constant 0 : index
    %55 = vector.load %arg5[%c2, %c0_24, %c0_25] : memref<9x8x4xf32, #tpu.memory_space<vmem>>, vector<1x8x4xf32>
    %56 = vector.shape_cast %55 : vector<1x8x4xf32> to vector<8x4xf32>
    %cst_26 = arith.constant dense<0.000000e+00> : vector<8x512xf32>
    %57 = tpu.matmul %56, %54, %cst_26 {dimension_numbers = #tpu.dot_dimension_numbers<[1], [0], [0], [1], [0, 0, 1, 1], [], []>} : vector<8x4xf32>, vector<4x512xf32>, vector<8x512xf32> -> vector<8x512xf32>
    %58 = arith.addf %50, %57 : vector<8x512xf32>
    %c1_i32 = arith.constant 1 : i32
    %59 = tpu.dynamic_rotate %32 by %c1_i32 dim 1 : vector<4x512xf32>, i32 -> vector<4x512xf32>
    %60 = vector.extract_strided_slice %1 {offsets = [3, 0], sizes = [1, 512], strides = [1, 1]} : vector<9x512xf32> to vector<1x512xf32>
    %61 = vector.broadcast %60 : vector<1x512xf32> to vector<4x512xf32>
    %62 = arith.mulf %59, %61 : vector<4x512xf32>
    %c3 = arith.constant 3 : index
    %c0_27 = arith.constant 0 : index
    %c0_28 = arith.constant 0 : index
    %63 = vector.load %arg5[%c3, %c0_27, %c0_28] : memref<9x8x4xf32, #tpu.memory_space<vmem>>, vector<1x8x4xf32>
    %64 = vector.shape_cast %63 : vector<1x8x4xf32> to vector<8x4xf32>
    %cst_29 = arith.constant dense<0.000000e+00> : vector<8x512xf32>
    %65 = tpu.matmul %64, %62, %cst_29 {dimension_numbers = #tpu.dot_dimension_numbers<[1], [0], [0], [1], [0, 0, 1, 1], [], []>} : vector<8x4xf32>, vector<4x512xf32>, vector<8x512xf32> -> vector<8x512xf32>
    %66 = arith.addf %58, %65 : vector<8x512xf32>
    %c4 = arith.constant 4 : index
    %c0_30 = arith.constant 0 : index
    %c0_31 = arith.constant 0 : index
    %67 = vector.load %arg5[%c4, %c0_30, %c0_31] : memref<9x8x4xf32, #tpu.memory_space<vmem>>, vector<1x8x4xf32>
    %68 = vector.shape_cast %67 : vector<1x8x4xf32> to vector<8x4xf32>
    %cst_32 = arith.constant dense<0.000000e+00> : vector<8x512xf32>
    %69 = tpu.matmul %68, %32, %cst_32 {dimension_numbers = #tpu.dot_dimension_numbers<[1], [0], [0], [1], [0, 0, 1, 1], [], []>} : vector<8x4xf32>, vector<4x512xf32>, vector<8x512xf32> -> vector<8x512xf32>
    %70 = arith.addf %66, %69 : vector<8x512xf32>
    %c511_i32 = arith.constant 511 : i32
    %71 = tpu.dynamic_rotate %32 by %c511_i32 dim 1 : vector<4x512xf32>, i32 -> vector<4x512xf32>
    %72 = vector.extract_strided_slice %1 {offsets = [5, 0], sizes = [1, 512], strides = [1, 1]} : vector<9x512xf32> to vector<1x512xf32>
    %73 = vector.broadcast %72 : vector<1x512xf32> to vector<4x512xf32>
    %74 = arith.mulf %71, %73 : vector<4x512xf32>
    %c5 = arith.constant 5 : index
    %c0_33 = arith.constant 0 : index
    %c0_34 = arith.constant 0 : index
    %75 = vector.load %arg5[%c5, %c0_33, %c0_34] : memref<9x8x4xf32, #tpu.memory_space<vmem>>, vector<1x8x4xf32>
    %76 = vector.shape_cast %75 : vector<1x8x4xf32> to vector<8x4xf32>
    %cst_35 = arith.constant dense<0.000000e+00> : vector<8x512xf32>
    %77 = tpu.matmul %76, %74, %cst_35 {dimension_numbers = #tpu.dot_dimension_numbers<[1], [0], [0], [1], [0, 0, 1, 1], [], []>} : vector<8x4xf32>, vector<4x512xf32>, vector<8x512xf32> -> vector<8x512xf32>
    %78 = arith.addf %70, %77 : vector<8x512xf32>
    %c497_i32 = arith.constant 497 : i32
    %79 = tpu.dynamic_rotate %32 by %c497_i32 dim 1 : vector<4x512xf32>, i32 -> vector<4x512xf32>
    %80 = vector.extract_strided_slice %1 {offsets = [6, 0], sizes = [1, 512], strides = [1, 1]} : vector<9x512xf32> to vector<1x512xf32>
    %81 = vector.broadcast %80 : vector<1x512xf32> to vector<4x512xf32>
    %82 = arith.mulf %79, %81 : vector<4x512xf32>
    %c6 = arith.constant 6 : index
    %c0_36 = arith.constant 0 : index
    %c0_37 = arith.constant 0 : index
    %83 = vector.load %arg5[%c6, %c0_36, %c0_37] : memref<9x8x4xf32, #tpu.memory_space<vmem>>, vector<1x8x4xf32>
    %84 = vector.shape_cast %83 : vector<1x8x4xf32> to vector<8x4xf32>
    %cst_38 = arith.constant dense<0.000000e+00> : vector<8x512xf32>
    %85 = tpu.matmul %84, %82, %cst_38 {dimension_numbers = #tpu.dot_dimension_numbers<[1], [0], [0], [1], [0, 0, 1, 1], [], []>} : vector<8x4xf32>, vector<4x512xf32>, vector<8x512xf32> -> vector<8x512xf32>
    %86 = arith.addf %78, %85 : vector<8x512xf32>
    %c496_i32 = arith.constant 496 : i32
    %87 = tpu.dynamic_rotate %32 by %c496_i32 dim 1 : vector<4x512xf32>, i32 -> vector<4x512xf32>
    %88 = vector.extract_strided_slice %1 {offsets = [7, 0], sizes = [1, 512], strides = [1, 1]} : vector<9x512xf32> to vector<1x512xf32>
    %89 = vector.broadcast %88 : vector<1x512xf32> to vector<4x512xf32>
    %90 = arith.mulf %87, %89 : vector<4x512xf32>
    %c7 = arith.constant 7 : index
    %c0_39 = arith.constant 0 : index
    %c0_40 = arith.constant 0 : index
    %91 = vector.load %arg5[%c7, %c0_39, %c0_40] : memref<9x8x4xf32, #tpu.memory_space<vmem>>, vector<1x8x4xf32>
    %92 = vector.shape_cast %91 : vector<1x8x4xf32> to vector<8x4xf32>
    %cst_41 = arith.constant dense<0.000000e+00> : vector<8x512xf32>
    %93 = tpu.matmul %92, %90, %cst_41 {dimension_numbers = #tpu.dot_dimension_numbers<[1], [0], [0], [1], [0, 0, 1, 1], [], []>} : vector<8x4xf32>, vector<4x512xf32>, vector<8x512xf32> -> vector<8x512xf32>
    %94 = arith.addf %86, %93 : vector<8x512xf32>
    %c495_i32 = arith.constant 495 : i32
    %95 = tpu.dynamic_rotate %32 by %c495_i32 dim 1 : vector<4x512xf32>, i32 -> vector<4x512xf32>
    %96 = vector.extract_strided_slice %1 {offsets = [8, 0], sizes = [1, 512], strides = [1, 1]} : vector<9x512xf32> to vector<1x512xf32>
    %97 = vector.broadcast %96 : vector<1x512xf32> to vector<4x512xf32>
    %98 = arith.mulf %95, %97 : vector<4x512xf32>
    %c8 = arith.constant 8 : index
    %c0_42 = arith.constant 0 : index
    %c0_43 = arith.constant 0 : index
    %99 = vector.load %arg5[%c8, %c0_42, %c0_43] : memref<9x8x4xf32, #tpu.memory_space<vmem>>, vector<1x8x4xf32>
    %100 = vector.shape_cast %99 : vector<1x8x4xf32> to vector<8x4xf32>
    %cst_44 = arith.constant dense<0.000000e+00> : vector<8x512xf32>
    %101 = tpu.matmul %100, %98, %cst_44 {dimension_numbers = #tpu.dot_dimension_numbers<[1], [0], [0], [1], [0, 0, 1, 1], [], []>} : vector<8x4xf32>, vector<4x512xf32>, vector<8x512xf32> -> vector<8x512xf32>
    %102 = arith.addf %94, %101 : vector<8x512xf32>
    %c0_45 = arith.constant 0 : index
    %c0_46 = arith.constant 0 : index
    %103 = vector.load %arg6[%c0_45, %c0_46] : memref<8x1xf32, #tpu.memory_space<vmem>>, vector<8x1xf32>
    %c0_47 = arith.constant 0 : index
    %c0_48 = arith.constant 0 : index
    %104 = vector.load %arg7[%c0_47, %c0_48] : memref<8x1xf32, #tpu.memory_space<vmem>>, vector<8x1xf32>
    %cst_49 = arith.constant dense<0.000000e+00> : vector<8xf32>
    %105 = vector.multi_reduction <add>, %102, %cst_49 [1] : vector<8x512xf32> to vector<8xf32>
    %106 = vector.shape_cast %105 : vector<8xf32> to vector<8x1xf32>
    %cst_50 = arith.constant 0.001953125 : f32
    %107 = vector.broadcast %cst_50 : f32 to vector<8x1xf32>
    %108 = arith.mulf %106, %107 : vector<8x1xf32>
    %109 = arith.mulf %102, %102 : vector<8x512xf32>
    %cst_51 = arith.constant dense<0.000000e+00> : vector<8xf32>
    %110 = vector.multi_reduction <add>, %109, %cst_51 [1] : vector<8x512xf32> to vector<8xf32>
    %111 = vector.shape_cast %110 : vector<8xf32> to vector<8x1xf32>
    %cst_52 = arith.constant 0.001953125 : f32
    %112 = vector.broadcast %cst_52 : f32 to vector<8x1xf32>
    %113 = arith.mulf %111, %112 : vector<8x1xf32>
    %114 = arith.mulf %108, %108 : vector<8x1xf32>
    %115 = arith.subf %113, %114 : vector<8x1xf32>
    %cst_53 = arith.constant 0.000000e+00 : f32
    %116 = vector.broadcast %cst_53 : f32 to vector<8x1xf32>
    %117 = arith.maximumf %115, %116 : vector<8x1xf32>
    %cst_54 = arith.constant 9.99999974E-6 : f32
    %118 = vector.broadcast %cst_54 : f32 to vector<8x1xf32>
    %119 = arith.addf %117, %118 : vector<8x1xf32>
    %120 = math.rsqrt %119 : vector<8x1xf32>
    %121 = arith.mulf %103, %120 : vector<8x1xf32>
    %122 = arith.mulf %108, %121 : vector<8x1xf32>
    %123 = arith.subf %104, %122 : vector<8x1xf32>
    %124 = vector.broadcast %121 : vector<8x1xf32> to vector<8x512xf32>
    %125 = arith.mulf %102, %124 : vector<8x512xf32>
    %126 = vector.broadcast %123 : vector<8x1xf32> to vector<8x512xf32>
    %127 = arith.addf %125, %126 : vector<8x512xf32>
    %cst_55 = arith.constant 0.000000e+00 : f32
    %128 = vector.broadcast %cst_55 : f32 to vector<8x512xf32>
    %129 = arith.maximumf %127, %128 : vector<8x512xf32>
    %cst_56 = arith.constant 0.000000e+00 : f32
    %130 = vector.broadcast %cst_56 : f32 to vector<8x512xf32>
    %c17_i32_57 = arith.constant 17 : i32
    %131 = tpu.dynamic_rotate %33 by %c17_i32_57 dim 1 : vector<4x512xf32>, i32 -> vector<4x512xf32>
    %132 = vector.extract_strided_slice %1 {offsets = [0, 0], sizes = [1, 512], strides = [1, 1]} : vector<9x512xf32> to vector<1x512xf32>
    %133 = vector.broadcast %132 : vector<1x512xf32> to vector<4x512xf32>
    %134 = arith.mulf %131, %133 : vector<4x512xf32>
    %c0_58 = arith.constant 0 : index
    %c0_59 = arith.constant 0 : index
    %c0_60 = arith.constant 0 : index
    %135 = vector.load %arg8[%c0_58, %c0_59, %c0_60] : memref<9x8x4xf32, #tpu.memory_space<vmem>>, vector<1x8x4xf32>
    %136 = vector.shape_cast %135 : vector<1x8x4xf32> to vector<8x4xf32>
    %cst_61 = arith.constant dense<0.000000e+00> : vector<8x512xf32>
    %137 = tpu.matmul %136, %134, %cst_61 {dimension_numbers = #tpu.dot_dimension_numbers<[1], [0], [0], [1], [0, 0, 1, 1], [], []>} : vector<8x4xf32>, vector<4x512xf32>, vector<8x512xf32> -> vector<8x512xf32>
    %138 = arith.addf %130, %137 : vector<8x512xf32>
    %c16_i32_62 = arith.constant 16 : i32
    %139 = tpu.dynamic_rotate %33 by %c16_i32_62 dim 1 : vector<4x512xf32>, i32 -> vector<4x512xf32>
    %140 = vector.extract_strided_slice %1 {offsets = [1, 0], sizes = [1, 512], strides = [1, 1]} : vector<9x512xf32> to vector<1x512xf32>
    %141 = vector.broadcast %140 : vector<1x512xf32> to vector<4x512xf32>
    %142 = arith.mulf %139, %141 : vector<4x512xf32>
    %c1_63 = arith.constant 1 : index
    %c0_64 = arith.constant 0 : index
    %c0_65 = arith.constant 0 : index
    %143 = vector.load %arg8[%c1_63, %c0_64, %c0_65] : memref<9x8x4xf32, #tpu.memory_space<vmem>>, vector<1x8x4xf32>
    %144 = vector.shape_cast %143 : vector<1x8x4xf32> to vector<8x4xf32>
    %cst_66 = arith.constant dense<0.000000e+00> : vector<8x512xf32>
    %145 = tpu.matmul %144, %142, %cst_66 {dimension_numbers = #tpu.dot_dimension_numbers<[1], [0], [0], [1], [0, 0, 1, 1], [], []>} : vector<8x4xf32>, vector<4x512xf32>, vector<8x512xf32> -> vector<8x512xf32>
    %146 = arith.addf %138, %145 : vector<8x512xf32>
    %c15_i32_67 = arith.constant 15 : i32
    %147 = tpu.dynamic_rotate %33 by %c15_i32_67 dim 1 : vector<4x512xf32>, i32 -> vector<4x512xf32>
    %148 = vector.extract_strided_slice %1 {offsets = [2, 0], sizes = [1, 512], strides = [1, 1]} : vector<9x512xf32> to vector<1x512xf32>
    %149 = vector.broadcast %148 : vector<1x512xf32> to vector<4x512xf32>
    %150 = arith.mulf %147, %149 : vector<4x512xf32>
    %c2_68 = arith.constant 2 : index
    %c0_69 = arith.constant 0 : index
    %c0_70 = arith.constant 0 : index
    %151 = vector.load %arg8[%c2_68, %c0_69, %c0_70] : memref<9x8x4xf32, #tpu.memory_space<vmem>>, vector<1x8x4xf32>
    %152 = vector.shape_cast %151 : vector<1x8x4xf32> to vector<8x4xf32>
    %cst_71 = arith.constant dense<0.000000e+00> : vector<8x512xf32>
    %153 = tpu.matmul %152, %150, %cst_71 {dimension_numbers = #tpu.dot_dimension_numbers<[1], [0], [0], [1], [0, 0, 1, 1], [], []>} : vector<8x4xf32>, vector<4x512xf32>, vector<8x512xf32> -> vector<8x512xf32>
    %154 = arith.addf %146, %153 : vector<8x512xf32>
    %c1_i32_72 = arith.constant 1 : i32
    %155 = tpu.dynamic_rotate %33 by %c1_i32_72 dim 1 : vector<4x512xf32>, i32 -> vector<4x512xf32>
    %156 = vector.extract_strided_slice %1 {offsets = [3, 0], sizes = [1, 512], strides = [1, 1]} : vector<9x512xf32> to vector<1x512xf32>
    %157 = vector.broadcast %156 : vector<1x512xf32> to vector<4x512xf32>
    %158 = arith.mulf %155, %157 : vector<4x512xf32>
    %c3_73 = arith.constant 3 : index
    %c0_74 = arith.constant 0 : index
    %c0_75 = arith.constant 0 : index
    %159 = vector.load %arg8[%c3_73, %c0_74, %c0_75] : memref<9x8x4xf32, #tpu.memory_space<vmem>>, vector<1x8x4xf32>
    %160 = vector.shape_cast %159 : vector<1x8x4xf32> to vector<8x4xf32>
    %cst_76 = arith.constant dense<0.000000e+00> : vector<8x512xf32>
    %161 = tpu.matmul %160, %158, %cst_76 {dimension_numbers = #tpu.dot_dimension_numbers<[1], [0], [0], [1], [0, 0, 1, 1], [], []>} : vector<8x4xf32>, vector<4x512xf32>, vector<8x512xf32> -> vector<8x512xf32>
    %162 = arith.addf %154, %161 : vector<8x512xf32>
    %c4_77 = arith.constant 4 : index
    %c0_78 = arith.constant 0 : index
    %c0_79 = arith.constant 0 : index
    %163 = vector.load %arg8[%c4_77, %c0_78, %c0_79] : memref<9x8x4xf32, #tpu.memory_space<vmem>>, vector<1x8x4xf32>
    %164 = vector.shape_cast %163 : vector<1x8x4xf32> to vector<8x4xf32>
    %cst_80 = arith.constant dense<0.000000e+00> : vector<8x512xf32>
    %165 = tpu.matmul %164, %33, %cst_80 {dimension_numbers = #tpu.dot_dimension_numbers<[1], [0], [0], [1], [0, 0, 1, 1], [], []>} : vector<8x4xf32>, vector<4x512xf32>, vector<8x512xf32> -> vector<8x512xf32>
    %166 = arith.addf %162, %165 : vector<8x512xf32>
    %c511_i32_81 = arith.constant 511 : i32
    %167 = tpu.dynamic_rotate %33 by %c511_i32_81 dim 1 : vector<4x512xf32>, i32 -> vector<4x512xf32>
    %168 = vector.extract_strided_slice %1 {offsets = [5, 0], sizes = [1, 512], strides = [1, 1]} : vector<9x512xf32> to vector<1x512xf32>
    %169 = vector.broadcast %168 : vector<1x512xf32> to vector<4x512xf32>
    %170 = arith.mulf %167, %169 : vector<4x512xf32>
    %c5_82 = arith.constant 5 : index
    %c0_83 = arith.constant 0 : index
    %c0_84 = arith.constant 0 : index
    %171 = vector.load %arg8[%c5_82, %c0_83, %c0_84] : memref<9x8x4xf32, #tpu.memory_space<vmem>>, vector<1x8x4xf32>
    %172 = vector.shape_cast %171 : vector<1x8x4xf32> to vector<8x4xf32>
    %cst_85 = arith.constant dense<0.000000e+00> : vector<8x512xf32>
    %173 = tpu.matmul %172, %170, %cst_85 {dimension_numbers = #tpu.dot_dimension_numbers<[1], [0], [0], [1], [0, 0, 1, 1], [], []>} : vector<8x4xf32>, vector<4x512xf32>, vector<8x512xf32> -> vector<8x512xf32>
    %174 = arith.addf %166, %173 : vector<8x512xf32>
    %c497_i32_86 = arith.constant 497 : i32
    %175 = tpu.dynamic_rotate %33 by %c497_i32_86 dim 1 : vector<4x512xf32>, i32 -> vector<4x512xf32>
    %176 = vector.extract_strided_slice %1 {offsets = [6, 0], sizes = [1, 512], strides = [1, 1]} : vector<9x512xf32> to vector<1x512xf32>
    %177 = vector.broadcast %176 : vector<1x512xf32> to vector<4x512xf32>
    %178 = arith.mulf %175, %177 : vector<4x512xf32>
    %c6_87 = arith.constant 6 : index
    %c0_88 = arith.constant 0 : index
    %c0_89 = arith.constant 0 : index
    %179 = vector.load %arg8[%c6_87, %c0_88, %c0_89] : memref<9x8x4xf32, #tpu.memory_space<vmem>>, vector<1x8x4xf32>
    %180 = vector.shape_cast %179 : vector<1x8x4xf32> to vector<8x4xf32>
    %cst_90 = arith.constant dense<0.000000e+00> : vector<8x512xf32>
    %181 = tpu.matmul %180, %178, %cst_90 {dimension_numbers = #tpu.dot_dimension_numbers<[1], [0], [0], [1], [0, 0, 1, 1], [], []>} : vector<8x4xf32>, vector<4x512xf32>, vector<8x512xf32> -> vector<8x512xf32>
    %182 = arith.addf %174, %181 : vector<8x512xf32>
    %c496_i32_91 = arith.constant 496 : i32
    %183 = tpu.dynamic_rotate %33 by %c496_i32_91 dim 1 : vector<4x512xf32>, i32 -> vector<4x512xf32>
    %184 = vector.extract_strided_slice %1 {offsets = [7, 0], sizes = [1, 512], strides = [1, 1]} : vector<9x512xf32> to vector<1x512xf32>
    %185 = vector.broadcast %184 : vector<1x512xf32> to vector<4x512xf32>
    %186 = arith.mulf %183, %185 : vector<4x512xf32>
    %c7_92 = arith.constant 7 : index
    %c0_93 = arith.constant 0 : index
    %c0_94 = arith.constant 0 : index
    %187 = vector.load %arg8[%c7_92, %c0_93, %c0_94] : memref<9x8x4xf32, #tpu.memory_space<vmem>>, vector<1x8x4xf32>
    %188 = vector.shape_cast %187 : vector<1x8x4xf32> to vector<8x4xf32>
    %cst_95 = arith.constant dense<0.000000e+00> : vector<8x512xf32>
    %189 = tpu.matmul %188, %186, %cst_95 {dimension_numbers = #tpu.dot_dimension_numbers<[1], [0], [0], [1], [0, 0, 1, 1], [], []>} : vector<8x4xf32>, vector<4x512xf32>, vector<8x512xf32> -> vector<8x512xf32>
    %190 = arith.addf %182, %189 : vector<8x512xf32>
    %c495_i32_96 = arith.constant 495 : i32
    %191 = tpu.dynamic_rotate %33 by %c495_i32_96 dim 1 : vector<4x512xf32>, i32 -> vector<4x512xf32>
    %192 = vector.extract_strided_slice %1 {offsets = [8, 0], sizes = [1, 512], strides = [1, 1]} : vector<9x512xf32> to vector<1x512xf32>
    %193 = vector.broadcast %192 : vector<1x512xf32> to vector<4x512xf32>
    %194 = arith.mulf %191, %193 : vector<4x512xf32>
    %c8_97 = arith.constant 8 : index
    %c0_98 = arith.constant 0 : index
    %c0_99 = arith.constant 0 : index
    %195 = vector.load %arg8[%c8_97, %c0_98, %c0_99] : memref<9x8x4xf32, #tpu.memory_space<vmem>>, vector<1x8x4xf32>
    %196 = vector.shape_cast %195 : vector<1x8x4xf32> to vector<8x4xf32>
    %cst_100 = arith.constant dense<0.000000e+00> : vector<8x512xf32>
    %197 = tpu.matmul %196, %194, %cst_100 {dimension_numbers = #tpu.dot_dimension_numbers<[1], [0], [0], [1], [0, 0, 1, 1], [], []>} : vector<8x4xf32>, vector<4x512xf32>, vector<8x512xf32> -> vector<8x512xf32>
    %198 = arith.addf %190, %197 : vector<8x512xf32>
    %c0_101 = arith.constant 0 : index
    %c0_102 = arith.constant 0 : index
    %199 = vector.load %arg9[%c0_101, %c0_102] : memref<8x1xf32, #tpu.memory_space<vmem>>, vector<8x1xf32>
    %c0_103 = arith.constant 0 : index
    %c0_104 = arith.constant 0 : index
    %200 = vector.load %arg10[%c0_103, %c0_104] : memref<8x1xf32, #tpu.memory_space<vmem>>, vector<8x1xf32>
    %cst_105 = arith.constant dense<0.000000e+00> : vector<8xf32>
    %201 = vector.multi_reduction <add>, %198, %cst_105 [1] : vector<8x512xf32> to vector<8xf32>
    %202 = vector.shape_cast %201 : vector<8xf32> to vector<8x1xf32>
    %cst_106 = arith.constant 0.001953125 : f32
    %203 = vector.broadcast %cst_106 : f32 to vector<8x1xf32>
    %204 = arith.mulf %202, %203 : vector<8x1xf32>
    %205 = arith.mulf %198, %198 : vector<8x512xf32>
    %cst_107 = arith.constant dense<0.000000e+00> : vector<8xf32>
    %206 = vector.multi_reduction <add>, %205, %cst_107 [1] : vector<8x512xf32> to vector<8xf32>
    %207 = vector.shape_cast %206 : vector<8xf32> to vector<8x1xf32>
    %cst_108 = arith.constant 0.001953125 : f32
    %208 = vector.broadcast %cst_108 : f32 to vector<8x1xf32>
    %209 = arith.mulf %207, %208 : vector<8x1xf32>
    %210 = arith.mulf %204, %204 : vector<8x1xf32>
    %211 = arith.subf %209, %210 : vector<8x1xf32>
    %cst_109 = arith.constant 0.000000e+00 : f32
    %212 = vector.broadcast %cst_109 : f32 to vector<8x1xf32>
    %213 = arith.maximumf %211, %212 : vector<8x1xf32>
    %cst_110 = arith.constant 9.99999974E-6 : f32
    %214 = vector.broadcast %cst_110 : f32 to vector<8x1xf32>
    %215 = arith.addf %213, %214 : vector<8x1xf32>
    %216 = math.rsqrt %215 : vector<8x1xf32>
    %217 = arith.mulf %199, %216 : vector<8x1xf32>
    %218 = arith.mulf %204, %217 : vector<8x1xf32>
    %219 = arith.subf %200, %218 : vector<8x1xf32>
    %220 = vector.broadcast %217 : vector<8x1xf32> to vector<8x512xf32>
    %221 = arith.mulf %198, %220 : vector<8x512xf32>
    %222 = vector.broadcast %219 : vector<8x1xf32> to vector<8x512xf32>
    %223 = arith.addf %221, %222 : vector<8x512xf32>
    %cst_111 = arith.constant 0.000000e+00 : f32
    %224 = vector.broadcast %cst_111 : f32 to vector<8x512xf32>
    %225 = arith.maximumf %223, %224 : vector<8x512xf32>
    %cst_112 = arith.constant 0.000000e+00 : f32
    %226 = vector.broadcast %cst_112 : f32 to vector<8x512xf32>
    %c17_i32_113 = arith.constant 17 : i32
    %227 = tpu.dynamic_rotate %225 by %c17_i32_113 dim 1 : vector<8x512xf32>, i32 -> vector<8x512xf32>
    %228 = vector.extract_strided_slice %1 {offsets = [0, 0], sizes = [1, 512], strides = [1, 1]} : vector<9x512xf32> to vector<1x512xf32>
    %229 = vector.broadcast %228 : vector<1x512xf32> to vector<8x512xf32>
    %230 = arith.mulf %227, %229 : vector<8x512xf32>
    %c0_114 = arith.constant 0 : index
    %c0_115 = arith.constant 0 : index
    %c0_116 = arith.constant 0 : index
    %231 = vector.load %arg11[%c0_114, %c0_115, %c0_116] : memref<9x8x8xf32, #tpu.memory_space<vmem>>, vector<1x8x8xf32>
    %232 = vector.shape_cast %231 : vector<1x8x8xf32> to vector<8x8xf32>
    %cst_117 = arith.constant dense<0.000000e+00> : vector<8x512xf32>
    %233 = tpu.matmul %232, %230, %cst_117 {dimension_numbers = #tpu.dot_dimension_numbers<[1], [0], [0], [1], [0, 0, 1, 1], [], []>} : vector<8x8xf32>, vector<8x512xf32>, vector<8x512xf32> -> vector<8x512xf32>
    %234 = arith.addf %226, %233 : vector<8x512xf32>
    %c16_i32_118 = arith.constant 16 : i32
    %235 = tpu.dynamic_rotate %225 by %c16_i32_118 dim 1 : vector<8x512xf32>, i32 -> vector<8x512xf32>
    %236 = vector.extract_strided_slice %1 {offsets = [1, 0], sizes = [1, 512], strides = [1, 1]} : vector<9x512xf32> to vector<1x512xf32>
    %237 = vector.broadcast %236 : vector<1x512xf32> to vector<8x512xf32>
    %238 = arith.mulf %235, %237 : vector<8x512xf32>
    %c1_119 = arith.constant 1 : index
    %c0_120 = arith.constant 0 : index
    %c0_121 = arith.constant 0 : index
    %239 = vector.load %arg11[%c1_119, %c0_120, %c0_121] : memref<9x8x8xf32, #tpu.memory_space<vmem>>, vector<1x8x8xf32>
    %240 = vector.shape_cast %239 : vector<1x8x8xf32> to vector<8x8xf32>
    %cst_122 = arith.constant dense<0.000000e+00> : vector<8x512xf32>
    %241 = tpu.matmul %240, %238, %cst_122 {dimension_numbers = #tpu.dot_dimension_numbers<[1], [0], [0], [1], [0, 0, 1, 1], [], []>} : vector<8x8xf32>, vector<8x512xf32>, vector<8x512xf32> -> vector<8x512xf32>
    %242 = arith.addf %234, %241 : vector<8x512xf32>
    %c15_i32_123 = arith.constant 15 : i32
    %243 = tpu.dynamic_rotate %225 by %c15_i32_123 dim 1 : vector<8x512xf32>, i32 -> vector<8x512xf32>
    %244 = vector.extract_strided_slice %1 {offsets = [2, 0], sizes = [1, 512], strides = [1, 1]} : vector<9x512xf32> to vector<1x512xf32>
    %245 = vector.broadcast %244 : vector<1x512xf32> to vector<8x512xf32>
    %246 = arith.mulf %243, %245 : vector<8x512xf32>
    %c2_124 = arith.constant 2 : index
    %c0_125 = arith.constant 0 : index
    %c0_126 = arith.constant 0 : index
    %247 = vector.load %arg11[%c2_124, %c0_125, %c0_126] : memref<9x8x8xf32, #tpu.memory_space<vmem>>, vector<1x8x8xf32>
    %248 = vector.shape_cast %247 : vector<1x8x8xf32> to vector<8x8xf32>
    %cst_127 = arith.constant dense<0.000000e+00> : vector<8x512xf32>
    %249 = tpu.matmul %248, %246, %cst_127 {dimension_numbers = #tpu.dot_dimension_numbers<[1], [0], [0], [1], [0, 0, 1, 1], [], []>} : vector<8x8xf32>, vector<8x512xf32>, vector<8x512xf32> -> vector<8x512xf32>
    %250 = arith.addf %242, %249 : vector<8x512xf32>
    %c1_i32_128 = arith.constant 1 : i32
    %251 = tpu.dynamic_rotate %225 by %c1_i32_128 dim 1 : vector<8x512xf32>, i32 -> vector<8x512xf32>
    %252 = vector.extract_strided_slice %1 {offsets = [3, 0], sizes = [1, 512], strides = [1, 1]} : vector<9x512xf32> to vector<1x512xf32>
    %253 = vector.broadcast %252 : vector<1x512xf32> to vector<8x512xf32>
    %254 = arith.mulf %251, %253 : vector<8x512xf32>
    %c3_129 = arith.constant 3 : index
    %c0_130 = arith.constant 0 : index
    %c0_131 = arith.constant 0 : index
    %255 = vector.load %arg11[%c3_129, %c0_130, %c0_131] : memref<9x8x8xf32, #tpu.memory_space<vmem>>, vector<1x8x8xf32>
    %256 = vector.shape_cast %255 : vector<1x8x8xf32> to vector<8x8xf32>
    %cst_132 = arith.constant dense<0.000000e+00> : vector<8x512xf32>
    %257 = tpu.matmul %256, %254, %cst_132 {dimension_numbers = #tpu.dot_dimension_numbers<[1], [0], [0], [1], [0, 0, 1, 1], [], []>} : vector<8x8xf32>, vector<8x512xf32>, vector<8x512xf32> -> vector<8x512xf32>
    %258 = arith.addf %250, %257 : vector<8x512xf32>
    %c4_133 = arith.constant 4 : index
    %c0_134 = arith.constant 0 : index
    %c0_135 = arith.constant 0 : index
    %259 = vector.load %arg11[%c4_133, %c0_134, %c0_135] : memref<9x8x8xf32, #tpu.memory_space<vmem>>, vector<1x8x8xf32>
    %260 = vector.shape_cast %259 : vector<1x8x8xf32> to vector<8x8xf32>
    %cst_136 = arith.constant dense<0.000000e+00> : vector<8x512xf32>
    %261 = tpu.matmul %260, %225, %cst_136 {dimension_numbers = #tpu.dot_dimension_numbers<[1], [0], [0], [1], [0, 0, 1, 1], [], []>} : vector<8x8xf32>, vector<8x512xf32>, vector<8x512xf32> -> vector<8x512xf32>
    %262 = arith.addf %258, %261 : vector<8x512xf32>
    %c511_i32_137 = arith.constant 511 : i32
    %263 = tpu.dynamic_rotate %225 by %c511_i32_137 dim 1 : vector<8x512xf32>, i32 -> vector<8x512xf32>
    %264 = vector.extract_strided_slice %1 {offsets = [5, 0], sizes = [1, 512], strides = [1, 1]} : vector<9x512xf32> to vector<1x512xf32>
    %265 = vector.broadcast %264 : vector<1x512xf32> to vector<8x512xf32>
    %266 = arith.mulf %263, %265 : vector<8x512xf32>
    %c5_138 = arith.constant 5 : index
    %c0_139 = arith.constant 0 : index
    %c0_140 = arith.constant 0 : index
    %267 = vector.load %arg11[%c5_138, %c0_139, %c0_140] : memref<9x8x8xf32, #tpu.memory_space<vmem>>, vector<1x8x8xf32>
    %268 = vector.shape_cast %267 : vector<1x8x8xf32> to vector<8x8xf32>
    %cst_141 = arith.constant dense<0.000000e+00> : vector<8x512xf32>
    %269 = tpu.matmul %268, %266, %cst_141 {dimension_numbers = #tpu.dot_dimension_numbers<[1], [0], [0], [1], [0, 0, 1, 1], [], []>} : vector<8x8xf32>, vector<8x512xf32>, vector<8x512xf32> -> vector<8x512xf32>
    %270 = arith.addf %262, %269 : vector<8x512xf32>
    %c497_i32_142 = arith.constant 497 : i32
    %271 = tpu.dynamic_rotate %225 by %c497_i32_142 dim 1 : vector<8x512xf32>, i32 -> vector<8x512xf32>
    %272 = vector.extract_strided_slice %1 {offsets = [6, 0], sizes = [1, 512], strides = [1, 1]} : vector<9x512xf32> to vector<1x512xf32>
    %273 = vector.broadcast %272 : vector<1x512xf32> to vector<8x512xf32>
    %274 = arith.mulf %271, %273 : vector<8x512xf32>
    %c6_143 = arith.constant 6 : index
    %c0_144 = arith.constant 0 : index
    %c0_145 = arith.constant 0 : index
    %275 = vector.load %arg11[%c6_143, %c0_144, %c0_145] : memref<9x8x8xf32, #tpu.memory_space<vmem>>, vector<1x8x8xf32>
    %276 = vector.shape_cast %275 : vector<1x8x8xf32> to vector<8x8xf32>
    %cst_146 = arith.constant dense<0.000000e+00> : vector<8x512xf32>
    %277 = tpu.matmul %276, %274, %cst_146 {dimension_numbers = #tpu.dot_dimension_numbers<[1], [0], [0], [1], [0, 0, 1, 1], [], []>} : vector<8x8xf32>, vector<8x512xf32>, vector<8x512xf32> -> vector<8x512xf32>
    %278 = arith.addf %270, %277 : vector<8x512xf32>
    %c496_i32_147 = arith.constant 496 : i32
    %279 = tpu.dynamic_rotate %225 by %c496_i32_147 dim 1 : vector<8x512xf32>, i32 -> vector<8x512xf32>
    %280 = vector.extract_strided_slice %1 {offsets = [7, 0], sizes = [1, 512], strides = [1, 1]} : vector<9x512xf32> to vector<1x512xf32>
    %281 = vector.broadcast %280 : vector<1x512xf32> to vector<8x512xf32>
    %282 = arith.mulf %279, %281 : vector<8x512xf32>
    %c7_148 = arith.constant 7 : index
    %c0_149 = arith.constant 0 : index
    %c0_150 = arith.constant 0 : index
    %283 = vector.load %arg11[%c7_148, %c0_149, %c0_150] : memref<9x8x8xf32, #tpu.memory_space<vmem>>, vector<1x8x8xf32>
    %284 = vector.shape_cast %283 : vector<1x8x8xf32> to vector<8x8xf32>
    %cst_151 = arith.constant dense<0.000000e+00> : vector<8x512xf32>
    %285 = tpu.matmul %284, %282, %cst_151 {dimension_numbers = #tpu.dot_dimension_numbers<[1], [0], [0], [1], [0, 0, 1, 1], [], []>} : vector<8x8xf32>, vector<8x512xf32>, vector<8x512xf32> -> vector<8x512xf32>
    %286 = arith.addf %278, %285 : vector<8x512xf32>
    %c495_i32_152 = arith.constant 495 : i32
    %287 = tpu.dynamic_rotate %225 by %c495_i32_152 dim 1 : vector<8x512xf32>, i32 -> vector<8x512xf32>
    %288 = vector.extract_strided_slice %1 {offsets = [8, 0], sizes = [1, 512], strides = [1, 1]} : vector<9x512xf32> to vector<1x512xf32>
    %289 = vector.broadcast %288 : vector<1x512xf32> to vector<8x512xf32>
    %290 = arith.mulf %287, %289 : vector<8x512xf32>
    %c8_153 = arith.constant 8 : index
    %c0_154 = arith.constant 0 : index
    %c0_155 = arith.constant 0 : index
    %291 = vector.load %arg11[%c8_153, %c0_154, %c0_155] : memref<9x8x8xf32, #tpu.memory_space<vmem>>, vector<1x8x8xf32>
    %292 = vector.shape_cast %291 : vector<1x8x8xf32> to vector<8x8xf32>
    %cst_156 = arith.constant dense<0.000000e+00> : vector<8x512xf32>
    %293 = tpu.matmul %292, %290, %cst_156 {dimension_numbers = #tpu.dot_dimension_numbers<[1], [0], [0], [1], [0, 0, 1, 1], [], []>} : vector<8x8xf32>, vector<8x512xf32>, vector<8x512xf32> -> vector<8x512xf32>
    %294 = arith.addf %286, %293 : vector<8x512xf32>
    %c0_157 = arith.constant 0 : index
    %c0_158 = arith.constant 0 : index
    %295 = vector.load %arg12[%c0_157, %c0_158] : memref<8x1xf32, #tpu.memory_space<vmem>>, vector<8x1xf32>
    %c0_159 = arith.constant 0 : index
    %c0_160 = arith.constant 0 : index
    %296 = vector.load %arg13[%c0_159, %c0_160] : memref<8x1xf32, #tpu.memory_space<vmem>>, vector<8x1xf32>
    %cst_161 = arith.constant dense<0.000000e+00> : vector<8xf32>
    %297 = vector.multi_reduction <add>, %294, %cst_161 [1] : vector<8x512xf32> to vector<8xf32>
    %298 = vector.shape_cast %297 : vector<8xf32> to vector<8x1xf32>
    %cst_162 = arith.constant 0.001953125 : f32
    %299 = vector.broadcast %cst_162 : f32 to vector<8x1xf32>
    %300 = arith.mulf %298, %299 : vector<8x1xf32>
    %301 = arith.mulf %294, %294 : vector<8x512xf32>
    %cst_163 = arith.constant dense<0.000000e+00> : vector<8xf32>
    %302 = vector.multi_reduction <add>, %301, %cst_163 [1] : vector<8x512xf32> to vector<8xf32>
    %303 = vector.shape_cast %302 : vector<8xf32> to vector<8x1xf32>
    %cst_164 = arith.constant 0.001953125 : f32
    %304 = vector.broadcast %cst_164 : f32 to vector<8x1xf32>
    %305 = arith.mulf %303, %304 : vector<8x1xf32>
    %306 = arith.mulf %300, %300 : vector<8x1xf32>
    %307 = arith.subf %305, %306 : vector<8x1xf32>
    %cst_165 = arith.constant 0.000000e+00 : f32
    %308 = vector.broadcast %cst_165 : f32 to vector<8x1xf32>
    %309 = arith.maximumf %307, %308 : vector<8x1xf32>
    %cst_166 = arith.constant 9.99999974E-6 : f32
    %310 = vector.broadcast %cst_166 : f32 to vector<8x1xf32>
    %311 = arith.addf %309, %310 : vector<8x1xf32>
    %312 = math.rsqrt %311 : vector<8x1xf32>
    %313 = arith.mulf %295, %312 : vector<8x1xf32>
    %314 = arith.mulf %300, %313 : vector<8x1xf32>
    %315 = arith.subf %296, %314 : vector<8x1xf32>
    %316 = vector.broadcast %313 : vector<8x1xf32> to vector<8x512xf32>
    %317 = arith.mulf %294, %316 : vector<8x512xf32>
    %318 = vector.broadcast %315 : vector<8x1xf32> to vector<8x512xf32>
    %319 = arith.addf %317, %318 : vector<8x512xf32>
    %cst_167 = arith.constant 0.000000e+00 : f32
    %320 = vector.broadcast %cst_167 : f32 to vector<8x512xf32>
    %321 = arith.maximumf %319, %320 : vector<8x512xf32>
    %c17_i32_168 = arith.constant 17 : i32
    %322 = tpu.dynamic_rotate %0 by %c17_i32_168 dim 1 : vector<4x512xf32>, i32 -> vector<4x512xf32>
    %323 = vector.extract_strided_slice %1 {offsets = [0, 0], sizes = [1, 512], strides = [1, 1]} : vector<9x512xf32> to vector<1x512xf32>
    %cst_169 = arith.constant 5.000000e-01 : f32
    %324 = vector.broadcast %cst_169 : f32 to vector<1x512xf32>
    %325 = arith.cmpf ogt, %323, %324 : vector<1x512xf32>
    %cst_170 = arith.constant 0xFF800000 : f32
    %326 = vector.shape_cast %325 : vector<1x512xi1> to vector<1x512xi1>
    %327 = vector.broadcast %326 : vector<1x512xi1> to vector<4x512xi1>
    %328 = vector.broadcast %cst_170 : f32 to vector<4x512xf32>
    %329 = arith.select %327, %322, %328 : vector<4x512xi1>, vector<4x512xf32>
    %330 = arith.maximumf %0, %329 : vector<4x512xf32>
    %c16_i32_171 = arith.constant 16 : i32
    %331 = tpu.dynamic_rotate %0 by %c16_i32_171 dim 1 : vector<4x512xf32>, i32 -> vector<4x512xf32>
    %332 = vector.extract_strided_slice %1 {offsets = [1, 0], sizes = [1, 512], strides = [1, 1]} : vector<9x512xf32> to vector<1x512xf32>
    %cst_172 = arith.constant 5.000000e-01 : f32
    %333 = vector.broadcast %cst_172 : f32 to vector<1x512xf32>
    %334 = arith.cmpf ogt, %332, %333 : vector<1x512xf32>
    %cst_173 = arith.constant 0xFF800000 : f32
    %335 = vector.shape_cast %334 : vector<1x512xi1> to vector<1x512xi1>
    %336 = vector.broadcast %335 : vector<1x512xi1> to vector<4x512xi1>
    %337 = vector.broadcast %cst_173 : f32 to vector<4x512xf32>
    %338 = arith.select %336, %331, %337 : vector<4x512xi1>, vector<4x512xf32>
    %339 = arith.maximumf %330, %338 : vector<4x512xf32>
    %c15_i32_174 = arith.constant 15 : i32
    %340 = tpu.dynamic_rotate %0 by %c15_i32_174 dim 1 : vector<4x512xf32>, i32 -> vector<4x512xf32>
    %341 = vector.extract_strided_slice %1 {offsets = [2, 0], sizes = [1, 512], strides = [1, 1]} : vector<9x512xf32> to vector<1x512xf32>
    %cst_175 = arith.constant 5.000000e-01 : f32
    %342 = vector.broadcast %cst_175 : f32 to vector<1x512xf32>
    %343 = arith.cmpf ogt, %341, %342 : vector<1x512xf32>
    %cst_176 = arith.constant 0xFF800000 : f32
    %344 = vector.shape_cast %343 : vector<1x512xi1> to vector<1x512xi1>
    %345 = vector.broadcast %344 : vector<1x512xi1> to vector<4x512xi1>
    %346 = vector.broadcast %cst_176 : f32 to vector<4x512xf32>
    %347 = arith.select %345, %340, %346 : vector<4x512xi1>, vector<4x512xf32>
    %348 = arith.maximumf %339, %347 : vector<4x512xf32>
    %c1_i32_177 = arith.constant 1 : i32
    %349 = tpu.dynamic_rotate %0 by %c1_i32_177 dim 1 : vector<4x512xf32>, i32 -> vector<4x512xf32>
    %350 = vector.extract_strided_slice %1 {offsets = [3, 0], sizes = [1, 512], strides = [1, 1]} : vector<9x512xf32> to vector<1x512xf32>
    %cst_178 = arith.constant 5.000000e-01 : f32
    %351 = vector.broadcast %cst_178 : f32 to vector<1x512xf32>
    %352 = arith.cmpf ogt, %350, %351 : vector<1x512xf32>
    %cst_179 = arith.constant 0xFF800000 : f32
    %353 = vector.shape_cast %352 : vector<1x512xi1> to vector<1x512xi1>
    %354 = vector.broadcast %353 : vector<1x512xi1> to vector<4x512xi1>
    %355 = vector.broadcast %cst_179 : f32 to vector<4x512xf32>
    %356 = arith.select %354, %349, %355 : vector<4x512xi1>, vector<4x512xf32>
    %357 = arith.maximumf %348, %356 : vector<4x512xf32>
    %c511_i32_180 = arith.constant 511 : i32
    %358 = tpu.dynamic_rotate %0 by %c511_i32_180 dim 1 : vector<4x512xf32>, i32 -> vector<4x512xf32>
    %359 = vector.extract_strided_slice %1 {offsets = [5, 0], sizes = [1, 512], strides = [1, 1]} : vector<9x512xf32> to vector<1x512xf32>
    %cst_181 = arith.constant 5.000000e-01 : f32
    %360 = vector.broadcast %cst_181 : f32 to vector<1x512xf32>
    %361 = arith.cmpf ogt, %359, %360 : vector<1x512xf32>
    %cst_182 = arith.constant 0xFF800000 : f32
    %362 = vector.shape_cast %361 : vector<1x512xi1> to vector<1x512xi1>
    %363 = vector.broadcast %362 : vector<1x512xi1> to vector<4x512xi1>
    %364 = vector.broadcast %cst_182 : f32 to vector<4x512xf32>
    %365 = arith.select %363, %358, %364 : vector<4x512xi1>, vector<4x512xf32>
    %366 = arith.maximumf %357, %365 : vector<4x512xf32>
    %c497_i32_183 = arith.constant 497 : i32
    %367 = tpu.dynamic_rotate %0 by %c497_i32_183 dim 1 : vector<4x512xf32>, i32 -> vector<4x512xf32>
    %368 = vector.extract_strided_slice %1 {offsets = [6, 0], sizes = [1, 512], strides = [1, 1]} : vector<9x512xf32> to vector<1x512xf32>
    %cst_184 = arith.constant 5.000000e-01 : f32
    %369 = vector.broadcast %cst_184 : f32 to vector<1x512xf32>
    %370 = arith.cmpf ogt, %368, %369 : vector<1x512xf32>
    %cst_185 = arith.constant 0xFF800000 : f32
    %371 = vector.shape_cast %370 : vector<1x512xi1> to vector<1x512xi1>
    %372 = vector.broadcast %371 : vector<1x512xi1> to vector<4x512xi1>
    %373 = vector.broadcast %cst_185 : f32 to vector<4x512xf32>
    %374 = arith.select %372, %367, %373 : vector<4x512xi1>, vector<4x512xf32>
    %375 = arith.maximumf %366, %374 : vector<4x512xf32>
    %c496_i32_186 = arith.constant 496 : i32
    %376 = tpu.dynamic_rotate %0 by %c496_i32_186 dim 1 : vector<4x512xf32>, i32 -> vector<4x512xf32>
    %377 = vector.extract_strided_slice %1 {offsets = [7, 0], sizes = [1, 512], strides = [1, 1]} : vector<9x512xf32> to vector<1x512xf32>
    %cst_187 = arith.constant 5.000000e-01 : f32
    %378 = vector.broadcast %cst_187 : f32 to vector<1x512xf32>
    %379 = arith.cmpf ogt, %377, %378 : vector<1x512xf32>
    %cst_188 = arith.constant 0xFF800000 : f32
    %380 = vector.shape_cast %379 : vector<1x512xi1> to vector<1x512xi1>
    %381 = vector.broadcast %380 : vector<1x512xi1> to vector<4x512xi1>
    %382 = vector.broadcast %cst_188 : f32 to vector<4x512xf32>
    %383 = arith.select %381, %376, %382 : vector<4x512xi1>, vector<4x512xf32>
    %384 = arith.maximumf %375, %383 : vector<4x512xf32>
    %c495_i32_189 = arith.constant 495 : i32
    %385 = tpu.dynamic_rotate %0 by %c495_i32_189 dim 1 : vector<4x512xf32>, i32 -> vector<4x512xf32>
    %386 = vector.extract_strided_slice %1 {offsets = [8, 0], sizes = [1, 512], strides = [1, 1]} : vector<9x512xf32> to vector<1x512xf32>
    %cst_190 = arith.constant 5.000000e-01 : f32
    %387 = vector.broadcast %cst_190 : f32 to vector<1x512xf32>
    %388 = arith.cmpf ogt, %386, %387 : vector<1x512xf32>
    %cst_191 = arith.constant 0xFF800000 : f32
    %389 = vector.shape_cast %388 : vector<1x512xi1> to vector<1x512xi1>
    %390 = vector.broadcast %389 : vector<1x512xi1> to vector<4x512xi1>
    %391 = vector.broadcast %cst_191 : f32 to vector<4x512xf32>
    %392 = arith.select %390, %385, %391 : vector<4x512xi1>, vector<4x512xf32>
    %393 = arith.maximumf %384, %392 : vector<4x512xf32>
    %c0_192 = arith.constant 0 : index
    %c0_193 = arith.constant 0 : index
    %394 = vector.load %arg14[%c0_192, %c0_193] : memref<8x4xf32, #tpu.memory_space<vmem>>, vector<8x4xf32>
    %cst_194 = arith.constant dense<0.000000e+00> : vector<8x512xf32>
    %395 = tpu.matmul %394, %393, %cst_194 {dimension_numbers = #tpu.dot_dimension_numbers<[1], [0], [0], [1], [0, 0, 1, 1], [], []>} : vector<8x4xf32>, vector<4x512xf32>, vector<8x512xf32> -> vector<8x512xf32>
    %c0_195 = arith.constant 0 : index
    %c0_196 = arith.constant 0 : index
    %396 = vector.load %arg15[%c0_195, %c0_196] : memref<8x1xf32, #tpu.memory_space<vmem>>, vector<8x1xf32>
    %c0_197 = arith.constant 0 : index
    %c0_198 = arith.constant 0 : index
    %397 = vector.load %arg16[%c0_197, %c0_198] : memref<8x1xf32, #tpu.memory_space<vmem>>, vector<8x1xf32>
    %cst_199 = arith.constant dense<0.000000e+00> : vector<8xf32>
    %398 = vector.multi_reduction <add>, %395, %cst_199 [1] : vector<8x512xf32> to vector<8xf32>
    %399 = vector.shape_cast %398 : vector<8xf32> to vector<8x1xf32>
    %cst_200 = arith.constant 0.001953125 : f32
    %400 = vector.broadcast %cst_200 : f32 to vector<8x1xf32>
    %401 = arith.mulf %399, %400 : vector<8x1xf32>
    %402 = arith.mulf %395, %395 : vector<8x512xf32>
    %cst_201 = arith.constant dense<0.000000e+00> : vector<8xf32>
    %403 = vector.multi_reduction <add>, %402, %cst_201 [1] : vector<8x512xf32> to vector<8xf32>
    %404 = vector.shape_cast %403 : vector<8xf32> to vector<8x1xf32>
    %cst_202 = arith.constant 0.001953125 : f32
    %405 = vector.broadcast %cst_202 : f32 to vector<8x1xf32>
    %406 = arith.mulf %404, %405 : vector<8x1xf32>
    %407 = arith.mulf %401, %401 : vector<8x1xf32>
    %408 = arith.subf %406, %407 : vector<8x1xf32>
    %cst_203 = arith.constant 0.000000e+00 : f32
    %409 = vector.broadcast %cst_203 : f32 to vector<8x1xf32>
    %410 = arith.maximumf %408, %409 : vector<8x1xf32>
    %cst_204 = arith.constant 9.99999974E-6 : f32
    %411 = vector.broadcast %cst_204 : f32 to vector<8x1xf32>
    %412 = arith.addf %410, %411 : vector<8x1xf32>
    %413 = math.rsqrt %412 : vector<8x1xf32>
    %414 = arith.mulf %396, %413 : vector<8x1xf32>
    %415 = arith.mulf %401, %414 : vector<8x1xf32>
    %416 = arith.subf %397, %415 : vector<8x1xf32>
    %417 = vector.broadcast %414 : vector<8x1xf32> to vector<8x512xf32>
    %418 = arith.mulf %395, %417 : vector<8x512xf32>
    %419 = vector.broadcast %416 : vector<8x1xf32> to vector<8x512xf32>
    %420 = arith.addf %418, %419 : vector<8x512xf32>
    %cst_205 = arith.constant 0.000000e+00 : f32
    %421 = vector.broadcast %cst_205 : f32 to vector<8x512xf32>
    %422 = arith.maximumf %420, %421 : vector<8x512xf32>
    %423 = tpu.concatenate %31, %129, %321, %422 in 0 : vector<8x512xf32>, vector<8x512xf32>, vector<8x512xf32>, vector<8x512xf32> -> vector<32x512xf32>
    %c0_206 = arith.constant 0 : index
    %c0_207 = arith.constant 0 : index
    %424 = vector.load %arg17[%c0_206, %c0_207] : memref<32x512xf32, #tpu.memory_space<vmem>>, vector<32x512xf32>
    tpu.vector_store %arg17[%c0_206, %c0_207], %423 {strides = array<i32>} : memref<32x512xf32, #tpu.memory_space<vmem>>, vector<32x512xf32>,
    return
  }
}

</mosaic_0001>

<llo_original>
// kernel: inception_forward.1
$region0: #{inception_forward.1}
  #allocation0 [shape = 'u32[]', space=smem, size = 0x4, offset = 0x4, fixed_abs, tag = 'smem constant byte address 0x4 - core index']
  #allocation1 [shape = 'u32[144,128]{1,0:T(1,128)}', space=vmem, size = 0x12000, scoped, tag = 'internal scratch']
  %s0 = inlined_call_operand.vmem [shape: f32[4,512], index: 0, kind: input, shape index: {}]
  %s1 = inlined_call_operand.vmem [shape: f32[9,512], index: 1, kind: input, shape index: {}]
  %s2 = inlined_call_operand.vmem [shape: f32[16,4], index: 2, kind: input, shape index: {}]
  %s3 = inlined_call_operand.vmem [shape: f32[16,1], index: 3, kind: input, shape index: {}]
  %s4 = inlined_call_operand.vmem [shape: f32[16,1], index: 4, kind: input, shape index: {}]
  %s5 = inlined_call_operand.vmem [shape: f32[9,8,4], index: 5, kind: input, shape index: {}]
  %s6 = inlined_call_operand.vmem [shape: f32[8,1], index: 6, kind: input, shape index: {}]
  %s7 = inlined_call_operand.vmem [shape: f32[8,1], index: 7, kind: input, shape index: {}]
  %s8 = inlined_call_operand.vmem [shape: f32[9,8,4], index: 8, kind: input, shape index: {}]
  %s9 = inlined_call_operand.vmem [shape: f32[8,1], index: 9, kind: input, shape index: {}]
  %s10 = inlined_call_operand.vmem [shape: f32[8,1], index: 10, kind: input, shape index: {}]
  %s11 = inlined_call_operand.vmem [shape: f32[9,8,8], index: 11, kind: input, shape index: {}]
  %s12 = inlined_call_operand.vmem [shape: f32[8,1], index: 12, kind: input, shape index: {}]
  %s13 = inlined_call_operand.vmem [shape: f32[8,1], index: 13, kind: input, shape index: {}]
  %s14 = inlined_call_operand.vmem [shape: f32[8,4], index: 14, kind: input, shape index: {}]
  %s15 = inlined_call_operand.vmem [shape: f32[8,1], index: 15, kind: input, shape index: {}]
  %s16 = inlined_call_operand.vmem [shape: f32[8,1], index: 16, kind: input, shape index: {}]
  %s17 = inlined_call_operand.vmem [shape: f32[32,512], index: 17, kind: output, shape index: {}]
  %s18 = sld [smem:[#allocation0]]
  $region78: #{inception_forward.1} parent=0
    _
  %s20 = ssub.s32 1, %s18
  %s21 = scalar_select 0, %s20, %s18
  // Predicated region
  $region2: #{inception_forward.1} parent=0 // pred_check
    _
  $region3: #{inception_forward.1} parent=0 // pred_check_branch
    %23 = sbr.rel (0) target = $region5
  $region4: #{inception_forward.1} parent=0 // pred_region
    _
  $region5: #{inception_forward.1} parent=0 // pred_fallthru
    _
  // Predicated region
  $region6: #{inception_forward.1} parent=0 // pred_check
    _
  $region7: #{inception_forward.1} parent=0 // pred_check_branch
    %25 = sbr.rel (0) target = $region9
  $region8: #{inception_forward.1} parent=0 // pred_region
    _
  $region9: #{inception_forward.1} parent=0 // pred_fallthru
    _
  // Predicated region
  $region10: #{inception_forward.1} parent=0 // pred_check
    _
  $region11: #{inception_forward.1} parent=0 // pred_check_branch
    %27 = sbr.rel (0) target = $region13
  $region12: #{inception_forward.1} parent=0 // pred_region
    _
  $region13: #{inception_forward.1} parent=0 // pred_fallthru
    _
  // Predicated region
  $region14: #{inception_forward.1} parent=0 // pred_check
    _
  $region15: #{inception_forward.1} parent=0 // pred_check_branch
    %29 = sbr.rel (0) target = $region17
  $region16: #{inception_forward.1} parent=0 // pred_region
    _
  $region17: #{inception_forward.1} parent=0 // pred_fallthru
    _
  // Predicated region
  $region18: #{inception_forward.1} parent=0 // pred_check
    _
  $region19: #{inception_forward.1} parent=0 // pred_check_branch
    %31 = sbr.rel (0) target = $region21
  $region20: #{inception_forward.1} parent=0 // pred_region
    _
  $region21: #{inception_forward.1} parent=0 // pred_fallthru
    _
  // Predicated region
  $region22: #{inception_forward.1} parent=0 // pred_check
    _
  $region23: #{inception_forward.1} parent=0 // pred_check_branch
    %33 = sbr.rel (0) target = $region25
  $region24: #{inception_forward.1} parent=0 // pred_region
    _
  $region25: #{inception_forward.1} parent=0 // pred_fallthru
    _
  // Predicated region
  $region26: #{inception_forward.1} parent=0 // pred_check
    _
  $region27: #{inception_forward.1} parent=0 // pred_check_branch
    %35 = sbr.rel (0) target = $region29
  $region28: #{inception_forward.1} parent=0 // pred_region
    _
  $region29: #{inception_forward.1} parent=0 // pred_fallthru
    _
  // Predicated region
  $region30: #{inception_forward.1} parent=0 // pred_check
    _
  $region31: #{inception_forward.1} parent=0 // pred_check_branch
    %37 = sbr.rel (0) target = $region33
  $region32: #{inception_forward.1} parent=0 // pred_region
    _
  $region33: #{inception_forward.1} parent=0 // pred_fallthru
    _
  // Predicated region
  $region34: #{inception_forward.1} parent=0 // pred_check
    _
  $region35: #{inception_forward.1} parent=0 // pred_check_branch
    %39 = sbr.rel (0) target = $region37
  $region36: #{inception_forward.1} parent=0 // pred_region
    _
  $region37: #{inception_forward.1} parent=0 // pred_fallthru
    _
  // Predicated region
  $region38: #{inception_forward.1} parent=0 // pred_check
    _
  $region39: #{inception_forward.1} parent=0 // pred_check_branch
    %41 = sbr.rel (0) target = $region41
  $region40: #{inception_forward.1} parent=0 // pred_region
    _
  $region41: #{inception_forward.1} parent=0 // pred_fallthru
    _
  // Predicated region
  $region42: #{inception_forward.1} parent=0 // pred_check
    _
  $region43: #{inception_forward.1} parent=0 // pred_check_branch
    %43 = sbr.rel (0) target = $region45
  $region44: #{inception_forward.1} parent=0 // pred_region
    _
  $region45: #{inception_forward.1} parent=0 // pred_fallthru
    _
  // Predicated region
  $region46: #{inception_forward.1} parent=0 // pred_check
    _
  $region47: #{inception_forward.1} parent=0 // pred_check_branch
    %45 = sbr.rel (0) target = $region49
  $region48: #{inception_forward.1} parent=0 // pred_region
    _
  $region49: #{inception_forward.1} parent=0 // pred_fallthru
    _
  // Predicated region
  $region50: #{inception_forward.1} parent=0 // pred_check
    _
  $region51: #{inception_forward.1} parent=0 // pred_check_branch
    %47 = sbr.rel (0) target = $region53
  $region52: #{inception_forward.1} parent=0 // pred_region
    _
  $region53: #{inception_forward.1} parent=0 // pred_fallthru
    _
  // Predicated region
  $region54: #{inception_forward.1} parent=0 // pred_check
    _
  $region55: #{inception_forward.1} parent=0 // pred_check_branch
    %49 = sbr.rel (0) target = $region57
  $region56: #{inception_forward.1} parent=0 // pred_region
    _
  $region57: #{inception_forward.1} parent=0 // pred_fallthru
    _
  // Predicated region
  $region58: #{inception_forward.1} parent=0 // pred_check
    _
  $region59: #{inception_forward.1} parent=0 // pred_check_branch
    %51 = sbr.rel (0) target = $region61
  $region60: #{inception_forward.1} parent=0 // pred_region
    _
  $region61: #{inception_forward.1} parent=0 // pred_fallthru
    _
  // Predicated region
  $region62: #{inception_forward.1} parent=0 // pred_check
    _
  $region63: #{inception_forward.1} parent=0 // pred_check_branch
    %53 = sbr.rel (0) target = $region65
  $region64: #{inception_forward.1} parent=0 // pred_region
    _
  $region65: #{inception_forward.1} parent=0 // pred_fallthru
    _
  // Predicated region
  $region66: #{inception_forward.1} parent=0 // pred_check
    _
  $region67: #{inception_forward.1} parent=0 // pred_check_branch
    %55 = sbr.rel (0) target = $region69
  $region68: #{inception_forward.1} parent=0 // pred_region
    _
  $region69: #{inception_forward.1} parent=0 // pred_fallthru
    _
  %v56 = vld [vmem:[%s0] sm:$0xff]
  %v57 = vld [vmem:[%s0 + $0x8] sm:$0xff]
  %v58 = vld [vmem:[%s1] sm:$0xff]
  %v59 = vld [vmem:[%s1 + $0x8] sm:$0xff]
  %v60 = vld [vmem:[%s1 + $0x10] sm:$0xff]
  %v61 = vld [vmem:[%s1 + $0x18] sm:$0xff]
  %v62 = vld [vmem:[%s1 + $0x20] sm:$0x1]
  %v63 = vld [vmem:[%s1 + $0x28] sm:$0x1]
  %v64 = vld [vmem:[%s1 + $0x30] sm:$0x1]
  %v65 = vld [vmem:[%s1 + $0x38] sm:$0x1]
  %v66 = vld [vmem:[%s2] sm:$0xff]
  %v67 = vld [vmem:[%s2 + $0x8] sm:$0xff]
  %v70 = vcombine.high %v56, %v56
  %v71 = vcombine.high %v57, %v57
  %vm72 = vcmask 31744
  %v74 = vsel %vm72, %v66, 0
  %v77 = vsel %vm72, %v67, 0
  %vm79 = vcmask 1043456
  %v80 = vsel %vm79, %v56, 0
  %v82 = vsel %vm79, %v70, 0
  %v84 = vsel %vm79, %v57, 0
  %v86 = vsel %vm79, %v71, 0
  %88 = vmatprep.subr.mxu0 %v82
  %89 = vmatpush1.msra.mxu0 %v80
  %90 = vmatprep.subr.mxu0 0.0
  %91 = vmatpush1.msra.mxu0 0.0
  %92 = vmatprep.subr.mxu0 0.0
  %93 = vmatpush1.msra.mxu0 0.0
  %94 = vmatprep.subr.mxu0 0.0
  %95 = vmatpush1.msra.mxu0 0.0
  %96 = vmatprep.subr.mxu0 0.0
  %97 = vmatpush1.msra.mxu0 0.0
  %98 = vmatprep.subr.mxu0 0.0
  %99 = vmatpush1.msra.mxu0 0.0
  %100 = vmatprep.subr.mxu0 0.0
  %101 = vmatpush1.msra.mxu0 0.0
  %102 = vmatprep.subr.mxu0 0.0
  %103 = vmatpush1.msra.mxu0 0.0
  %104 = vmatprep.subr.mxu0 0.0
  %105 = vmatpush1.msra.mxu0 0.0
  %106 = vmatprep.subr.mxu0 0.0
  %107 = vmatpush1.msra.mxu0 0.0
  %108 = vmatprep.subr.mxu0 0.0
  %109 = vmatpush1.msra.mxu0 0.0
  %110 = vmatprep.subr.mxu0 0.0
  %111 = vmatpush1.msra.mxu0 0.0
  %112 = vmatprep.subr.mxu0 0.0
  %113 = vmatpush1.msra.mxu0 0.0
  %114 = vmatprep.subr.mxu0 0.0
  %115 = vmatpush1.msra.mxu0 0.0
  %116 = vmatprep.subr.mxu0 0.0
  %117 = vmatpush1.msra.mxu0 0.0
  %118 = vmatprep.subr.mxu0 0.0
  %119 = vmatpush1.msra.mxu0 0.0
  %120 = vmatprep.subr.mxu0 0.0
  %121 = vmatpush1.msra.mxu0 0.0
  %122 = vmatprep.subr.mxu0 0.0
  %123 = vmatpush1.msra.mxu0 0.0
  %124 = vmatprep.subr.mxu0 0.0
  %125 = vmatpush1.msra.mxu0 0.0
  %126 = vmatprep.subr.mxu0 0.0
  %127 = vmatpush1.msra.mxu0 0.0
  %128 = vmatprep.subr.mxu0 0.0
  %129 = vmatpush1.msra.mxu0 0.0
  %130 = vmatprep.subr.mxu0 0.0
  %131 = vmatpush1.msra.mxu0 0.0
  %132 = vmatprep.subr.mxu0 0.0
  %133 = vmatpush1.msra.mxu0 0.0
  %134 = vmatprep.subr.mxu0 0.0
  %135 = vmatpush1.msra.mxu0 0.0
  %136 = vmatprep.subr.mxu0 0.0
  %137 = vmatpush1.msra.mxu0 0.0
  %138 = vmatprep.subr.mxu0 0.0
  %139 = vmatpush1.msra.mxu0 0.0
  %140 = vmatprep.subr.mxu0 0.0
  %141 = vmatpush1.msra.mxu0 0.0
  %142 = vmatprep.subr.mxu0 0.0
  %143 = vmatpush1.msra.mxu0 0.0
  %144 = vmatprep.subr.mxu0 0.0
  %145 = vmatpush1.msra.mxu0 0.0
  %146 = vmatprep.subr.mxu0 0.0
  %147 = vmatpush1.msra.mxu0 0.0
  %148 = vmatprep.subr.mxu0 0.0
  %149 = vmatpush1.msra.mxu0 0.0
  %150 = vmatprep.subr.mxu0 0.0
  %151 = vmatpush1.msra.mxu0 0.0
  %152 = vmatprep.mubr.f32.mxu0 0.0
  %153 = vmatmul.mubr.f32.gmra.mrb[0].mxu0 %v74
  %v154 = vpop.f32.mrb[0].mxu0
  %v155 = vadd.f32 0.0, %v154
  %v156 = vpop.f32.mrb[0].mxu0
  %v157 = vadd.f32 0.0, %v156
  %158 = vmatprep.mubr.f32.mxu0 0.0
  %159 = vmatmul.mubr.f32.gmra.mrb[0].mxu0 %v77
  %v160 = vpop.f32.mrb[0].mxu0
  %v161 = vadd.f32 0.0, %v160
  %v162 = vpop.f32.mrb[0].mxu0
  %v163 = vadd.f32 0.0, %v162
  %164 = vdwg.mxu0
  %165 = vmatprep.subr.mxu0 %v86
  %166 = vmatpush1.msra.mxu0 %v84
  %167 = vmatprep.subr.mxu0 0.0
  %168 = vmatpush1.msra.mxu0 0.0
  %169 = vmatprep.subr.mxu0 0.0
  %170 = vmatpush1.msra.mxu0 0.0
  %171 = vmatprep.subr.mxu0 0.0
  %172 = vmatpush1.msra.mxu0 0.0
  %173 = vmatprep.subr.mxu0 0.0
  %174 = vmatpush1.msra.mxu0 0.0
  %175 = vmatprep.subr.mxu0 0.0
  %176 = vmatpush1.msra.mxu0 0.0
  %177 = vmatprep.subr.mxu0 0.0
  %178 = vmatpush1.msra.mxu0 0.0
  %179 = vmatprep.subr.mxu0 0.0
  %180 = vmatpush1.msra.mxu0 0.0
  %181 = vmatprep.subr.mxu0 0.0
  %182 = vmatpush1.msra.mxu0 0.0
  %183 = vmatprep.subr.mxu0 0.0
  %184 = vmatpush1.msra.mxu0 0.0
  %185 = vmatprep.subr.mxu0 0.0
  %186 = vmatpush1.msra.mxu0 0.0
  %187 = vmatprep.subr.mxu0 0.0
  %188 = vmatpush1.msra.mxu0 0.0
  %189 = vmatprep.subr.mxu0 0.0
  %190 = vmatpush1.msra.mxu0 0.0
  %191 = vmatprep.subr.mxu0 0.0
  %192 = vmatpush1.msra.mxu0 0.0
  %193 = vmatprep.subr.mxu0 0.0
  %194 = vmatpush1.msra.mxu0 0.0
  %195 = vmatprep.subr.mxu0 0.0
  %196 = vmatpush1.msra.mxu0 0.0
  %197 = vmatprep.subr.mxu0 0.0
  %198 = vmatpush1.msra.mxu0 0.0
  %199 = vmatprep.subr.mxu0 0.0
  %200 = vmatpush1.msra.mxu0 0.0
  %201 = vmatprep.subr.mxu0 0.0
  %202 = vmatpush1.msra.mxu0 0.0
  %203 = vmatprep.subr.mxu0 0.0
  %204 = vmatpush1.msra.mxu0 0.0
  %205 = vmatprep.subr.mxu0 0.0
  %206 = vmatpush1.msra.mxu0 0.0
  %207 = vmatprep.subr.mxu0 0.0
  %208 = vmatpush1.msra.mxu0 0.0
  %209 = vmatprep.subr.mxu0 0.0
  %210 = vmatpush1.msra.mxu0 0.0
  %211 = vmatprep.subr.mxu0 0.0
  %212 = vmatpush1.msra.mxu0 0.0
  %213 = vmatprep.subr.mxu0 0.0
  %214 = vmatpush1.msra.mxu0 0.0
  %215 = vmatprep.subr.mxu0 0.0
  %216 = vmatpush1.msra.mxu0 0.0
  %217 = vmatprep.subr.mxu0 0.0
  %218 = vmatpush1.msra.mxu0 0.0
  %219 = vmatprep.subr.mxu0 0.0
  %220 = vmatpush1.msra.mxu0 0.0
  %221 = vmatprep.subr.mxu0 0.0
  %222 = vmatpush1.msra.mxu0 0.0
  %223 = vmatprep.subr.mxu0 0.0
  %224 = vmatpush1.msra.mxu0 0.0
  %225 = vmatprep.subr.mxu0 0.0
  %226 = vmatpush1.msra.mxu0 0.0
  %227 = vmatprep.subr.mxu0 0.0
  %228 = vmatpush1.msra.mxu0 0.0
  %229 = vmatprep.mubr.f32.mxu0 0.0
  %230 = vmatmul.mubr.f32.gmra.mrb[0].mxu0 %v74
  %v231 = vpop.f32.mrb[0].mxu0
  %v232 = vadd.f32 0.0, %v231
  %v233 = vpop.f32.mrb[0].mxu0
  %v234 = vadd.f32 0.0, %v233
  %235 = vmatprep.mubr.f32.mxu0 0.0
  %236 = vmatmul.mubr.f32.gmra.mrb[0].mxu0 %v77
  %v237 = vpop.f32.mrb[0].mxu0
  %v238 = vadd.f32 0.0, %v237
  %v239 = vpop.f32.mrb[0].mxu0
  %v240 = vadd.f32 0.0, %v239
  %241 = vdwg.mxu0
  %v242 = vld [vmem:[%s3] sm:$0xff]
  %v243 = vld [vmem:[%s3 + $0x8] sm:$0xff]
  %v244 = vld [vmem:[%s4] sm:$0xff]
  %v245 = vld [vmem:[%s4 + $0x8] sm:$0xff]
  %v246 = vadd.f32 %v155, %v157
  %v247 = vadd.f32 %v246, %v232
  %v248 = vadd.f32 %v247, %v234
  %249 = vadd.xlane.f32.xlu0 %v248
  %v250 = vpop.xlane.xlu0 %249
  %v251 = vadd.f32 %v161, %v163
  %v252 = vadd.f32 %v251, %v238
  %v253 = vadd.f32 %v252, %v240
  %254 = vadd.xlane.f32.xlu0 %v253
  %v255 = vpop.xlane.xlu0 %254
  %v256 = vmul.f32 %v250, 0.001953125
  %v257 = vmul.f32 %v255, 0.001953125
  %v258 = vmul.f32 %v155, %v155
  %v259 = vmul.f32 %v157, %v157
  %v260 = vmul.f32 %v232, %v232
  %v261 = vmul.f32 %v234, %v234
  %v262 = vmul.f32 %v161, %v161
  %v263 = vmul.f32 %v163, %v163
  %v264 = vmul.f32 %v238, %v238
  %v265 = vmul.f32 %v240, %v240
  %v266 = vadd.f32 %v258, %v259
  %v267 = vadd.f32 %v266, %v260
  %v268 = vadd.f32 %v267, %v261
  %269 = vadd.xlane.f32.xlu0 %v268
  %v270 = vpop.xlane.xlu0 %269
  %v271 = vadd.f32 %v262, %v263
  %v272 = vadd.f32 %v271, %v264
  %v273 = vadd.f32 %v272, %v265
  %274 = vadd.xlane.f32.xlu0 %v273
  %v275 = vpop.xlane.xlu0 %274
  %v276 = vmul.f32 %v270, 0.001953125
  %v277 = vmul.f32 %v275, 0.001953125
  %v278 = vmul.f32 %v256, %v256
  %v279 = vmul.f32 %v257, %v257
  %v280 = vsub.f32 %v276, %v278
  %v281 = vsub.f32 %v277, %v279
  %v282 = vmax.f32 %v280, 0.0
  %v283 = vmax.f32 %v281, 0.0
  %v284 = vadd.f32 %v282, 1e-05
  %v285 = vadd.f32 %v283, 1e-05
  %v286 = vrsqrt.pop %v284
  %v287 = vrsqrt.pop %v285
  %v288 = vmul.f32 %v242, %v286
  %v289 = vmul.f32 %v243, %v287
  %v290 = vmul.f32 %v256, %v288
  %v291 = vmul.f32 %v257, %v289
  %v292 = vsub.f32 %v244, %v290
  %v293 = vsub.f32 %v245, %v291
  %295 = vset.pattern.permute.xlu0 0
  %296 = vperm.xlu0 %295, %v288
  %v297 = vpop.permute.xlu0 %296
  %300 = vset.pattern.permute.xlu0 0
  %301 = vperm.xlu0 %300, %v289
  %v302 = vpop.permute.xlu0 %301
  %v304 = vmul.f32 %v155, %v297
  %v305 = vmul.f32 %v157, %v297
  %v306 = vmul.f32 %v232, %v297
  %v307 = vmul.f32 %v234, %v297
  %v308 = vmul.f32 %v161, %v302
  %v309 = vmul.f32 %v163, %v302
  %v310 = vmul.f32 %v238, %v302
  %v311 = vmul.f32 %v240, %v302
  %313 = vset.pattern.permute.xlu0 0
  %314 = vperm.xlu0 %313, %v292
  %v315 = vpop.permute.xlu0 %314
  %318 = vset.pattern.permute.xlu0 0
  %319 = vperm.xlu0 %318, %v293
  %v320 = vpop.permute.xlu0 %319
  %v322 = vadd.f32 %v304, %v315
  %v323 = vadd.f32 %v305, %v315
  %v324 = vadd.f32 %v306, %v315
  %v325 = vadd.f32 %v307, %v315
  %v326 = vadd.f32 %v308, %v320
  %v327 = vadd.f32 %v309, %v320
  %v328 = vadd.f32 %v310, %v320
  %v329 = vadd.f32 %v311, %v320
  %v330 = vmax.f32 %v322, 0.0
  %v331 = vmax.f32 %v323, 0.0
  %v332 = vmax.f32 %v324, 0.0
  %v333 = vmax.f32 %v325, 0.0
  %v334 = vmax.f32 %v326, 0.0
  %v335 = vmax.f32 %v327, 0.0
  %v336 = vmax.f32 %v328, 0.0
  %v337 = vmax.f32 %v329, 0.0
  %338 = vrot.lane.b32.xlu0 %v334, 17
  %v339 = vpop.permute.xlu0 %338
  %340 = vrot.lane.b32.xlu0 %v335, 17
  %v341 = vpop.permute.xlu0 %340
  %342 = vrot.lane.b32.xlu0 %v336, 17
  %v343 = vpop.permute.xlu0 %342
  %344 = vrot.lane.b32.xlu0 %v337, 17
  %v345 = vpop.permute.xlu0 %344
  %v346 = vlaneseq
  %v347 = vand.u32 %v346, 127
  %vm348 = vcmp.lt.s32.totalorder %v347, 17
  %v349 = vsel %vm348, %v343, %v345
  %v350 = vsel %vm348, %v341, %v343
  %v351 = vsel %vm348, %v339, %v341
  %v352 = vsel %vm348, %v345, %v339
  %v353 = vlaneseq
  %v354 = vshrl.u32 %v353, 7
  %v355 = vsub.s32 0, %v354
  %v356 = vrot.slane %v58, %v355
  %v357 = vlaneseq
  %v358 = vshrl.u32 %v357, 7
  %v359 = vsub.s32 0, %v358
  %v360 = vrot.slane %v59, %v359
  %v361 = vlaneseq
  %v362 = vshrl.u32 %v361, 7
  %v363 = vsub.s32 0, %v362
  %v364 = vrot.slane %v60, %v363
  %v365 = vlaneseq
  %v366 = vshrl.u32 %v365, 7
  %v367 = vsub.s32 0, %v366
  %v368 = vrot.slane %v61, %v367
  %v369 = vmul.f32 %v352, %v356
  %v370 = vmul.f32 %v351, %v360
  %v371 = vmul.f32 %v350, %v364
  %v372 = vmul.f32 %v349, %v368
  %v373 = vld [vmem:[%s5] sm:$0xff]
  %374 = vrot.lane.b32.xlu0 %v334, 16
  %v375 = vpop.permute.xlu0 %374
  %376 = vrot.lane.b32.xlu0 %v335, 16
  %v377 = vpop.permute.xlu0 %376
  %378 = vrot.lane.b32.xlu0 %v336, 16
  %v379 = vpop.permute.xlu0 %378
  %380 = vrot.lane.b32.xlu0 %v337, 16
  %v381 = vpop.permute.xlu0 %380
  %vm382 = vcmp.lt.s32.totalorder %v347, 16
  %v383 = vsel %vm382, %v379, %v381
  %v384 = vsel %vm382, %v377, %v379
  %v385 = vsel %vm382, %v375, %v377
  %v386 = vsel %vm382, %v381, %v375
  %v387 = vlaneseq
  %v388 = vshrl.u32 %v387, 7
  %v389 = vsub.s32 1, %v388
  %v390 = vrot.slane %v58, %v389
  %v391 = vlaneseq
  %v392 = vshrl.u32 %v391, 7
  %v393 = vsub.s32 1, %v392
  %v394 = vrot.slane %v59, %v393
  %v395 = vlaneseq
  %v396 = vshrl.u32 %v395, 7
  %v397 = vsub.s32 1, %v396
  %v398 = vrot.slane %v60, %v397
  %v399 = vlaneseq
  %v400 = vshrl.u32 %v399, 7
  %v401 = vsub.s32 1, %v400
  %v402 = vrot.slane %v61, %v401
  %v403 = vmul.f32 %v386, %v390
  %v404 = vmul.f32 %v385, %v394
  %v405 = vmul.f32 %v384, %v398
  %v406 = vmul.f32 %v383, %v402
  %s407 = scalar_lea.vmem %s5, 8
  %v408 = vld [vmem:[%s407] sm:$0xff]
  %v410 = vsel %vm72, %v408, 0
  %v413 = vsel %vm79, %v403, 0
  %v416 = vsel %vm79, %v404, 0
  %v419 = vsel %vm79, %v405, 0
  %v422 = vsel %vm79, %v406, 0
  %424 = vmatprep.subr.mxu0 %v416
  %425 = vmatpush1.msra.mxu0 %v413
  %426 = vmatprep.subr.mxu0 0.0
  %427 = vmatpush1.msra.mxu0 0.0
  %428 = vmatprep.subr.mxu0 0.0
  %429 = vmatpush1.msra.mxu0 0.0
  %430 = vmatprep.subr.mxu0 0.0
  %431 = vmatpush1.msra.mxu0 0.0
  %432 = vmatprep.subr.mxu0 0.0
  %433 = vmatpush1.msra.mxu0 0.0
  %434 = vmatprep.subr.mxu0 0.0
  %435 = vmatpush1.msra.mxu0 0.0
  %436 = vmatprep.subr.mxu0 0.0
  %437 = vmatpush1.msra.mxu0 0.0
  %438 = vmatprep.subr.mxu0 0.0
  %439 = vmatpush1.msra.mxu0 0.0
  %440 = vmatprep.subr.mxu0 0.0
  %441 = vmatpush1.msra.mxu0 0.0
  %442 = vmatprep.subr.mxu0 0.0
  %443 = vmatpush1.msra.mxu0 0.0
  %444 = vmatprep.subr.mxu0 0.0
  %445 = vmatpush1.msra.mxu0 0.0
  %446 = vmatprep.subr.mxu0 0.0
  %447 = vmatpush1.msra.mxu0 0.0
  %448 = vmatprep.subr.mxu0 0.0
  %449 = vmatpush1.msra.mxu0 0.0
  %450 = vmatprep.subr.mxu0 0.0
  %451 = vmatpush1.msra.mxu0 0.0
  %452 = vmatprep.subr.mxu0 0.0
  %453 = vmatpush1.msra.mxu0 0.0
  %454 = vmatprep.subr.mxu0 0.0
  %455 = vmatpush1.msra.mxu0 0.0
  %456 = vmatprep.subr.mxu0 0.0
  %457 = vmatpush1.msra.mxu0 0.0
  %458 = vmatprep.subr.mxu0 0.0
  %459 = vmatpush1.msra.mxu0 0.0
  %460 = vmatprep.subr.mxu0 0.0
  %461 = vmatpush1.msra.mxu0 0.0
  %462 = vmatprep.subr.mxu0 0.0
  %463 = vmatpush1.msra.mxu0 0.0
  %464 = vmatprep.subr.mxu0 0.0
  %465 = vmatpush1.msra.mxu0 0.0
  %466 = vmatprep.subr.mxu0 0.0
  %467 = vmatpush1.msra.mxu0 0.0
  %468 = vmatprep.subr.mxu0 0.0
  %469 = vmatpush1.msra.mxu0 0.0
  %470 = vmatprep.subr.mxu0 0.0
  %471 = vmatpush1.msra.mxu0 0.0
  %472 = vmatprep.subr.mxu0 0.0
  %473 = vmatpush1.msra.mxu0 0.0
  %474 = vmatprep.subr.mxu0 0.0
  %475 = vmatpush1.msra.mxu0 0.0
  %476 = vmatprep.subr.mxu0 0.0
  %477 = vmatpush1.msra.mxu0 0.0
  %478 = vmatprep.subr.mxu0 0.0
  %479 = vmatpush1.msra.mxu0 0.0
  %480 = vmatprep.subr.mxu0 0.0
  %481 = vmatpush1.msra.mxu0 0.0
  %482 = vmatprep.subr.mxu0 0.0
  %483 = vmatpush1.msra.mxu0 0.0
  %484 = vmatprep.subr.mxu0 0.0
  %485 = vmatpush1.msra.mxu0 0.0
  %486 = vmatprep.subr.mxu0 0.0
  %487 = vmatpush1.msra.mxu0 0.0
  %488 = vmatprep.mubr.f32.mxu0 0.0
  %489 = vmatmul.mubr.f32.gmra.mrb[0].mxu0 %v410
  %v490 = vpop.f32.mrb[0].mxu0
  %v491 = vadd.f32 0.0, %v490
  %v492 = vpop.f32.mrb[0].mxu0
  %v493 = vadd.f32 0.0, %v492
  %494 = vdwg.mxu0
  %495 = vmatprep.subr.mxu0 %v422
  %496 = vmatpush1.msra.mxu0 %v419
  %497 = vmatprep.subr.mxu0 0.0
  %498 = vmatpush1.msra.mxu0 0.0
  %499 = vmatprep.subr.mxu0 0.0
  %500 = vmatpush1.msra.mxu0 0.0
  %501 = vmatprep.subr.mxu0 0.0
  %502 = vmatpush1.msra.mxu0 0.0
  %503 = vmatprep.subr.mxu0 0.0
  %504 = vmatpush1.msra.mxu0 0.0
  %505 = vmatprep.subr.mxu0 0.0
  %506 = vmatpush1.msra.mxu0 0.0
  %507 = vmatprep.subr.mxu0 0.0
  %508 = vmatpush1.msra.mxu0 0.0
  %509 = vmatprep.subr.mxu0 0.0
  %510 = vmatpush1.msra.mxu0 0.0
  %511 = vmatprep.subr.mxu0 0.0
  %512 = vmatpush1.msra.mxu0 0.0
  %513 = vmatprep.subr.mxu0 0.0
  %514 = vmatpush1.msra.mxu0 0.0
  %515 = vmatprep.subr.mxu0 0.0
  %516 = vmatpush1.msra.mxu0 0.0
  %517 = vmatprep.subr.mxu0 0.0
  %518 = vmatpush1.msra.mxu0 0.0
  %519 = vmatprep.subr.mxu0 0.0
  %520 = vmatpush1.msra.mxu0 0.0
  %521 = vmatprep.subr.mxu0 0.0
  %522 = vmatpush1.msra.mxu0 0.0
  %523 = vmatprep.subr.mxu0 0.0
  %524 = vmatpush1.msra.mxu0 0.0
  %525 = vmatprep.subr.mxu0 0.0
  %526 = vmatpush1.msra.mxu0 0.0
  %527 = vmatprep.subr.mxu0 0.0
  %528 = vmatpush1.msra.mxu0 0.0
  %529 = vmatprep.subr.mxu0 0.0
  %530 = vmatpush1.msra.mxu0 0.0
  %531 = vmatprep.subr.mxu0 0.0
  %532 = vmatpush1.msra.mxu0 0.0
  %533 = vmatprep.subr.mxu0 0.0
  %534 = vmatpush1.msra.mxu0 0.0
  %535 = vmatprep.subr.mxu0 0.0
  %536 = vmatpush1.msra.mxu0 0.0
  %537 = vmatprep.subr.mxu0 0.0
  %538 = vmatpush1.msra.mxu0 0.0
  %539 = vmatprep.subr.mxu0 0.0
  %540 = vmatpush1.msra.mxu0 0.0
  %541 = vmatprep.subr.mxu0 0.0
  %542 = vmatpush1.msra.mxu0 0.0
  %543 = vmatprep.subr.mxu0 0.0
  %544 = vmatpush1.msra.mxu0 0.0
  %545 = vmatprep.subr.mxu0 0.0
  %546 = vmatpush1.msra.mxu0 0.0
  %547 = vmatprep.subr.mxu0 0.0
  %548 = vmatpush1.msra.mxu0 0.0
  %549 = vmatprep.subr.mxu0 0.0
  %550 = vmatpush1.msra.mxu0 0.0
  %551 = vmatprep.subr.mxu0 0.0
  %552 = vmatpush1.msra.mxu0 0.0
  %553 = vmatprep.subr.mxu0 0.0
  %554 = vmatpush1.msra.mxu0 0.0
  %555 = vmatprep.subr.mxu0 0.0
  %556 = vmatpush1.msra.mxu0 0.0
  %557 = vmatprep.subr.mxu0 0.0
  %558 = vmatpush1.msra.mxu0 0.0
  %559 = vmatprep.mubr.f32.mxu0 0.0
  %560 = vmatmul.mubr.f32.gmra.mrb[0].mxu0 %v410
  %v561 = vpop.f32.mrb[0].mxu0
  %v562 = vadd.f32 0.0, %v561
  %v563 = vpop.f32.mrb[0].mxu0
  %v564 = vadd.f32 0.0, %v563
  %565 = vdwg.mxu0
  %v567 = vsel %vm72, %v373, 0
  %v570 = vsel %vm79, %v369, 0
  %v573 = vsel %vm79, %v370, 0
  %v576 = vsel %vm79, %v371, 0
  %v579 = vsel %vm79, %v372, 0
  %581 = vmatprep.subr.mxu0 %v573
  %582 = vmatpush1.msra.mxu0 %v570
  %583 = vmatprep.subr.mxu0 0.0
  %584 = vmatpush1.msra.mxu0 0.0
  %585 = vmatprep.subr.mxu0 0.0
  %586 = vmatpush1.msra.mxu0 0.0
  %587 = vmatprep.subr.mxu0 0.0
  %588 = vmatpush1.msra.mxu0 0.0
  %589 = vmatprep.subr.mxu0 0.0
  %590 = vmatpush1.msra.mxu0 0.0
  %591 = vmatprep.subr.mxu0 0.0
  %592 = vmatpush1.msra.mxu0 0.0
  %593 = vmatprep.subr.mxu0 0.0
  %594 = vmatpush1.msra.mxu0 0.0
  %595 = vmatprep.subr.mxu0 0.0
  %596 = vmatpush1.msra.mxu0 0.0
  %597 = vmatprep.subr.mxu0 0.0
  %598 = vmatpush1.msra.mxu0 0.0
  %599 = vmatprep.subr.mxu0 0.0
  %600 = vmatpush1.msra.mxu0 0.0
  %601 = vmatprep.subr.mxu0 0.0
  %602 = vmatpush1.msra.mxu0 0.0
  %603 = vmatprep.subr.mxu0 0.0
  %604 = vmatpush1.msra.mxu0 0.0
  %605 = vmatprep.subr.mxu0 0.0
  %606 = vmatpush1.msra.mxu0 0.0
  %607 = vmatprep.subr.mxu0 0.0
  %608 = vmatpush1.msra.mxu0 0.0
  %609 = vmatprep.subr.mxu0 0.0
  %610 = vmatpush1.msra.mxu0 0.0
  %611 = vmatprep.subr.mxu0 0.0
  %612 = vmatpush1.msra.mxu0 0.0
  %613 = vmatprep.subr.mxu0 0.0
  %614 = vmatpush1.msra.mxu0 0.0
  %615 = vmatprep.subr.mxu0 0.0
  %616 = vmatpush1.msra.mxu0 0.0
  %617 = vmatprep.subr.mxu0 0.0
  %618 = vmatpush1.msra.mxu0 0.0
  %619 = vmatprep.subr.mxu0 0.0
  %620 = vmatpush1.msra.mxu0 0.0
  %621 = vmatprep.subr.mxu0 0.0
  %622 = vmatpush1.msra.mxu0 0.0
  %623 = vmatprep.subr.mxu0 0.0
  %624 = vmatpush1.msra.mxu0 0.0
  %625 = vmatprep.subr.mxu0 0.0
  %626 = vmatpush1.msra.mxu0 0.0
  %627 = vmatprep.subr.mxu0 0.0
  %628 = vmatpush1.msra.mxu0 0.0
  %629 = vmatprep.subr.mxu0 0.0
  %630 = vmatpush1.msra.mxu0 0.0
  %631 = vmatprep.subr.mxu0 0.0
  %632 = vmatpush1.msra.mxu0 0.0
  %633 = vmatprep.subr.mxu0 0.0
  %634 = vmatpush1.msra.mxu0 0.0
  %635 = vmatprep.subr.mxu0 0.0
  %636 = vmatpush1.msra.mxu0 0.0
  %637 = vmatprep.subr.mxu0 0.0
  %638 = vmatpush1.msra.mxu0 0.0
  %639 = vmatprep.subr.mxu0 0.0
  %640 = vmatpush1.msra.mxu0 0.0
  %641 = vmatprep.subr.mxu0 0.0
  %642 = vmatpush1.msra.mxu0 0.0
  %643 = vmatprep.subr.mxu0 0.0
  %644 = vmatpush1.msra.mxu0 0.0
  %645 = vmatprep.mubr.f32.mxu0 0.0
  %646 = vmatmul.mubr.f32.gmra.mrb[0].mxu0 %v567
  %v647 = vpop.f32.mrb[0].mxu0
  %v648 = vadd.f32 %v491, %v647
  %v649 = vpop.f32.mrb[0].mxu0
  %v650 = vadd.f32 %v493, %v649
  %651 = vdwg.mxu0
  %652 = vmatprep.subr.mxu0 %v579
  %653 = vmatpush1.msra.mxu0 %v576
  %654 = vmatprep.subr.mxu0 0.0
  %655 = vmatpush1.msra.mxu0 0.0
  %656 = vmatprep.subr.mxu0 0.0
  %657 = vmatpush1.msra.mxu0 0.0
  %658 = vmatprep.subr.mxu0 0.0
  %659 = vmatpush1.msra.mxu0 0.0
  %660 = vmatprep.subr.mxu0 0.0
  %661 = vmatpush1.msra.mxu0 0.0
  %662 = vmatprep.subr.mxu0 0.0
  %663 = vmatpush1.msra.mxu0 0.0
  %664 = vmatprep.subr.mxu0 0.0
  %665 = vmatpush1.msra.mxu0 0.0
  %666 = vmatprep.subr.mxu0 0.0
  %667 = vmatpush1.msra.mxu0 0.0
  %668 = vmatprep.subr.mxu0 0.0
  %669 = vmatpush1.msra.mxu0 0.0
  %670 = vmatprep.subr.mxu0 0.0
  %671 = vmatpush1.msra.mxu0 0.0
  %672 = vmatprep.subr.mxu0 0.0
  %673 = vmatpush1.msra.mxu0 0.0
  %674 = vmatprep.subr.mxu0 0.0
  %675 = vmatpush1.msra.mxu0 0.0
  %676 = vmatprep.subr.mxu0 0.0
  %677 = vmatpush1.msra.mxu0 0.0
  %678 = vmatprep.subr.mxu0 0.0
  %679 = vmatpush1.msra.mxu0 0.0
  %680 = vmatprep.subr.mxu0 0.0
  %681 = vmatpush1.msra.mxu0 0.0
  %682 = vmatprep.subr.mxu0 0.0
  %683 = vmatpush1.msra.mxu0 0.0
  %684 = vmatprep.subr.mxu0 0.0
  %685 = vmatpush1.msra.mxu0 0.0
  %686 = vmatprep.subr.mxu0 0.0
  %687 = vmatpush1.msra.mxu0 0.0
  %688 = vmatprep.subr.mxu0 0.0
  %689 = vmatpush1.msra.mxu0 0.0
  %690 = vmatprep.subr.mxu0 0.0
  %691 = vmatpush1.msra.mxu0 0.0
  %692 = vmatprep.subr.mxu0 0.0
  %693 = vmatpush1.msra.mxu0 0.0
  %694 = vmatprep.subr.mxu0 0.0
  %695 = vmatpush1.msra.mxu0 0.0
  %696 = vmatprep.subr.mxu0 0.0
  %697 = vmatpush1.msra.mxu0 0.0
  %698 = vmatprep.subr.mxu0 0.0
  %699 = vmatpush1.msra.mxu0 0.0
  %700 = vmatprep.subr.mxu0 0.0
  %701 = vmatpush1.msra.mxu0 0.0
  %702 = vmatprep.subr.mxu0 0.0
  %703 = vmatpush1.msra.mxu0 0.0
  %704 = vmatprep.subr.mxu0 0.0
  %705 = vmatpush1.msra.mxu0 0.0
  %706 = vmatprep.subr.mxu0 0.0
  %707 = vmatpush1.msra.mxu0 0.0
  %708 = vmatprep.subr.mxu0 0.0
  %709 = vmatpush1.msra.mxu0 0.0
  %710 = vmatprep.subr.mxu0 0.0
  %711 = vmatpush1.msra.mxu0 0.0
  %712 = vmatprep.subr.mxu0 0.0
  %713 = vmatpush1.msra.mxu0 0.0
  %714 = vmatprep.subr.mxu0 0.0
  %715 = vmatpush1.msra.mxu0 0.0
  %716 = vmatprep.mubr.f32.mxu0 0.0
  %717 = vmatmul.mubr.f32.gmra.mrb[0].mxu0 %v567
  %v718 = vpop.f32.mrb[0].mxu0
  %v719 = vadd.f32 %v562, %v718
  %v720 = vpop.f32.mrb[0].mxu0
  %v721 = vadd.f32 %v564, %v720
  %722 = vdwg.mxu0
  %723 = vrot.lane.b32.xlu0 %v334, 15
  %v724 = vpop.permute.xlu0 %723
  %725 = vrot.lane.b32.xlu0 %v335, 15
  %v726 = vpop.permute.xlu0 %725
  %727 = vrot.lane.b32.xlu0 %v336, 15
  %v728 = vpop.permute.xlu0 %727
  %729 = vrot.lane.b32.xlu0 %v337, 15
  %v730 = vpop.permute.xlu0 %729
  %vm731 = vcmp.lt.s32.totalorder %v347, 15
  %v732 = vsel %vm731, %v728, %v730
  %v733 = vsel %vm731, %v726, %v728
  %v734 = vsel %vm731, %v724, %v726
  %v735 = vsel %vm731, %v730, %v724
  %v736 = vlaneseq
  %v737 = vshrl.u32 %v736, 7
  %v738 = vsub.s32 2, %v737
  %v739 = vrot.slane %v58, %v738
  %v740 = vlaneseq
  %v741 = vshrl.u32 %v740, 7
  %v742 = vsub.s32 2, %v741
  %v743 = vrot.slane %v59, %v742
  %v744 = vlaneseq
  %v745 = vshrl.u32 %v744, 7
  %v746 = vsub.s32 2, %v745
  %v747 = vrot.slane %v60, %v746
  %v748 = vlaneseq
  %v749 = vshrl.u32 %v748, 7
  %v750 = vsub.s32 2, %v749
  %v751 = vrot.slane %v61, %v750
  %v752 = vmul.f32 %v735, %v739
  %v753 = vmul.f32 %v734, %v743
  %v754 = vmul.f32 %v733, %v747
  %v755 = vmul.f32 %v732, %v751
  %s756 = scalar_lea.vmem %s5, 16
  %v757 = vld [vmem:[%s756] sm:$0xff]
  %v759 = vsel %vm72, %v757, 0
  %v762 = vsel %vm79, %v752, 0
  %v765 = vsel %vm79, %v753, 0
  %v768 = vsel %vm79, %v754, 0
  %v771 = vsel %vm79, %v755, 0
  %773 = vmatprep.subr.mxu0 %v765
  %774 = vmatpush1.msra.mxu0 %v762
  %775 = vmatprep.subr.mxu0 0.0
  %776 = vmatpush1.msra.mxu0 0.0
  %777 = vmatprep.subr.mxu0 0.0
  %778 = vmatpush1.msra.mxu0 0.0
  %779 = vmatprep.subr.mxu0 0.0
  %780 = vmatpush1.msra.mxu0 0.0
  %781 = vmatprep.subr.mxu0 0.0
  %782 = vmatpush1.msra.mxu0 0.0
  %783 = vmatprep.subr.mxu0 0.0
  %784 = vmatpush1.msra.mxu0 0.0
  %785 = vmatprep.subr.mxu0 0.0
  %786 = vmatpush1.msra.mxu0 0.0
  %787 = vmatprep.subr.mxu0 0.0
  %788 = vmatpush1.msra.mxu0 0.0
  %789 = vmatprep.subr.mxu0 0.0
  %790 = vmatpush1.msra.mxu0 0.0
  %791 = vmatprep.subr.mxu0 0.0
  %792 = vmatpush1.msra.mxu0 0.0
  %793 = vmatprep.subr.mxu0 0.0
  %794 = vmatpush1.msra.mxu0 0.0
  %795 = vmatprep.subr.mxu0 0.0
  %796 = vmatpush1.msra.mxu0 0.0
  %797 = vmatprep.subr.mxu0 0.0
  %798 = vmatpush1.msra.mxu0 0.0
  %799 = vmatprep.subr.mxu0 0.0
  %800 = vmatpush1.msra.mxu0 0.0
  %801 = vmatprep.subr.mxu0 0.0
  %802 = vmatpush1.msra.mxu0 0.0
  %803 = vmatprep.subr.mxu0 0.0
  %804 = vmatpush1.msra.mxu0 0.0
  %805 = vmatprep.subr.mxu0 0.0
  %806 = vmatpush1.msra.mxu0 0.0
  %807 = vmatprep.subr.mxu0 0.0
  %808 = vmatpush1.msra.mxu0 0.0
  %809 = vmatprep.subr.mxu0 0.0
  %810 = vmatpush1.msra.mxu0 0.0
  %811 = vmatprep.subr.mxu0 0.0
  %812 = vmatpush1.msra.mxu0 0.0
  %813 = vmatprep.subr.mxu0 0.0
  %814 = vmatpush1.msra.mxu0 0.0
  %815 = vmatprep.subr.mxu0 0.0
  %816 = vmatpush1.msra.mxu0 0.0
  %817 = vmatprep.subr.mxu0 0.0
  %818 = vmatpush1.msra.mxu0 0.0
  %819 = vmatprep.subr.mxu0 0.0
  %820 = vmatpush1.msra.mxu0 0.0
  %821 = vmatprep.subr.mxu0 0.0
  %822 = vmatpush1.msra.mxu0 0.0
  %823 = vmatprep.subr.mxu0 0.0
  %824 = vmatpush1.msra.mxu0 0.0
  %825 = vmatprep.subr.mxu0 0.0
  %826 = vmatpush1.msra.mxu0 0.0
  %827 = vmatprep.subr.mxu0 0.0
  %828 = vmatpush1.msra.mxu0 0.0
  %829 = vmatprep.subr.mxu0 0.0
  %830 = vmatpush1.msra.mxu0 0.0
  %831 = vmatprep.subr.mxu0 0.0
  %832 = vmatpush1.msra.mxu0 0.0
  %833 = vmatprep.subr.mxu0 0.0
  %834 = vmatpush1.msra.mxu0 0.0
  %835 = vmatprep.subr.mxu0 0.0
  %836 = vmatpush1.msra.mxu0 0.0
  %837 = vmatprep.mubr.f32.mxu0 0.0
  %838 = vmatmul.mubr.f32.gmra.mrb[0].mxu0 %v759
  %v839 = vpop.f32.mrb[0].mxu0
  %v840 = vadd.f32 0.0, %v839
  %v841 = vpop.f32.mrb[0].mxu0
  %v842 = vadd.f32 0.0, %v841
  %843 = vdwg.mxu0
  %844 = vmatprep.subr.mxu0 %v771
  %845 = vmatpush1.msra.mxu0 %v768
  %846 = vmatprep.subr.mxu0 0.0
  %847 = vmatpush1.msra.mxu0 0.0
  %848 = vmatprep.subr.mxu0 0.0
  %849 = vmatpush1.msra.mxu0 0.0
  %850 = vmatprep.subr.mxu0 0.0
  %851 = vmatpush1.msra.mxu0 0.0
  %852 = vmatprep.subr.mxu0 0.0
  %853 = vmatpush1.msra.mxu0 0.0
  %854 = vmatprep.subr.mxu0 0.0
  %855 = vmatpush1.msra.mxu0 0.0
  %856 = vmatprep.subr.mxu0 0.0
  %857 = vmatpush1.msra.mxu0 0.0
  %858 = vmatprep.subr.mxu0 0.0
  %859 = vmatpush1.msra.mxu0 0.0
  %860 = vmatprep.subr.mxu0 0.0
  %861 = vmatpush1.msra.mxu0 0.0
  %862 = vmatprep.subr.mxu0 0.0
  %863 = vmatpush1.msra.mxu0 0.0
  %864 = vmatprep.subr.mxu0 0.0
  %865 = vmatpush1.msra.mxu0 0.0
  %866 = vmatprep.subr.mxu0 0.0
  %867 = vmatpush1.msra.mxu0 0.0
  %868 = vmatprep.subr.mxu0 0.0
  %869 = vmatpush1.msra.mxu0 0.0
  %870 = vmatprep.subr.mxu0 0.0
  %871 = vmatpush1.msra.mxu0 0.0
  %872 = vmatprep.subr.mxu0 0.0
  %873 = vmatpush1.msra.mxu0 0.0
  %874 = vmatprep.subr.mxu0 0.0
  %875 = vmatpush1.msra.mxu0 0.0
  %876 = vmatprep.subr.mxu0 0.0
  %877 = vmatpush1.msra.mxu0 0.0
  %878 = vmatprep.subr.mxu0 0.0
  %879 = vmatpush1.msra.mxu0 0.0
  %880 = vmatprep.subr.mxu0 0.0
  %881 = vmatpush1.msra.mxu0 0.0
  %882 = vmatprep.subr.mxu0 0.0
  %883 = vmatpush1.msra.mxu0 0.0
  %884 = vmatprep.subr.mxu0 0.0
  %885 = vmatpush1.msra.mxu0 0.0
  %886 = vmatprep.subr.mxu0 0.0
  %887 = vmatpush1.msra.mxu0 0.0
  %888 = vmatprep.subr.mxu0 0.0
  %889 = vmatpush1.msra.mxu0 0.0
  %890 = vmatprep.subr.mxu0 0.0
  %891 = vmatpush1.msra.mxu0 0.0
  %892 = vmatprep.subr.mxu0 0.0
  %893 = vmatpush1.msra.mxu0 0.0
  %894 = vmatprep.subr.mxu0 0.0
  %895 = vmatpush1.msra.mxu0 0.0
  %896 = vmatprep.subr.mxu0 0.0
  %897 = vmatpush1.msra.mxu0 0.0
  %898 = vmatprep.subr.mxu0 0.0
  %899 = vmatpush1.msra.mxu0 0.0
  %900 = vmatprep.subr.mxu0 0.0
  %901 = vmatpush1.msra.mxu0 0.0
  %902 = vmatprep.subr.mxu0 0.0
  %903 = vmatpush1.msra.mxu0 0.0
  %904 = vmatprep.subr.mxu0 0.0
  %905 = vmatpush1.msra.mxu0 0.0
  %906 = vmatprep.subr.mxu0 0.0
  %907 = vmatpush1.msra.mxu0 0.0
  %908 = vmatprep.mubr.f32.mxu0 0.0
  %909 = vmatmul.mubr.f32.gmra.mrb[0].mxu0 %v759
  %v910 = vpop.f32.mrb[0].mxu0
  %v911 = vadd.f32 0.0, %v910
  %v912 = vpop.f32.mrb[0].mxu0
  %v913 = vadd.f32 0.0, %v912
  %914 = vdwg.mxu0
  %v915 = vadd.f32 %v648, %v840
  %v916 = vadd.f32 %v650, %v842
  %v917 = vadd.f32 %v719, %v911
  %v918 = vadd.f32 %v721, %v913
  %919 = vrot.lane.b32.xlu0 %v334, 1
  %v920 = vpop.permute.xlu0 %919
  %921 = vrot.lane.b32.xlu0 %v335, 1
  %v922 = vpop.permute.xlu0 %921
  %923 = vrot.lane.b32.xlu0 %v336, 1
  %v924 = vpop.permute.xlu0 %923
  %925 = vrot.lane.b32.xlu0 %v337, 1
  %v926 = vpop.permute.xlu0 %925
  %vm927 = vcmp.lt.s32.totalorder %v347, 1
  %v928 = vsel %vm927, %v924, %v926
  %v929 = vsel %vm927, %v922, %v924
  %v930 = vsel %vm927, %v920, %v922
  %v931 = vsel %vm927, %v926, %v920
  %v932 = vlaneseq
  %v933 = vshrl.u32 %v932, 7
  %v934 = vsub.s32 3, %v933
  %v935 = vrot.slane %v58, %v934
  %v936 = vlaneseq
  %v937 = vshrl.u32 %v936, 7
  %v938 = vsub.s32 3, %v937
  %v939 = vrot.slane %v59, %v938
  %v940 = vlaneseq
  %v941 = vshrl.u32 %v940, 7
  %v942 = vsub.s32 3, %v941
  %v943 = vrot.slane %v60, %v942
  %v944 = vlaneseq
  %v945 = vshrl.u32 %v944, 7
  %v946 = vsub.s32 3, %v945
  %v947 = vrot.slane %v61, %v946
  %v948 = vmul.f32 %v931, %v935
  %v949 = vmul.f32 %v930, %v939
  %v950 = vmul.f32 %v929, %v943
  %v951 = vmul.f32 %v928, %v947
  %s952 = scalar_lea.vmem %s5, 24
  %v953 = vld [vmem:[%s952] sm:$0xff]
  %v955 = vsel %vm72, %v953, 0
  %v958 = vsel %vm79, %v948, 0
  %v961 = vsel %vm79, %v949, 0
  %v964 = vsel %vm79, %v950, 0
  %v967 = vsel %vm79, %v951, 0
  %969 = vmatprep.subr.mxu0 %v961
  %970 = vmatpush1.msra.mxu0 %v958
  %971 = vmatprep.subr.mxu0 0.0
  %972 = vmatpush1.msra.mxu0 0.0
  %973 = vmatprep.subr.mxu0 0.0
  %974 = vmatpush1.msra.mxu0 0.0
  %975 = vmatprep.subr.mxu0 0.0
  %976 = vmatpush1.msra.mxu0 0.0
  %977 = vmatprep.subr.mxu0 0.0
  %978 = vmatpush1.msra.mxu0 0.0
  %979 = vmatprep.subr.mxu0 0.0
  %980 = vmatpush1.msra.mxu0 0.0
  %981 = vmatprep.subr.mxu0 0.0
  %982 = vmatpush1.msra.mxu0 0.0
  %983 = vmatprep.subr.mxu0 0.0
  %984 = vmatpush1.msra.mxu0 0.0
  %985 = vmatprep.subr.mxu0 0.0
  %986 = vmatpush1.msra.mxu0 0.0
  %987 = vmatprep.subr.mxu0 0.0
  %988 = vmatpush1.msra.mxu0 0.0
  %989 = vmatprep.subr.mxu0 0.0
  %990 = vmatpush1.msra.mxu0 0.0
  %991 = vmatprep.subr.mxu0 0.0
  %992 = vmatpush1.msra.mxu0 0.0
  %993 = vmatprep.subr.mxu0 0.0
  %994 = vmatpush1.msra.mxu0 0.0
  %995 = vmatprep.subr.mxu0 0.0
  %996 = vmatpush1.msra.mxu0 0.0
  %997 = vmatprep.subr.mxu0 0.0
  %998 = vmatpush1.msra.mxu0 0.0
  %999 = vmatprep.subr.mxu0 0.0
  %1000 = vmatpush1.msra.mxu0 0.0
  %1001 = vmatprep.subr.mxu0 0.0
  %1002 = vmatpush1.msra.mxu0 0.0
  %1003 = vmatprep.subr.mxu0 0.0
  %1004 = vmatpush1.msra.mxu0 0.0
  %1005 = vmatprep.subr.mxu0 0.0
  %1006 = vmatpush1.msra.mxu0 0.0
  %1007 = vmatprep.subr.mxu0 0.0
  %1008 = vmatpush1.msra.mxu0 0.0
  %1009 = vmatprep.subr.mxu0 0.0
  %1010 = vmatpush1.msra.mxu0 0.0
  %1011 = vmatprep.subr.mxu0 0.0
  %1012 = vmatpush1.msra.mxu0 0.0
  %1013 = vmatprep.subr.mxu0 0.0
  %1014 = vmatpush1.msra.mxu0 0.0
  %1015 = vmatprep.subr.mxu0 0.0
  %1016 = vmatpush1.msra.mxu0 0.0
  %1017 = vmatprep.subr.mxu0 0.0
  %1018 = vmatpush1.msra.mxu0 0.0
  %1019 = vmatprep.subr.mxu0 0.0
  %1020 = vmatpush1.msra.mxu0 0.0
  %1021 = vmatprep.subr.mxu0 0.0
  %1022 = vmatpush1.msra.mxu0 0.0
  %1023 = vmatprep.subr.mxu0 0.0
  %1024 = vmatpush1.msra.mxu0 0.0
  %1025 = vmatprep.subr.mxu0 0.0
  %1026 = vmatpush1.msra.mxu0 0.0
  %1027 = vmatprep.subr.mxu0 0.0
  %1028 = vmatpush1.msra.mxu0 0.0
  %1029 = vmatprep.subr.mxu0 0.0
  %1030 = vmatpush1.msra.mxu0 0.0
  %1031 = vmatprep.subr.mxu0 0.0
  %1032 = vmatpush1.msra.mxu0 0.0
  %1033 = vmatprep.mubr.f32.mxu0 0.0
  %1034 = vmatmul.mubr.f32.gmra.mrb[0].mxu0 %v955
  %v1035 = vpop.f32.mrb[0].mxu0
  %v1036 = vadd.f32 0.0, %v1035
  %v1037 = vpop.f32.mrb[0].mxu0
  %v1038 = vadd.f32 0.0, %v1037
  %1039 = vdwg.mxu0
  %1040 = vmatprep.subr.mxu0 %v967
  %1041 = vmatpush1.msra.mxu0 %v964
  %1042 = vmatprep.subr.mxu0 0.0
  %1043 = vmatpush1.msra.mxu0 0.0
  %1044 = vmatprep.subr.mxu0 0.0
  %1045 = vmatpush1.msra.mxu0 0.0
  %1046 = vmatprep.subr.mxu0 0.0
  %1047 = vmatpush1.msra.mxu0 0.0
  %1048 = vmatprep.subr.mxu0 0.0
  %1049 = vmatpush1.msra.mxu0 0.0
  %1050 = vmatprep.subr.mxu0 0.0
  %1051 = vmatpush1.msra.mxu0 0.0
  %1052 = vmatprep.subr.mxu0 0.0
  %1053 = vmatpush1.msra.mxu0 0.0
  %1054 = vmatprep.subr.mxu0 0.0
  %1055 = vmatpush1.msra.mxu0 0.0
  %1056 = vmatprep.subr.mxu0 0.0
  %1057 = vmatpush1.msra.mxu0 0.0
  %1058 = vmatprep.subr.mxu0 0.0
  %1059 = vmatpush1.msra.mxu0 0.0
  %1060 = vmatprep.subr.mxu0 0.0
  %1061 = vmatpush1.msra.mxu0 0.0
  %1062 = vmatprep.subr.mxu0 0.0
  %1063 = vmatpush1.msra.mxu0 0.0
  %1064 = vmatprep.subr.mxu0 0.0
  %1065 = vmatpush1.msra.mxu0 0.0
  %1066 = vmatprep.subr.mxu0 0.0
  %1067 = vmatpush1.msra.mxu0 0.0
  %1068 = vmatprep.subr.mxu0 0.0
  %1069 = vmatpush1.msra.mxu0 0.0
  %1070 = vmatprep.subr.mxu0 0.0
  %1071 = vmatpush1.msra.mxu0 0.0
  %1072 = vmatprep.subr.mxu0 0.0
  %1073 = vmatpush1.msra.mxu0 0.0
  %1074 = vmatprep.subr.mxu0 0.0
  %1075 = vmatpush1.msra.mxu0 0.0
  %1076 = vmatprep.subr.mxu0 0.0
  %1077 = vmatpush1.msra.mxu0 0.0
  %1078 = vmatprep.subr.mxu0 0.0
  %1079 = vmatpush1.msra.mxu0 0.0
  %1080 = vmatprep.subr.mxu0 0.0
  %1081 = vmatpush1.msra.mxu0 0.0
  %1082 = vmatprep.subr.mxu0 0.0
  %1083 = vmatpush1.msra.mxu0 0.0
  %1084 = vmatprep.subr.mxu0 0.0
  %1085 = vmatpush1.msra.mxu0 0.0
  %1086 = vmatprep.subr.mxu0 0.0
  %1087 = vmatpush1.msra.mxu0 0.0
  %1088 = vmatprep.subr.mxu0 0.0
  %1089 = vmatpush1.msra.mxu0 0.0
  %1090 = vmatprep.subr.mxu0 0.0
  %1091 = vmatpush1.msra.mxu0 0.0
  %1092 = vmatprep.subr.mxu0 0.0
  %1093 = vmatpush1.msra.mxu0 0.0
  %1094 = vmatprep.subr.mxu0 0.0
  %1095 = vmatpush1.msra.mxu0 0.0
  %1096 = vmatprep.subr.mxu0 0.0
  %1097 = vmatpush1.msra.mxu0 0.0
  %1098 = vmatprep.subr.mxu0 0.0
  %1099 = vmatpush1.msra.mxu0 0.0
  %1100 = vmatprep.subr.mxu0 0.0
  %1101 = vmatpush1.msra.mxu0 0.0
  %1102 = vmatprep.subr.mxu0 0.0
  %1103 = vmatpush1.msra.mxu0 0.0
  %1104 = vmatprep.mubr.f32.mxu0 0.0
  %1105 = vmatmul.mubr.f32.gmra.mrb[0].mxu0 %v955
  %v1106 = vpop.f32.mrb[0].mxu0
  %v1107 = vadd.f32 0.0, %v1106
  %v1108 = vpop.f32.mrb[0].mxu0
  %v1109 = vadd.f32 0.0, %v1108
  %1110 = vdwg.mxu0
  %v1111 = vadd.f32 %v915, %v1036
  %v1112 = vadd.f32 %v916, %v1038
  %v1113 = vadd.f32 %v917, %v1107
  %v1114 = vadd.f32 %v918, %v1109
  %s1115 = scalar_lea.vmem %s5, 32
  %v1116 = vld [vmem:[%s1115] sm:$0xff]
  %v1118 = vsel %vm72, %v1116, 0
  %v1121 = vsel %vm79, %v334, 0
  %v1124 = vsel %vm79, %v335, 0
  %v1127 = vsel %vm79, %v336, 0
  %v1130 = vsel %vm79, %v337, 0
  %1132 = vmatprep.subr.mxu0 %v1124
  %1133 = vmatpush1.msra.mxu0 %v1121
  %1134 = vmatprep.subr.mxu0 0.0
  %1135 = vmatpush1.msra.mxu0 0.0
  %1136 = vmatprep.subr.mxu0 0.0
  %1137 = vmatpush1.msra.mxu0 0.0
  %1138 = vmatprep.subr.mxu0 0.0
  %1139 = vmatpush1.msra.mxu0 0.0
  %1140 = vmatprep.subr.mxu0 0.0
  %1141 = vmatpush1.msra.mxu0 0.0
  %1142 = vmatprep.subr.mxu0 0.0
  %1143 = vmatpush1.msra.mxu0 0.0
  %1144 = vmatprep.subr.mxu0 0.0
  %1145 = vmatpush1.msra.mxu0 0.0
  %1146 = vmatprep.subr.mxu0 0.0
  %1147 = vmatpush1.msra.mxu0 0.0
  %1148 = vmatprep.subr.mxu0 0.0
  %1149 = vmatpush1.msra.mxu0 0.0
  %1150 = vmatprep.subr.mxu0 0.0
  %1151 = vmatpush1.msra.mxu0 0.0
  %1152 = vmatprep.subr.mxu0 0.0
  %1153 = vmatpush1.msra.mxu0 0.0
  %1154 = vmatprep.subr.mxu0 0.0
  %1155 = vmatpush1.msra.mxu0 0.0
  %1156 = vmatprep.subr.mxu0 0.0
  %1157 = vmatpush1.msra.mxu0 0.0
  %1158 = vmatprep.subr.mxu0 0.0
  %1159 = vmatpush1.msra.mxu0 0.0
  %1160 = vmatprep.subr.mxu0 0.0
  %1161 = vmatpush1.msra.mxu0 0.0
  %1162 = vmatprep.subr.mxu0 0.0
  %1163 = vmatpush1.msra.mxu0 0.0
  %1164 = vmatprep.subr.mxu0 0.0
  %1165 = vmatpush1.msra.mxu0 0.0
  %1166 = vmatprep.subr.mxu0 0.0
  %1167 = vmatpush1.msra.mxu0 0.0
  %1168 = vmatprep.subr.mxu0 0.0
  %1169 = vmatpush1.msra.mxu0 0.0
  %1170 = vmatprep.subr.mxu0 0.0
  %1171 = vmatpush1.msra.mxu0 0.0
  %1172 = vmatprep.subr.mxu0 0.0
  %1173 = vmatpush1.msra.mxu0 0.0
  %1174 = vmatprep.subr.mxu0 0.0
  %1175 = vmatpush1.msra.mxu0 0.0
  %1176 = vmatprep.subr.mxu0 0.0
  %1177 = vmatpush1.msra.mxu0 0.0
  %1178 = vmatprep.subr.mxu0 0.0
  %1179 = vmatpush1.msra.mxu0 0.0
  %1180 = vmatprep.subr.mxu0 0.0
  %1181 = vmatpush1.msra.mxu0 0.0
  %1182 = vmatprep.subr.mxu0 0.0
  %1183 = vmatpush1.msra.mxu0 0.0
  %1184 = vmatprep.subr.mxu0 0.0
  %1185 = vmatpush1.msra.mxu0 0.0
  %1186 = vmatprep.subr.mxu0 0.0
  %1187 = vmatpush1.msra.mxu0 0.0
  %1188 = vmatprep.subr.mxu0 0.0
  %1189 = vmatpush1.msra.mxu0 0.0
  %1190 = vmatprep.subr.mxu0 0.0
  %1191 = vmatpush1.msra.mxu0 0.0
  %1192 = vmatprep.subr.mxu0 0.0
  %1193 = vmatpush1.msra.mxu0 0.0
  %1194 = vmatprep.subr.mxu0 0.0
  %1195 = vmatpush1.msra.mxu0 0.0
  %1196 = vmatprep.mubr.f32.mxu0 0.0
  %1197 = vmatmul.mubr.f32.gmra.mrb[0].mxu0 %v1118
  %v1198 = vpop.f32.mrb[0].mxu0
  %v1199 = vadd.f32 0.0, %v1198
  %v1200 = vpop.f32.mrb[0].mxu0
  %v1201 = vadd.f32 0.0, %v1200
  %1202 = vdwg.mxu0
  %1203 = vmatprep.subr.mxu0 %v1130
  %1204 = vmatpush1.msra.mxu0 %v1127
  %1205 = vmatprep.subr.mxu0 0.0
  %1206 = vmatpush1.msra.mxu0 0.0
  %1207 = vmatprep.subr.mxu0 0.0
  %1208 = vmatpush1.msra.mxu0 0.0
  %1209 = vmatprep.subr.mxu0 0.0
  %1210 = vmatpush1.msra.mxu0 0.0
  %1211 = vmatprep.subr.mxu0 0.0
  %1212 = vmatpush1.msra.mxu0 0.0
  %1213 = vmatprep.subr.mxu0 0.0
  %1214 = vmatpush1.msra.mxu0 0.0
  %1215 = vmatprep.subr.mxu0 0.0
  %1216 = vmatpush1.msra.mxu0 0.0
  %1217 = vmatprep.subr.mxu0 0.0
  %1218 = vmatpush1.msra.mxu0 0.0
  %1219 = vmatprep.subr.mxu0 0.0
  %1220 = vmatpush1.msra.mxu0 0.0
  %1221 = vmatprep.subr.mxu0 0.0
  %1222 = vmatpush1.msra.mxu0 0.0
  %1223 = vmatprep.subr.mxu0 0.0
  %1224 = vmatpush1.msra.mxu0 0.0
  %1225 = vmatprep.subr.mxu0 0.0
  %1226 = vmatpush1.msra.mxu0 0.0
  %1227 = vmatprep.subr.mxu0 0.0
  %1228 = vmatpush1.msra.mxu0 0.0
  %1229 = vmatprep.subr.mxu0 0.0
  %1230 = vmatpush1.msra.mxu0 0.0
  %1231 = vmatprep.subr.mxu0 0.0
  %1232 = vmatpush1.msra.mxu0 0.0
  %1233 = vmatprep.subr.mxu0 0.0
  %1234 = vmatpush1.msra.mxu0 0.0
  %1235 = vmatprep.subr.mxu0 0.0
  %1236 = vmatpush1.msra.mxu0 0.0
  %1237 = vmatprep.subr.mxu0 0.0
  %1238 = vmatpush1.msra.mxu0 0.0
  %1239 = vmatprep.subr.mxu0 0.0
  %1240 = vmatpush1.msra.mxu0 0.0
  %1241 = vmatprep.subr.mxu0 0.0
  %1242 = vmatpush1.msra.mxu0 0.0
  %1243 = vmatprep.subr.mxu0 0.0
  %1244 = vmatpush1.msra.mxu0 0.0
  %1245 = vmatprep.subr.mxu0 0.0
  %1246 = vmatpush1.msra.mxu0 0.0
  %1247 = vmatprep.subr.mxu0 0.0
  %1248 = vmatpush1.msra.mxu0 0.0
  %1249 = vmatprep.subr.mxu0 0.0
  %1250 = vmatpush1.msra.mxu0 0.0
  %1251 = vmatprep.subr.mxu0 0.0
  %1252 = vmatpush1.msra.mxu0 0.0
  %1253 = vmatprep.subr.mxu0 0.0
  %1254 = vmatpush1.msra.mxu0 0.0
  %1255 = vmatprep.subr.mxu0 0.0
  %1256 = vmatpush1.msra.mxu0 0.0
  %1257 = vmatprep.subr.mxu0 0.0
  %1258 = vmatpush1.msra.mxu0 0.0
  %1259 = vmatprep.subr.mxu0 0.0
  %1260 = vmatpush1.msra.mxu0 0.0
  %1261 = vmatprep.subr.mxu0 0.0
  %1262 = vmatpush1.msra.mxu0 0.0
  %1263 = vmatprep.subr.mxu0 0.0
  %1264 = vmatpush1.msra.mxu0 0.0
  %1265 = vmatprep.subr.mxu0 0.0
  %1266 = vmatpush1.msra.mxu0 0.0
  %1267 = vmatprep.mubr.f32.mxu0 0.0
  %1268 = vmatmul.mubr.f32.gmra.mrb[0].mxu0 %v1118
  %v1269 = vpop.f32.mrb[0].mxu0
  %v1270 = vadd.f32 0.0, %v1269
  %v1271 = vpop.f32.mrb[0].mxu0
  %v1272 = vadd.f32 0.0, %v1271
  %1273 = vdwg.mxu0
  %v1274 = vadd.f32 %v1111, %v1199
  %v1275 = vadd.f32 %v1112, %v1201
  %v1276 = vadd.f32 %v1113, %v1270
  %v1277 = vadd.f32 %v1114, %v1272
  %1278 = vrot.lane.b32.xlu0 %v334, 127
  %v1279 = vpop.permute.xlu0 %1278
  %1280 = vrot.lane.b32.xlu0 %v335, 127
  %v1281 = vpop.permute.xlu0 %1280
  %1282 = vrot.lane.b32.xlu0 %v336, 127
  %v1283 = vpop.permute.xlu0 %1282
  %1284 = vrot.lane.b32.xlu0 %v337, 127
  %v1285 = vpop.permute.xlu0 %1284
  %vm1286 = vcmp.lt.s32.totalorder %v347, 127
  %v1287 = vsel %vm1286, %v1283, %v1285
  %v1288 = vsel %vm1286, %v1281, %v1283
  %v1289 = vsel %vm1286, %v1279, %v1281
  %v1290 = vsel %vm1286, %v1285, %v1279
  %v1291 = vlaneseq
  %v1292 = vshrl.u32 %v1291, 7
  %v1293 = vsub.s32 5, %v1292
  %v1294 = vrot.slane %v58, %v1293
  %v1295 = vlaneseq
  %v1296 = vshrl.u32 %v1295, 7
  %v1297 = vsub.s32 5, %v1296
  %v1298 = vrot.slane %v59, %v1297
  %v1299 = vlaneseq
  %v1300 = vshrl.u32 %v1299, 7
  %v1301 = vsub.s32 5, %v1300
  %v1302 = vrot.slane %v60, %v1301
  %v1303 = vlaneseq
  %v1304 = vshrl.u32 %v1303, 7
  %v1305 = vsub.s32 5, %v1304
  %v1306 = vrot.slane %v61, %v1305
  %v1307 = vmul.f32 %v1289, %v1294
  %v1308 = vmul.f32 %v1288, %v1298
  %v1309 = vmul.f32 %v1287, %v1302
  %v1310 = vmul.f32 %v1290, %v1306
  %s1311 = scalar_lea.vmem %s5, 40
  %v1312 = vld [vmem:[%s1311] sm:$0xff]
  %v1314 = vsel %vm72, %v1312, 0
  %v1317 = vsel %vm79, %v1307, 0
  %v1320 = vsel %vm79, %v1308, 0
  %v1323 = vsel %vm79, %v1309, 0
  %v1326 = vsel %vm79, %v1310, 0
  %1328 = vmatprep.subr.mxu0 %v1320
  %1329 = vmatpush1.msra.mxu0 %v1317
  %1330 = vmatprep.subr.mxu0 0.0
  %1331 = vmatpush1.msra.mxu0 0.0
  %1332 = vmatprep.subr.mxu0 0.0
  %1333 = vmatpush1.msra.mxu0 0.0
  %1334 = vmatprep.subr.mxu0 0.0
  %1335 = vmatpush1.msra.mxu0 0.0
  %1336 = vmatprep.subr.mxu0 0.0
  %1337 = vmatpush1.msra.mxu0 0.0
  %1338 = vmatprep.subr.mxu0 0.0
  %1339 = vmatpush1.msra.mxu0 0.0
  %1340 = vmatprep.subr.mxu0 0.0
  %1341 = vmatpush1.msra.mxu0 0.0
  %1342 = vmatprep.subr.mxu0 0.0
  %1343 = vmatpush1.msra.mxu0 0.0
  %1344 = vmatprep.subr.mxu0 0.0
  %1345 = vmatpush1.msra.mxu0 0.0
  %1346 = vmatprep.subr.mxu0 0.0
  %1347 = vmatpush1.msra.mxu0 0.0
  %1348 = vmatprep.subr.mxu0 0.0
  %1349 = vmatpush1.msra.mxu0 0.0
  %1350 = vmatprep.subr.mxu0 0.0
  %1351 = vmatpush1.msra.mxu0 0.0
  %1352 = vmatprep.subr.mxu0 0.0
  %1353 = vmatpush1.msra.mxu0 0.0
  %1354 = vmatprep.subr.mxu0 0.0
  %1355 = vmatpush1.msra.mxu0 0.0
  %1356 = vmatprep.subr.mxu0 0.0
  %1357 = vmatpush1.msra.mxu0 0.0
  %1358 = vmatprep.subr.mxu0 0.0
  %1359 = vmatpush1.msra.mxu0 0.0
  %1360 = vmatprep.subr.mxu0 0.0
  %1361 = vmatpush1.msra.mxu0 0.0
  %1362 = vmatprep.subr.mxu0 0.0
  %1363 = vmatpush1.msra.mxu0 0.0
  %1364 = vmatprep.subr.mxu0 0.0
  %1365 = vmatpush1.msra.mxu0 0.0
  %1366 = vmatprep.subr.mxu0 0.0
  %1367 = vmatpush1.msra.mxu0 0.0
  %1368 = vmatprep.subr.mxu0 0.0
  %1369 = vmatpush1.msra.mxu0 0.0
  %1370 = vmatprep.subr.mxu0 0.0
  %1371 = vmatpush1.msra.mxu0 0.0
  %1372 = vmatprep.subr.mxu0 0.0
  %1373 = vmatpush1.msra.mxu0 0.0
  %1374 = vmatprep.subr.mxu0 0.0
  %1375 = vmatpush1.msra.mxu0 0.0
  %1376 = vmatprep.subr.mxu0 0.0
  %1377 = vmatpush1.msra.mxu0 0.0
  %1378 = vmatprep.subr.mxu0 0.0
  %1379 = vmatpush1.msra.mxu0 0.0
  %1380 = vmatprep.subr.mxu0 0.0
  %1381 = vmatpush1.msra.mxu0 0.0
  %1382 = vmatprep.subr.mxu0 0.0
  %1383 = vmatpush1.msra.mxu0 0.0
  %1384 = vmatprep.subr.mxu0 0.0
  %1385 = vmatpush1.msra.mxu0 0.0
  %1386 = vmatprep.subr.mxu0 0.0
  %1387 = vmatpush1.msra.mxu0 0.0
  %1388 = vmatprep.subr.mxu0 0.0
  %1389 = vmatpush1.msra.mxu0 0.0
  %1390 = vmatprep.subr.mxu0 0.0
  %1391 = vmatpush1.msra.mxu0 0.0
  %1392 = vmatprep.mubr.f32.mxu0 0.0
  %1393 = vmatmul.mubr.f32.gmra.mrb[0].mxu0 %v1314
  %v1394 = vpop.f32.mrb[0].mxu0
  %v1395 = vadd.f32 0.0, %v1394
  %v1396 = vpop.f32.mrb[0].mxu0
  %v1397 = vadd.f32 0.0, %v1396
  %1398 = vdwg.mxu0
  %1399 = vmatprep.subr.mxu0 %v1326
  %1400 = vmatpush1.msra.mxu0 %v1323
  %1401 = vmatprep.subr.mxu0 0.0
  %1402 = vmatpush1.msra.mxu0 0.0
  %1403 = vmatprep.subr.mxu0 0.0
  %1404 = vmatpush1.msra.mxu0 0.0
  %1405 = vmatprep.subr.mxu0 0.0
  %1406 = vmatpush1.msra.mxu0 0.0
  %1407 = vmatprep.subr.mxu0 0.0
  %1408 = vmatpush1.msra.mxu0 0.0
  %1409 = vmatprep.subr.mxu0 0.0
  %1410 = vmatpush1.msra.mxu0 0.0
  %1411 = vmatprep.subr.mxu0 0.0
  %1412 = vmatpush1.msra.mxu0 0.0
  %1413 = vmatprep.subr.mxu0 0.0
  %1414 = vmatpush1.msra.mxu0 0.0
  %1415 = vmatprep.subr.mxu0 0.0
  %1416 = vmatpush1.msra.mxu0 0.0
  %1417 = vmatprep.subr.mxu0 0.0
  %1418 = vmatpush1.msra.mxu0 0.0
  %1419 = vmatprep.subr.mxu0 0.0
  %1420 = vmatpush1.msra.mxu0 0.0
  %1421 = vmatprep.subr.mxu0 0.0
  %1422 = vmatpush1.msra.mxu0 0.0
  %1423 = vmatprep.subr.mxu0 0.0
  %1424 = vmatpush1.msra.mxu0 0.0
  %1425 = vmatprep.subr.mxu0 0.0
  %1426 = vmatpush1.msra.mxu0 0.0
  %1427 = vmatprep.subr.mxu0 0.0
  %1428 = vmatpush1.msra.mxu0 0.0
  %1429 = vmatprep.subr.mxu0 0.0
  %1430 = vmatpush1.msra.mxu0 0.0
  %1431 = vmatprep.subr.mxu0 0.0
  %1432 = vmatpush1.msra.mxu0 0.0
  %1433 = vmatprep.subr.mxu0 0.0
  %1434 = vmatpush1.msra.mxu0 0.0
  %1435 = vmatprep.subr.mxu0 0.0
  %1436 = vmatpush1.msra.mxu0 0.0
  %1437 = vmatprep.subr.mxu0 0.0
  %1438 = vmatpush1.msra.mxu0 0.0
  %1439 = vmatprep.subr.mxu0 0.0
  %1440 = vmatpush1.msra.mxu0 0.0
  %1441 = vmatprep.subr.mxu0 0.0
  %1442 = vmatpush1.msra.mxu0 0.0
  %1443 = vmatprep.subr.mxu0 0.0
  %1444 = vmatpush1.msra.mxu0 0.0
  %1445 = vmatprep.subr.mxu0 0.0
  %1446 = vmatpush1.msra.mxu0 0.0
  %1447 = vmatprep.subr.mxu0 0.0
  %1448 = vmatpush1.msra.mxu0 0.0
  %1449 = vmatprep.subr.mxu0 0.0
  %1450 = vmatpush1.msra.mxu0 0.0
  %1451 = vmatprep.subr.mxu0 0.0
  %1452 = vmatpush1.msra.mxu0 0.0
  %1453 = vmatprep.subr.mxu0 0.0
  %1454 = vmatpush1.msra.mxu0 0.0
  %1455 = vmatprep.subr.mxu0 0.0
  %1456 = vmatpush1.msra.mxu0 0.0
  %1457 = vmatprep.subr.mxu0 0.0
  %1458 = vmatpush1.msra.mxu0 0.0
  %1459 = vmatprep.subr.mxu0 0.0
  %1460 = vmatpush1.msra.mxu0 0.0
  %1461 = vmatprep.subr.mxu0 0.0
  %1462 = vmatpush1.msra.mxu0 0.0
  %1463 = vmatprep.mubr.f32.mxu0 0.0
  %1464 = vmatmul.mubr.f32.gmra.mrb[0].mxu0 %v1314
  %v1465 = vpop.f32.mrb[0].mxu0
  %v1466 = vadd.f32 0.0, %v1465
  %v1467 = vpop.f32.mrb[0].mxu0
  %v1468 = vadd.f32 0.0, %v1467
  %1469 = vdwg.mxu0
  %v1470 = vadd.f32 %v1274, %v1395
  %v1471 = vadd.f32 %v1275, %v1397
  %v1472 = vadd.f32 %v1276, %v1466
  %v1473 = vadd.f32 %v1277, %v1468
  %1474 = vrot.lane.b32.xlu0 %v334, 113
  %v1475 = vpop.permute.xlu0 %1474
  %1476 = vrot.lane.b32.xlu0 %v335, 113
  %v1477 = vpop.permute.xlu0 %1476
  %1478 = vrot.lane.b32.xlu0 %v336, 113
  %v1479 = vpop.permute.xlu0 %1478
  %1480 = vrot.lane.b32.xlu0 %v337, 113
  %v1481 = vpop.permute.xlu0 %1480
  %vm1482 = vcmp.lt.s32.totalorder %v347, 113
  %v1483 = vsel %vm1482, %v1479, %v1481
  %v1484 = vsel %vm1482, %v1477, %v1479
  %v1485 = vsel %vm1482, %v1475, %v1477
  %v1486 = vsel %vm1482, %v1481, %v1475
  %v1487 = vlaneseq
  %v1488 = vshrl.u32 %v1487, 7
  %v1489 = vsub.s32 6, %v1488
  %v1490 = vrot.slane %v58, %v1489
  %v1491 = vlaneseq
  %v1492 = vshrl.u32 %v1491, 7
  %v1493 = vsub.s32 6, %v1492
  %v1494 = vrot.slane %v59, %v1493
  %v1495 = vlaneseq
  %v1496 = vshrl.u32 %v1495, 7
  %v1497 = vsub.s32 6, %v1496
  %v1498 = vrot.slane %v60, %v1497
  %v1499 = vlaneseq
  %v1500 = vshrl.u32 %v1499, 7
  %v1501 = vsub.s32 6, %v1500
  %v1502 = vrot.slane %v61, %v1501
  %v1503 = vmul.f32 %v1485, %v1490
  %v1504 = vmul.f32 %v1484, %v1494
  %v1505 = vmul.f32 %v1483, %v1498
  %v1506 = vmul.f32 %v1486, %v1502
  %s1507 = scalar_lea.vmem %s5, 48
  %v1508 = vld [vmem:[%s1507] sm:$0xff]
  %v1510 = vsel %vm72, %v1508, 0
  %v1513 = vsel %vm79, %v1503, 0
  %v1516 = vsel %vm79, %v1504, 0
  %v1519 = vsel %vm79, %v1505, 0
  %v1522 = vsel %vm79, %v1506, 0
  %1524 = vmatprep.subr.mxu0 %v1516
  %1525 = vmatpush1.msra.mxu0 %v1513
  %1526 = vmatprep.subr.mxu0 0.0
  %1527 = vmatpush1.msra.mxu0 0.0
  %1528 = vmatprep.subr.mxu0 0.0
  %1529 = vmatpush1.msra.mxu0 0.0
  %1530 = vmatprep.subr.mxu0 0.0
  %1531 = vmatpush1.msra.mxu0 0.0
  %1532 = vmatprep.subr.mxu0 0.0
  %1533 = vmatpush1.msra.mxu0 0.0
  %1534 = vmatprep.subr.mxu0 0.0
  %1535 = vmatpush1.msra.mxu0 0.0
  %1536 = vmatprep.subr.mxu0 0.0
  %1537 = vmatpush1.msra.mxu0 0.0
  %1538 = vmatprep.subr.mxu0 0.0
  %1539 = vmatpush1.msra.mxu0 0.0
  %1540 = vmatprep.subr.mxu0 0.0
  %1541 = vmatpush1.msra.mxu0 0.0
  %1542 = vmatprep.subr.mxu0 0.0
  %1543 = vmatpush1.msra.mxu0 0.0
  %1544 = vmatprep.subr.mxu0 0.0
  %1545 = vmatpush1.msra.mxu0 0.0
  %1546 = vmatprep.subr.mxu0 0.0
  %1547 = vmatpush1.msra.mxu0 0.0
  %1548 = vmatprep.subr.mxu0 0.0
  %1549 = vmatpush1.msra.mxu0 0.0
  %1550 = vmatprep.subr.mxu0 0.0
  %1551 = vmatpush1.msra.mxu0 0.0
  %1552 = vmatprep.subr.mxu0 0.0
  %1553 = vmatpush1.msra.mxu0 0.0
  %1554 = vmatprep.subr.mxu0 0.0
  %1555 = vmatpush1.msra.mxu0 0.0
  %1556 = vmatprep.subr.mxu0 0.0
  %1557 = vmatpush1.msra.mxu0 0.0
  %1558 = vmatprep.subr.mxu0 0.0
  %1559 = vmatpush1.msra.mxu0 0.0
  %1560 = vmatprep.subr.mxu0 0.0
  %1561 = vmatpush1.msra.mxu0 0.0
  %1562 = vmatprep.subr.mxu0 0.0
  %1563 = vmatpush1.msra.mxu0 0.0
  %1564 = vmatprep.subr.mxu0 0.0
  %1565 = vmatpush1.msra.mxu0 0.0
  %1566 = vmatprep.subr.mxu0 0.0
  %1567 = vmatpush1.msra.mxu0 0.0
  %1568 = vmatprep.subr.mxu0 0.0
  %1569 = vmatpush1.msra.mxu0 0.0
  %1570 = vmatprep.subr.mxu0 0.0
  %1571 = vmatpush1.msra.mxu0 0.0
  %1572 = vmatprep.subr.mxu0 0.0
  %1573 = vmatpush1.msra.mxu0 0.0
  %1574 = vmatprep.subr.mxu0 0.0
  %1575 = vmatpush1.msra.mxu0 0.0
  %1576 = vmatprep.subr.mxu0 0.0
  %1577 = vmatpush1.msra.mxu0 0.0
  %1578 = vmatprep.subr.mxu0 0.0
  %1579 = vmatpush1.msra.mxu0 0.0
  %1580 = vmatprep.subr.mxu0 0.0
  %1581 = vmatpush1.msra.mxu0 0.0
  %1582 = vmatprep.subr.mxu0 0.0
  %1583 = vmatpush1.msra.mxu0 0.0
  %1584 = vmatprep.subr.mxu0 0.0
  %1585 = vmatpush1.msra.mxu0 0.0
  %1586 = vmatprep.subr.mxu0 0.0
  %1587 = vmatpush1.msra.mxu0 0.0
  %1588 = vmatprep.mubr.f32.mxu0 0.0
  %1589 = vmatmul.mubr.f32.gmra.mrb[0].mxu0 %v1510
  %v1590 = vpop.f32.mrb[0].mxu0
  %v1591 = vadd.f32 0.0, %v1590
  %v1592 = vpop.f32.mrb[0].mxu0
  %v1593 = vadd.f32 0.0, %v1592
  %1594 = vdwg.mxu0
  %1595 = vmatprep.subr.mxu0 %v1522
  %1596 = vmatpush1.msra.mxu0 %v1519
  %1597 = vmatprep.subr.mxu0 0.0
  %1598 = vmatpush1.msra.mxu0 0.0
  %1599 = vmatprep.subr.mxu0 0.0
  %1600 = vmatpush1.msra.mxu0 0.0
  %1601 = vmatprep.subr.mxu0 0.0
  %1602 = vmatpush1.msra.mxu0 0.0
  %1603 = vmatprep.subr.mxu0 0.0
  %1604 = vmatpush1.msra.mxu0 0.0
  %1605 = vmatprep.subr.mxu0 0.0
  %1606 = vmatpush1.msra.mxu0 0.0
  %1607 = vmatprep.subr.mxu0 0.0
  %1608 = vmatpush1.msra.mxu0 0.0
  %1609 = vmatprep.subr.mxu0 0.0
  %1610 = vmatpush1.msra.mxu0 0.0
  %1611 = vmatprep.subr.mxu0 0.0
  %1612 = vmatpush1.msra.mxu0 0.0
  %1613 = vmatprep.subr.mxu0 0.0
  %1614 = vmatpush1.msra.mxu0 0.0
  %1615 = vmatprep.subr.mxu0 0.0
  %1616 = vmatpush1.msra.mxu0 0.0
  %1617 = vmatprep.subr.mxu0 0.0
  %1618 = vmatpush1.msra.mxu0 0.0
  %1619 = vmatprep.subr.mxu0 0.0
  %1620 = vmatpush1.msra.mxu0 0.0
  %1621 = vmatprep.subr.mxu0 0.0
  %1622 = vmatpush1.msra.mxu0 0.0
  %1623 = vmatprep.subr.mxu0 0.0
  %1624 = vmatpush1.msra.mxu0 0.0
  %1625 = vmatprep.subr.mxu0 0.0
  %1626 = vmatpush1.msra.mxu0 0.0
  %1627 = vmatprep.subr.mxu0 0.0
  %1628 = vmatpush1.msra.mxu0 0.0
  %1629 = vmatprep.subr.mxu0 0.0
  %1630 = vmatpush1.msra.mxu0 0.0
  %1631 = vmatprep.subr.mxu0 0.0
  %1632 = vmatpush1.msra.mxu0 0.0
  %1633 = vmatprep.subr.mxu0 0.0
  %1634 = vmatpush1.msra.mxu0 0.0
  %1635 = vmatprep.subr.mxu0 0.0
  %1636 = vmatpush1.msra.mxu0 0.0
  %1637 = vmatprep.subr.mxu0 0.0
  %1638 = vmatpush1.msra.mxu0 0.0
  %1639 = vmatprep.subr.mxu0 0.0
  %1640 = vmatpush1.msra.mxu0 0.0
  %1641 = vmatprep.subr.mxu0 0.0
  %1642 = vmatpush1.msra.mxu0 0.0
  %1643 = vmatprep.subr.mxu0 0.0
  %1644 = vmatpush1.msra.mxu0 0.0
  %1645 = vmatprep.subr.mxu0 0.0
  %1646 = vmatpush1.msra.mxu0 0.0
  %1647 = vmatprep.subr.mxu0 0.0
  %1648 = vmatpush1.msra.mxu0 0.0
  %1649 = vmatprep.subr.mxu0 0.0
  %1650 = vmatpush1.msra.mxu0 0.0
  %1651 = vmatprep.subr.mxu0 0.0
  %1652 = vmatpush1.msra.mxu0 0.0
  %1653 = vmatprep.subr.mxu0 0.0
  %1654 = vmatpush1.msra.mxu0 0.0
  %1655 = vmatprep.subr.mxu0 0.0
  %1656 = vmatpush1.msra.mxu0 0.0
  %1657 = vmatprep.subr.mxu0 0.0
  %1658 = vmatpush1.msra.mxu0 0.0
  %1659 = vmatprep.mubr.f32.mxu0 0.0
  %1660 = vmatmul.mubr.f32.gmra.mrb[0].mxu0 %v1510
  %v1661 = vpop.f32.mrb[0].mxu0
  %v1662 = vadd.f32 0.0, %v1661
  %v1663 = vpop.f32.mrb[0].mxu0
  %v1664 = vadd.f32 0.0, %v1663
  %1665 = vdwg.mxu0
  %v1666 = vadd.f32 %v1470, %v1591
  %v1667 = vadd.f32 %v1471, %v1593
  %v1668 = vadd.f32 %v1472, %v1662
  %v1669 = vadd.f32 %v1473, %v1664
  %1670 = vrot.lane.b32.xlu0 %v334, 112
  %v1671 = vpop.permute.xlu0 %1670
  %1672 = vrot.lane.b32.xlu0 %v335, 112
  %v1673 = vpop.permute.xlu0 %1672
  %1674 = vrot.lane.b32.xlu0 %v336, 112
  %v1675 = vpop.permute.xlu0 %1674
  %1676 = vrot.lane.b32.xlu0 %v337, 112
  %v1677 = vpop.permute.xlu0 %1676
  %vm1678 = vcmp.lt.s32.totalorder %v347, 112
  %v1679 = vsel %vm1678, %v1675, %v1677
  %v1680 = vsel %vm1678, %v1673, %v1675
  %v1681 = vsel %vm1678, %v1671, %v1673
  %v1682 = vsel %vm1678, %v1677, %v1671
  %v1683 = vlaneseq
  %v1684 = vshrl.u32 %v1683, 7
  %v1685 = vsub.s32 7, %v1684
  %v1686 = vrot.slane %v58, %v1685
  %v1687 = vlaneseq
  %v1688 = vshrl.u32 %v1687, 7
  %v1689 = vsub.s32 7, %v1688
  %v1690 = vrot.slane %v59, %v1689
  %v1691 = vlaneseq
  %v1692 = vshrl.u32 %v1691, 7
  %v1693 = vsub.s32 7, %v1692
  %v1694 = vrot.slane %v60, %v1693
  %v1695 = vlaneseq
  %v1696 = vshrl.u32 %v1695, 7
  %v1697 = vsub.s32 7, %v1696
  %v1698 = vrot.slane %v61, %v1697
  %v1699 = vmul.f32 %v1681, %v1686
  %v1700 = vmul.f32 %v1680, %v1690
  %v1701 = vmul.f32 %v1679, %v1694
  %v1702 = vmul.f32 %v1682, %v1698
  %s1703 = scalar_lea.vmem %s5, 56
  %v1704 = vld [vmem:[%s1703] sm:$0xff]
  %v1706 = vsel %vm72, %v1704, 0
  %v1709 = vsel %vm79, %v1699, 0
  %v1712 = vsel %vm79, %v1700, 0
  %v1715 = vsel %vm79, %v1701, 0
  %v1718 = vsel %vm79, %v1702, 0
  %1720 = vmatprep.subr.mxu0 %v1712
  %1721 = vmatpush1.msra.mxu0 %v1709
  %1722 = vmatprep.subr.mxu0 0.0
  %1723 = vmatpush1.msra.mxu0 0.0
  %1724 = vmatprep.subr.mxu0 0.0
  %1725 = vmatpush1.msra.mxu0 0.0
  %1726 = vmatprep.subr.mxu0 0.0
  %1727 = vmatpush1.msra.mxu0 0.0
  %1728 = vmatprep.subr.mxu0 0.0
  %1729 = vmatpush1.msra.mxu0 0.0
  %1730 = vmatprep.subr.mxu0 0.0
  %1731 = vmatpush1.msra.mxu0 0.0
  %1732 = vmatprep.subr.mxu0 0.0
  %1733 = vmatpush1.msra.mxu0 0.0
  %1734 = vmatprep.subr.mxu0 0.0
  %1735 = vmatpush1.msra.mxu0 0.0
  %1736 = vmatprep.subr.mxu0 0.0
  %1737 = vmatpush1.msra.mxu0 0.0
  %1738 = vmatprep.subr.mxu0 0.0
  %1739 = vmatpush1.msra.mxu0 0.0
  %1740 = vmatprep.subr.mxu0 0.0
  %1741 = vmatpush1.msra.mxu0 0.0
  %1742 = vmatprep.subr.mxu0 0.0
  %1743 = vmatpush1.msra.mxu0 0.0
  %1744 = vmatprep.subr.mxu0 0.0
  %1745 = vmatpush1.msra.mxu0 0.0
  %1746 = vmatprep.subr.mxu0 0.0
  %1747 = vmatpush1.msra.mxu0 0.0
  %1748 = vmatprep.subr.mxu0 0.0
  %1749 = vmatpush1.msra.mxu0 0.0
  %1750 = vmatprep.subr.mxu0 0.0
  %1751 = vmatpush1.msra.mxu0 0.0
  %1752 = vmatprep.subr.mxu0 0.0
  %1753 = vmatpush1.msra.mxu0 0.0
  %1754 = vmatprep.subr.mxu0 0.0
  %1755 = vmatpush1.msra.mxu0 0.0
  %1756 = vmatprep.subr.mxu0 0.0
  %1757 = vmatpush1.msra.mxu0 0.0
  %1758 = vmatprep.subr.mxu0 0.0
  %1759 = vmatpush1.msra.mxu0 0.0
  %1760 = vmatprep.subr.mxu0 0.0
  %1761 = vmatpush1.msra.mxu0 0.0
  %1762 = vmatprep.subr.mxu0 0.0
  %1763 = vmatpush1.msra.mxu0 0.0
  %1764 = vmatprep.subr.mxu0 0.0
  %1765 = vmatpush1.msra.mxu0 0.0
  %1766 = vmatprep.subr.mxu0 0.0
  %1767 = vmatpush1.msra.mxu0 0.0
  %1768 = vmatprep.subr.mxu0 0.0
  %1769 = vmatpush1.msra.mxu0 0.0
  %1770 = vmatprep.subr.mxu0 0.0
  %1771 = vmatpush1.msra.mxu0 0.0
  %1772 = vmatprep.subr.mxu0 0.0
  %1773 = vmatpush1.msra.mxu0 0.0
  %1774 = vmatprep.subr.mxu0 0.0
  %1775 = vmatpush1.msra.mxu0 0.0
  %1776 = vmatprep.subr.mxu0 0.0
  %1777 = vmatpush1.msra.mxu0 0.0
  %1778 = vmatprep.subr.mxu0 0.0
  %1779 = vmatpush1.msra.mxu0 0.0
  %1780 = vmatprep.subr.mxu0 0.0
  %1781 = vmatpush1.msra.mxu0 0.0
  %1782 = vmatprep.subr.mxu0 0.0
  %1783 = vmatpush1.msra.mxu0 0.0
  %1784 = vmatprep.mubr.f32.mxu0 0.0
  %1785 = vmatmul.mubr.f32.gmra.mrb[0].mxu0 %v1706
  %v1786 = vpop.f32.mrb[0].mxu0
  %v1787 = vadd.f32 0.0, %v1786
  %v1788 = vpop.f32.mrb[0].mxu0
  %v1789 = vadd.f32 0.0, %v1788
  %1790 = vdwg.mxu0
  %1791 = vmatprep.subr.mxu0 %v1718
  %1792 = vmatpush1.msra.mxu0 %v1715
  %1793 = vmatprep.subr.mxu0 0.0
  %1794 = vmatpush1.msra.mxu0 0.0
  %1795 = vmatprep.subr.mxu0 0.0
  %1796 = vmatpush1.msra.mxu0 0.0
  %1797 = vmatprep.subr.mxu0 0.0
  %1798 = vmatpush1.msra.mxu0 0.0
  %1799 = vmatprep.subr.mxu0 0.0
  %1800 = vmatpush1.msra.mxu0 0.0
  %1801 = vmatprep.subr.mxu0 0.0
  %1802 = vmatpush1.msra.mxu0 0.0
  %1803 = vmatprep.subr.mxu0 0.0
  %1804 = vmatpush1.msra.mxu0 0.0
  %1805 = vmatprep.subr.mxu0 0.0
  %1806 = vmatpush1.msra.mxu0 0.0
  %1807 = vmatprep.subr.mxu0 0.0
  %1808 = vmatpush1.msra.mxu0 0.0
  %1809 = vmatprep.subr.mxu0 0.0
  %1810 = vmatpush1.msra.mxu0 0.0
  %1811 = vmatprep.subr.mxu0 0.0
  %1812 = vmatpush1.msra.mxu0 0.0
  %1813 = vmatprep.subr.mxu0 0.0
  %1814 = vmatpush1.msra.mxu0 0.0
  %1815 = vmatprep.subr.mxu0 0.0
  %1816 = vmatpush1.msra.mxu0 0.0
  %1817 = vmatprep.subr.mxu0 0.0
  %1818 = vmatpush1.msra.mxu0 0.0
  %1819 = vmatprep.subr.mxu0 0.0
  %1820 = vmatpush1.msra.mxu0 0.0
  %1821 = vmatprep.subr.mxu0 0.0
  %1822 = vmatpush1.msra.mxu0 0.0
  %1823 = vmatprep.subr.mxu0 0.0
  %1824 = vmatpush1.msra.mxu0 0.0
  %1825 = vmatprep.subr.mxu0 0.0
  %1826 = vmatpush1.msra.mxu0 0.0
  %1827 = vmatprep.subr.mxu0 0.0
  %1828 = vmatpush1.msra.mxu0 0.0
  %1829 = vmatprep.subr.mxu0 0.0
  %1830 = vmatpush1.msra.mxu0 0.0
  %1831 = vmatprep.subr.mxu0 0.0
  %1832 = vmatpush1.msra.mxu0 0.0
  %1833 = vmatprep.subr.mxu0 0.0
  %1834 = vmatpush1.msra.mxu0 0.0
  %1835 = vmatprep.subr.mxu0 0.0
  %1836 = vmatpush1.msra.mxu0 0.0
  %1837 = vmatprep.subr.mxu0 0.0
  %1838 = vmatpush1.msra.mxu0 0.0
  %1839 = vmatprep.subr.mxu0 0.0
  %1840 = vmatpush1.msra.mxu0 0.0
  %1841 = vmatprep.subr.mxu0 0.0
  %1842 = vmatpush1.msra.mxu0 0.0
  %1843 = vmatprep.subr.mxu0 0.0
  %1844 = vmatpush1.msra.mxu0 0.0
  %1845 = vmatprep.subr.mxu0 0.0
  %1846 = vmatpush1.msra.mxu0 0.0
  %1847 = vmatprep.subr.mxu0 0.0
  %1848 = vmatpush1.msra.mxu0 0.0
  %1849 = vmatprep.subr.mxu0 0.0
  %1850 = vmatpush1.msra.mxu0 0.0
  %1851 = vmatprep.subr.mxu0 0.0
  %1852 = vmatpush1.msra.mxu0 0.0
  %1853 = vmatprep.subr.mxu0 0.0
  %1854 = vmatpush1.msra.mxu0 0.0
  %1855 = vmatprep.mubr.f32.mxu0 0.0
  %1856 = vmatmul.mubr.f32.gmra.mrb[0].mxu0 %v1706
  %v1857 = vpop.f32.mrb[0].mxu0
  %v1858 = vadd.f32 0.0, %v1857
  %v1859 = vpop.f32.mrb[0].mxu0
  %v1860 = vadd.f32 0.0, %v1859
  %1861 = vdwg.mxu0
  %v1862 = vadd.f32 %v1666, %v1787
  %v1863 = vadd.f32 %v1667, %v1789
  %v1864 = vadd.f32 %v1668, %v1858
  %v1865 = vadd.f32 %v1669, %v1860
  %1866 = vrot.lane.b32.xlu0 %v334, 111
  %v1867 = vpop.permute.xlu0 %1866
  %1868 = vrot.lane.b32.xlu0 %v335, 111
  %v1869 = vpop.permute.xlu0 %1868
  %1870 = vrot.lane.b32.xlu0 %v336, 111
  %v1871 = vpop.permute.xlu0 %1870
  %1872 = vrot.lane.b32.xlu0 %v337, 111
  %v1873 = vpop.permute.xlu0 %1872
  %vm1874 = vcmp.lt.s32.totalorder %v347, 111
  %v1875 = vsel %vm1874, %v1871, %v1873
  %v1876 = vsel %vm1874, %v1869, %v1871
  %v1877 = vsel %vm1874, %v1867, %v1869
  %v1878 = vsel %vm1874, %v1873, %v1867
  %v1879 = vlaneseq
  %v1880 = vshrl.u32 %v1879, 7
  %v1881 = vsub.s32 0, %v1880
  %v1882 = vrot.slane %v62, %v1881
  %v1883 = vlaneseq
  %v1884 = vshrl.u32 %v1883, 7
  %v1885 = vsub.s32 0, %v1884
  %v1886 = vrot.slane %v63, %v1885
  %v1887 = vlaneseq
  %v1888 = vshrl.u32 %v1887, 7
  %v1889 = vsub.s32 0, %v1888
  %v1890 = vrot.slane %v64, %v1889
  %v1891 = vlaneseq
  %v1892 = vshrl.u32 %v1891, 7
  %v1893 = vsub.s32 0, %v1892
  %v1894 = vrot.slane %v65, %v1893
  %v1895 = vmul.f32 %v1877, %v1882
  %v1896 = vmul.f32 %v1876, %v1886
  %v1897 = vmul.f32 %v1875, %v1890
  %v1898 = vmul.f32 %v1878, %v1894
  %s1899 = scalar_lea.vmem %s5, 64
  %v1900 = vld [vmem:[%s1899] sm:$0xff]
  %v1902 = vsel %vm72, %v1900, 0
  %v1905 = vsel %vm79, %v1895, 0
  %v1908 = vsel %vm79, %v1896, 0
  %v1911 = vsel %vm79, %v1897, 0
  %v1914 = vsel %vm79, %v1898, 0
  %1916 = vmatprep.subr.mxu0 %v1908
  %1917 = vmatpush1.msra.mxu0 %v1905
  %1918 = vmatprep.subr.mxu0 0.0
  %1919 = vmatpush1.msra.mxu0 0.0
  %1920 = vmatprep.subr.mxu0 0.0
  %1921 = vmatpush1.msra.mxu0 0.0
  %1922 = vmatprep.subr.mxu0 0.0
  %1923 = vmatpush1.msra.mxu0 0.0
  %1924 = vmatprep.subr.mxu0 0.0
  %1925 = vmatpush1.msra.mxu0 0.0
  %1926 = vmatprep.subr.mxu0 0.0
  %1927 = vmatpush1.msra.mxu0 0.0
  %1928 = vmatprep.subr.mxu0 0.0
  %1929 = vmatpush1.msra.mxu0 0.0
  %1930 = vmatprep.subr.mxu0 0.0
  %1931 = vmatpush1.msra.mxu0 0.0
  %1932 = vmatprep.subr.mxu0 0.0
  %1933 = vmatpush1.msra.mxu0 0.0
  %1934 = vmatprep.subr.mxu0 0.0
  %1935 = vmatpush1.msra.mxu0 0.0
  %1936 = vmatprep.subr.mxu0 0.0
  %1937 = vmatpush1.msra.mxu0 0.0
  %1938 = vmatprep.subr.mxu0 0.0
  %1939 = vmatpush1.msra.mxu0 0.0
  %1940 = vmatprep.subr.mxu0 0.0
  %1941 = vmatpush1.msra.mxu0 0.0
  %1942 = vmatprep.subr.mxu0 0.0
  %1943 = vmatpush1.msra.mxu0 0.0
  %1944 = vmatprep.subr.mxu0 0.0
  %1945 = vmatpush1.msra.mxu0 0.0
  %1946 = vmatprep.subr.mxu0 0.0
  %1947 = vmatpush1.msra.mxu0 0.0
  %1948 = vmatprep.subr.mxu0 0.0
  %1949 = vmatpush1.msra.mxu0 0.0
  %1950 = vmatprep.subr.mxu0 0.0
  %1951 = vmatpush1.msra.mxu0 0.0
  %1952 = vmatprep.subr.mxu0 0.0
  %1953 = vmatpush1.msra.mxu0 0.0
  %1954 = vmatprep.subr.mxu0 0.0
  %1955 = vmatpush1.msra.mxu0 0.0
  %1956 = vmatprep.subr.mxu0 0.0
  %1957 = vmatpush1.msra.mxu0 0.0
  %1958 = vmatprep.subr.mxu0 0.0
  %1959 = vmatpush1.msra.mxu0 0.0
  %1960 = vmatprep.subr.mxu0 0.0
  %1961 = vmatpush1.msra.mxu0 0.0
  %1962 = vmatprep.subr.mxu0 0.0
  %1963 = vmatpush1.msra.mxu0 0.0
  %1964 = vmatprep.subr.mxu0 0.0
  %1965 = vmatpush1.msra.mxu0 0.0
  %1966 = vmatprep.subr.mxu0 0.0
  %1967 = vmatpush1.msra.mxu0 0.0
  %1968 = vmatprep.subr.mxu0 0.0
  %1969 = vmatpush1.msra.mxu0 0.0
  %1970 = vmatprep.subr.mxu0 0.0
  %1971 = vmatpush1.msra.mxu0 0.0
  %1972 = vmatprep.subr.mxu0 0.0
  %1973 = vmatpush1.msra.mxu0 0.0
  %1974 = vmatprep.subr.mxu0 0.0
  %1975 = vmatpush1.msra.mxu0 0.0
  %1976 = vmatprep.subr.mxu0 0.0
  %1977 = vmatpush1.msra.mxu0 0.0
  %1978 = vmatprep.subr.mxu0 0.0
  %1979 = vmatpush1.msra.mxu0 0.0
  %1980 = vmatprep.mubr.f32.mxu0 0.0
  %1981 = vmatmul.mubr.f32.gmra.mrb[0].mxu0 %v1902
  %v1982 = vpop.f32.mrb[0].mxu0
  %v1983 = vadd.f32 0.0, %v1982
  %v1984 = vpop.f32.mrb[0].mxu0
  %v1985 = vadd.f32 0.0, %v1984
  %1986 = vdwg.mxu0
  %1987 = vmatprep.subr.mxu0 %v1914
  %1988 = vmatpush1.msra.mxu0 %v1911
  %1989 = vmatprep.subr.mxu0 0.0
  %1990 = vmatpush1.msra.mxu0 0.0
  %1991 = vmatprep.subr.mxu0 0.0
  %1992 = vmatpush1.msra.mxu0 0.0
  %1993 = vmatprep.subr.mxu0 0.0
  %1994 = vmatpush1.msra.mxu0 0.0
  %1995 = vmatprep.subr.mxu0 0.0
  %1996 = vmatpush1.msra.mxu0 0.0
  %1997 = vmatprep.subr.mxu0 0.0
  %1998 = vmatpush1.msra.mxu0 0.0
  %1999 = vmatprep.subr.mxu0 0.0
  %2000 = vmatpush1.msra.mxu0 0.0
  %2001 = vmatprep.subr.mxu0 0.0
  %2002 = vmatpush1.msra.mxu0 0.0
  %2003 = vmatprep.subr.mxu0 0.0
  %2004 = vmatpush1.msra.mxu0 0.0
  %2005 = vmatprep.subr.mxu0 0.0
  %2006 = vmatpush1.msra.mxu0 0.0
  %2007 = vmatprep.subr.mxu0 0.0
  %2008 = vmatpush1.msra.mxu0 0.0
  %2009 = vmatprep.subr.mxu0 0.0
  %2010 = vmatpush1.msra.mxu0 0.0
  %2011 = vmatprep.subr.mxu0 0.0
  %2012 = vmatpush1.msra.mxu0 0.0
  %2013 = vmatprep.subr.mxu0 0.0
  %2014 = vmatpush1.msra.mxu0 0.0
  %2015 = vmatprep.subr.mxu0 0.0
  %2016 = vmatpush1.msra.mxu0 0.0
  %2017 = vmatprep.subr.mxu0 0.0
  %2018 = vmatpush1.msra.mxu0 0.0
  %2019 = vmatprep.subr.mxu0 0.0
  %2020 = vmatpush1.msra.mxu0 0.0
  %2021 = vmatprep.subr.mxu0 0.0
  %2022 = vmatpush1.msra.mxu0 0.0
  %2023 = vmatprep.subr.mxu0 0.0
  %2024 = vmatpush1.msra.mxu0 0.0
  %2025 = vmatprep.subr.mxu0 0.0
  %2026 = vmatpush1.msra.mxu0 0.0
  %2027 = vmatprep.subr.mxu0 0.0
  %2028 = vmatpush1.msra.mxu0 0.0
  %2029 = vmatprep.subr.mxu0 0.0
  %2030 = vmatpush1.msra.mxu0 0.0
  %2031 = vmatprep.subr.mxu0 0.0
  %2032 = vmatpush1.msra.mxu0 0.0
  %2033 = vmatprep.subr.mxu0 0.0
  %2034 = vmatpush1.msra.mxu0 0.0
  %2035 = vmatprep.subr.mxu0 0.0
  %2036 = vmatpush1.msra.mxu0 0.0
  %2037 = vmatprep.subr.mxu0 0.0
  %2038 = vmatpush1.msra.mxu0 0.0
  %2039 = vmatprep.subr.mxu0 0.0
  %2040 = vmatpush1.msra.mxu0 0.0
  %2041 = vmatprep.subr.mxu0 0.0
  %2042 = vmatpush1.msra.mxu0 0.0
  %2043 = vmatprep.subr.mxu0 0.0
  %2044 = vmatpush1.msra.mxu0 0.0
  %2045 = vmatprep.subr.mxu0 0.0
  %2046 = vmatpush1.msra.mxu0 0.0
  %2047 = vmatprep.subr.mxu0 0.0
  %2048 = vmatpush1.msra.mxu0 0.0
  %2049 = vmatprep.subr.mxu0 0.0
  %2050 = vmatpush1.msra.mxu0 0.0
  %2051 = vmatprep.mubr.f32.mxu0 0.0
  %2052 = vmatmul.mubr.f32.gmra.mrb[0].mxu0 %v1902
  %v2053 = vpop.f32.mrb[0].mxu0
  %v2054 = vadd.f32 0.0, %v2053
  %v2055 = vpop.f32.mrb[0].mxu0
  %v2056 = vadd.f32 0.0, %v2055
  %2057 = vdwg.mxu0
  %v2058 = vadd.f32 %v1862, %v1983
  %v2059 = vadd.f32 %v1863, %v1985
  %v2060 = vadd.f32 %v1864, %v2054
  %v2061 = vadd.f32 %v1865, %v2056
  %v2062 = vld [vmem:[%s6] sm:$0xff]
  %v2063 = vld [vmem:[%s7] sm:$0xff]
  %v2064 = vadd.f32 %v2058, %v2059
  %v2065 = vadd.f32 %v2064, %v2060
  %v2066 = vadd.f32 %v2065, %v2061
  %2067 = vadd.xlane.f32.xlu0 %v2066
  %v2068 = vpop.xlane.xlu0 %2067
  %v2069 = vmul.f32 %v2068, 0.001953125
  %v2070 = vmul.f32 %v2058, %v2058
  %v2071 = vmul.f32 %v2059, %v2059
  %v2072 = vmul.f32 %v2060, %v2060
  %v2073 = vmul.f32 %v2061, %v2061
  %v2074 = vadd.f32 %v2070, %v2071
  %v2075 = vadd.f32 %v2074, %v2072
  %v2076 = vadd.f32 %v2075, %v2073
  %2077 = vadd.xlane.f32.xlu0 %v2076
  %v2078 = vpop.xlane.xlu0 %2077
  %v2079 = vmul.f32 %v2078, 0.001953125
  %v2080 = vmul.f32 %v2069, %v2069
  %v2081 = vsub.f32 %v2079, %v2080
  %v2082 = vmax.f32 %v2081, 0.0
  %v2083 = vadd.f32 %v2082, 1e-05
  %v2084 = vrsqrt.pop %v2083
  %v2085 = vmul.f32 %v2062, %v2084
  %v2086 = vmul.f32 %v2069, %v2085
  %v2087 = vsub.f32 %v2063, %v2086
  %2089 = vset.pattern.permute.xlu0 0
  %2090 = vperm.xlu0 %2089, %v2085
  %v2091 = vpop.permute.xlu0 %2090
  %v2093 = vmul.f32 %v2058, %v2091
  %v2094 = vmul.f32 %v2059, %v2091
  %v2095 = vmul.f32 %v2060, %v2091
  %v2096 = vmul.f32 %v2061, %v2091
  %2098 = vset.pattern.permute.xlu0 0
  %2099 = vperm.xlu0 %2098, %v2087
  %v2100 = vpop.permute.xlu0 %2099
  %v2102 = vadd.f32 %v2093, %v2100
  %v2103 = vadd.f32 %v2094, %v2100
  %v2104 = vadd.f32 %v2095, %v2100
  %v2105 = vadd.f32 %v2096, %v2100
  %v2106 = vmax.f32 %v2102, 0.0
  %v2107 = vmax.f32 %v2103, 0.0
  %v2108 = vmax.f32 %v2104, 0.0
  %v2109 = vmax.f32 %v2105, 0.0
  %v2110 = vrot.slane %v334, 4
  %v2111 = vrot.slane %v335, 4
  %v2112 = vrot.slane %v336, 4
  %v2113 = vrot.slane %v337, 4
  %2118 = vrot.lane.b32.xlu0 %v2110, 17
  %v2119 = vpop.permute.xlu0 %2118
  %2120 = vrot.lane.b32.xlu0 %v2111, 17
  %v2121 = vpop.permute.xlu0 %2120
  %2122 = vrot.lane.b32.xlu0 %v2112, 17
  %v2123 = vpop.permute.xlu0 %2122
  %2124 = vrot.lane.b32.xlu0 %v2113, 17
  %v2125 = vpop.permute.xlu0 %2124
  %v2126 = vsel %vm348, %v2123, %v2125
  %v2127 = vsel %vm348, %v2121, %v2123
  %v2128 = vsel %vm348, %v2119, %v2121
  %v2129 = vsel %vm348, %v2125, %v2119
  %v2130 = vmul.f32 %v2129, %v356
  %v2131 = vmul.f32 %v2128, %v360
  %v2132 = vmul.f32 %v2127, %v364
  %v2133 = vmul.f32 %v2126, %v368
  %v2134 = vld [vmem:[%s8] sm:$0xff]
  %2135 = vrot.lane.b32.xlu0 %v2110, 16
  %v2136 = vpop.permute.xlu0 %2135
  %2137 = vrot.lane.b32.xlu0 %v2111, 16
  %v2138 = vpop.permute.xlu0 %2137
  %2139 = vrot.lane.b32.xlu0 %v2112, 16
  %v2140 = vpop.permute.xlu0 %2139
  %2141 = vrot.lane.b32.xlu0 %v2113, 16
  %v2142 = vpop.permute.xlu0 %2141
  %v2143 = vsel %vm382, %v2140, %v2142
  %v2144 = vsel %vm382, %v2138, %v2140
  %v2145 = vsel %vm382, %v2136, %v2138
  %v2146 = vsel %vm382, %v2142, %v2136
  %v2147 = vmul.f32 %v2146, %v390
  %v2148 = vmul.f32 %v2145, %v394
  %v2149 = vmul.f32 %v2144, %v398
  %v2150 = vmul.f32 %v2143, %v402
  %s2151 = scalar_lea.vmem %s8, 8
  %v2152 = vld [vmem:[%s2151] sm:$0xff]
  %v2154 = vsel %vm72, %v2152, 0
  %v2157 = vsel %vm79, %v2147, 0
  %v2160 = vsel %vm79, %v2148, 0
  %v2163 = vsel %vm79, %v2149, 0
  %v2166 = vsel %vm79, %v2150, 0
  %2168 = vmatprep.subr.mxu0 %v2160
  %2169 = vmatpush1.msra.mxu0 %v2157
  %2170 = vmatprep.subr.mxu0 0.0
  %2171 = vmatpush1.msra.mxu0 0.0
  %2172 = vmatprep.subr.mxu0 0.0
  %2173 = vmatpush1.msra.mxu0 0.0
  %2174 = vmatprep.subr.mxu0 0.0
  %2175 = vmatpush1.msra.mxu0 0.0
  %2176 = vmatprep.subr.mxu0 0.0
  %2177 = vmatpush1.msra.mxu0 0.0
  %2178 = vmatprep.subr.mxu0 0.0
  %2179 = vmatpush1.msra.mxu0 0.0
  %2180 = vmatprep.subr.mxu0 0.0
  %2181 = vmatpush1.msra.mxu0 0.0
  %2182 = vmatprep.subr.mxu0 0.0
  %2183 = vmatpush1.msra.mxu0 0.0
  %2184 = vmatprep.subr.mxu0 0.0
  %2185 = vmatpush1.msra.mxu0 0.0
  %2186 = vmatprep.subr.mxu0 0.0
  %2187 = vmatpush1.msra.mxu0 0.0
  %2188 = vmatprep.subr.mxu0 0.0
  %2189 = vmatpush1.msra.mxu0 0.0
  %2190 = vmatprep.subr.mxu0 0.0
  %2191 = vmatpush1.msra.mxu0 0.0
  %2192 = vmatprep.subr.mxu0 0.0
  %2193 = vmatpush1.msra.mxu0 0.0
  %2194 = vmatprep.subr.mxu0 0.0
  %2195 = vmatpush1.msra.mxu0 0.0
  %2196 = vmatprep.subr.mxu0 0.0
  %2197 = vmatpush1.msra.mxu0 0.0
  %2198 = vmatprep.subr.mxu0 0.0
  %2199 = vmatpush1.msra.mxu0 0.0
  %2200 = vmatprep.subr.mxu0 0.0
  %2201 = vmatpush1.msra.mxu0 0.0
  %2202 = vmatprep.subr.mxu0 0.0
  %2203 = vmatpush1.msra.mxu0 0.0
  %2204 = vmatprep.subr.mxu0 0.0
  %2205 = vmatpush1.msra.mxu0 0.0
  %2206 = vmatprep.subr.mxu0 0.0
  %2207 = vmatpush1.msra.mxu0 0.0
  %2208 = vmatprep.subr.mxu0 0.0
  %2209 = vmatpush1.msra.mxu0 0.0
  %2210 = vmatprep.subr.mxu0 0.0
  %2211 = vmatpush1.msra.mxu0 0.0
  %2212 = vmatprep.subr.mxu0 0.0
  %2213 = vmatpush1.msra.mxu0 0.0
  %2214 = vmatprep.subr.mxu0 0.0
  %2215 = vmatpush1.msra.mxu0 0.0
  %2216 = vmatprep.subr.mxu0 0.0
  %2217 = vmatpush1.msra.mxu0 0.0
  %2218 = vmatprep.subr.mxu0 0.0
  %2219 = vmatpush1.msra.mxu0 0.0
  %2220 = vmatprep.subr.mxu0 0.0
  %2221 = vmatpush1.msra.mxu0 0.0
  %2222 = vmatprep.subr.mxu0 0.0
  %2223 = vmatpush1.msra.mxu0 0.0
  %2224 = vmatprep.subr.mxu0 0.0
  %2225 = vmatpush1.msra.mxu0 0.0
  %2226 = vmatprep.subr.mxu0 0.0
  %2227 = vmatpush1.msra.mxu0 0.0
  %2228 = vmatprep.subr.mxu0 0.0
  %2229 = vmatpush1.msra.mxu0 0.0
  %2230 = vmatprep.subr.mxu0 0.0
  %2231 = vmatpush1.msra.mxu0 0.0
  %2232 = vmatprep.mubr.f32.mxu0 0.0
  %2233 = vmatmul.mubr.f32.gmra.mrb[0].mxu0 %v2154
  %v2234 = vpop.f32.mrb[0].mxu0
  %v2235 = vadd.f32 0.0, %v2234
  %v2236 = vpop.f32.mrb[0].mxu0
  %v2237 = vadd.f32 0.0, %v2236
  %2238 = vdwg.mxu0
  %2239 = vmatprep.subr.mxu0 %v2166
  %2240 = vmatpush1.msra.mxu0 %v2163
  %2241 = vmatprep.subr.mxu0 0.0
  %2242 = vmatpush1.msra.mxu0 0.0
  %2243 = vmatprep.subr.mxu0 0.0
  %2244 = vmatpush1.msra.mxu0 0.0
  %2245 = vmatprep.subr.mxu0 0.0
  %2246 = vmatpush1.msra.mxu0 0.0
  %2247 = vmatprep.subr.mxu0 0.0
  %2248 = vmatpush1.msra.mxu0 0.0
  %2249 = vmatprep.subr.mxu0 0.0
  %2250 = vmatpush1.msra.mxu0 0.0
  %2251 = vmatprep.subr.mxu0 0.0
  %2252 = vmatpush1.msra.mxu0 0.0
  %2253 = vmatprep.subr.mxu0 0.0
  %2254 = vmatpush1.msra.mxu0 0.0
  %2255 = vmatprep.subr.mxu0 0.0
  %2256 = vmatpush1.msra.mxu0 0.0
  %2257 = vmatprep.subr.mxu0 0.0
  %2258 = vmatpush1.msra.mxu0 0.0
  %2259 = vmatprep.subr.mxu0 0.0
  %2260 = vmatpush1.msra.mxu0 0.0
  %2261 = vmatprep.subr.mxu0 0.0
  %2262 = vmatpush1.msra.mxu0 0.0
  %2263 = vmatprep.subr.mxu0 0.0
  %2264 = vmatpush1.msra.mxu0 0.0
  %2265 = vmatprep.subr.mxu0 0.0
  %2266 = vmatpush1.msra.mxu0 0.0
  %2267 = vmatprep.subr.mxu0 0.0
  %2268 = vmatpush1.msra.mxu0 0.0
  %2269 = vmatprep.subr.mxu0 0.0
  %2270 = vmatpush1.msra.mxu0 0.0
  %2271 = vmatprep.subr.mxu0 0.0
  %2272 = vmatpush1.msra.mxu0 0.0
  %2273 = vmatprep.subr.mxu0 0.0
  %2274 = vmatpush1.msra.mxu0 0.0
  %2275 = vmatprep.subr.mxu0 0.0
  %2276 = vmatpush1.msra.mxu0 0.0
  %2277 = vmatprep.subr.mxu0 0.0
  %2278 = vmatpush1.msra.mxu0 0.0
  %2279 = vmatprep.subr.mxu0 0.0
  %2280 = vmatpush1.msra.mxu0 0.0
  %2281 = vmatprep.subr.mxu0 0.0
  %2282 = vmatpush1.msra.mxu0 0.0
  %2283 = vmatprep.subr.mxu0 0.0
  %2284 = vmatpush1.msra.mxu0 0.0
  %2285 = vmatprep.subr.mxu0 0.0
  %2286 = vmatpush1.msra.mxu0 0.0
  %2287 = vmatprep.subr.mxu0 0.0
  %2288 = vmatpush1.msra.mxu0 0.0
  %2289 = vmatprep.subr.mxu0 0.0
  %2290 = vmatpush1.msra.mxu0 0.0
  %2291 = vmatprep.subr.mxu0 0.0
  %2292 = vmatpush1.msra.mxu0 0.0
  %2293 = vmatprep.subr.mxu0 0.0
  %2294 = vmatpush1.msra.mxu0 0.0
  %2295 = vmatprep.subr.mxu0 0.0
  %2296 = vmatpush1.msra.mxu0 0.0
  %2297 = vmatprep.subr.mxu0 0.0
  %2298 = vmatpush1.msra.mxu0 0.0
  %2299 = vmatprep.subr.mxu0 0.0
  %2300 = vmatpush1.msra.mxu0 0.0
  %2301 = vmatprep.subr.mxu0 0.0
  %2302 = vmatpush1.msra.mxu0 0.0
  %2303 = vmatprep.mubr.f32.mxu0 0.0
  %2304 = vmatmul.mubr.f32.gmra.mrb[0].mxu0 %v2154
  %v2305 = vpop.f32.mrb[0].mxu0
  %v2306 = vadd.f32 0.0, %v2305
  %v2307 = vpop.f32.mrb[0].mxu0
  %v2308 = vadd.f32 0.0, %v2307
  %2309 = vdwg.mxu0
  %v2311 = vsel %vm72, %v2134, 0
  %v2314 = vsel %vm79, %v2130, 0
  %v2317 = vsel %vm79, %v2131, 0
  %v2320 = vsel %vm79, %v2132, 0
  %v2323 = vsel %vm79, %v2133, 0
  %2325 = vmatprep.subr.mxu0 %v2317
  %2326 = vmatpush1.msra.mxu0 %v2314
  %2327 = vmatprep.subr.mxu0 0.0
  %2328 = vmatpush1.msra.mxu0 0.0
  %2329 = vmatprep.subr.mxu0 0.0
  %2330 = vmatpush1.msra.mxu0 0.0
  %2331 = vmatprep.subr.mxu0 0.0
  %2332 = vmatpush1.msra.mxu0 0.0
  %2333 = vmatprep.subr.mxu0 0.0
  %2334 = vmatpush1.msra.mxu0 0.0
  %2335 = vmatprep.subr.mxu0 0.0
  %2336 = vmatpush1.msra.mxu0 0.0
  %2337 = vmatprep.subr.mxu0 0.0
  %2338 = vmatpush1.msra.mxu0 0.0
  %2339 = vmatprep.subr.mxu0 0.0
  %2340 = vmatpush1.msra.mxu0 0.0
  %2341 = vmatprep.subr.mxu0 0.0
  %2342 = vmatpush1.msra.mxu0 0.0
  %2343 = vmatprep.subr.mxu0 0.0
  %2344 = vmatpush1.msra.mxu0 0.0
  %2345 = vmatprep.subr.mxu0 0.0
  %2346 = vmatpush1.msra.mxu0 0.0
  %2347 = vmatprep.subr.mxu0 0.0
  %2348 = vmatpush1.msra.mxu0 0.0
  %2349 = vmatprep.subr.mxu0 0.0
  %2350 = vmatpush1.msra.mxu0 0.0
  %2351 = vmatprep.subr.mxu0 0.0
  %2352 = vmatpush1.msra.mxu0 0.0
  %2353 = vmatprep.subr.mxu0 0.0
  %2354 = vmatpush1.msra.mxu0 0.0
  %2355 = vmatprep.subr.mxu0 0.0
  %2356 = vmatpush1.msra.mxu0 0.0
  %2357 = vmatprep.subr.mxu0 0.0
  %2358 = vmatpush1.msra.mxu0 0.0
  %2359 = vmatprep.subr.mxu0 0.0
  %2360 = vmatpush1.msra.mxu0 0.0
  %2361 = vmatprep.subr.mxu0 0.0
  %2362 = vmatpush1.msra.mxu0 0.0
  %2363 = vmatprep.subr.mxu0 0.0
  %2364 = vmatpush1.msra.mxu0 0.0
  %2365 = vmatprep.subr.mxu0 0.0
  %2366 = vmatpush1.msra.mxu0 0.0
  %2367 = vmatprep.subr.mxu0 0.0
  %2368 = vmatpush1.msra.mxu0 0.0
  %2369 = vmatprep.subr.mxu0 0.0
  %2370 = vmatpush1.msra.mxu0 0.0
  %2371 = vmatprep.subr.mxu0 0.0
  %2372 = vmatpush1.msra.mxu0 0.0
  %2373 = vmatprep.subr.mxu0 0.0
  %2374 = vmatpush1.msra.mxu0 0.0
  %2375 = vmatprep.subr.mxu0 0.0
  %2376 = vmatpush1.msra.mxu0 0.0
  %2377 = vmatprep.subr.mxu0 0.0
  %2378 = vmatpush1.msra.mxu0 0.0
  %2379 = vmatprep.subr.mxu0 0.0
  %2380 = vmatpush1.msra.mxu0 0.0
  %2381 = vmatprep.subr.mxu0 0.0
  %2382 = vmatpush1.msra.mxu0 0.0
  %2383 = vmatprep.subr.mxu0 0.0
  %2384 = vmatpush1.msra.mxu0 0.0
  %2385 = vmatprep.subr.mxu0 0.0
  %2386 = vmatpush1.msra.mxu0 0.0
  %2387 = vmatprep.subr.mxu0 0.0
  %2388 = vmatpush1.msra.mxu0 0.0
  %2389 = vmatprep.mubr.f32.mxu0 0.0
  %2390 = vmatmul.mubr.f32.gmra.mrb[0].mxu0 %v2311
  %v2391 = vpop.f32.mrb[0].mxu0
  %v2392 = vadd.f32 %v2235, %v2391
  %v2393 = vpop.f32.mrb[0].mxu0
  %v2394 = vadd.f32 %v2237, %v2393
  %2395 = vdwg.mxu0
  %2396 = vmatprep.subr.mxu0 %v2323
  %2397 = vmatpush1.msra.mxu0 %v2320
  %2398 = vmatprep.subr.mxu0 0.0
  %2399 = vmatpush1.msra.mxu0 0.0
  %2400 = vmatprep.subr.mxu0 0.0
  %2401 = vmatpush1.msra.mxu0 0.0
  %2402 = vmatprep.subr.mxu0 0.0
  %2403 = vmatpush1.msra.mxu0 0.0
  %2404 = vmatprep.subr.mxu0 0.0
  %2405 = vmatpush1.msra.mxu0 0.0
  %2406 = vmatprep.subr.mxu0 0.0
  %2407 = vmatpush1.msra.mxu0 0.0
  %2408 = vmatprep.subr.mxu0 0.0
  %2409 = vmatpush1.msra.mxu0 0.0
  %2410 = vmatprep.subr.mxu0 0.0
  %2411 = vmatpush1.msra.mxu0 0.0
  %2412 = vmatprep.subr.mxu0 0.0
  %2413 = vmatpush1.msra.mxu0 0.0
  %2414 = vmatprep.subr.mxu0 0.0
  %2415 = vmatpush1.msra.mxu0 0.0
  %2416 = vmatprep.subr.mxu0 0.0
  %2417 = vmatpush1.msra.mxu0 0.0
  %2418 = vmatprep.subr.mxu0 0.0
  %2419 = vmatpush1.msra.mxu0 0.0
  %2420 = vmatprep.subr.mxu0 0.0
  %2421 = vmatpush1.msra.mxu0 0.0
  %2422 = vmatprep.subr.mxu0 0.0
  %2423 = vmatpush1.msra.mxu0 0.0
  %2424 = vmatprep.subr.mxu0 0.0
  %2425 = vmatpush1.msra.mxu0 0.0
  %2426 = vmatprep.subr.mxu0 0.0
  %2427 = vmatpush1.msra.mxu0 0.0
  %2428 = vmatprep.subr.mxu0 0.0
  %2429 = vmatpush1.msra.mxu0 0.0
  %2430 = vmatprep.subr.mxu0 0.0
  %2431 = vmatpush1.msra.mxu0 0.0
  %2432 = vmatprep.subr.mxu0 0.0
  %2433 = vmatpush1.msra.mxu0 0.0
  %2434 = vmatprep.subr.mxu0 0.0
  %2435 = vmatpush1.msra.mxu0 0.0
  %2436 = vmatprep.subr.mxu0 0.0
  %2437 = vmatpush1.msra.mxu0 0.0
  %2438 = vmatprep.subr.mxu0 0.0
  %2439 = vmatpush1.msra.mxu0 0.0
  %2440 = vmatprep.subr.mxu0 0.0
  %2441 = vmatpush1.msra.mxu0 0.0
  %2442 = vmatprep.subr.mxu0 0.0
  %2443 = vmatpush1.msra.mxu0 0.0
  %2444 = vmatprep.subr.mxu0 0.0
  %2445 = vmatpush1.msra.mxu0 0.0
  %2446 = vmatprep.subr.mxu0 0.0
  %2447 = vmatpush1.msra.mxu0 0.0
  %2448 = vmatprep.subr.mxu0 0.0
  %2449 = vmatpush1.msra.mxu0 0.0
  %2450 = vmatprep.subr.mxu0 0.0
  %2451 = vmatpush1.msra.mxu0 0.0
  %2452 = vmatprep.subr.mxu0 0.0
  %2453 = vmatpush1.msra.mxu0 0.0
  %2454 = vmatprep.subr.mxu0 0.0
  %2455 = vmatpush1.msra.mxu0 0.0
  %2456 = vmatprep.subr.mxu0 0.0
  %2457 = vmatpush1.msra.mxu0 0.0
  %2458 = vmatprep.subr.mxu0 0.0
  %2459 = vmatpush1.msra.mxu0 0.0
  %2460 = vmatprep.mubr.f32.mxu0 0.0
  %2461 = vmatmul.mubr.f32.gmra.mrb[0].mxu0 %v2311
  %v2462 = vpop.f32.mrb[0].mxu0
  %v2463 = vadd.f32 %v2306, %v2462
  %v2464 = vpop.f32.mrb[0].mxu0
  %v2465 = vadd.f32 %v2308, %v2464
  %2466 = vdwg.mxu0
  %2467 = vrot.lane.b32.xlu0 %v2110, 15
  %v2468 = vpop.permute.xlu0 %2467
  %2469 = vrot.lane.b32.xlu0 %v2111, 15
  %v2470 = vpop.permute.xlu0 %2469
  %2471 = vrot.lane.b32.xlu0 %v2112, 15
  %v2472 = vpop.permute.xlu0 %2471
  %2473 = vrot.lane.b32.xlu0 %v2113, 15
  %v2474 = vpop.permute.xlu0 %2473
  %v2475 = vsel %vm731, %v2472, %v2474
  %v2476 = vsel %vm731, %v2470, %v2472
  %v2477 = vsel %vm731, %v2468, %v2470
  %v2478 = vsel %vm731, %v2474, %v2468
  %v2479 = vmul.f32 %v2478, %v739
  %v2480 = vmul.f32 %v2477, %v743
  %v2481 = vmul.f32 %v2476, %v747
  %v2482 = vmul.f32 %v2475, %v751
  %s2483 = scalar_lea.vmem %s8, 16
  %v2484 = vld [vmem:[%s2483] sm:$0xff]
  %v2486 = vsel %vm72, %v2484, 0
  %v2489 = vsel %vm79, %v2479, 0
  %v2492 = vsel %vm79, %v2480, 0
  %v2495 = vsel %vm79, %v2481, 0
  %v2498 = vsel %vm79, %v2482, 0
  %2500 = vmatprep.subr.mxu0 %v2492
  %2501 = vmatpush1.msra.mxu0 %v2489
  %2502 = vmatprep.subr.mxu0 0.0
  %2503 = vmatpush1.msra.mxu0 0.0
  %2504 = vmatprep.subr.mxu0 0.0
  %2505 = vmatpush1.msra.mxu0 0.0
  %2506 = vmatprep.subr.mxu0 0.0
  %2507 = vmatpush1.msra.mxu0 0.0
  %2508 = vmatprep.subr.mxu0 0.0
  %2509 = vmatpush1.msra.mxu0 0.0
  %2510 = vmatprep.subr.mxu0 0.0
  %2511 = vmatpush1.msra.mxu0 0.0
  %2512 = vmatprep.subr.mxu0 0.0
  %2513 = vmatpush1.msra.mxu0 0.0
  %2514 = vmatprep.subr.mxu0 0.0
  %2515 = vmatpush1.msra.mxu0 0.0
  %2516 = vmatprep.subr.mxu0 0.0
  %2517 = vmatpush1.msra.mxu0 0.0
  %2518 = vmatprep.subr.mxu0 0.0
  %2519 = vmatpush1.msra.mxu0 0.0
  %2520 = vmatprep.subr.mxu0 0.0
  %2521 = vmatpush1.msra.mxu0 0.0
  %2522 = vmatprep.subr.mxu0 0.0
  %2523 = vmatpush1.msra.mxu0 0.0
  %2524 = vmatprep.subr.mxu0 0.0
  %2525 = vmatpush1.msra.mxu0 0.0
  %2526 = vmatprep.subr.mxu0 0.0
  %2527 = vmatpush1.msra.mxu0 0.0
  %2528 = vmatprep.subr.mxu0 0.0
  %2529 = vmatpush1.msra.mxu0 0.0
  %2530 = vmatprep.subr.mxu0 0.0
  %2531 = vmatpush1.msra.mxu0 0.0
  %2532 = vmatprep.subr.mxu0 0.0
  %2533 = vmatpush1.msra.mxu0 0.0
  %2534 = vmatprep.subr.mxu0 0.0
  %2535 = vmatpush1.msra.mxu0 0.0
  %2536 = vmatprep.subr.mxu0 0.0
  %2537 = vmatpush1.msra.mxu0 0.0
  %2538 = vmatprep.subr.mxu0 0.0
  %2539 = vmatpush1.msra.mxu0 0.0
  %2540 = vmatprep.subr.mxu0 0.0
  %2541 = vmatpush1.msra.mxu0 0.0
  %2542 = vmatprep.subr.mxu0 0.0
  %2543 = vmatpush1.msra.mxu0 0.0
  %2544 = vmatprep.subr.mxu0 0.0
  %2545 = vmatpush1.msra.mxu0 0.0
  %2546 = vmatprep.subr.mxu0 0.0
  %2547 = vmatpush1.msra.mxu0 0.0
  %2548 = vmatprep.subr.mxu0 0.0
  %2549 = vmatpush1.msra.mxu0 0.0
  %2550 = vmatprep.subr.mxu0 0.0
  %2551 = vmatpush1.msra.mxu0 0.0
  %2552 = vmatprep.subr.mxu0 0.0
  %2553 = vmatpush1.msra.mxu0 0.0
  %2554 = vmatprep.subr.mxu0 0.0
  %2555 = vmatpush1.msra.mxu0 0.0
  %2556 = vmatprep.subr.mxu0 0.0
  %2557 = vmatpush1.msra.mxu0 0.0
  %2558 = vmatprep.subr.mxu0 0.0
  %2559 = vmatpush1.msra.mxu0 0.0
  %2560 = vmatprep.subr.mxu0 0.0
  %2561 = vmatpush1.msra.mxu0 0.0
  %2562 = vmatprep.subr.mxu0 0.0
  %2563 = vmatpush1.msra.mxu0 0.0
  %2564 = vmatprep.mubr.f32.mxu0 0.0
  %2565 = vmatmul.mubr.f32.gmra.mrb[0].mxu0 %v2486
  %v2566 = vpop.f32.mrb[0].mxu0
  %v2567 = vadd.f32 0.0, %v2566
  %v2568 = vpop.f32.mrb[0].mxu0
  %v2569 = vadd.f32 0.0, %v2568
  %2570 = vdwg.mxu0
  %2571 = vmatprep.subr.mxu0 %v2498
  %2572 = vmatpush1.msra.mxu0 %v2495
  %2573 = vmatprep.subr.mxu0 0.0
  %2574 = vmatpush1.msra.mxu0 0.0
  %2575 = vmatprep.subr.mxu0 0.0
  %2576 = vmatpush1.msra.mxu0 0.0
  %2577 = vmatprep.subr.mxu0 0.0
  %2578 = vmatpush1.msra.mxu0 0.0
  %2579 = vmatprep.subr.mxu0 0.0
  %2580 = vmatpush1.msra.mxu0 0.0
  %2581 = vmatprep.subr.mxu0 0.0
  %2582 = vmatpush1.msra.mxu0 0.0
  %2583 = vmatprep.subr.mxu0 0.0
  %2584 = vmatpush1.msra.mxu0 0.0
  %2585 = vmatprep.subr.mxu0 0.0
  %2586 = vmatpush1.msra.mxu0 0.0
  %2587 = vmatprep.subr.mxu0 0.0
  %2588 = vmatpush1.msra.mxu0 0.0
  %2589 = vmatprep.subr.mxu0 0.0
  %2590 = vmatpush1.msra.mxu0 0.0
  %2591 = vmatprep.subr.mxu0 0.0
  %2592 = vmatpush1.msra.mxu0 0.0
  %2593 = vmatprep.subr.mxu0 0.0
  %2594 = vmatpush1.msra.mxu0 0.0
  %2595 = vmatprep.subr.mxu0 0.0
  %2596 = vmatpush1.msra.mxu0 0.0
  %2597 = vmatprep.subr.mxu0 0.0
  %2598 = vmatpush1.msra.mxu0 0.0
  %2599 = vmatprep.subr.mxu0 0.0
  %2600 = vmatpush1.msra.mxu0 0.0
  %2601 = vmatprep.subr.mxu0 0.0
  %2602 = vmatpush1.msra.mxu0 0.0
  %2603 = vmatprep.subr.mxu0 0.0
  %2604 = vmatpush1.msra.mxu0 0.0
  %2605 = vmatprep.subr.mxu0 0.0
  %2606 = vmatpush1.msra.mxu0 0.0
  %2607 = vmatprep.subr.mxu0 0.0
  %2608 = vmatpush1.msra.mxu0 0.0
  %2609 = vmatprep.subr.mxu0 0.0
  %2610 = vmatpush1.msra.mxu0 0.0
  %2611 = vmatprep.subr.mxu0 0.0
  %2612 = vmatpush1.msra.mxu0 0.0
  %2613 = vmatprep.subr.mxu0 0.0
  %2614 = vmatpush1.msra.mxu0 0.0
  %2615 = vmatprep.subr.mxu0 0.0
  %2616 = vmatpush1.msra.mxu0 0.0
  %2617 = vmatprep.subr.mxu0 0.0
  %2618 = vmatpush1.msra.mxu0 0.0
  %2619 = vmatprep.subr.mxu0 0.0
  %2620 = vmatpush1.msra.mxu0 0.0
  %2621 = vmatprep.subr.mxu0 0.0
  %2622 = vmatpush1.msra.mxu0 0.0
  %2623 = vmatprep.subr.mxu0 0.0
  %2624 = vmatpush1.msra.mxu0 0.0
  %2625 = vmatprep.subr.mxu0 0.0
  %2626 = vmatpush1.msra.mxu0 0.0
  %2627 = vmatprep.subr.mxu0 0.0
  %2628 = vmatpush1.msra.mxu0 0.0
  %2629 = vmatprep.subr.mxu0 0.0
  %2630 = vmatpush1.msra.mxu0 0.0
  %2631 = vmatprep.subr.mxu0 0.0
  %2632 = vmatpush1.msra.mxu0 0.0
  %2633 = vmatprep.subr.mxu0 0.0
  %2634 = vmatpush1.msra.mxu0 0.0
  %2635 = vmatprep.mubr.f32.mxu0 0.0
  %2636 = vmatmul.mubr.f32.gmra.mrb[0].mxu0 %v2486
  %v2637 = vpop.f32.mrb[0].mxu0
  %v2638 = vadd.f32 0.0, %v2637
  %v2639 = vpop.f32.mrb[0].mxu0
  %v2640 = vadd.f32 0.0, %v2639
  %2641 = vdwg.mxu0
  %v2642 = vadd.f32 %v2392, %v2567
  %v2643 = vadd.f32 %v2394, %v2569
  %v2644 = vadd.f32 %v2463, %v2638
  %v2645 = vadd.f32 %v2465, %v2640
  %2646 = vrot.lane.b32.xlu0 %v2110, 1
  %v2647 = vpop.permute.xlu0 %2646
  %2648 = vrot.lane.b32.xlu0 %v2111, 1
  %v2649 = vpop.permute.xlu0 %2648
  %2650 = vrot.lane.b32.xlu0 %v2112, 1
  %v2651 = vpop.permute.xlu0 %2650
  %2652 = vrot.lane.b32.xlu0 %v2113, 1
  %v2653 = vpop.permute.xlu0 %2652
  %v2654 = vsel %vm927, %v2651, %v2653
  %v2655 = vsel %vm927, %v2649, %v2651
  %v2656 = vsel %vm927, %v2647, %v2649
  %v2657 = vsel %vm927, %v2653, %v2647
  %v2658 = vmul.f32 %v2657, %v935
  %v2659 = vmul.f32 %v2656, %v939
  %v2660 = vmul.f32 %v2655, %v943
  %v2661 = vmul.f32 %v2654, %v947
  %s2662 = scalar_lea.vmem %s8, 24
  %v2663 = vld [vmem:[%s2662] sm:$0xff]
  %v2665 = vsel %vm72, %v2663, 0
  %v2668 = vsel %vm79, %v2658, 0
  %v2671 = vsel %vm79, %v2659, 0
  %v2674 = vsel %vm79, %v2660, 0
  %v2677 = vsel %vm79, %v2661, 0
  %2679 = vmatprep.subr.mxu0 %v2671
  %2680 = vmatpush1.msra.mxu0 %v2668
  %2681 = vmatprep.subr.mxu0 0.0
  %2682 = vmatpush1.msra.mxu0 0.0
  %2683 = vmatprep.subr.mxu0 0.0
  %2684 = vmatpush1.msra.mxu0 0.0
  %2685 = vmatprep.subr.mxu0 0.0
  %2686 = vmatpush1.msra.mxu0 0.0
  %2687 = vmatprep.subr.mxu0 0.0
  %2688 = vmatpush1.msra.mxu0 0.0
  %2689 = vmatprep.subr.mxu0 0.0
  %2690 = vmatpush1.msra.mxu0 0.0
  %2691 = vmatprep.subr.mxu0 0.0
  %2692 = vmatpush1.msra.mxu0 0.0
  %2693 = vmatprep.subr.mxu0 0.0
  %2694 = vmatpush1.msra.mxu0 0.0
  %2695 = vmatprep.subr.mxu0 0.0
  %2696 = vmatpush1.msra.mxu0 0.0
  %2697 = vmatprep.subr.mxu0 0.0
  %2698 = vmatpush1.msra.mxu0 0.0
  %2699 = vmatprep.subr.mxu0 0.0
  %2700 = vmatpush1.msra.mxu0 0.0
  %2701 = vmatprep.subr.mxu0 0.0
  %2702 = vmatpush1.msra.mxu0 0.0
  %2703 = vmatprep.subr.mxu0 0.0
  %2704 = vmatpush1.msra.mxu0 0.0
  %2705 = vmatprep.subr.mxu0 0.0
  %2706 = vmatpush1.msra.mxu0 0.0
  %2707 = vmatprep.subr.mxu0 0.0
  %2708 = vmatpush1.msra.mxu0 0.0
  %2709 = vmatprep.subr.mxu0 0.0
  %2710 = vmatpush1.msra.mxu0 0.0
  %2711 = vmatprep.subr.mxu0 0.0
  %2712 = vmatpush1.msra.mxu0 0.0
  %2713 = vmatprep.subr.mxu0 0.0
  %2714 = vmatpush1.msra.mxu0 0.0
  %2715 = vmatprep.subr.mxu0 0.0
  %2716 = vmatpush1.msra.mxu0 0.0
  %2717 = vmatprep.subr.mxu0 0.0
  %2718 = vmatpush1.msra.mxu0 0.0
  %2719 = vmatprep.subr.mxu0 0.0
  %2720 = vmatpush1.msra.mxu0 0.0
  %2721 = vmatprep.subr.mxu0 0.0
  %2722 = vmatpush1.msra.mxu0 0.0
  %2723 = vmatprep.subr.mxu0 0.0
  %2724 = vmatpush1.msra.mxu0 0.0
  %2725 = vmatprep.subr.mxu0 0.0
  %2726 = vmatpush1.msra.mxu0 0.0
  %2727 = vmatprep.subr.mxu0 0.0
  %2728 = vmatpush1.msra.mxu0 0.0
  %2729 = vmatprep.subr.mxu0 0.0
  %2730 = vmatpush1.msra.mxu0 0.0
  %2731 = vmatprep.subr.mxu0 0.0
  %2732 = vmatpush1.msra.mxu0 0.0
  %2733 = vmatprep.subr.mxu0 0.0
  %2734 = vmatpush1.msra.mxu0 0.0
  %2735 = vmatprep.subr.mxu0 0.0
  %2736 = vmatpush1.msra.mxu0 0.0
  %2737 = vmatprep.subr.mxu0 0.0
  %2738 = vmatpush1.msra.mxu0 0.0
  %2739 = vmatprep.subr.mxu0 0.0
  %2740 = vmatpush1.msra.mxu0 0.0
  %2741 = vmatprep.subr.mxu0 0.0
  %2742 = vmatpush1.msra.mxu0 0.0
  %2743 = vmatprep.mubr.f32.mxu0 0.0
  %2744 = vmatmul.mubr.f32.gmra.mrb[0].mxu0 %v2665
  %v2745 = vpop.f32.mrb[0].mxu0
  %v2746 = vadd.f32 0.0, %v2745
  %v2747 = vpop.f32.mrb[0].mxu0
  %v2748 = vadd.f32 0.0, %v2747
  %2749 = vdwg.mxu0
  %2750 = vmatprep.subr.mxu0 %v2677
  %2751 = vmatpush1.msra.mxu0 %v2674
  %2752 = vmatprep.subr.mxu0 0.0
  %2753 = vmatpush1.msra.mxu0 0.0
  %2754 = vmatprep.subr.mxu0 0.0
  %2755 = vmatpush1.msra.mxu0 0.0
  %2756 = vmatprep.subr.mxu0 0.0
  %2757 = vmatpush1.msra.mxu0 0.0
  %2758 = vmatprep.subr.mxu0 0.0
  %2759 = vmatpush1.msra.mxu0 0.0
  %2760 = vmatprep.subr.mxu0 0.0
  %2761 = vmatpush1.msra.mxu0 0.0
  %2762 = vmatprep.subr.mxu0 0.0
  %2763 = vmatpush1.msra.mxu0 0.0
  %2764 = vmatprep.subr.mxu0 0.0
  %2765 = vmatpush1.msra.mxu0 0.0
  %2766 = vmatprep.subr.mxu0 0.0
  %2767 = vmatpush1.msra.mxu0 0.0
  %2768 = vmatprep.subr.mxu0 0.0
  %2769 = vmatpush1.msra.mxu0 0.0
  %2770 = vmatprep.subr.mxu0 0.0
  %2771 = vmatpush1.msra.mxu0 0.0
  %2772 = vmatprep.subr.mxu0 0.0
  %2773 = vmatpush1.msra.mxu0 0.0
  %2774 = vmatprep.subr.mxu0 0.0
  %2775 = vmatpush1.msra.mxu0 0.0
  %2776 = vmatprep.subr.mxu0 0.0
  %2777 = vmatpush1.msra.mxu0 0.0
  %2778 = vmatprep.subr.mxu0 0.0
  %2779 = vmatpush1.msra.mxu0 0.0
  %2780 = vmatprep.subr.mxu0 0.0
  %2781 = vmatpush1.msra.mxu0 0.0
  %2782 = vmatprep.subr.mxu0 0.0
  %2783 = vmatpush1.msra.mxu0 0.0
  %2784 = vmatprep.subr.mxu0 0.0
  %2785 = vmatpush1.msra.mxu0 0.0
  %2786 = vmatprep.subr.mxu0 0.0
  %2787 = vmatpush1.msra.mxu0 0.0
  %2788 = vmatprep.subr.mxu0 0.0
  %2789 = vmatpush1.msra.mxu0 0.0
  %2790 = vmatprep.subr.mxu0 0.0
  %2791 = vmatpush1.msra.mxu0 0.0
  %2792 = vmatprep.subr.mxu0 0.0
  %2793 = vmatpush1.msra.mxu0 0.0
  %2794 = vmatprep.subr.mxu0 0.0
  %2795 = vmatpush1.msra.mxu0 0.0
  %2796 = vmatprep.subr.mxu0 0.0
  %2797 = vmatpush1.msra.mxu0 0.0
  %2798 = vmatprep.subr.mxu0 0.0
  %2799 = vmatpush1.msra.mxu0 0.0
  %2800 = vmatprep.subr.mxu0 0.0
  %2801 = vmatpush1.msra.mxu0 0.0
  %2802 = vmatprep.subr.mxu0 0.0
  %2803 = vmatpush1.msra.mxu0 0.0
  %2804 = vmatprep.subr.mxu0 0.0
  %2805 = vmatpush1.msra.mxu0 0.0
  %2806 = vmatprep.subr.mxu0 0.0
  %2807 = vmatpush1.msra.mxu0 0.0
  %2808 = vmatprep.subr.mxu0 0.0
  %2809 = vmatpush1.msra.mxu0 0.0
  %2810 = vmatprep.subr.mxu0 0.0
  %2811 = vmatpush1.msra.mxu0 0.0
  %2812 = vmatprep.subr.mxu0 0.0
  %2813 = vmatpush1.msra.mxu0 0.0
  %2814 = vmatprep.mubr.f32.mxu0 0.0
  %2815 = vmatmul.mubr.f32.gmra.mrb[0].mxu0 %v2665
  %v2816 = vpop.f32.mrb[0].mxu0
  %v2817 = vadd.f32 0.0, %v2816
  %v2818 = vpop.f32.mrb[0].mxu0
  %v2819 = vadd.f32 0.0, %v2818
  %2820 = vdwg.mxu0
  %v2821 = vadd.f32 %v2642, %v2746
  %v2822 = vadd.f32 %v2643, %v2748
  %v2823 = vadd.f32 %v2644, %v2817
  %v2824 = vadd.f32 %v2645, %v2819
  %s2825 = scalar_lea.vmem %s8, 32
  %v2826 = vld [vmem:[%s2825] sm:$0xff]
  %v2828 = vsel %vm72, %v2826, 0
  %v2830 = vsel %vm79, %v2110, 0
  %v2832 = vsel %vm79, %v2111, 0
  %v2834 = vsel %vm79, %v2112, 0
  %v2836 = vsel %vm79, %v2113, 0
  %2838 = vmatprep.subr.mxu0 %v2832
  %2839 = vmatpush1.msra.mxu0 %v2830
  %2840 = vmatprep.subr.mxu0 0.0
  %2841 = vmatpush1.msra.mxu0 0.0
  %2842 = vmatprep.subr.mxu0 0.0
  %2843 = vmatpush1.msra.mxu0 0.0
  %2844 = vmatprep.subr.mxu0 0.0
  %2845 = vmatpush1.msra.mxu0 0.0
  %2846 = vmatprep.subr.mxu0 0.0
  %2847 = vmatpush1.msra.mxu0 0.0
  %2848 = vmatprep.subr.mxu0 0.0
  %2849 = vmatpush1.msra.mxu0 0.0
  %2850 = vmatprep.subr.mxu0 0.0
  %2851 = vmatpush1.msra.mxu0 0.0
  %2852 = vmatprep.subr.mxu0 0.0
  %2853 = vmatpush1.msra.mxu0 0.0
  %2854 = vmatprep.subr.mxu0 0.0
  %2855 = vmatpush1.msra.mxu0 0.0
  %2856 = vmatprep.subr.mxu0 0.0
  %2857 = vmatpush1.msra.mxu0 0.0
  %2858 = vmatprep.subr.mxu0 0.0
  %2859 = vmatpush1.msra.mxu0 0.0
  %2860 = vmatprep.subr.mxu0 0.0
  %2861 = vmatpush1.msra.mxu0 0.0
  %2862 = vmatprep.subr.mxu0 0.0
  %2863 = vmatpush1.msra.mxu0 0.0
  %2864 = vmatprep.subr.mxu0 0.0
  %2865 = vmatpush1.msra.mxu0 0.0
  %2866 = vmatprep.subr.mxu0 0.0
  %2867 = vmatpush1.msra.mxu0 0.0
  %2868 = vmatprep.subr.mxu0 0.0
  %2869 = vmatpush1.msra.mxu0 0.0
  %2870 = vmatprep.subr.mxu0 0.0
  %2871 = vmatpush1.msra.mxu0 0.0
  %2872 = vmatprep.subr.mxu0 0.0
  %2873 = vmatpush1.msra.mxu0 0.0
  %2874 = vmatprep.subr.mxu0 0.0
  %2875 = vmatpush1.msra.mxu0 0.0
  %2876 = vmatprep.subr.mxu0 0.0
  %2877 = vmatpush1.msra.mxu0 0.0
  %2878 = vmatprep.subr.mxu0 0.0
  %2879 = vmatpush1.msra.mxu0 0.0
  %2880 = vmatprep.subr.mxu0 0.0
  %2881 = vmatpush1.msra.mxu0 0.0
  %2882 = vmatprep.subr.mxu0 0.0
  %2883 = vmatpush1.msra.mxu0 0.0
  %2884 = vmatprep.subr.mxu0 0.0
  %2885 = vmatpush1.msra.mxu0 0.0
  %2886 = vmatprep.subr.mxu0 0.0
  %2887 = vmatpush1.msra.mxu0 0.0
  %2888 = vmatprep.subr.mxu0 0.0
  %2889 = vmatpush1.msra.mxu0 0.0
  %2890 = vmatprep.subr.mxu0 0.0
  %2891 = vmatpush1.msra.mxu0 0.0
  %2892 = vmatprep.subr.mxu0 0.0
  %2893 = vmatpush1.msra.mxu0 0.0
  %2894 = vmatprep.subr.mxu0 0.0
  %2895 = vmatpush1.msra.mxu0 0.0
  %2896 = vmatprep.subr.mxu0 0.0
  %2897 = vmatpush1.msra.mxu0 0.0
  %2898 = vmatprep.subr.mxu0 0.0
  %2899 = vmatpush1.msra.mxu0 0.0
  %2900 = vmatprep.subr.mxu0 0.0
  %2901 = vmatpush1.msra.mxu0 0.0
  %2902 = vmatprep.mubr.f32.mxu0 0.0
  %2903 = vmatmul.mubr.f32.gmra.mrb[0].mxu0 %v2828
  %v2904 = vpop.f32.mrb[0].mxu0
  %v2905 = vadd.f32 0.0, %v2904
  %v2906 = vpop.f32.mrb[0].mxu0
  %v2907 = vadd.f32 0.0, %v2906
  %2908 = vdwg.mxu0
  %2909 = vmatprep.subr.mxu0 %v2836
  %2910 = vmatpush1.msra.mxu0 %v2834
  %2911 = vmatprep.subr.mxu0 0.0
  %2912 = vmatpush1.msra.mxu0 0.0
  %2913 = vmatprep.subr.mxu0 0.0
  %2914 = vmatpush1.msra.mxu0 0.0
  %2915 = vmatprep.subr.mxu0 0.0
  %2916 = vmatpush1.msra.mxu0 0.0
  %2917 = vmatprep.subr.mxu0 0.0
  %2918 = vmatpush1.msra.mxu0 0.0
  %2919 = vmatprep.subr.mxu0 0.0
  %2920 = vmatpush1.msra.mxu0 0.0
  %2921 = vmatprep.subr.mxu0 0.0
  %2922 = vmatpush1.msra.mxu0 0.0
  %2923 = vmatprep.subr.mxu0 0.0
  %2924 = vmatpush1.msra.mxu0 0.0
  %2925 = vmatprep.subr.mxu0 0.0
  %2926 = vmatpush1.msra.mxu0 0.0
  %2927 = vmatprep.subr.mxu0 0.0
  %2928 = vmatpush1.msra.mxu0 0.0
  %2929 = vmatprep.subr.mxu0 0.0
  %2930 = vmatpush1.msra.mxu0 0.0
  %2931 = vmatprep.subr.mxu0 0.0
  %2932 = vmatpush1.msra.mxu0 0.0
  %2933 = vmatprep.subr.mxu0 0.0
  %2934 = vmatpush1.msra.mxu0 0.0
  %2935 = vmatprep.subr.mxu0 0.0
  %2936 = vmatpush1.msra.mxu0 0.0
  %2937 = vmatprep.subr.mxu0 0.0
  %2938 = vmatpush1.msra.mxu0 0.0
  %2939 = vmatprep.subr.mxu0 0.0
  %2940 = vmatpush1.msra.mxu0 0.0
  %2941 = vmatprep.subr.mxu0 0.0
  %2942 = vmatpush1.msra.mxu0 0.0
  %2943 = vmatprep.subr.mxu0 0.0
  %2944 = vmatpush1.msra.mxu0 0.0
  %2945 = vmatprep.subr.mxu0 0.0
  %2946 = vmatpush1.msra.mxu0 0.0
  %2947 = vmatprep.subr.mxu0 0.0
  %2948 = vmatpush1.msra.mxu0 0.0
  %2949 = vmatprep.subr.mxu0 0.0
  %2950 = vmatpush1.msra.mxu0 0.0
  %2951 = vmatprep.subr.mxu0 0.0
  %2952 = vmatpush1.msra.mxu0 0.0
  %2953 = vmatprep.subr.mxu0 0.0
  %2954 = vmatpush1.msra.mxu0 0.0
  %2955 = vmatprep.subr.mxu0 0.0
  %2956 = vmatpush1.msra.mxu0 0.0
  %2957 = vmatprep.subr.mxu0 0.0
  %2958 = vmatpush1.msra.mxu0 0.0
  %2959 = vmatprep.subr.mxu0 0.0
  %2960 = vmatpush1.msra.mxu0 0.0
  %2961 = vmatprep.subr.mxu0 0.0
  %2962 = vmatpush1.msra.mxu0 0.0
  %2963 = vmatprep.subr.mxu0 0.0
  %2964 = vmatpush1.msra.mxu0 0.0
  %2965 = vmatprep.subr.mxu0 0.0
  %2966 = vmatpush1.msra.mxu0 0.0
  %2967 = vmatprep.subr.mxu0 0.0
  %2968 = vmatpush1.msra.mxu0 0.0
  %2969 = vmatprep.subr.mxu0 0.0
  %2970 = vmatpush1.msra.mxu0 0.0
  %2971 = vmatprep.subr.mxu0 0.0
  %2972 = vmatpush1.msra.mxu0 0.0
  %2973 = vmatprep.mubr.f32.mxu0 0.0
  %2974 = vmatmul.mubr.f32.gmra.mrb[0].mxu0 %v2828
  %v2975 = vpop.f32.mrb[0].mxu0
  %v2976 = vadd.f32 0.0, %v2975
  %v2977 = vpop.f32.mrb[0].mxu0
  %v2978 = vadd.f32 0.0, %v2977
  %2979 = vdwg.mxu0
  %v2980 = vadd.f32 %v2821, %v2905
  %v2981 = vadd.f32 %v2822, %v2907
  %v2982 = vadd.f32 %v2823, %v2976
  %v2983 = vadd.f32 %v2824, %v2978
  %2984 = vrot.lane.b32.xlu0 %v2110, 127
  %v2985 = vpop.permute.xlu0 %2984
  %2986 = vrot.lane.b32.xlu0 %v2111, 127
  %v2987 = vpop.permute.xlu0 %2986
  %2988 = vrot.lane.b32.xlu0 %v2112, 127
  %v2989 = vpop.permute.xlu0 %2988
  %2990 = vrot.lane.b32.xlu0 %v2113, 127
  %v2991 = vpop.permute.xlu0 %2990
  %v2992 = vsel %vm1286, %v2989, %v2991
  %v2993 = vsel %vm1286, %v2987, %v2989
  %v2994 = vsel %vm1286, %v2985, %v2987
  %v2995 = vsel %vm1286, %v2991, %v2985
  %v2996 = vmul.f32 %v2994, %v1294
  %v2997 = vmul.f32 %v2993, %v1298
  %v2998 = vmul.f32 %v2992, %v1302
  %v2999 = vmul.f32 %v2995, %v1306
  %s3000 = scalar_lea.vmem %s8, 40
  %v3001 = vld [vmem:[%s3000] sm:$0xff]
  %v3003 = vsel %vm72, %v3001, 0
  %v3006 = vsel %vm79, %v2996, 0
  %v3009 = vsel %vm79, %v2997, 0
  %v3012 = vsel %vm79, %v2998, 0
  %v3015 = vsel %vm79, %v2999, 0
  %3017 = vmatprep.subr.mxu0 %v3009
  %3018 = vmatpush1.msra.mxu0 %v3006
  %3019 = vmatprep.subr.mxu0 0.0
  %3020 = vmatpush1.msra.mxu0 0.0
  %3021 = vmatprep.subr.mxu0 0.0
  %3022 = vmatpush1.msra.mxu0 0.0
  %3023 = vmatprep.subr.mxu0 0.0
  %3024 = vmatpush1.msra.mxu0 0.0
  %3025 = vmatprep.subr.mxu0 0.0
  %3026 = vmatpush1.msra.mxu0 0.0
  %3027 = vmatprep.subr.mxu0 0.0
  %3028 = vmatpush1.msra.mxu0 0.0
  %3029 = vmatprep.subr.mxu0 0.0
  %3030 = vmatpush1.msra.mxu0 0.0
  %3031 = vmatprep.subr.mxu0 0.0
  %3032 = vmatpush1.msra.mxu0 0.0
  %3033 = vmatprep.subr.mxu0 0.0
  %3034 = vmatpush1.msra.mxu0 0.0
  %3035 = vmatprep.subr.mxu0 0.0
  %3036 = vmatpush1.msra.mxu0 0.0
  %3037 = vmatprep.subr.mxu0 0.0
  %3038 = vmatpush1.msra.mxu0 0.0
  %3039 = vmatprep.subr.mxu0 0.0
  %3040 = vmatpush1.msra.mxu0 0.0
  %3041 = vmatprep.subr.mxu0 0.0
  %3042 = vmatpush1.msra.mxu0 0.0
  %3043 = vmatprep.subr.mxu0 0.0
  %3044 = vmatpush1.msra.mxu0 0.0
  %3045 = vmatprep.subr.mxu0 0.0
  %3046 = vmatpush1.msra.mxu0 0.0
  %3047 = vmatprep.subr.mxu0 0.0
  %3048 = vmatpush1.msra.mxu0 0.0
  %3049 = vmatprep.subr.mxu0 0.0
  %3050 = vmatpush1.msra.mxu0 0.0
  %3051 = vmatprep.subr.mxu0 0.0
  %3052 = vmatpush1.msra.mxu0 0.0
  %3053 = vmatprep.subr.mxu0 0.0
  %3054 = vmatpush1.msra.mxu0 0.0
  %3055 = vmatprep.subr.mxu0 0.0
  %3056 = vmatpush1.msra.mxu0 0.0
  %3057 = vmatprep.subr.mxu0 0.0
  %3058 = vmatpush1.msra.mxu0 0.0
  %3059 = vmatprep.subr.mxu0 0.0
  %3060 = vmatpush1.msra.mxu0 0.0
  %3061 = vmatprep.subr.mxu0 0.0
  %3062 = vmatpush1.msra.mxu0 0.0
  %3063 = vmatprep.subr.mxu0 0.0
  %3064 = vmatpush1.msra.mxu0 0.0
  %3065 = vmatprep.subr.mxu0 0.0
  %3066 = vmatpush1.msra.mxu0 0.0
  %3067 = vmatprep.subr.mxu0 0.0
  %3068 = vmatpush1.msra.mxu0 0.0
  %3069 = vmatprep.subr.mxu0 0.0
  %3070 = vmatpush1.msra.mxu0 0.0
  %3071 = vmatprep.subr.mxu0 0.0
  %3072 = vmatpush1.msra.mxu0 0.0
  %3073 = vmatprep.subr.mxu0 0.0
  %3074 = vmatpush1.msra.mxu0 0.0
  %3075 = vmatprep.subr.mxu0 0.0
  %3076 = vmatpush1.msra.mxu0 0.0
  %3077 = vmatprep.subr.mxu0 0.0
  %3078 = vmatpush1.msra.mxu0 0.0
  %3079 = vmatprep.subr.mxu0 0.0
  %3080 = vmatpush1.msra.mxu0 0.0
  %3081 = vmatprep.mubr.f32.mxu0 0.0
  %3082 = vmatmul.mubr.f32.gmra.mrb[0].mxu0 %v3003
  %v3083 = vpop.f32.mrb[0].mxu0
  %v3084 = vadd.f32 0.0, %v3083
  %v3085 = vpop.f32.mrb[0].mxu0
  %v3086 = vadd.f32 0.0, %v3085
  %3087 = vdwg.mxu0
  %3088 = vmatprep.subr.mxu0 %v3015
  %3089 = vmatpush1.msra.mxu0 %v3012
  %3090 = vmatprep.subr.mxu0 0.0
  %3091 = vmatpush1.msra.mxu0 0.0
  %3092 = vmatprep.subr.mxu0 0.0
  %3093 = vmatpush1.msra.mxu0 0.0
  %3094 = vmatprep.subr.mxu0 0.0
  %3095 = vmatpush1.msra.mxu0 0.0
  %3096 = vmatprep.subr.mxu0 0.0
  %3097 = vmatpush1.msra.mxu0 0.0
  %3098 = vmatprep.subr.mxu0 0.0
  %3099 = vmatpush1.msra.mxu0 0.0
  %3100 = vmatprep.subr.mxu0 0.0
  %3101 = vmatpush1.msra.mxu0 0.0
  %3102 = vmatprep.subr.mxu0 0.0
  %3103 = vmatpush1.msra.mxu0 0.0
  %3104 = vmatprep.subr.mxu0 0.0
  %3105 = vmatpush1.msra.mxu0 0.0
  %3106 = vmatprep.subr.mxu0 0.0
  %3107 = vmatpush1.msra.mxu0 0.0
  %3108 = vmatprep.subr.mxu0 0.0
  %3109 = vmatpush1.msra.mxu0 0.0
  %3110 = vmatprep.subr.mxu0 0.0
  %3111 = vmatpush1.msra.mxu0 0.0
  %3112 = vmatprep.subr.mxu0 0.0
  %3113 = vmatpush1.msra.mxu0 0.0
  %3114 = vmatprep.subr.mxu0 0.0
  %3115 = vmatpush1.msra.mxu0 0.0
  %3116 = vmatprep.subr.mxu0 0.0
  %3117 = vmatpush1.msra.mxu0 0.0
  %3118 = vmatprep.subr.mxu0 0.0
  %3119 = vmatpush1.msra.mxu0 0.0
  %3120 = vmatprep.subr.mxu0 0.0
  %3121 = vmatpush1.msra.mxu0 0.0
  %3122 = vmatprep.subr.mxu0 0.0
  %3123 = vmatpush1.msra.mxu0 0.0
  %3124 = vmatprep.subr.mxu0 0.0
  %3125 = vmatpush1.msra.mxu0 0.0
  %3126 = vmatprep.subr.mxu0 0.0
  %3127 = vmatpush1.msra.mxu0 0.0
  %3128 = vmatprep.subr.mxu0 0.0
  %3129 = vmatpush1.msra.mxu0 0.0
  %3130 = vmatprep.subr.mxu0 0.0
  %3131 = vmatpush1.msra.mxu0 0.0
  %3132 = vmatprep.subr.mxu0 0.0
  %3133 = vmatpush1.msra.mxu0 0.0
  %3134 = vmatprep.subr.mxu0 0.0
  %3135 = vmatpush1.msra.mxu0 0.0
  %3136 = vmatprep.subr.mxu0 0.0
  %3137 = vmatpush1.msra.mxu0 0.0
  %3138 = vmatprep.subr.mxu0 0.0
  %3139 = vmatpush1.msra.mxu0 0.0
  %3140 = vmatprep.subr.mxu0 0.0
  %3141 = vmatpush1.msra.mxu0 0.0
  %3142 = vmatprep.subr.mxu0 0.0
  %3143 = vmatpush1.msra.mxu0 0.0
  %3144 = vmatprep.subr.mxu0 0.0
  %3145 = vmatpush1.msra.mxu0 0.0
  %3146 = vmatprep.subr.mxu0 0.0
  %3147 = vmatpush1.msra.mxu0 0.0
  %3148 = vmatprep.subr.mxu0 0.0
  %3149 = vmatpush1.msra.mxu0 0.0
  %3150 = vmatprep.subr.mxu0 0.0
  %3151 = vmatpush1.msra.mxu0 0.0
  %3152 = vmatprep.mubr.f32.mxu0 0.0
  %3153 = vmatmul.mubr.f32.gmra.mrb[0].mxu0 %v3003
  %v3154 = vpop.f32.mrb[0].mxu0
  %v3155 = vadd.f32 0.0, %v3154
  %v3156 = vpop.f32.mrb[0].mxu0
  %v3157 = vadd.f32 0.0, %v3156
  %3158 = vdwg.mxu0
  %v3159 = vadd.f32 %v2980, %v3084
  %v3160 = vadd.f32 %v2981, %v3086
  %v3161 = vadd.f32 %v2982, %v3155
  %v3162 = vadd.f32 %v2983, %v3157
  %3163 = vrot.lane.b32.xlu0 %v2110, 113
  %v3164 = vpop.permute.xlu0 %3163
  %3165 = vrot.lane.b32.xlu0 %v2111, 113
  %v3166 = vpop.permute.xlu0 %3165
  %3167 = vrot.lane.b32.xlu0 %v2112, 113
  %v3168 = vpop.permute.xlu0 %3167
  %3169 = vrot.lane.b32.xlu0 %v2113, 113
  %v3170 = vpop.permute.xlu0 %3169
  %v3171 = vsel %vm1482, %v3168, %v3170
  %v3172 = vsel %vm1482, %v3166, %v3168
  %v3173 = vsel %vm1482, %v3164, %v3166
  %v3174 = vsel %vm1482, %v3170, %v3164
  %v3175 = vmul.f32 %v3173, %v1490
  %v3176 = vmul.f32 %v3172, %v1494
  %v3177 = vmul.f32 %v3171, %v1498
  %v3178 = vmul.f32 %v3174, %v1502
  %s3179 = scalar_lea.vmem %s8, 48
  %v3180 = vld [vmem:[%s3179] sm:$0xff]
  %v3182 = vsel %vm72, %v3180, 0
  %v3185 = vsel %vm79, %v3175, 0
  %v3188 = vsel %vm79, %v3176, 0
  %v3191 = vsel %vm79, %v3177, 0
  %v3194 = vsel %vm79, %v3178, 0
  %3196 = vmatprep.subr.mxu0 %v3188
  %3197 = vmatpush1.msra.mxu0 %v3185
  %3198 = vmatprep.subr.mxu0 0.0
  %3199 = vmatpush1.msra.mxu0 0.0
  %3200 = vmatprep.subr.mxu0 0.0
  %3201 = vmatpush1.msra.mxu0 0.0
  %3202 = vmatprep.subr.mxu0 0.0
  %3203 = vmatpush1.msra.mxu0 0.0
  %3204 = vmatprep.subr.mxu0 0.0
  %3205 = vmatpush1.msra.mxu0 0.0
  %3206 = vmatprep.subr.mxu0 0.0
  %3207 = vmatpush1.msra.mxu0 0.0
  %3208 = vmatprep.subr.mxu0 0.0
  %3209 = vmatpush1.msra.mxu0 0.0
  %3210 = vmatprep.subr.mxu0 0.0
  %3211 = vmatpush1.msra.mxu0 0.0
  %3212 = vmatprep.subr.mxu0 0.0
  %3213 = vmatpush1.msra.mxu0 0.0
  %3214 = vmatprep.subr.mxu0 0.0
  %3215 = vmatpush1.msra.mxu0 0.0
  %3216 = vmatprep.subr.mxu0 0.0
  %3217 = vmatpush1.msra.mxu0 0.0
  %3218 = vmatprep.subr.mxu0 0.0
  %3219 = vmatpush1.msra.mxu0 0.0
  %3220 = vmatprep.subr.mxu0 0.0
  %3221 = vmatpush1.msra.mxu0 0.0
  %3222 = vmatprep.subr.mxu0 0.0
  %3223 = vmatpush1.msra.mxu0 0.0
  %3224 = vmatprep.subr.mxu0 0.0
  %3225 = vmatpush1.msra.mxu0 0.0
  %3226 = vmatprep.subr.mxu0 0.0
  %3227 = vmatpush1.msra.mxu0 0.0
  %3228 = vmatprep.subr.mxu0 0.0
  %3229 = vmatpush1.msra.mxu0 0.0
  %3230 = vmatprep.subr.mxu0 0.0
  %3231 = vmatpush1.msra.mxu0 0.0
  %3232 = vmatprep.subr.mxu0 0.0
  %3233 = vmatpush1.msra.mxu0 0.0
  %3234 = vmatprep.subr.mxu0 0.0
  %3235 = vmatpush1.msra.mxu0 0.0
  %3236 = vmatprep.subr.mxu0 0.0
  %3237 = vmatpush1.msra.mxu0 0.0
  %3238 = vmatprep.subr.mxu0 0.0
  %3239 = vmatpush1.msra.mxu0 0.0
  %3240 = vmatprep.subr.mxu0 0.0
  %3241 = vmatpush1.msra.mxu0 0.0
  %3242 = vmatprep.subr.mxu0 0.0
  %3243 = vmatpush1.msra.mxu0 0.0
  %3244 = vmatprep.subr.mxu0 0.0
  %3245 = vmatpush1.msra.mxu0 0.0
  %3246 = vmatprep.subr.mxu0 0.0
  %3247 = vmatpush1.msra.mxu0 0.0
  %3248 = vmatprep.subr.mxu0 0.0
  %3249 = vmatpush1.msra.mxu0 0.0
  %3250 = vmatprep.subr.mxu0 0.0
  %3251 = vmatpush1.msra.mxu0 0.0
  %3252 = vmatprep.subr.mxu0 0.0
  %3253 = vmatpush1.msra.mxu0 0.0
  %3254 = vmatprep.subr.mxu0 0.0
  %3255 = vmatpush1.msra.mxu0 0.0
  %3256 = vmatprep.subr.mxu0 0.0
  %3257 = vmatpush1.msra.mxu0 0.0
  %3258 = vmatprep.subr.mxu0 0.0
  %3259 = vmatpush1.msra.mxu0 0.0
  %3260 = vmatprep.mubr.f32.mxu0 0.0
  %3261 = vmatmul.mubr.f32.gmra.mrb[0].mxu0 %v3182
  %v3262 = vpop.f32.mrb[0].mxu0
  %v3263 = vadd.f32 0.0, %v3262
  %v3264 = vpop.f32.mrb[0].mxu0
  %v3265 = vadd.f32 0.0, %v3264
  %3266 = vdwg.mxu0
  %3267 = vmatprep.subr.mxu0 %v3194
  %3268 = vmatpush1.msra.mxu0 %v3191
  %3269 = vmatprep.subr.mxu0 0.0
  %3270 = vmatpush1.msra.mxu0 0.0
  %3271 = vmatprep.subr.mxu0 0.0
  %3272 = vmatpush1.msra.mxu0 0.0
  %3273 = vmatprep.subr.mxu0 0.0
  %3274 = vmatpush1.msra.mxu0 0.0
  %3275 = vmatprep.subr.mxu0 0.0
  %3276 = vmatpush1.msra.mxu0 0.0
  %3277 = vmatprep.subr.mxu0 0.0
  %3278 = vmatpush1.msra.mxu0 0.0
  %3279 = vmatprep.subr.mxu0 0.0
  %3280 = vmatpush1.msra.mxu0 0.0
  %3281 = vmatprep.subr.mxu0 0.0
  %3282 = vmatpush1.msra.mxu0 0.0
  %3283 = vmatprep.subr.mxu0 0.0
  %3284 = vmatpush1.msra.mxu0 0.0
  %3285 = vmatprep.subr.mxu0 0.0
  %3286 = vmatpush1.msra.mxu0 0.0
  %3287 = vmatprep.subr.mxu0 0.0
  %3288 = vmatpush1.msra.mxu0 0.0
  %3289 = vmatprep.subr.mxu0 0.0
  %3290 = vmatpush1.msra.mxu0 0.0
  %3291 = vmatprep.subr.mxu0 0.0
  %3292 = vmatpush1.msra.mxu0 0.0
  %3293 = vmatprep.subr.mxu0 0.0
  %3294 = vmatpush1.msra.mxu0 0.0
  %3295 = vmatprep.subr.mxu0 0.0
  %3296 = vmatpush1.msra.mxu0 0.0
  %3297 = vmatprep.subr.mxu0 0.0
  %3298 = vmatpush1.msra.mxu0 0.0
  %3299 = vmatprep.subr.mxu0 0.0
  %3300 = vmatpush1.msra.mxu0 0.0
  %3301 = vmatprep.subr.mxu0 0.0
  %3302 = vmatpush1.msra.mxu0 0.0
  %3303 = vmatprep.subr.mxu0 0.0
  %3304 = vmatpush1.msra.mxu0 0.0
  %3305 = vmatprep.subr.mxu0 0.0
  %3306 = vmatpush1.msra.mxu0 0.0
  %3307 = vmatprep.subr.mxu0 0.0
  %3308 = vmatpush1.msra.mxu0 0.0
  %3309 = vmatprep.subr.mxu0 0.0
  %3310 = vmatpush1.msra.mxu0 0.0
  %3311 = vmatprep.subr.mxu0 0.0
  %3312 = vmatpush1.msra.mxu0 0.0
  %3313 = vmatprep.subr.mxu0 0.0
  %3314 = vmatpush1.msra.mxu0 0.0
  %3315 = vmatprep.subr.mxu0 0.0
  %3316 = vmatpush1.msra.mxu0 0.0
  %3317 = vmatprep.subr.mxu0 0.0
  %3318 = vmatpush1.msra.mxu0 0.0
  %3319 = vmatprep.subr.mxu0 0.0
  %3320 = vmatpush1.msra.mxu0 0.0
  %3321 = vmatprep.subr.mxu0 0.0
  %3322 = vmatpush1.msra.mxu0 0.0
  %3323 = vmatprep.subr.mxu0 0.0
  %3324 = vmatpush1.msra.mxu0 0.0
  %3325 = vmatprep.subr.mxu0 0.0
  %3326 = vmatpush1.msra.mxu0 0.0
  %3327 = vmatprep.subr.mxu0 0.0
  %3328 = vmatpush1.msra.mxu0 0.0
  %3329 = vmatprep.subr.mxu0 0.0
  %3330 = vmatpush1.msra.mxu0 0.0
  %3331 = vmatprep.mubr.f32.mxu0 0.0
  %3332 = vmatmul.mubr.f32.gmra.mrb[0].mxu0 %v3182
  %v3333 = vpop.f32.mrb[0].mxu0
  %v3334 = vadd.f32 0.0, %v3333
  %v3335 = vpop.f32.mrb[0].mxu0
  %v3336 = vadd.f32 0.0, %v3335
  %3337 = vdwg.mxu0
  %v3338 = vadd.f32 %v3159, %v3263
  %v3339 = vadd.f32 %v3160, %v3265
  %v3340 = vadd.f32 %v3161, %v3334
  %v3341 = vadd.f32 %v3162, %v3336
  %3342 = vrot.lane.b32.xlu0 %v2110, 112
  %v3343 = vpop.permute.xlu0 %3342
  %3344 = vrot.lane.b32.xlu0 %v2111, 112
  %v3345 = vpop.permute.xlu0 %3344
  %3346 = vrot.lane.b32.xlu0 %v2112, 112
  %v3347 = vpop.permute.xlu0 %3346
  %3348 = vrot.lane.b32.xlu0 %v2113, 112
  %v3349 = vpop.permute.xlu0 %3348
  %v3350 = vsel %vm1678, %v3347, %v3349
  %v3351 = vsel %vm1678, %v3345, %v3347
  %v3352 = vsel %vm1678, %v3343, %v3345
  %v3353 = vsel %vm1678, %v3349, %v3343
  %v3354 = vmul.f32 %v3352, %v1686
  %v3355 = vmul.f32 %v3351, %v1690
  %v3356 = vmul.f32 %v3350, %v1694
  %v3357 = vmul.f32 %v3353, %v1698
  %s3358 = scalar_lea.vmem %s8, 56
  %v3359 = vld [vmem:[%s3358] sm:$0xff]
  %v3361 = vsel %vm72, %v3359, 0
  %v3364 = vsel %vm79, %v3354, 0
  %v3367 = vsel %vm79, %v3355, 0
  %v3370 = vsel %vm79, %v3356, 0
  %v3373 = vsel %vm79, %v3357, 0
  %3375 = vmatprep.subr.mxu0 %v3367
  %3376 = vmatpush1.msra.mxu0 %v3364
  %3377 = vmatprep.subr.mxu0 0.0
  %3378 = vmatpush1.msra.mxu0 0.0
  %3379 = vmatprep.subr.mxu0 0.0
  %3380 = vmatpush1.msra.mxu0 0.0
  %3381 = vmatprep.subr.mxu0 0.0
  %3382 = vmatpush1.msra.mxu0 0.0
  %3383 = vmatprep.subr.mxu0 0.0
  %3384 = vmatpush1.msra.mxu0 0.0
  %3385 = vmatprep.subr.mxu0 0.0
  %3386 = vmatpush1.msra.mxu0 0.0
  %3387 = vmatprep.subr.mxu0 0.0
  %3388 = vmatpush1.msra.mxu0 0.0
  %3389 = vmatprep.subr.mxu0 0.0
  %3390 = vmatpush1.msra.mxu0 0.0
  %3391 = vmatprep.subr.mxu0 0.0
  %3392 = vmatpush1.msra.mxu0 0.0
  %3393 = vmatprep.subr.mxu0 0.0
  %3394 = vmatpush1.msra.mxu0 0.0
  %3395 = vmatprep.subr.mxu0 0.0
  %3396 = vmatpush1.msra.mxu0 0.0
  %3397 = vmatprep.subr.mxu0 0.0
  %3398 = vmatpush1.msra.mxu0 0.0
  %3399 = vmatprep.subr.mxu0 0.0
  %3400 = vmatpush1.msra.mxu0 0.0
  %3401 = vmatprep.subr.mxu0 0.0
  %3402 = vmatpush1.msra.mxu0 0.0
  %3403 = vmatprep.subr.mxu0 0.0
  %3404 = vmatpush1.msra.mxu0 0.0
  %3405 = vmatprep.subr.mxu0 0.0
  %3406 = vmatpush1.msra.mxu0 0.0
  %3407 = vmatprep.subr.mxu0 0.0
  %3408 = vmatpush1.msra.mxu0 0.0
  %3409 = vmatprep.subr.mxu0 0.0
  %3410 = vmatpush1.msra.mxu0 0.0
  %3411 = vmatprep.subr.mxu0 0.0
  %3412 = vmatpush1.msra.mxu0 0.0
  %3413 = vmatprep.subr.mxu0 0.0
  %3414 = vmatpush1.msra.mxu0 0.0
  %3415 = vmatprep.subr.mxu0 0.0
  %3416 = vmatpush1.msra.mxu0 0.0
  %3417 = vmatprep.subr.mxu0 0.0
  %3418 = vmatpush1.msra.mxu0 0.0
  %3419 = vmatprep.subr.mxu0 0.0
  %3420 = vmatpush1.msra.mxu0 0.0
  %3421 = vmatprep.subr.mxu0 0.0
  %3422 = vmatpush1.msra.mxu0 0.0
  %3423 = vmatprep.subr.mxu0 0.0
  %3424 = vmatpush1.msra.mxu0 0.0
  %3425 = vmatprep.subr.mxu0 0.0
  %3426 = vmatpush1.msra.mxu0 0.0
  %3427 = vmatprep.subr.mxu0 0.0
  %3428 = vmatpush1.msra.mxu0 0.0
  %3429 = vmatprep.subr.mxu0 0.0
  %3430 = vmatpush1.msra.mxu0 0.0
  %3431 = vmatprep.subr.mxu0 0.0
  %3432 = vmatpush1.msra.mxu0 0.0
  %3433 = vmatprep.subr.mxu0 0.0
  %3434 = vmatpush1.msra.mxu0 0.0
  %3435 = vmatprep.subr.mxu0 0.0
  %3436 = vmatpush1.msra.mxu0 0.0
  %3437 = vmatprep.subr.mxu0 0.0
  %3438 = vmatpush1.msra.mxu0 0.0
  %3439 = vmatprep.mubr.f32.mxu0 0.0
  %3440 = vmatmul.mubr.f32.gmra.mrb[0].mxu0 %v3361
  %v3441 = vpop.f32.mrb[0].mxu0
  %v3442 = vadd.f32 0.0, %v3441
  %v3443 = vpop.f32.mrb[0].mxu0
  %v3444 = vadd.f32 0.0, %v3443
  %3445 = vdwg.mxu0
  %3446 = vmatprep.subr.mxu0 %v3373
  %3447 = vmatpush1.msra.mxu0 %v3370
  %3448 = vmatprep.subr.mxu0 0.0
  %3449 = vmatpush1.msra.mxu0 0.0
  %3450 = vmatprep.subr.mxu0 0.0
  %3451 = vmatpush1.msra.mxu0 0.0
  %3452 = vmatprep.subr.mxu0 0.0
  %3453 = vmatpush1.msra.mxu0 0.0
  %3454 = vmatprep.subr.mxu0 0.0
  %3455 = vmatpush1.msra.mxu0 0.0
  %3456 = vmatprep.subr.mxu0 0.0
  %3457 = vmatpush1.msra.mxu0 0.0
  %3458 = vmatprep.subr.mxu0 0.0
  %3459 = vmatpush1.msra.mxu0 0.0
  %3460 = vmatprep.subr.mxu0 0.0
  %3461 = vmatpush1.msra.mxu0 0.0
  %3462 = vmatprep.subr.mxu0 0.0
  %3463 = vmatpush1.msra.mxu0 0.0
  %3464 = vmatprep.subr.mxu0 0.0
  %3465 = vmatpush1.msra.mxu0 0.0
  %3466 = vmatprep.subr.mxu0 0.0
  %3467 = vmatpush1.msra.mxu0 0.0
  %3468 = vmatprep.subr.mxu0 0.0
  %3469 = vmatpush1.msra.mxu0 0.0
  %3470 = vmatprep.subr.mxu0 0.0
  %3471 = vmatpush1.msra.mxu0 0.0
  %3472 = vmatprep.subr.mxu0 0.0
  %3473 = vmatpush1.msra.mxu0 0.0
  %3474 = vmatprep.subr.mxu0 0.0
  %3475 = vmatpush1.msra.mxu0 0.0
  %3476 = vmatprep.subr.mxu0 0.0
  %3477 = vmatpush1.msra.mxu0 0.0
  %3478 = vmatprep.subr.mxu0 0.0
  %3479 = vmatpush1.msra.mxu0 0.0
  %3480 = vmatprep.subr.mxu0 0.0
  %3481 = vmatpush1.msra.mxu0 0.0
  %3482 = vmatprep.subr.mxu0 0.0
  %3483 = vmatpush1.msra.mxu0 0.0
  %3484 = vmatprep.subr.mxu0 0.0
  %3485 = vmatpush1.msra.mxu0 0.0
  %3486 = vmatprep.subr.mxu0 0.0
  %3487 = vmatpush1.msra.mxu0 0.0
  %3488 = vmatprep.subr.mxu0 0.0
  %3489 = vmatpush1.msra.mxu0 0.0
  %3490 = vmatprep.subr.mxu0 0.0
  %3491 = vmatpush1.msra.mxu0 0.0
  %3492 = vmatprep.subr.mxu0 0.0
  %3493 = vmatpush1.msra.mxu0 0.0
  %3494 = vmatprep.subr.mxu0 0.0
  %3495 = vmatpush1.msra.mxu0 0.0
  %3496 = vmatprep.subr.mxu0 0.0
  %3497 = vmatpush1.msra.mxu0 0.0
  %3498 = vmatprep.subr.mxu0 0.0
  %3499 = vmatpush1.msra.mxu0 0.0
  %3500 = vmatprep.subr.mxu0 0.0
  %3501 = vmatpush1.msra.mxu0 0.0
  %3502 = vmatprep.subr.mxu0 0.0
  %3503 = vmatpush1.msra.mxu0 0.0
  %3504 = vmatprep.subr.mxu0 0.0
  %3505 = vmatpush1.msra.mxu0 0.0
  %3506 = vmatprep.subr.mxu0 0.0
  %3507 = vmatpush1.msra.mxu0 0.0
  %3508 = vmatprep.subr.mxu0 0.0
  %3509 = vmatpush1.msra.mxu0 0.0
  %3510 = vmatprep.mubr.f32.mxu0 0.0
  %3511 = vmatmul.mubr.f32.gmra.mrb[0].mxu0 %v3361
  %v3512 = vpop.f32.mrb[0].mxu0
  %v3513 = vadd.f32 0.0, %v3512
  %v3514 = vpop.f32.mrb[0].mxu0
  %v3515 = vadd.f32 0.0, %v3514
  %3516 = vdwg.mxu0
  %v3517 = vadd.f32 %v3338, %v3442
  %v3518 = vadd.f32 %v3339, %v3444
  %v3519 = vadd.f32 %v3340, %v3513
  %v3520 = vadd.f32 %v3341, %v3515
  %3521 = vrot.lane.b32.xlu0 %v2110, 111
  %v3522 = vpop.permute.xlu0 %3521
  %3523 = vrot.lane.b32.xlu0 %v2111, 111
  %v3524 = vpop.permute.xlu0 %3523
  %3525 = vrot.lane.b32.xlu0 %v2112, 111
  %v3526 = vpop.permute.xlu0 %3525
  %3527 = vrot.lane.b32.xlu0 %v2113, 111
  %v3528 = vpop.permute.xlu0 %3527
  %v3529 = vsel %vm1874, %v3526, %v3528
  %v3530 = vsel %vm1874, %v3524, %v3526
  %v3531 = vsel %vm1874, %v3522, %v3524
  %v3532 = vsel %vm1874, %v3528, %v3522
  %v3533 = vmul.f32 %v3531, %v1882
  %v3534 = vmul.f32 %v3530, %v1886
  %v3535 = vmul.f32 %v3529, %v1890
  %v3536 = vmul.f32 %v3532, %v1894
  %s3537 = scalar_lea.vmem %s8, 64
  %v3538 = vld [vmem:[%s3537] sm:$0xff]
  %v3540 = vsel %vm72, %v3538, 0
  %v3543 = vsel %vm79, %v3533, 0
  %v3546 = vsel %vm79, %v3534, 0
  %v3549 = vsel %vm79, %v3535, 0
  %v3552 = vsel %vm79, %v3536, 0
  %3554 = vmatprep.subr.mxu0 %v3546
  %3555 = vmatpush1.msra.mxu0 %v3543
  %3556 = vmatprep.subr.mxu0 0.0
  %3557 = vmatpush1.msra.mxu0 0.0
  %3558 = vmatprep.subr.mxu0 0.0
  %3559 = vmatpush1.msra.mxu0 0.0
  %3560 = vmatprep.subr.mxu0 0.0
  %3561 = vmatpush1.msra.mxu0 0.0
  %3562 = vmatprep.subr.mxu0 0.0
  %3563 = vmatpush1.msra.mxu0 0.0
  %3564 = vmatprep.subr.mxu0 0.0
  %3565 = vmatpush1.msra.mxu0 0.0
  %3566 = vmatprep.subr.mxu0 0.0
  %3567 = vmatpush1.msra.mxu0 0.0
  %3568 = vmatprep.subr.mxu0 0.0
  %3569 = vmatpush1.msra.mxu0 0.0
  %3570 = vmatprep.subr.mxu0 0.0
  %3571 = vmatpush1.msra.mxu0 0.0
  %3572 = vmatprep.subr.mxu0 0.0
  %3573 = vmatpush1.msra.mxu0 0.0
  %3574 = vmatprep.subr.mxu0 0.0
  %3575 = vmatpush1.msra.mxu0 0.0
  %3576 = vmatprep.subr.mxu0 0.0
  %3577 = vmatpush1.msra.mxu0 0.0
  %3578 = vmatprep.subr.mxu0 0.0
  %3579 = vmatpush1.msra.mxu0 0.0
  %3580 = vmatprep.subr.mxu0 0.0
  %3581 = vmatpush1.msra.mxu0 0.0
  %3582 = vmatprep.subr.mxu0 0.0
  %3583 = vmatpush1.msra.mxu0 0.0
  %3584 = vmatprep.subr.mxu0 0.0
  %3585 = vmatpush1.msra.mxu0 0.0
  %3586 = vmatprep.subr.mxu0 0.0
  %3587 = vmatpush1.msra.mxu0 0.0
  %3588 = vmatprep.subr.mxu0 0.0
  %3589 = vmatpush1.msra.mxu0 0.0
  %3590 = vmatprep.subr.mxu0 0.0
  %3591 = vmatpush1.msra.mxu0 0.0
  %3592 = vmatprep.subr.mxu0 0.0
  %3593 = vmatpush1.msra.mxu0 0.0
  %3594 = vmatprep.subr.mxu0 0.0
  %3595 = vmatpush1.msra.mxu0 0.0
  %3596 = vmatprep.subr.mxu0 0.0
  %3597 = vmatpush1.msra.mxu0 0.0
  %3598 = vmatprep.subr.mxu0 0.0
  %3599 = vmatpush1.msra.mxu0 0.0
  %3600 = vmatprep.subr.mxu0 0.0
  %3601 = vmatpush1.msra.mxu0 0.0
  %3602 = vmatprep.subr.mxu0 0.0
  %3603 = vmatpush1.msra.mxu0 0.0
  %3604 = vmatprep.subr.mxu0 0.0
  %3605 = vmatpush1.msra.mxu0 0.0
  %3606 = vmatprep.subr.mxu0 0.0
  %3607 = vmatpush1.msra.mxu0 0.0
  %3608 = vmatprep.subr.mxu0 0.0
  %3609 = vmatpush1.msra.mxu0 0.0
  %3610 = vmatprep.subr.mxu0 0.0
  %3611 = vmatpush1.msra.mxu0 0.0
  %3612 = vmatprep.subr.mxu0 0.0
  %3613 = vmatpush1.msra.mxu0 0.0
  %3614 = vmatprep.subr.mxu0 0.0
  %3615 = vmatpush1.msra.mxu0 0.0
  %3616 = vmatprep.subr.mxu0 0.0
  %3617 = vmatpush1.msra.mxu0 0.0
  %3618 = vmatprep.mubr.f32.mxu0 0.0
  %3619 = vmatmul.mubr.f32.gmra.mrb[0].mxu0 %v3540
  %v3620 = vpop.f32.mrb[0].mxu0
  %v3621 = vadd.f32 0.0, %v3620
  %v3622 = vpop.f32.mrb[0].mxu0
  %v3623 = vadd.f32 0.0, %v3622
  %3624 = vdwg.mxu0
  %3625 = vmatprep.subr.mxu0 %v3552
  %3626 = vmatpush1.msra.mxu0 %v3549
  %3627 = vmatprep.subr.mxu0 0.0
  %3628 = vmatpush1.msra.mxu0 0.0
  %3629 = vmatprep.subr.mxu0 0.0
  %3630 = vmatpush1.msra.mxu0 0.0
  %3631 = vmatprep.subr.mxu0 0.0
  %3632 = vmatpush1.msra.mxu0 0.0
  %3633 = vmatprep.subr.mxu0 0.0
  %3634 = vmatpush1.msra.mxu0 0.0
  %3635 = vmatprep.subr.mxu0 0.0
  %3636 = vmatpush1.msra.mxu0 0.0
  %3637 = vmatprep.subr.mxu0 0.0
  %3638 = vmatpush1.msra.mxu0 0.0
  %3639 = vmatprep.subr.mxu0 0.0
  %3640 = vmatpush1.msra.mxu0 0.0
  %3641 = vmatprep.subr.mxu0 0.0
  %3642 = vmatpush1.msra.mxu0 0.0
  %3643 = vmatprep.subr.mxu0 0.0
  %3644 = vmatpush1.msra.mxu0 0.0
  %3645 = vmatprep.subr.mxu0 0.0
  %3646 = vmatpush1.msra.mxu0 0.0
  %3647 = vmatprep.subr.mxu0 0.0
  %3648 = vmatpush1.msra.mxu0 0.0
  %3649 = vmatprep.subr.mxu0 0.0
  %3650 = vmatpush1.msra.mxu0 0.0
  %3651 = vmatprep.subr.mxu0 0.0
  %3652 = vmatpush1.msra.mxu0 0.0
  %3653 = vmatprep.subr.mxu0 0.0
  %3654 = vmatpush1.msra.mxu0 0.0
  %3655 = vmatprep.subr.mxu0 0.0
  %3656 = vmatpush1.msra.mxu0 0.0
  %3657 = vmatprep.subr.mxu0 0.0
  %3658 = vmatpush1.msra.mxu0 0.0
  %3659 = vmatprep.subr.mxu0 0.0
  %3660 = vmatpush1.msra.mxu0 0.0
  %3661 = vmatprep.subr.mxu0 0.0
  %3662 = vmatpush1.msra.mxu0 0.0
  %3663 = vmatprep.subr.mxu0 0.0
  %3664 = vmatpush1.msra.mxu0 0.0
  %3665 = vmatprep.subr.mxu0 0.0
  %3666 = vmatpush1.msra.mxu0 0.0
  %3667 = vmatprep.subr.mxu0 0.0
  %3668 = vmatpush1.msra.mxu0 0.0
  %3669 = vmatprep.subr.mxu0 0.0
  %3670 = vmatpush1.msra.mxu0 0.0
  %3671 = vmatprep.subr.mxu0 0.0
  %3672 = vmatpush1.msra.mxu0 0.0
  %3673 = vmatprep.subr.mxu0 0.0
  %3674 = vmatpush1.msra.mxu0 0.0
  %3675 = vmatprep.subr.mxu0 0.0
  %3676 = vmatpush1.msra.mxu0 0.0
  %3677 = vmatprep.subr.mxu0 0.0
  %3678 = vmatpush1.msra.mxu0 0.0
  %3679 = vmatprep.subr.mxu0 0.0
  %3680 = vmatpush1.msra.mxu0 0.0
  %3681 = vmatprep.subr.mxu0 0.0
  %3682 = vmatpush1.msra.mxu0 0.0
  %3683 = vmatprep.subr.mxu0 0.0
  %3684 = vmatpush1.msra.mxu0 0.0
  %3685 = vmatprep.subr.mxu0 0.0
  %3686 = vmatpush1.msra.mxu0 0.0
  %3687 = vmatprep.subr.mxu0 0.0
  %3688 = vmatpush1.msra.mxu0 0.0
  %3689 = vmatprep.mubr.f32.mxu0 0.0
  %3690 = vmatmul.mubr.f32.gmra.mrb[0].mxu0 %v3540
  %v3691 = vpop.f32.mrb[0].mxu0
  %v3692 = vadd.f32 0.0, %v3691
  %v3693 = vpop.f32.mrb[0].mxu0
  %v3694 = vadd.f32 0.0, %v3693
  %3695 = vdwg.mxu0
  %v3696 = vadd.f32 %v3517, %v3621
  %v3697 = vadd.f32 %v3518, %v3623
  %v3698 = vadd.f32 %v3519, %v3692
  %v3699 = vadd.f32 %v3520, %v3694
  %v3700 = vld [vmem:[%s9] sm:$0xff]
  %v3701 = vld [vmem:[%s10] sm:$0xff]
  %v3702 = vadd.f32 %v3696, %v3697
  %v3703 = vadd.f32 %v3702, %v3698
  %v3704 = vadd.f32 %v3703, %v3699
  %3705 = vadd.xlane.f32.xlu0 %v3704
  %v3706 = vpop.xlane.xlu0 %3705
  %v3707 = vmul.f32 %v3706, 0.001953125
  %v3708 = vmul.f32 %v3696, %v3696
  %v3709 = vmul.f32 %v3697, %v3697
  %v3710 = vmul.f32 %v3698, %v3698
  %v3711 = vmul.f32 %v3699, %v3699
  %v3712 = vadd.f32 %v3708, %v3709
  %v3713 = vadd.f32 %v3712, %v3710
  %v3714 = vadd.f32 %v3713, %v3711
  %3715 = vadd.xlane.f32.xlu0 %v3714
  %v3716 = vpop.xlane.xlu0 %3715
  %v3717 = vmul.f32 %v3716, 0.001953125
  %v3718 = vmul.f32 %v3707, %v3707
  %v3719 = vsub.f32 %v3717, %v3718
  %v3720 = vmax.f32 %v3719, 0.0
  %v3721 = vadd.f32 %v3720, 1e-05
  %v3722 = vrsqrt.pop %v3721
  %v3723 = vmul.f32 %v3700, %v3722
  %v3724 = vmul.f32 %v3707, %v3723
  %v3725 = vsub.f32 %v3701, %v3724
  %3727 = vset.pattern.permute.xlu0 0
  %3728 = vperm.xlu0 %3727, %v3723
  %v3729 = vpop.permute.xlu0 %3728
  %v3731 = vmul.f32 %v3696, %v3729
  %v3732 = vmul.f32 %v3697, %v3729
  %v3733 = vmul.f32 %v3698, %v3729
  %v3734 = vmul.f32 %v3699, %v3729
  %3736 = vset.pattern.permute.xlu0 0
  %3737 = vperm.xlu0 %3736, %v3725
  %v3738 = vpop.permute.xlu0 %3737
  %v3740 = vadd.f32 %v3731, %v3738
  %v3741 = vadd.f32 %v3732, %v3738
  %v3742 = vadd.f32 %v3733, %v3738
  %v3743 = vadd.f32 %v3734, %v3738
  %v3744 = vmax.f32 %v3740, 0.0
  %v3745 = vmax.f32 %v3741, 0.0
  %v3746 = vmax.f32 %v3742, 0.0
  %v3747 = vmax.f32 %v3743, 0.0
  %3748 = vrot.lane.b32.xlu0 %v3744, 17
  %v3749 = vpop.permute.xlu0 %3748
  %3750 = vrot.lane.b32.xlu0 %v3745, 17
  %v3751 = vpop.permute.xlu0 %3750
  %3752 = vrot.lane.b32.xlu0 %v3746, 17
  %v3753 = vpop.permute.xlu0 %3752
  %3754 = vrot.lane.b32.xlu0 %v3747, 17
  %v3755 = vpop.permute.xlu0 %3754
  %v3756 = vsel %vm348, %v3753, %v3755
  %v3757 = vsel %vm348, %v3751, %v3753
  %v3758 = vsel %vm348, %v3749, %v3751
  %v3759 = vsel %vm348, %v3755, %v3749
  %v3760 = vmul.f32 %v3759, %v356
  %v3761 = vmul.f32 %v3758, %v360
  %v3762 = vmul.f32 %v3757, %v364
  %v3763 = vmul.f32 %v3756, %v368
  %v3764 = vld [vmem:[%s11] sm:$0xff]
  %3765 = vrot.lane.b32.xlu0 %v3744, 16
  %v3766 = vpop.permute.xlu0 %3765
  %3767 = vrot.lane.b32.xlu0 %v3745, 16
  %v3768 = vpop.permute.xlu0 %3767
  %3769 = vrot.lane.b32.xlu0 %v3746, 16
  %v3770 = vpop.permute.xlu0 %3769
  %3771 = vrot.lane.b32.xlu0 %v3747, 16
  %v3772 = vpop.permute.xlu0 %3771
  %v3773 = vsel %vm382, %v3770, %v3772
  %v3774 = vsel %vm382, %v3768, %v3770
  %v3775 = vsel %vm382, %v3766, %v3768
  %v3776 = vsel %vm382, %v3772, %v3766
  %v3777 = vmul.f32 %v3776, %v390
  %v3778 = vmul.f32 %v3775, %v394
  %v3779 = vmul.f32 %v3774, %v398
  %v3780 = vmul.f32 %v3773, %v402
  %s3781 = scalar_lea.vmem %s11, 8
  %v3782 = vld [vmem:[%s3781] sm:$0xff]
  %vm3783 = vcmask 64512
  %v3785 = vsel %vm3783, %v3782, 0
  %3787 = vmatprep.subr.mxu0 %v3778
  %3788 = vmatpush1.msra.mxu0 %v3777
  %3789 = vmatprep.subr.mxu0 0.0
  %3790 = vmatpush1.msra.mxu0 0.0
  %3791 = vmatprep.subr.mxu0 0.0
  %3792 = vmatpush1.msra.mxu0 0.0
  %3793 = vmatprep.subr.mxu0 0.0
  %3794 = vmatpush1.msra.mxu0 0.0
  %3795 = vmatprep.subr.mxu0 0.0
  %3796 = vmatpush1.msra.mxu0 0.0
  %3797 = vmatprep.subr.mxu0 0.0
  %3798 = vmatpush1.msra.mxu0 0.0
  %3799 = vmatprep.subr.mxu0 0.0
  %3800 = vmatpush1.msra.mxu0 0.0
  %3801 = vmatprep.subr.mxu0 0.0
  %3802 = vmatpush1.msra.mxu0 0.0
  %3803 = vmatprep.subr.mxu0 0.0
  %3804 = vmatpush1.msra.mxu0 0.0
  %3805 = vmatprep.subr.mxu0 0.0
  %3806 = vmatpush1.msra.mxu0 0.0
  %3807 = vmatprep.subr.mxu0 0.0
  %3808 = vmatpush1.msra.mxu0 0.0
  %3809 = vmatprep.subr.mxu0 0.0
  %3810 = vmatpush1.msra.mxu0 0.0
  %3811 = vmatprep.subr.mxu0 0.0
  %3812 = vmatpush1.msra.mxu0 0.0
  %3813 = vmatprep.subr.mxu0 0.0
  %3814 = vmatpush1.msra.mxu0 0.0
  %3815 = vmatprep.subr.mxu0 0.0
  %3816 = vmatpush1.msra.mxu0 0.0
  %3817 = vmatprep.subr.mxu0 0.0
  %3818 = vmatpush1.msra.mxu0 0.0
  %3819 = vmatprep.subr.mxu0 0.0
  %3820 = vmatpush1.msra.mxu0 0.0
  %3821 = vmatprep.subr.mxu0 0.0
  %3822 = vmatpush1.msra.mxu0 0.0
  %3823 = vmatprep.subr.mxu0 0.0
  %3824 = vmatpush1.msra.mxu0 0.0
  %3825 = vmatprep.subr.mxu0 0.0
  %3826 = vmatpush1.msra.mxu0 0.0
  %3827 = vmatprep.subr.mxu0 0.0
  %3828 = vmatpush1.msra.mxu0 0.0
  %3829 = vmatprep.subr.mxu0 0.0
  %3830 = vmatpush1.msra.mxu0 0.0
  %3831 = vmatprep.subr.mxu0 0.0
  %3832 = vmatpush1.msra.mxu0 0.0
  %3833 = vmatprep.subr.mxu0 0.0
  %3834 = vmatpush1.msra.mxu0 0.0
  %3835 = vmatprep.subr.mxu0 0.0
  %3836 = vmatpush1.msra.mxu0 0.0
  %3837 = vmatprep.subr.mxu0 0.0
  %3838 = vmatpush1.msra.mxu0 0.0
  %3839 = vmatprep.subr.mxu0 0.0
  %3840 = vmatpush1.msra.mxu0 0.0
  %3841 = vmatprep.subr.mxu0 0.0
  %3842 = vmatpush1.msra.mxu0 0.0
  %3843 = vmatprep.subr.mxu0 0.0
  %3844 = vmatpush1.msra.mxu0 0.0
  %3845 = vmatprep.subr.mxu0 0.0
  %3846 = vmatpush1.msra.mxu0 0.0
  %3847 = vmatprep.subr.mxu0 0.0
  %3848 = vmatpush1.msra.mxu0 0.0
  %3849 = vmatprep.subr.mxu0 0.0
  %3850 = vmatpush1.msra.mxu0 0.0
  %3851 = vmatprep.mubr.f32.mxu0 0.0
  %3852 = vmatmul.mubr.f32.gmra.mrb[0].mxu0 %v3785
  %v3853 = vpop.f32.mrb[0].mxu0
  %v3854 = vadd.f32 0.0, %v3853
  %v3855 = vpop.f32.mrb[0].mxu0
  %v3856 = vadd.f32 0.0, %v3855
  %3857 = vdwg.mxu0
  %3858 = vmatprep.subr.mxu0 %v3780
  %3859 = vmatpush1.msra.mxu0 %v3779
  %3860 = vmatprep.subr.mxu0 0.0
  %3861 = vmatpush1.msra.mxu0 0.0
  %3862 = vmatprep.subr.mxu0 0.0
  %3863 = vmatpush1.msra.mxu0 0.0
  %3864 = vmatprep.subr.mxu0 0.0
  %3865 = vmatpush1.msra.mxu0 0.0
  %3866 = vmatprep.subr.mxu0 0.0
  %3867 = vmatpush1.msra.mxu0 0.0
  %3868 = vmatprep.subr.mxu0 0.0
  %3869 = vmatpush1.msra.mxu0 0.0
  %3870 = vmatprep.subr.mxu0 0.0
  %3871 = vmatpush1.msra.mxu0 0.0
  %3872 = vmatprep.subr.mxu0 0.0
  %3873 = vmatpush1.msra.mxu0 0.0
  %3874 = vmatprep.subr.mxu0 0.0
  %3875 = vmatpush1.msra.mxu0 0.0
  %3876 = vmatprep.subr.mxu0 0.0
  %3877 = vmatpush1.msra.mxu0 0.0
  %3878 = vmatprep.subr.mxu0 0.0
  %3879 = vmatpush1.msra.mxu0 0.0
  %3880 = vmatprep.subr.mxu0 0.0
  %3881 = vmatpush1.msra.mxu0 0.0
  %3882 = vmatprep.subr.mxu0 0.0
  %3883 = vmatpush1.msra.mxu0 0.0
  %3884 = vmatprep.subr.mxu0 0.0
  %3885 = vmatpush1.msra.mxu0 0.0
  %3886 = vmatprep.subr.mxu0 0.0
  %3887 = vmatpush1.msra.mxu0 0.0
  %3888 = vmatprep.subr.mxu0 0.0
  %3889 = vmatpush1.msra.mxu0 0.0
  %3890 = vmatprep.subr.mxu0 0.0
  %3891 = vmatpush1.msra.mxu0 0.0
  %3892 = vmatprep.subr.mxu0 0.0
  %3893 = vmatpush1.msra.mxu0 0.0
  %3894 = vmatprep.subr.mxu0 0.0
  %3895 = vmatpush1.msra.mxu0 0.0
  %3896 = vmatprep.subr.mxu0 0.0
  %3897 = vmatpush1.msra.mxu0 0.0
  %3898 = vmatprep.subr.mxu0 0.0
  %3899 = vmatpush1.msra.mxu0 0.0
  %3900 = vmatprep.subr.mxu0 0.0
  %3901 = vmatpush1.msra.mxu0 0.0
  %3902 = vmatprep.subr.mxu0 0.0
  %3903 = vmatpush1.msra.mxu0 0.0
  %3904 = vmatprep.subr.mxu0 0.0
  %3905 = vmatpush1.msra.mxu0 0.0
  %3906 = vmatprep.subr.mxu0 0.0
  %3907 = vmatpush1.msra.mxu0 0.0
  %3908 = vmatprep.subr.mxu0 0.0
  %3909 = vmatpush1.msra.mxu0 0.0
  %3910 = vmatprep.subr.mxu0 0.0
  %3911 = vmatpush1.msra.mxu0 0.0
  %3912 = vmatprep.subr.mxu0 0.0
  %3913 = vmatpush1.msra.mxu0 0.0
  %3914 = vmatprep.subr.mxu0 0.0
  %3915 = vmatpush1.msra.mxu0 0.0
  %3916 = vmatprep.subr.mxu0 0.0
  %3917 = vmatpush1.msra.mxu0 0.0
  %3918 = vmatprep.subr.mxu0 0.0
  %3919 = vmatpush1.msra.mxu0 0.0
  %3920 = vmatprep.subr.mxu0 0.0
  %3921 = vmatpush1.msra.mxu0 0.0
  %3922 = vmatprep.mubr.f32.mxu0 0.0
  %3923 = vmatmul.mubr.f32.gmra.mrb[0].mxu0 %v3785
  %v3924 = vpop.f32.mrb[0].mxu0
  %v3925 = vadd.f32 0.0, %v3924
  %v3926 = vpop.f32.mrb[0].mxu0
  %v3927 = vadd.f32 0.0, %v3926
  %3928 = vdwg.mxu0
  %v3930 = vsel %vm3783, %v3764, 0
  %3932 = vmatprep.subr.mxu0 %v3761
  %3933 = vmatpush1.msra.mxu0 %v3760
  %3934 = vmatprep.subr.mxu0 0.0
  %3935 = vmatpush1.msra.mxu0 0.0
  %3936 = vmatprep.subr.mxu0 0.0
  %3937 = vmatpush1.msra.mxu0 0.0
  %3938 = vmatprep.subr.mxu0 0.0
  %3939 = vmatpush1.msra.mxu0 0.0
  %3940 = vmatprep.subr.mxu0 0.0
  %3941 = vmatpush1.msra.mxu0 0.0
  %3942 = vmatprep.subr.mxu0 0.0
  %3943 = vmatpush1.msra.mxu0 0.0
  %3944 = vmatprep.subr.mxu0 0.0
  %3945 = vmatpush1.msra.mxu0 0.0
  %3946 = vmatprep.subr.mxu0 0.0
  %3947 = vmatpush1.msra.mxu0 0.0
  %3948 = vmatprep.subr.mxu0 0.0
  %3949 = vmatpush1.msra.mxu0 0.0
  %3950 = vmatprep.subr.mxu0 0.0
  %3951 = vmatpush1.msra.mxu0 0.0
  %3952 = vmatprep.subr.mxu0 0.0
  %3953 = vmatpush1.msra.mxu0 0.0
  %3954 = vmatprep.subr.mxu0 0.0
  %3955 = vmatpush1.msra.mxu0 0.0
  %3956 = vmatprep.subr.mxu0 0.0
  %3957 = vmatpush1.msra.mxu0 0.0
  %3958 = vmatprep.subr.mxu0 0.0
  %3959 = vmatpush1.msra.mxu0 0.0
  %3960 = vmatprep.subr.mxu0 0.0
  %3961 = vmatpush1.msra.mxu0 0.0
  %3962 = vmatprep.subr.mxu0 0.0
  %3963 = vmatpush1.msra.mxu0 0.0
  %3964 = vmatprep.subr.mxu0 0.0
  %3965 = vmatpush1.msra.mxu0 0.0
  %3966 = vmatprep.subr.mxu0 0.0
  %3967 = vmatpush1.msra.mxu0 0.0
  %3968 = vmatprep.subr.mxu0 0.0
  %3969 = vmatpush1.msra.mxu0 0.0
  %3970 = vmatprep.subr.mxu0 0.0
  %3971 = vmatpush1.msra.mxu0 0.0
  %3972 = vmatprep.subr.mxu0 0.0
  %3973 = vmatpush1.msra.mxu0 0.0
  %3974 = vmatprep.subr.mxu0 0.0
  %3975 = vmatpush1.msra.mxu0 0.0
  %3976 = vmatprep.subr.mxu0 0.0
  %3977 = vmatpush1.msra.mxu0 0.0
  %3978 = vmatprep.subr.mxu0 0.0
  %3979 = vmatpush1.msra.mxu0 0.0
  %3980 = vmatprep.subr.mxu0 0.0
  %3981 = vmatpush1.msra.mxu0 0.0
  %3982 = vmatprep.subr.mxu0 0.0
  %3983 = vmatpush1.msra.mxu0 0.0
  %3984 = vmatprep.subr.mxu0 0.0
  %3985 = vmatpush1.msra.mxu0 0.0
  %3986 = vmatprep.subr.mxu0 0.0
  %3987 = vmatpush1.msra.mxu0 0.0
  %3988 = vmatprep.subr.mxu0 0.0
  %3989 = vmatpush1.msra.mxu0 0.0
  %3990 = vmatprep.subr.mxu0 0.0
  %3991 = vmatpush1.msra.mxu0 0.0
  %3992 = vmatprep.subr.mxu0 0.0
  %3993 = vmatpush1.msra.mxu0 0.0
  %3994 = vmatprep.subr.mxu0 0.0
  %3995 = vmatpush1.msra.mxu0 0.0
  %3996 = vmatprep.mubr.f32.mxu0 0.0
  %3997 = vmatmul.mubr.f32.gmra.mrb[0].mxu0 %v3930
  %v3998 = vpop.f32.mrb[0].mxu0
  %v3999 = vadd.f32 %v3854, %v3998
  %v4000 = vpop.f32.mrb[0].mxu0
  %v4001 = vadd.f32 %v3856, %v4000
  %4002 = vdwg.mxu0
  %4003 = vmatprep.subr.mxu0 %v3763
  %4004 = vmatpush1.msra.mxu0 %v3762
  %4005 = vmatprep.subr.mxu0 0.0
  %4006 = vmatpush1.msra.mxu0 0.0
  %4007 = vmatprep.subr.mxu0 0.0
  %4008 = vmatpush1.msra.mxu0 0.0
  %4009 = vmatprep.subr.mxu0 0.0
  %4010 = vmatpush1.msra.mxu0 0.0
  %4011 = vmatprep.subr.mxu0 0.0
  %4012 = vmatpush1.msra.mxu0 0.0
  %4013 = vmatprep.subr.mxu0 0.0
  %4014 = vmatpush1.msra.mxu0 0.0
  %4015 = vmatprep.subr.mxu0 0.0
  %4016 = vmatpush1.msra.mxu0 0.0
  %4017 = vmatprep.subr.mxu0 0.0
  %4018 = vmatpush1.msra.mxu0 0.0
  %4019 = vmatprep.subr.mxu0 0.0
  %4020 = vmatpush1.msra.mxu0 0.0
  %4021 = vmatprep.subr.mxu0 0.0
  %4022 = vmatpush1.msra.mxu0 0.0
  %4023 = vmatprep.subr.mxu0 0.0
  %4024 = vmatpush1.msra.mxu0 0.0
  %4025 = vmatprep.subr.mxu0 0.0
  %4026 = vmatpush1.msra.mxu0 0.0
  %4027 = vmatprep.subr.mxu0 0.0
  %4028 = vmatpush1.msra.mxu0 0.0
  %4029 = vmatprep.subr.mxu0 0.0
  %4030 = vmatpush1.msra.mxu0 0.0
  %4031 = vmatprep.subr.mxu0 0.0
  %4032 = vmatpush1.msra.mxu0 0.0
  %4033 = vmatprep.subr.mxu0 0.0
  %4034 = vmatpush1.msra.mxu0 0.0
  %4035 = vmatprep.subr.mxu0 0.0
  %4036 = vmatpush1.msra.mxu0 0.0
  %4037 = vmatprep.subr.mxu0 0.0
  %4038 = vmatpush1.msra.mxu0 0.0
  %4039 = vmatprep.subr.mxu0 0.0
  %4040 = vmatpush1.msra.mxu0 0.0
  %4041 = vmatprep.subr.mxu0 0.0
  %4042 = vmatpush1.msra.mxu0 0.0
  %4043 = vmatprep.subr.mxu0 0.0
  %4044 = vmatpush1.msra.mxu0 0.0
  %4045 = vmatprep.subr.mxu0 0.0
  %4046 = vmatpush1.msra.mxu0 0.0
  %4047 = vmatprep.subr.mxu0 0.0
  %4048 = vmatpush1.msra.mxu0 0.0
  %4049 = vmatprep.subr.mxu0 0.0
  %4050 = vmatpush1.msra.mxu0 0.0
  %4051 = vmatprep.subr.mxu0 0.0
  %4052 = vmatpush1.msra.mxu0 0.0
  %4053 = vmatprep.subr.mxu0 0.0
  %4054 = vmatpush1.msra.mxu0 0.0
  %4055 = vmatprep.subr.mxu0 0.0
  %4056 = vmatpush1.msra.mxu0 0.0
  %4057 = vmatprep.subr.mxu0 0.0
  %4058 = vmatpush1.msra.mxu0 0.0
  %4059 = vmatprep.subr.mxu0 0.0
  %4060 = vmatpush1.msra.mxu0 0.0
  %4061 = vmatprep.subr.mxu0 0.0
  %4062 = vmatpush1.msra.mxu0 0.0
  %4063 = vmatprep.subr.mxu0 0.0
  %4064 = vmatpush1.msra.mxu0 0.0
  %4065 = vmatprep.subr.mxu0 0.0
  %4066 = vmatpush1.msra.mxu0 0.0
  %4067 = vmatprep.mubr.f32.mxu0 0.0
  %4068 = vmatmul.mubr.f32.gmra.mrb[0].mxu0 %v3930
  %v4069 = vpop.f32.mrb[0].mxu0
  %v4070 = vadd.f32 %v3925, %v4069
  %v4071 = vpop.f32.mrb[0].mxu0
  %v4072 = vadd.f32 %v3927, %v4071
  %4073 = vdwg.mxu0
  %4074 = vrot.lane.b32.xlu0 %v3744, 15
  %v4075 = vpop.permute.xlu0 %4074
  %4076 = vrot.lane.b32.xlu0 %v3745, 15
  %v4077 = vpop.permute.xlu0 %4076
  %4078 = vrot.lane.b32.xlu0 %v3746, 15
  %v4079 = vpop.permute.xlu0 %4078
  %4080 = vrot.lane.b32.xlu0 %v3747, 15
  %v4081 = vpop.permute.xlu0 %4080
  %v4082 = vsel %vm731, %v4079, %v4081
  %v4083 = vsel %vm731, %v4077, %v4079
  %v4084 = vsel %vm731, %v4075, %v4077
  %v4085 = vsel %vm731, %v4081, %v4075
  %v4086 = vmul.f32 %v4085, %v739
  %v4087 = vmul.f32 %v4084, %v743
  %v4088 = vmul.f32 %v4083, %v747
  %v4089 = vmul.f32 %v4082, %v751
  %s4090 = scalar_lea.vmem %s11, 16
  %v4091 = vld [vmem:[%s4090] sm:$0xff]
  %v4093 = vsel %vm3783, %v4091, 0
  %4095 = vmatprep.subr.mxu0 %v4087
  %4096 = vmatpush1.msra.mxu0 %v4086
  %4097 = vmatprep.subr.mxu0 0.0
  %4098 = vmatpush1.msra.mxu0 0.0
  %4099 = vmatprep.subr.mxu0 0.0
  %4100 = vmatpush1.msra.mxu0 0.0
  %4101 = vmatprep.subr.mxu0 0.0
  %4102 = vmatpush1.msra.mxu0 0.0
  %4103 = vmatprep.subr.mxu0 0.0
  %4104 = vmatpush1.msra.mxu0 0.0
  %4105 = vmatprep.subr.mxu0 0.0
  %4106 = vmatpush1.msra.mxu0 0.0
  %4107 = vmatprep.subr.mxu0 0.0
  %4108 = vmatpush1.msra.mxu0 0.0
  %4109 = vmatprep.subr.mxu0 0.0
  %4110 = vmatpush1.msra.mxu0 0.0
  %4111 = vmatprep.subr.mxu0 0.0
  %4112 = vmatpush1.msra.mxu0 0.0
  %4113 = vmatprep.subr.mxu0 0.0
  %4114 = vmatpush1.msra.mxu0 0.0
  %4115 = vmatprep.subr.mxu0 0.0
  %4116 = vmatpush1.msra.mxu0 0.0
  %4117 = vmatprep.subr.mxu0 0.0
  %4118 = vmatpush1.msra.mxu0 0.0
  %4119 = vmatprep.subr.mxu0 0.0
  %4120 = vmatpush1.msra.mxu0 0.0
  %4121 = vmatprep.subr.mxu0 0.0
  %4122 = vmatpush1.msra.mxu0 0.0
  %4123 = vmatprep.subr.mxu0 0.0
  %4124 = vmatpush1.msra.mxu0 0.0
  %4125 = vmatprep.subr.mxu0 0.0
  %4126 = vmatpush1.msra.mxu0 0.0
  %4127 = vmatprep.subr.mxu0 0.0
  %4128 = vmatpush1.msra.mxu0 0.0
  %4129 = vmatprep.subr.mxu0 0.0
  %4130 = vmatpush1.msra.mxu0 0.0
  %4131 = vmatprep.subr.mxu0 0.0
  %4132 = vmatpush1.msra.mxu0 0.0
  %4133 = vmatprep.subr.mxu0 0.0
  %4134 = vmatpush1.msra.mxu0 0.0
  %4135 = vmatprep.subr.mxu0 0.0
  %4136 = vmatpush1.msra.mxu0 0.0
  %4137 = vmatprep.subr.mxu0 0.0
  %4138 = vmatpush1.msra.mxu0 0.0
  %4139 = vmatprep.subr.mxu0 0.0
  %4140 = vmatpush1.msra.mxu0 0.0
  %4141 = vmatprep.subr.mxu0 0.0
  %4142 = vmatpush1.msra.mxu0 0.0
  %4143 = vmatprep.subr.mxu0 0.0
  %4144 = vmatpush1.msra.mxu0 0.0
  %4145 = vmatprep.subr.mxu0 0.0
  %4146 = vmatpush1.msra.mxu0 0.0
  %4147 = vmatprep.subr.mxu0 0.0
  %4148 = vmatpush1.msra.mxu0 0.0
  %4149 = vmatprep.subr.mxu0 0.0
  %4150 = vmatpush1.msra.mxu0 0.0
  %4151 = vmatprep.subr.mxu0 0.0
  %4152 = vmatpush1.msra.mxu0 0.0
  %4153 = vmatprep.subr.mxu0 0.0
  %4154 = vmatpush1.msra.mxu0 0.0
  %4155 = vmatprep.subr.mxu0 0.0
  %4156 = vmatpush1.msra.mxu0 0.0
  %4157 = vmatprep.subr.mxu0 0.0
  %4158 = vmatpush1.msra.mxu0 0.0
  %4159 = vmatprep.mubr.f32.mxu0 0.0
  %4160 = vmatmul.mubr.f32.gmra.mrb[0].mxu0 %v4093
  %v4161 = vpop.f32.mrb[0].mxu0
  %v4162 = vadd.f32 0.0, %v4161
  %v4163 = vpop.f32.mrb[0].mxu0
  %v4164 = vadd.f32 0.0, %v4163
  %4165 = vdwg.mxu0
  %4166 = vmatprep.subr.mxu0 %v4089
  %4167 = vmatpush1.msra.mxu0 %v4088
  %4168 = vmatprep.subr.mxu0 0.0
  %4169 = vmatpush1.msra.mxu0 0.0
  %4170 = vmatprep.subr.mxu0 0.0
  %4171 = vmatpush1.msra.mxu0 0.0
  %4172 = vmatprep.subr.mxu0 0.0
  %4173 = vmatpush1.msra.mxu0 0.0
  %4174 = vmatprep.subr.mxu0 0.0
  %4175 = vmatpush1.msra.mxu0 0.0
  %4176 = vmatprep.subr.mxu0 0.0
  %4177 = vmatpush1.msra.mxu0 0.0
  %4178 = vmatprep.subr.mxu0 0.0
  %4179 = vmatpush1.msra.mxu0 0.0
  %4180 = vmatprep.subr.mxu0 0.0
  %4181 = vmatpush1.msra.mxu0 0.0
  %4182 = vmatprep.subr.mxu0 0.0
  %4183 = vmatpush1.msra.mxu0 0.0
  %4184 = vmatprep.subr.mxu0 0.0
  %4185 = vmatpush1.msra.mxu0 0.0
  %4186 = vmatprep.subr.mxu0 0.0
  %4187 = vmatpush1.msra.mxu0 0.0
  %4188 = vmatprep.subr.mxu0 0.0
  %4189 = vmatpush1.msra.mxu0 0.0
  %4190 = vmatprep.subr.mxu0 0.0
  %4191 = vmatpush1.msra.mxu0 0.0
  %4192 = vmatprep.subr.mxu0 0.0
  %4193 = vmatpush1.msra.mxu0 0.0
  %4194 = vmatprep.subr.mxu0 0.0
  %4195 = vmatpush1.msra.mxu0 0.0
  %4196 = vmatprep.subr.mxu0 0.0
  %4197 = vmatpush1.msra.mxu0 0.0
  %4198 = vmatprep.subr.mxu0 0.0
  %4199 = vmatpush1.msra.mxu0 0.0
  %4200 = vmatprep.subr.mxu0 0.0
  %4201 = vmatpush1.msra.mxu0 0.0
  %4202 = vmatprep.subr.mxu0 0.0
  %4203 = vmatpush1.msra.mxu0 0.0
  %4204 = vmatprep.subr.mxu0 0.0
  %4205 = vmatpush1.msra.mxu0 0.0
  %4206 = vmatprep.subr.mxu0 0.0
  %4207 = vmatpush1.msra.mxu0 0.0
  %4208 = vmatprep.subr.mxu0 0.0
  %4209 = vmatpush1.msra.mxu0 0.0
  %4210 = vmatprep.subr.mxu0 0.0
  %4211 = vmatpush1.msra.mxu0 0.0
  %4212 = vmatprep.subr.mxu0 0.0
  %4213 = vmatpush1.msra.mxu0 0.0
  %4214 = vmatprep.subr.mxu0 0.0
  %4215 = vmatpush1.msra.mxu0 0.0
  %4216 = vmatprep.subr.mxu0 0.0
  %4217 = vmatpush1.msra.mxu0 0.0
  %4218 = vmatprep.subr.mxu0 0.0
  %4219 = vmatpush1.msra.mxu0 0.0
  %4220 = vmatprep.subr.mxu0 0.0
  %4221 = vmatpush1.msra.mxu0 0.0
  %4222 = vmatprep.subr.mxu0 0.0
  %4223 = vmatpush1.msra.mxu0 0.0
  %4224 = vmatprep.subr.mxu0 0.0
  %4225 = vmatpush1.msra.mxu0 0.0
  %4226 = vmatprep.subr.mxu0 0.0
  %4227 = vmatpush1.msra.mxu0 0.0
  %4228 = vmatprep.subr.mxu0 0.0
  %4229 = vmatpush1.msra.mxu0 0.0
  %4230 = vmatprep.mubr.f32.mxu0 0.0
  %4231 = vmatmul.mubr.f32.gmra.mrb[0].mxu0 %v4093
  %v4232 = vpop.f32.mrb[0].mxu0
  %v4233 = vadd.f32 0.0, %v4232
  %v4234 = vpop.f32.mrb[0].mxu0
  %v4235 = vadd.f32 0.0, %v4234
  %4236 = vdwg.mxu0
  %v4237 = vadd.f32 %v3999, %v4162
  %v4238 = vadd.f32 %v4001, %v4164
  %v4239 = vadd.f32 %v4070, %v4233
  %v4240 = vadd.f32 %v4072, %v4235
  %4241 = vrot.lane.b32.xlu0 %v3744, 1
  %v4242 = vpop.permute.xlu0 %4241
  %4243 = vrot.lane.b32.xlu0 %v3745, 1
  %v4244 = vpop.permute.xlu0 %4243
  %4245 = vrot.lane.b32.xlu0 %v3746, 1
  %v4246 = vpop.permute.xlu0 %4245
  %4247 = vrot.lane.b32.xlu0 %v3747, 1
  %v4248 = vpop.permute.xlu0 %4247
  %v4249 = vsel %vm927, %v4246, %v4248
  %v4250 = vsel %vm927, %v4244, %v4246
  %v4251 = vsel %vm927, %v4242, %v4244
  %v4252 = vsel %vm927, %v4248, %v4242
  %v4253 = vmul.f32 %v4252, %v935
  %v4254 = vmul.f32 %v4251, %v939
  %v4255 = vmul.f32 %v4250, %v943
  %v4256 = vmul.f32 %v4249, %v947
  %s4257 = scalar_lea.vmem %s11, 24
  %v4258 = vld [vmem:[%s4257] sm:$0xff]
  %v4260 = vsel %vm3783, %v4258, 0
  %4262 = vmatprep.subr.mxu0 %v4254
  %4263 = vmatpush1.msra.mxu0 %v4253
  %4264 = vmatprep.subr.mxu0 0.0
  %4265 = vmatpush1.msra.mxu0 0.0
  %4266 = vmatprep.subr.mxu0 0.0
  %4267 = vmatpush1.msra.mxu0 0.0
  %4268 = vmatprep.subr.mxu0 0.0
  %4269 = vmatpush1.msra.mxu0 0.0
  %4270 = vmatprep.subr.mxu0 0.0
  %4271 = vmatpush1.msra.mxu0 0.0
  %4272 = vmatprep.subr.mxu0 0.0
  %4273 = vmatpush1.msra.mxu0 0.0
  %4274 = vmatprep.subr.mxu0 0.0
  %4275 = vmatpush1.msra.mxu0 0.0
  %4276 = vmatprep.subr.mxu0 0.0
  %4277 = vmatpush1.msra.mxu0 0.0
  %4278 = vmatprep.subr.mxu0 0.0
  %4279 = vmatpush1.msra.mxu0 0.0
  %4280 = vmatprep.subr.mxu0 0.0
  %4281 = vmatpush1.msra.mxu0 0.0
  %4282 = vmatprep.subr.mxu0 0.0
  %4283 = vmatpush1.msra.mxu0 0.0
  %4284 = vmatprep.subr.mxu0 0.0
  %4285 = vmatpush1.msra.mxu0 0.0
  %4286 = vmatprep.subr.mxu0 0.0
  %4287 = vmatpush1.msra.mxu0 0.0
  %4288 = vmatprep.subr.mxu0 0.0
  %4289 = vmatpush1.msra.mxu0 0.0
  %4290 = vmatprep.subr.mxu0 0.0
  %4291 = vmatpush1.msra.mxu0 0.0
  %4292 = vmatprep.subr.mxu0 0.0
  %4293 = vmatpush1.msra.mxu0 0.0
  %4294 = vmatprep.subr.mxu0 0.0
  %4295 = vmatpush1.msra.mxu0 0.0
  %4296 = vmatprep.subr.mxu0 0.0
  %4297 = vmatpush1.msra.mxu0 0.0
  %4298 = vmatprep.subr.mxu0 0.0
  %4299 = vmatpush1.msra.mxu0 0.0
  %4300 = vmatprep.subr.mxu0 0.0
  %4301 = vmatpush1.msra.mxu0 0.0
  %4302 = vmatprep.subr.mxu0 0.0
  %4303 = vmatpush1.msra.mxu0 0.0
  %4304 = vmatprep.subr.mxu0 0.0
  %4305 = vmatpush1.msra.mxu0 0.0
  %4306 = vmatprep.subr.mxu0 0.0
  %4307 = vmatpush1.msra.mxu0 0.0
  %4308 = vmatprep.subr.mxu0 0.0
  %4309 = vmatpush1.msra.mxu0 0.0
  %4310 = vmatprep.subr.mxu0 0.0
  %4311 = vmatpush1.msra.mxu0 0.0
  %4312 = vmatprep.subr.mxu0 0.0
  %4313 = vmatpush1.msra.mxu0 0.0
  %4314 = vmatprep.subr.mxu0 0.0
  %4315 = vmatpush1.msra.mxu0 0.0
  %4316 = vmatprep.subr.mxu0 0.0
  %4317 = vmatpush1.msra.mxu0 0.0
  %4318 = vmatprep.subr.mxu0 0.0
  %4319 = vmatpush1.msra.mxu0 0.0
  %4320 = vmatprep.subr.mxu0 0.0
  %4321 = vmatpush1.msra.mxu0 0.0
  %4322 = vmatprep.subr.mxu0 0.0
  %4323 = vmatpush1.msra.mxu0 0.0
  %4324 = vmatprep.subr.mxu0 0.0
  %4325 = vmatpush1.msra.mxu0 0.0
  %4326 = vmatprep.mubr.f32.mxu0 0.0
  %4327 = vmatmul.mubr.f32.gmra.mrb[0].mxu0 %v4260
  %v4328 = vpop.f32.mrb[0].mxu0
  %v4329 = vadd.f32 0.0, %v4328
  %v4330 = vpop.f32.mrb[0].mxu0
  %v4331 = vadd.f32 0.0, %v4330
  %4332 = vdwg.mxu0
  %4333 = vmatprep.subr.mxu0 %v4256
  %4334 = vmatpush1.msra.mxu0 %v4255
  %4335 = vmatprep.subr.mxu0 0.0
  %4336 = vmatpush1.msra.mxu0 0.0
  %4337 = vmatprep.subr.mxu0 0.0
  %4338 = vmatpush1.msra.mxu0 0.0
  %4339 = vmatprep.subr.mxu0 0.0
  %4340 = vmatpush1.msra.mxu0 0.0
  %4341 = vmatprep.subr.mxu0 0.0
  %4342 = vmatpush1.msra.mxu0 0.0
  %4343 = vmatprep.subr.mxu0 0.0
  %4344 = vmatpush1.msra.mxu0 0.0
  %4345 = vmatprep.subr.mxu0 0.0
  %4346 = vmatpush1.msra.mxu0 0.0
  %4347 = vmatprep.subr.mxu0 0.0
  %4348 = vmatpush1.msra.mxu0 0.0
  %4349 = vmatprep.subr.mxu0 0.0
  %4350 = vmatpush1.msra.mxu0 0.0
  %4351 = vmatprep.subr.mxu0 0.0
  %4352 = vmatpush1.msra.mxu0 0.0
  %4353 = vmatprep.subr.mxu0 0.0
  %4354 = vmatpush1.msra.mxu0 0.0
  %4355 = vmatprep.subr.mxu0 0.0
  %4356 = vmatpush1.msra.mxu0 0.0
  %4357 = vmatprep.subr.mxu0 0.0
  %4358 = vmatpush1.msra.mxu0 0.0
  %4359 = vmatprep.subr.mxu0 0.0
  %4360 = vmatpush1.msra.mxu0 0.0
  %4361 = vmatprep.subr.mxu0 0.0
  %4362 = vmatpush1.msra.mxu0 0.0
  %4363 = vmatprep.subr.mxu0 0.0
  %4364 = vmatpush1.msra.mxu0 0.0
  %4365 = vmatprep.subr.mxu0 0.0
  %4366 = vmatpush1.msra.mxu0 0.0
  %4367 = vmatprep.subr.mxu0 0.0
  %4368 = vmatpush1.msra.mxu0 0.0
  %4369 = vmatprep.subr.mxu0 0.0
  %4370 = vmatpush1.msra.mxu0 0.0
  %4371 = vmatprep.subr.mxu0 0.0
  %4372 = vmatpush1.msra.mxu0 0.0
  %4373 = vmatprep.subr.mxu0 0.0
  %4374 = vmatpush1.msra.mxu0 0.0
  %4375 = vmatprep.subr.mxu0 0.0
  %4376 = vmatpush1.msra.mxu0 0.0
  %4377 = vmatprep.subr.mxu0 0.0
  %4378 = vmatpush1.msra.mxu0 0.0
  %4379 = vmatprep.subr.mxu0 0.0
  %4380 = vmatpush1.msra.mxu0 0.0
  %4381 = vmatprep.subr.mxu0 0.0
  %4382 = vmatpush1.msra.mxu0 0.0
  %4383 = vmatprep.subr.mxu0 0.0
  %4384 = vmatpush1.msra.mxu0 0.0
  %4385 = vmatprep.subr.mxu0 0.0
  %4386 = vmatpush1.msra.mxu0 0.0
  %4387 = vmatprep.subr.mxu0 0.0
  %4388 = vmatpush1.msra.mxu0 0.0
  %4389 = vmatprep.subr.mxu0 0.0
  %4390 = vmatpush1.msra.mxu0 0.0
  %4391 = vmatprep.subr.mxu0 0.0
  %4392 = vmatpush1.msra.mxu0 0.0
  %4393 = vmatprep.subr.mxu0 0.0
  %4394 = vmatpush1.msra.mxu0 0.0
  %4395 = vmatprep.subr.mxu0 0.0
  %4396 = vmatpush1.msra.mxu0 0.0
  %4397 = vmatprep.mubr.f32.mxu0 0.0
  %4398 = vmatmul.mubr.f32.gmra.mrb[0].mxu0 %v4260
  %v4399 = vpop.f32.mrb[0].mxu0
  %v4400 = vadd.f32 0.0, %v4399
  %v4401 = vpop.f32.mrb[0].mxu0
  %v4402 = vadd.f32 0.0, %v4401
  %4403 = vdwg.mxu0
  %v4404 = vadd.f32 %v4237, %v4329
  %v4405 = vadd.f32 %v4238, %v4331
  %v4406 = vadd.f32 %v4239, %v4400
  %v4407 = vadd.f32 %v4240, %v4402
  %s4408 = scalar_lea.vmem %s11, 32
  %v4409 = vld [vmem:[%s4408] sm:$0xff]
  %v4411 = vsel %vm3783, %v4409, 0
  %4413 = vmatprep.subr.mxu0 %v3745
  %4414 = vmatpush1.msra.mxu0 %v3744
  %4415 = vmatprep.subr.mxu0 0.0
  %4416 = vmatpush1.msra.mxu0 0.0
  %4417 = vmatprep.subr.mxu0 0.0
  %4418 = vmatpush1.msra.mxu0 0.0
  %4419 = vmatprep.subr.mxu0 0.0
  %4420 = vmatpush1.msra.mxu0 0.0
  %4421 = vmatprep.subr.mxu0 0.0
  %4422 = vmatpush1.msra.mxu0 0.0
  %4423 = vmatprep.subr.mxu0 0.0
  %4424 = vmatpush1.msra.mxu0 0.0
  %4425 = vmatprep.subr.mxu0 0.0
  %4426 = vmatpush1.msra.mxu0 0.0
  %4427 = vmatprep.subr.mxu0 0.0
  %4428 = vmatpush1.msra.mxu0 0.0
  %4429 = vmatprep.subr.mxu0 0.0
  %4430 = vmatpush1.msra.mxu0 0.0
  %4431 = vmatprep.subr.mxu0 0.0
  %4432 = vmatpush1.msra.mxu0 0.0
  %4433 = vmatprep.subr.mxu0 0.0
  %4434 = vmatpush1.msra.mxu0 0.0
  %4435 = vmatprep.subr.mxu0 0.0
  %4436 = vmatpush1.msra.mxu0 0.0
  %4437 = vmatprep.subr.mxu0 0.0
  %4438 = vmatpush1.msra.mxu0 0.0
  %4439 = vmatprep.subr.mxu0 0.0
  %4440 = vmatpush1.msra.mxu0 0.0
  %4441 = vmatprep.subr.mxu0 0.0
  %4442 = vmatpush1.msra.mxu0 0.0
  %4443 = vmatprep.subr.mxu0 0.0
  %4444 = vmatpush1.msra.mxu0 0.0
  %4445 = vmatprep.subr.mxu0 0.0
  %4446 = vmatpush1.msra.mxu0 0.0
  %4447 = vmatprep.subr.mxu0 0.0
  %4448 = vmatpush1.msra.mxu0 0.0
  %4449 = vmatprep.subr.mxu0 0.0
  %4450 = vmatpush1.msra.mxu0 0.0
  %4451 = vmatprep.subr.mxu0 0.0
  %4452 = vmatpush1.msra.mxu0 0.0
  %4453 = vmatprep.subr.mxu0 0.0
  %4454 = vmatpush1.msra.mxu0 0.0
  %4455 = vmatprep.subr.mxu0 0.0
  %4456 = vmatpush1.msra.mxu0 0.0
  %4457 = vmatprep.subr.mxu0 0.0
  %4458 = vmatpush1.msra.mxu0 0.0
  %4459 = vmatprep.subr.mxu0 0.0
  %4460 = vmatpush1.msra.mxu0 0.0
  %4461 = vmatprep.subr.mxu0 0.0
  %4462 = vmatpush1.msra.mxu0 0.0
  %4463 = vmatprep.subr.mxu0 0.0
  %4464 = vmatpush1.msra.mxu0 0.0
  %4465 = vmatprep.subr.mxu0 0.0
  %4466 = vmatpush1.msra.mxu0 0.0
  %4467 = vmatprep.subr.mxu0 0.0
  %4468 = vmatpush1.msra.mxu0 0.0
  %4469 = vmatprep.subr.mxu0 0.0
  %4470 = vmatpush1.msra.mxu0 0.0
  %4471 = vmatprep.subr.mxu0 0.0
  %4472 = vmatpush1.msra.mxu0 0.0
  %4473 = vmatprep.subr.mxu0 0.0
  %4474 = vmatpush1.msra.mxu0 0.0
  %4475 = vmatprep.subr.mxu0 0.0
  %4476 = vmatpush1.msra.mxu0 0.0
  %4477 = vmatprep.mubr.f32.mxu0 0.0
  %4478 = vmatmul.mubr.f32.gmra.mrb[0].mxu0 %v4411
  %v4479 = vpop.f32.mrb[0].mxu0
  %v4480 = vadd.f32 0.0, %v4479
  %v4481 = vpop.f32.mrb[0].mxu0
  %v4482 = vadd.f32 0.0, %v4481
  %4483 = vdwg.mxu0
  %4484 = vmatprep.subr.mxu0 %v3747
  %4485 = vmatpush1.msra.mxu0 %v3746
  %4486 = vmatprep.subr.mxu0 0.0
  %4487 = vmatpush1.msra.mxu0 0.0
  %4488 = vmatprep.subr.mxu0 0.0
  %4489 = vmatpush1.msra.mxu0 0.0
  %4490 = vmatprep.subr.mxu0 0.0
  %4491 = vmatpush1.msra.mxu0 0.0
  %4492 = vmatprep.subr.mxu0 0.0
  %4493 = vmatpush1.msra.mxu0 0.0
  %4494 = vmatprep.subr.mxu0 0.0
  %4495 = vmatpush1.msra.mxu0 0.0
  %4496 = vmatprep.subr.mxu0 0.0
  %4497 = vmatpush1.msra.mxu0 0.0
  %4498 = vmatprep.subr.mxu0 0.0
  %4499 = vmatpush1.msra.mxu0 0.0
  %4500 = vmatprep.subr.mxu0 0.0
  %4501 = vmatpush1.msra.mxu0 0.0
  %4502 = vmatprep.subr.mxu0 0.0
  %4503 = vmatpush1.msra.mxu0 0.0
  %4504 = vmatprep.subr.mxu0 0.0
  %4505 = vmatpush1.msra.mxu0 0.0
  %4506 = vmatprep.subr.mxu0 0.0
  %4507 = vmatpush1.msra.mxu0 0.0
  %4508 = vmatprep.subr.mxu0 0.0
  %4509 = vmatpush1.msra.mxu0 0.0
  %4510 = vmatprep.subr.mxu0 0.0
  %4511 = vmatpush1.msra.mxu0 0.0
  %4512 = vmatprep.subr.mxu0 0.0
  %4513 = vmatpush1.msra.mxu0 0.0
  %4514 = vmatprep.subr.mxu0 0.0
  %4515 = vmatpush1.msra.mxu0 0.0
  %4516 = vmatprep.subr.mxu0 0.0
  %4517 = vmatpush1.msra.mxu0 0.0
  %4518 = vmatprep.subr.mxu0 0.0
  %4519 = vmatpush1.msra.mxu0 0.0
  %4520 = vmatprep.subr.mxu0 0.0
  %4521 = vmatpush1.msra.mxu0 0.0
  %4522 = vmatprep.subr.mxu0 0.0
  %4523 = vmatpush1.msra.mxu0 0.0
  %4524 = vmatprep.subr.mxu0 0.0
  %4525 = vmatpush1.msra.mxu0 0.0
  %4526 = vmatprep.subr.mxu0 0.0
  %4527 = vmatpush1.msra.mxu0 0.0
  %4528 = vmatprep.subr.mxu0 0.0
  %4529 = vmatpush1.msra.mxu0 0.0
  %4530 = vmatprep.subr.mxu0 0.0
  %4531 = vmatpush1.msra.mxu0 0.0
  %4532 = vmatprep.subr.mxu0 0.0
  %4533 = vmatpush1.msra.mxu0 0.0
  %4534 = vmatprep.subr.mxu0 0.0
  %4535 = vmatpush1.msra.mxu0 0.0
  %4536 = vmatprep.subr.mxu0 0.0
  %4537 = vmatpush1.msra.mxu0 0.0
  %4538 = vmatprep.subr.mxu0 0.0
  %4539 = vmatpush1.msra.mxu0 0.0
  %4540 = vmatprep.subr.mxu0 0.0
  %4541 = vmatpush1.msra.mxu0 0.0
  %4542 = vmatprep.subr.mxu0 0.0
  %4543 = vmatpush1.msra.mxu0 0.0
  %4544 = vmatprep.subr.mxu0 0.0
  %4545 = vmatpush1.msra.mxu0 0.0
  %4546 = vmatprep.subr.mxu0 0.0
  %4547 = vmatpush1.msra.mxu0 0.0
  %4548 = vmatprep.mubr.f32.mxu0 0.0
  %4549 = vmatmul.mubr.f32.gmra.mrb[0].mxu0 %v4411
  %v4550 = vpop.f32.mrb[0].mxu0
  %v4551 = vadd.f32 0.0, %v4550
  %v4552 = vpop.f32.mrb[0].mxu0
  %v4553 = vadd.f32 0.0, %v4552
  %4554 = vdwg.mxu0
  %v4555 = vadd.f32 %v4404, %v4480
  %v4556 = vadd.f32 %v4405, %v4482
  %v4557 = vadd.f32 %v4406, %v4551
  %v4558 = vadd.f32 %v4407, %v4553
  %4559 = vrot.lane.b32.xlu0 %v3744, 127
  %v4560 = vpop.permute.xlu0 %4559
  %4561 = vrot.lane.b32.xlu0 %v3745, 127
  %v4562 = vpop.permute.xlu0 %4561
  %4563 = vrot.lane.b32.xlu0 %v3746, 127
  %v4564 = vpop.permute.xlu0 %4563
  %4565 = vrot.lane.b32.xlu0 %v3747, 127
  %v4566 = vpop.permute.xlu0 %4565
  %v4567 = vsel %vm1286, %v4564, %v4566
  %v4568 = vsel %vm1286, %v4562, %v4564
  %v4569 = vsel %vm1286, %v4560, %v4562
  %v4570 = vsel %vm1286, %v4566, %v4560
  %v4571 = vmul.f32 %v4569, %v1294
  %v4572 = vmul.f32 %v4568, %v1298
  %v4573 = vmul.f32 %v4567, %v1302
  %v4574 = vmul.f32 %v4570, %v1306
  %s4575 = scalar_lea.vmem %s11, 40
  %v4576 = vld [vmem:[%s4575] sm:$0xff]
  %v4578 = vsel %vm3783, %v4576, 0
  %4580 = vmatprep.subr.mxu0 %v4572
  %4581 = vmatpush1.msra.mxu0 %v4571
  %4582 = vmatprep.subr.mxu0 0.0
  %4583 = vmatpush1.msra.mxu0 0.0
  %4584 = vmatprep.subr.mxu0 0.0
  %4585 = vmatpush1.msra.mxu0 0.0
  %4586 = vmatprep.subr.mxu0 0.0
  %4587 = vmatpush1.msra.mxu0 0.0
  %4588 = vmatprep.subr.mxu0 0.0
  %4589 = vmatpush1.msra.mxu0 0.0
  %4590 = vmatprep.subr.mxu0 0.0
  %4591 = vmatpush1.msra.mxu0 0.0
  %4592 = vmatprep.subr.mxu0 0.0
  %4593 = vmatpush1.msra.mxu0 0.0
  %4594 = vmatprep.subr.mxu0 0.0
  %4595 = vmatpush1.msra.mxu0 0.0
  %4596 = vmatprep.subr.mxu0 0.0
  %4597 = vmatpush1.msra.mxu0 0.0
  %4598 = vmatprep.subr.mxu0 0.0
  %4599 = vmatpush1.msra.mxu0 0.0
  %4600 = vmatprep.subr.mxu0 0.0
  %4601 = vmatpush1.msra.mxu0 0.0
  %4602 = vmatprep.subr.mxu0 0.0
  %4603 = vmatpush1.msra.mxu0 0.0
  %4604 = vmatprep.subr.mxu0 0.0
  %4605 = vmatpush1.msra.mxu0 0.0
  %4606 = vmatprep.subr.mxu0 0.0
  %4607 = vmatpush1.msra.mxu0 0.0
  %4608 = vmatprep.subr.mxu0 0.0
  %4609 = vmatpush1.msra.mxu0 0.0
  %4610 = vmatprep.subr.mxu0 0.0
  %4611 = vmatpush1.msra.mxu0 0.0
  %4612 = vmatprep.subr.mxu0 0.0
  %4613 = vmatpush1.msra.mxu0 0.0
  %4614 = vmatprep.subr.mxu0 0.0
  %4615 = vmatpush1.msra.mxu0 0.0
  %4616 = vmatprep.subr.mxu0 0.0
  %4617 = vmatpush1.msra.mxu0 0.0
  %4618 = vmatprep.subr.mxu0 0.0
  %4619 = vmatpush1.msra.mxu0 0.0
  %4620 = vmatprep.subr.mxu0 0.0
  %4621 = vmatpush1.msra.mxu0 0.0
  %4622 = vmatprep.subr.mxu0 0.0
  %4623 = vmatpush1.msra.mxu0 0.0
  %4624 = vmatprep.subr.mxu0 0.0
  %4625 = vmatpush1.msra.mxu0 0.0
  %4626 = vmatprep.subr.mxu0 0.0
  %4627 = vmatpush1.msra.mxu0 0.0
  %4628 = vmatprep.subr.mxu0 0.0
  %4629 = vmatpush1.msra.mxu0 0.0
  %4630 = vmatprep.subr.mxu0 0.0
  %4631 = vmatpush1.msra.mxu0 0.0
  %4632 = vmatprep.subr.mxu0 0.0
  %4633 = vmatpush1.msra.mxu0 0.0
  %4634 = vmatprep.subr.mxu0 0.0
  %4635 = vmatpush1.msra.mxu0 0.0
  %4636 = vmatprep.subr.mxu0 0.0
  %4637 = vmatpush1.msra.mxu0 0.0
  %4638 = vmatprep.subr.mxu0 0.0
  %4639 = vmatpush1.msra.mxu0 0.0
  %4640 = vmatprep.subr.mxu0 0.0
  %4641 = vmatpush1.msra.mxu0 0.0
  %4642 = vmatprep.subr.mxu0 0.0
  %4643 = vmatpush1.msra.mxu0 0.0
  %4644 = vmatprep.mubr.f32.mxu0 0.0
  %4645 = vmatmul.mubr.f32.gmra.mrb[0].mxu0 %v4578
  %v4646 = vpop.f32.mrb[0].mxu0
  %v4647 = vadd.f32 0.0, %v4646
  %v4648 = vpop.f32.mrb[0].mxu0
  %v4649 = vadd.f32 0.0, %v4648
  %4650 = vdwg.mxu0
  %4651 = vmatprep.subr.mxu0 %v4574
  %4652 = vmatpush1.msra.mxu0 %v4573
  %4653 = vmatprep.subr.mxu0 0.0
  %4654 = vmatpush1.msra.mxu0 0.0
  %4655 = vmatprep.subr.mxu0 0.0
  %4656 = vmatpush1.msra.mxu0 0.0
  %4657 = vmatprep.subr.mxu0 0.0
  %4658 = vmatpush1.msra.mxu0 0.0
  %4659 = vmatprep.subr.mxu0 0.0
  %4660 = vmatpush1.msra.mxu0 0.0
  %4661 = vmatprep.subr.mxu0 0.0
  %4662 = vmatpush1.msra.mxu0 0.0
  %4663 = vmatprep.subr.mxu0 0.0
  %4664 = vmatpush1.msra.mxu0 0.0
  %4665 = vmatprep.subr.mxu0 0.0
  %4666 = vmatpush1.msra.mxu0 0.0
  %4667 = vmatprep.subr.mxu0 0.0
  %4668 = vmatpush1.msra.mxu0 0.0
  %4669 = vmatprep.subr.mxu0 0.0
  %4670 = vmatpush1.msra.mxu0 0.0
  %4671 = vmatprep.subr.mxu0 0.0
  %4672 = vmatpush1.msra.mxu0 0.0
  %4673 = vmatprep.subr.mxu0 0.0
  %4674 = vmatpush1.msra.mxu0 0.0
  %4675 = vmatprep.subr.mxu0 0.0
  %4676 = vmatpush1.msra.mxu0 0.0
  %4677 = vmatprep.subr.mxu0 0.0
  %4678 = vmatpush1.msra.mxu0 0.0
  %4679 = vmatprep.subr.mxu0 0.0
  %4680 = vmatpush1.msra.mxu0 0.0
  %4681 = vmatprep.subr.mxu0 0.0
  %4682 = vmatpush1.msra.mxu0 0.0
  %4683 = vmatprep.subr.mxu0 0.0
  %4684 = vmatpush1.msra.mxu0 0.0
  %4685 = vmatprep.subr.mxu0 0.0
  %4686 = vmatpush1.msra.mxu0 0.0
  %4687 = vmatprep.subr.mxu0 0.0
  %4688 = vmatpush1.msra.mxu0 0.0
  %4689 = vmatprep.subr.mxu0 0.0
  %4690 = vmatpush1.msra.mxu0 0.0
  %4691 = vmatprep.subr.mxu0 0.0
  %4692 = vmatpush1.msra.mxu0 0.0
  %4693 = vmatprep.subr.mxu0 0.0
  %4694 = vmatpush1.msra.mxu0 0.0
  %4695 = vmatprep.subr.mxu0 0.0
  %4696 = vmatpush1.msra.mxu0 0.0
  %4697 = vmatprep.subr.mxu0 0.0
  %4698 = vmatpush1.msra.mxu0 0.0
  %4699 = vmatprep.subr.mxu0 0.0
  %4700 = vmatpush1.msra.mxu0 0.0
  %4701 = vmatprep.subr.mxu0 0.0
  %4702 = vmatpush1.msra.mxu0 0.0
  %4703 = vmatprep.subr.mxu0 0.0
  %4704 = vmatpush1.msra.mxu0 0.0
  %4705 = vmatprep.subr.mxu0 0.0
  %4706 = vmatpush1.msra.mxu0 0.0
  %4707 = vmatprep.subr.mxu0 0.0
  %4708 = vmatpush1.msra.mxu0 0.0
  %4709 = vmatprep.subr.mxu0 0.0
  %4710 = vmatpush1.msra.mxu0 0.0
  %4711 = vmatprep.subr.mxu0 0.0
  %4712 = vmatpush1.msra.mxu0 0.0
  %4713 = vmatprep.subr.mxu0 0.0
  %4714 = vmatpush1.msra.mxu0 0.0
  %4715 = vmatprep.mubr.f32.mxu0 0.0
  %4716 = vmatmul.mubr.f32.gmra.mrb[0].mxu0 %v4578
  %v4717 = vpop.f32.mrb[0].mxu0
  %v4718 = vadd.f32 0.0, %v4717
  %v4719 = vpop.f32.mrb[0].mxu0
  %v4720 = vadd.f32 0.0, %v4719
  %4721 = vdwg.mxu0
  %v4722 = vadd.f32 %v4555, %v4647
  %v4723 = vadd.f32 %v4556, %v4649
  %v4724 = vadd.f32 %v4557, %v4718
  %v4725 = vadd.f32 %v4558, %v4720
  %4726 = vrot.lane.b32.xlu0 %v3744, 113
  %v4727 = vpop.permute.xlu0 %4726
  %4728 = vrot.lane.b32.xlu0 %v3745, 113
  %v4729 = vpop.permute.xlu0 %4728
  %4730 = vrot.lane.b32.xlu0 %v3746, 113
  %v4731 = vpop.permute.xlu0 %4730
  %4732 = vrot.lane.b32.xlu0 %v3747, 113
  %v4733 = vpop.permute.xlu0 %4732
  %v4734 = vsel %vm1482, %v4731, %v4733
  %v4735 = vsel %vm1482, %v4729, %v4731
  %v4736 = vsel %vm1482, %v4727, %v4729
  %v4737 = vsel %vm1482, %v4733, %v4727
  %v4738 = vmul.f32 %v4736, %v1490
  %v4739 = vmul.f32 %v4735, %v1494
  %v4740 = vmul.f32 %v4734, %v1498
  %v4741 = vmul.f32 %v4737, %v1502
  %s4742 = scalar_lea.vmem %s11, 48
  %v4743 = vld [vmem:[%s4742] sm:$0xff]
  %v4745 = vsel %vm3783, %v4743, 0
  %4747 = vmatprep.subr.mxu0 %v4739
  %4748 = vmatpush1.msra.mxu0 %v4738
  %4749 = vmatprep.subr.mxu0 0.0
  %4750 = vmatpush1.msra.mxu0 0.0
  %4751 = vmatprep.subr.mxu0 0.0
  %4752 = vmatpush1.msra.mxu0 0.0
  %4753 = vmatprep.subr.mxu0 0.0
  %4754 = vmatpush1.msra.mxu0 0.0
  %4755 = vmatprep.subr.mxu0 0.0
  %4756 = vmatpush1.msra.mxu0 0.0
  %4757 = vmatprep.subr.mxu0 0.0
  %4758 = vmatpush1.msra.mxu0 0.0
  %4759 = vmatprep.subr.mxu0 0.0
  %4760 = vmatpush1.msra.mxu0 0.0
  %4761 = vmatprep.subr.mxu0 0.0
  %4762 = vmatpush1.msra.mxu0 0.0
  %4763 = vmatprep.subr.mxu0 0.0
  %4764 = vmatpush1.msra.mxu0 0.0
  %4765 = vmatprep.subr.mxu0 0.0
  %4766 = vmatpush1.msra.mxu0 0.0
  %4767 = vmatprep.subr.mxu0 0.0
  %4768 = vmatpush1.msra.mxu0 0.0
  %4769 = vmatprep.subr.mxu0 0.0
  %4770 = vmatpush1.msra.mxu0 0.0
  %4771 = vmatprep.subr.mxu0 0.0
  %4772 = vmatpush1.msra.mxu0 0.0
  %4773 = vmatprep.subr.mxu0 0.0
  %4774 = vmatpush1.msra.mxu0 0.0
  %4775 = vmatprep.subr.mxu0 0.0
  %4776 = vmatpush1.msra.mxu0 0.0
  %4777 = vmatprep.subr.mxu0 0.0
  %4778 = vmatpush1.msra.mxu0 0.0
  %4779 = vmatprep.subr.mxu0 0.0
  %4780 = vmatpush1.msra.mxu0 0.0
  %4781 = vmatprep.subr.mxu0 0.0
  %4782 = vmatpush1.msra.mxu0 0.0
  %4783 = vmatprep.subr.mxu0 0.0
  %4784 = vmatpush1.msra.mxu0 0.0
  %4785 = vmatprep.subr.mxu0 0.0
  %4786 = vmatpush1.msra.mxu0 0.0
  %4787 = vmatprep.subr.mxu0 0.0
  %4788 = vmatpush1.msra.mxu0 0.0
  %4789 = vmatprep.subr.mxu0 0.0
  %4790 = vmatpush1.msra.mxu0 0.0
  %4791 = vmatprep.subr.mxu0 0.0
  %4792 = vmatpush1.msra.mxu0 0.0
  %4793 = vmatprep.subr.mxu0 0.0
  %4794 = vmatpush1.msra.mxu0 0.0
  %4795 = vmatprep.subr.mxu0 0.0
  %4796 = vmatpush1.msra.mxu0 0.0
  %4797 = vmatprep.subr.mxu0 0.0
  %4798 = vmatpush1.msra.mxu0 0.0
  %4799 = vmatprep.subr.mxu0 0.0
  %4800 = vmatpush1.msra.mxu0 0.0
  %4801 = vmatprep.subr.mxu0 0.0
  %4802 = vmatpush1.msra.mxu0 0.0
  %4803 = vmatprep.subr.mxu0 0.0
  %4804 = vmatpush1.msra.mxu0 0.0
  %4805 = vmatprep.subr.mxu0 0.0
  %4806 = vmatpush1.msra.mxu0 0.0
  %4807 = vmatprep.subr.mxu0 0.0
  %4808 = vmatpush1.msra.mxu0 0.0
  %4809 = vmatprep.subr.mxu0 0.0
  %4810 = vmatpush1.msra.mxu0 0.0
  %4811 = vmatprep.mubr.f32.mxu0 0.0
  %4812 = vmatmul.mubr.f32.gmra.mrb[0].mxu0 %v4745
  %v4813 = vpop.f32.mrb[0].mxu0
  %v4814 = vadd.f32 0.0, %v4813
  %v4815 = vpop.f32.mrb[0].mxu0
  %v4816 = vadd.f32 0.0, %v4815
  %4817 = vdwg.mxu0
  %4818 = vmatprep.subr.mxu0 %v4741
  %4819 = vmatpush1.msra.mxu0 %v4740
  %4820 = vmatprep.subr.mxu0 0.0
  %4821 = vmatpush1.msra.mxu0 0.0
  %4822 = vmatprep.subr.mxu0 0.0
  %4823 = vmatpush1.msra.mxu0 0.0
  %4824 = vmatprep.subr.mxu0 0.0
  %4825 = vmatpush1.msra.mxu0 0.0
  %4826 = vmatprep.subr.mxu0 0.0
  %4827 = vmatpush1.msra.mxu0 0.0
  %4828 = vmatprep.subr.mxu0 0.0
  %4829 = vmatpush1.msra.mxu0 0.0
  %4830 = vmatprep.subr.mxu0 0.0
  %4831 = vmatpush1.msra.mxu0 0.0
  %4832 = vmatprep.subr.mxu0 0.0
  %4833 = vmatpush1.msra.mxu0 0.0
  %4834 = vmatprep.subr.mxu0 0.0
  %4835 = vmatpush1.msra.mxu0 0.0
  %4836 = vmatprep.subr.mxu0 0.0
  %4837 = vmatpush1.msra.mxu0 0.0
  %4838 = vmatprep.subr.mxu0 0.0
  %4839 = vmatpush1.msra.mxu0 0.0
  %4840 = vmatprep.subr.mxu0 0.0
  %4841 = vmatpush1.msra.mxu0 0.0
  %4842 = vmatprep.subr.mxu0 0.0
  %4843 = vmatpush1.msra.mxu0 0.0
  %4844 = vmatprep.subr.mxu0 0.0
  %4845 = vmatpush1.msra.mxu0 0.0
  %4846 = vmatprep.subr.mxu0 0.0
  %4847 = vmatpush1.msra.mxu0 0.0
  %4848 = vmatprep.subr.mxu0 0.0
  %4849 = vmatpush1.msra.mxu0 0.0
  %4850 = vmatprep.subr.mxu0 0.0
  %4851 = vmatpush1.msra.mxu0 0.0
  %4852 = vmatprep.subr.mxu0 0.0
  %4853 = vmatpush1.msra.mxu0 0.0
  %4854 = vmatprep.subr.mxu0 0.0
  %4855 = vmatpush1.msra.mxu0 0.0
  %4856 = vmatprep.subr.mxu0 0.0
  %4857 = vmatpush1.msra.mxu0 0.0
  %4858 = vmatprep.subr.mxu0 0.0
  %4859 = vmatpush1.msra.mxu0 0.0
  %4860 = vmatprep.subr.mxu0 0.0
  %4861 = vmatpush1.msra.mxu0 0.0
  %4862 = vmatprep.subr.mxu0 0.0
  %4863 = vmatpush1.msra.mxu0 0.0
  %4864 = vmatprep.subr.mxu0 0.0
  %4865 = vmatpush1.msra.mxu0 0.0
  %4866 = vmatprep.subr.mxu0 0.0
  %4867 = vmatpush1.msra.mxu0 0.0
  %4868 = vmatprep.subr.mxu0 0.0
  %4869 = vmatpush1.msra.mxu0 0.0
  %4870 = vmatprep.subr.mxu0 0.0
  %4871 = vmatpush1.msra.mxu0 0.0
  %4872 = vmatprep.subr.mxu0 0.0
  %4873 = vmatpush1.msra.mxu0 0.0
  %4874 = vmatprep.subr.mxu0 0.0
  %4875 = vmatpush1.msra.mxu0 0.0
  %4876 = vmatprep.subr.mxu0 0.0
  %4877 = vmatpush1.msra.mxu0 0.0
  %4878 = vmatprep.subr.mxu0 0.0
  %4879 = vmatpush1.msra.mxu0 0.0
  %4880 = vmatprep.subr.mxu0 0.0
  %4881 = vmatpush1.msra.mxu0 0.0
  %4882 = vmatprep.mubr.f32.mxu0 0.0
  %4883 = vmatmul.mubr.f32.gmra.mrb[0].mxu0 %v4745
  %v4884 = vpop.f32.mrb[0].mxu0
  %v4885 = vadd.f32 0.0, %v4884
  %v4886 = vpop.f32.mrb[0].mxu0
  %v4887 = vadd.f32 0.0, %v4886
  %4888 = vdwg.mxu0
  %v4889 = vadd.f32 %v4722, %v4814
  %v4890 = vadd.f32 %v4723, %v4816
  %v4891 = vadd.f32 %v4724, %v4885
  %v4892 = vadd.f32 %v4725, %v4887
  %4893 = vrot.lane.b32.xlu0 %v3744, 112
  %v4894 = vpop.permute.xlu0 %4893
  %4895 = vrot.lane.b32.xlu0 %v3745, 112
  %v4896 = vpop.permute.xlu0 %4895
  %4897 = vrot.lane.b32.xlu0 %v3746, 112
  %v4898 = vpop.permute.xlu0 %4897
  %4899 = vrot.lane.b32.xlu0 %v3747, 112
  %v4900 = vpop.permute.xlu0 %4899
  %v4901 = vsel %vm1678, %v4898, %v4900
  %v4902 = vsel %vm1678, %v4896, %v4898
  %v4903 = vsel %vm1678, %v4894, %v4896
  %v4904 = vsel %vm1678, %v4900, %v4894
  %v4905 = vmul.f32 %v4903, %v1686
  %v4906 = vmul.f32 %v4902, %v1690
  %v4907 = vmul.f32 %v4901, %v1694
  %v4908 = vmul.f32 %v4904, %v1698
  %s4909 = scalar_lea.vmem %s11, 56
  %v4910 = vld [vmem:[%s4909] sm:$0xff]
  %v4912 = vsel %vm3783, %v4910, 0
  %4914 = vmatprep.subr.mxu0 %v4906
  %4915 = vmatpush1.msra.mxu0 %v4905
  %4916 = vmatprep.subr.mxu0 0.0
  %4917 = vmatpush1.msra.mxu0 0.0
  %4918 = vmatprep.subr.mxu0 0.0
  %4919 = vmatpush1.msra.mxu0 0.0
  %4920 = vmatprep.subr.mxu0 0.0
  %4921 = vmatpush1.msra.mxu0 0.0
  %4922 = vmatprep.subr.mxu0 0.0
  %4923 = vmatpush1.msra.mxu0 0.0
  %4924 = vmatprep.subr.mxu0 0.0
  %4925 = vmatpush1.msra.mxu0 0.0
  %4926 = vmatprep.subr.mxu0 0.0
  %4927 = vmatpush1.msra.mxu0 0.0
  %4928 = vmatprep.subr.mxu0 0.0
  %4929 = vmatpush1.msra.mxu0 0.0
  %4930 = vmatprep.subr.mxu0 0.0
  %4931 = vmatpush1.msra.mxu0 0.0
  %4932 = vmatprep.subr.mxu0 0.0
  %4933 = vmatpush1.msra.mxu0 0.0
  %4934 = vmatprep.subr.mxu0 0.0
  %4935 = vmatpush1.msra.mxu0 0.0
  %4936 = vmatprep.subr.mxu0 0.0
  %4937 = vmatpush1.msra.mxu0 0.0
  %4938 = vmatprep.subr.mxu0 0.0
  %4939 = vmatpush1.msra.mxu0 0.0
  %4940 = vmatprep.subr.mxu0 0.0
  %4941 = vmatpush1.msra.mxu0 0.0
  %4942 = vmatprep.subr.mxu0 0.0
  %4943 = vmatpush1.msra.mxu0 0.0
  %4944 = vmatprep.subr.mxu0 0.0
  %4945 = vmatpush1.msra.mxu0 0.0
  %4946 = vmatprep.subr.mxu0 0.0
  %4947 = vmatpush1.msra.mxu0 0.0
  %4948 = vmatprep.subr.mxu0 0.0
  %4949 = vmatpush1.msra.mxu0 0.0
  %4950 = vmatprep.subr.mxu0 0.0
  %4951 = vmatpush1.msra.mxu0 0.0
  %4952 = vmatprep.subr.mxu0 0.0
  %4953 = vmatpush1.msra.mxu0 0.0
  %4954 = vmatprep.subr.mxu0 0.0
  %4955 = vmatpush1.msra.mxu0 0.0
  %4956 = vmatprep.subr.mxu0 0.0
  %4957 = vmatpush1.msra.mxu0 0.0
  %4958 = vmatprep.subr.mxu0 0.0
  %4959 = vmatpush1.msra.mxu0 0.0
  %4960 = vmatprep.subr.mxu0 0.0
  %4961 = vmatpush1.msra.mxu0 0.0
  %4962 = vmatprep.subr.mxu0 0.0
  %4963 = vmatpush1.msra.mxu0 0.0
  %4964 = vmatprep.subr.mxu0 0.0
  %4965 = vmatpush1.msra.mxu0 0.0
  %4966 = vmatprep.subr.mxu0 0.0
  %4967 = vmatpush1.msra.mxu0 0.0
  %4968 = vmatprep.subr.mxu0 0.0
  %4969 = vmatpush1.msra.mxu0 0.0
  %4970 = vmatprep.subr.mxu0 0.0
  %4971 = vmatpush1.msra.mxu0 0.0
  %4972 = vmatprep.subr.mxu0 0.0
  %4973 = vmatpush1.msra.mxu0 0.0
  %4974 = vmatprep.subr.mxu0 0.0
  %4975 = vmatpush1.msra.mxu0 0.0
  %4976 = vmatprep.subr.mxu0 0.0
  %4977 = vmatpush1.msra.mxu0 0.0
  %4978 = vmatprep.mubr.f32.mxu0 0.0
  %4979 = vmatmul.mubr.f32.gmra.mrb[0].mxu0 %v4912
  %v4980 = vpop.f32.mrb[0].mxu0
  %v4981 = vadd.f32 0.0, %v4980
  %v4982 = vpop.f32.mrb[0].mxu0
  %v4983 = vadd.f32 0.0, %v4982
  %4984 = vdwg.mxu0
  %4985 = vmatprep.subr.mxu0 %v4908
  %4986 = vmatpush1.msra.mxu0 %v4907
  %4987 = vmatprep.subr.mxu0 0.0
  %4988 = vmatpush1.msra.mxu0 0.0
  %4989 = vmatprep.subr.mxu0 0.0
  %4990 = vmatpush1.msra.mxu0 0.0
  %4991 = vmatprep.subr.mxu0 0.0
  %4992 = vmatpush1.msra.mxu0 0.0
  %4993 = vmatprep.subr.mxu0 0.0
  %4994 = vmatpush1.msra.mxu0 0.0
  %4995 = vmatprep.subr.mxu0 0.0
  %4996 = vmatpush1.msra.mxu0 0.0
  %4997 = vmatprep.subr.mxu0 0.0
  %4998 = vmatpush1.msra.mxu0 0.0
  %4999 = vmatprep.subr.mxu0 0.0
  %5000 = vmatpush1.msra.mxu0 0.0
  %5001 = vmatprep.subr.mxu0 0.0
  %5002 = vmatpush1.msra.mxu0 0.0
  %5003 = vmatprep.subr.mxu0 0.0
  %5004 = vmatpush1.msra.mxu0 0.0
  %5005 = vmatprep.subr.mxu0 0.0
  %5006 = vmatpush1.msra.mxu0 0.0
  %5007 = vmatprep.subr.mxu0 0.0
  %5008 = vmatpush1.msra.mxu0 0.0
  %5009 = vmatprep.subr.mxu0 0.0
  %5010 = vmatpush1.msra.mxu0 0.0
  %5011 = vmatprep.subr.mxu0 0.0
  %5012 = vmatpush1.msra.mxu0 0.0
  %5013 = vmatprep.subr.mxu0 0.0
  %5014 = vmatpush1.msra.mxu0 0.0
  %5015 = vmatprep.subr.mxu0 0.0
  %5016 = vmatpush1.msra.mxu0 0.0
  %5017 = vmatprep.subr.mxu0 0.0
  %5018 = vmatpush1.msra.mxu0 0.0
  %5019 = vmatprep.subr.mxu0 0.0
  %5020 = vmatpush1.msra.mxu0 0.0
  %5021 = vmatprep.subr.mxu0 0.0
  %5022 = vmatpush1.msra.mxu0 0.0
  %5023 = vmatprep.subr.mxu0 0.0
  %5024 = vmatpush1.msra.mxu0 0.0
  %5025 = vmatprep.subr.mxu0 0.0
  %5026 = vmatpush1.msra.mxu0 0.0
  %5027 = vmatprep.subr.mxu0 0.0
  %5028 = vmatpush1.msra.mxu0 0.0
  %5029 = vmatprep.subr.mxu0 0.0
  %5030 = vmatpush1.msra.mxu0 0.0
  %5031 = vmatprep.subr.mxu0 0.0
  %5032 = vmatpush1.msra.mxu0 0.0
  %5033 = vmatprep.subr.mxu0 0.0
  %5034 = vmatpush1.msra.mxu0 0.0
  %5035 = vmatprep.subr.mxu0 0.0
  %5036 = vmatpush1.msra.mxu0 0.0
  %5037 = vmatprep.subr.mxu0 0.0
  %5038 = vmatpush1.msra.mxu0 0.0
  %5039 = vmatprep.subr.mxu0 0.0
  %5040 = vmatpush1.msra.mxu0 0.0
  %5041 = vmatprep.subr.mxu0 0.0
  %5042 = vmatpush1.msra.mxu0 0.0
  %5043 = vmatprep.subr.mxu0 0.0
  %5044 = vmatpush1.msra.mxu0 0.0
  %5045 = vmatprep.subr.mxu0 0.0
  %5046 = vmatpush1.msra.mxu0 0.0
  %5047 = vmatprep.subr.mxu0 0.0
  %5048 = vmatpush1.msra.mxu0 0.0
  %5049 = vmatprep.mubr.f32.mxu0 0.0
  %5050 = vmatmul.mubr.f32.gmra.mrb[0].mxu0 %v4912
  %v5051 = vpop.f32.mrb[0].mxu0
  %v5052 = vadd.f32 0.0, %v5051
  %v5053 = vpop.f32.mrb[0].mxu0
  %v5054 = vadd.f32 0.0, %v5053
  %5055 = vdwg.mxu0
  %v5056 = vadd.f32 %v4889, %v4981
  %v5057 = vadd.f32 %v4890, %v4983
  %v5058 = vadd.f32 %v4891, %v5052
  %v5059 = vadd.f32 %v4892, %v5054
  %5060 = vrot.lane.b32.xlu0 %v3744, 111
  %v5061 = vpop.permute.xlu0 %5060
  %5062 = vrot.lane.b32.xlu0 %v3745, 111
  %v5063 = vpop.permute.xlu0 %5062
  %5064 = vrot.lane.b32.xlu0 %v3746, 111
  %v5065 = vpop.permute.xlu0 %5064
  %5066 = vrot.lane.b32.xlu0 %v3747, 111
  %v5067 = vpop.permute.xlu0 %5066
  %v5068 = vsel %vm1874, %v5065, %v5067
  %v5069 = vsel %vm1874, %v5063, %v5065
  %v5070 = vsel %vm1874, %v5061, %v5063
  %v5071 = vsel %vm1874, %v5067, %v5061
  %v5072 = vmul.f32 %v5070, %v1882
  %v5073 = vmul.f32 %v5069, %v1886
  %v5074 = vmul.f32 %v5068, %v1890
  %v5075 = vmul.f32 %v5071, %v1894
  %s5076 = scalar_lea.vmem %s11, 64
  %v5077 = vld [vmem:[%s5076] sm:$0xff]
  %v5079 = vsel %vm3783, %v5077, 0
  %5081 = vmatprep.subr.mxu0 %v5073
  %5082 = vmatpush1.msra.mxu0 %v5072
  %5083 = vmatprep.subr.mxu0 0.0
  %5084 = vmatpush1.msra.mxu0 0.0
  %5085 = vmatprep.subr.mxu0 0.0
  %5086 = vmatpush1.msra.mxu0 0.0
  %5087 = vmatprep.subr.mxu0 0.0
  %5088 = vmatpush1.msra.mxu0 0.0
  %5089 = vmatprep.subr.mxu0 0.0
  %5090 = vmatpush1.msra.mxu0 0.0
  %5091 = vmatprep.subr.mxu0 0.0
  %5092 = vmatpush1.msra.mxu0 0.0
  %5093 = vmatprep.subr.mxu0 0.0
  %5094 = vmatpush1.msra.mxu0 0.0
  %5095 = vmatprep.subr.mxu0 0.0
  %5096 = vmatpush1.msra.mxu0 0.0
  %5097 = vmatprep.subr.mxu0 0.0
  %5098 = vmatpush1.msra.mxu0 0.0
  %5099 = vmatprep.subr.mxu0 0.0
  %5100 = vmatpush1.msra.mxu0 0.0
  %5101 = vmatprep.subr.mxu0 0.0
  %5102 = vmatpush1.msra.mxu0 0.0
  %5103 = vmatprep.subr.mxu0 0.0
  %5104 = vmatpush1.msra.mxu0 0.0
  %5105 = vmatprep.subr.mxu0 0.0
  %5106 = vmatpush1.msra.mxu0 0.0
  %5107 = vmatprep.subr.mxu0 0.0
  %5108 = vmatpush1.msra.mxu0 0.0
  %5109 = vmatprep.subr.mxu0 0.0
  %5110 = vmatpush1.msra.mxu0 0.0
  %5111 = vmatprep.subr.mxu0 0.0
  %5112 = vmatpush1.msra.mxu0 0.0
  %5113 = vmatprep.subr.mxu0 0.0
  %5114 = vmatpush1.msra.mxu0 0.0
  %5115 = vmatprep.subr.mxu0 0.0
  %5116 = vmatpush1.msra.mxu0 0.0
  %5117 = vmatprep.subr.mxu0 0.0
  %5118 = vmatpush1.msra.mxu0 0.0
  %5119 = vmatprep.subr.mxu0 0.0
  %5120 = vmatpush1.msra.mxu0 0.0
  %5121 = vmatprep.subr.mxu0 0.0
  %5122 = vmatpush1.msra.mxu0 0.0
  %5123 = vmatprep.subr.mxu0 0.0
  %5124 = vmatpush1.msra.mxu0 0.0
  %5125 = vmatprep.subr.mxu0 0.0
  %5126 = vmatpush1.msra.mxu0 0.0
  %5127 = vmatprep.subr.mxu0 0.0
  %5128 = vmatpush1.msra.mxu0 0.0
  %5129 = vmatprep.subr.mxu0 0.0
  %5130 = vmatpush1.msra.mxu0 0.0
  %5131 = vmatprep.subr.mxu0 0.0
  %5132 = vmatpush1.msra.mxu0 0.0
  %5133 = vmatprep.subr.mxu0 0.0
  %5134 = vmatpush1.msra.mxu0 0.0
  %5135 = vmatprep.subr.mxu0 0.0
  %5136 = vmatpush1.msra.mxu0 0.0
  %5137 = vmatprep.subr.mxu0 0.0
  %5138 = vmatpush1.msra.mxu0 0.0
  %5139 = vmatprep.subr.mxu0 0.0
  %5140 = vmatpush1.msra.mxu0 0.0
  %5141 = vmatprep.subr.mxu0 0.0
  %5142 = vmatpush1.msra.mxu0 0.0
  %5143 = vmatprep.subr.mxu0 0.0
  %5144 = vmatpush1.msra.mxu0 0.0
  %5145 = vmatprep.mubr.f32.mxu0 0.0
  %5146 = vmatmul.mubr.f32.gmra.mrb[0].mxu0 %v5079
  %v5147 = vpop.f32.mrb[0].mxu0
  %v5148 = vadd.f32 0.0, %v5147
  %v5149 = vpop.f32.mrb[0].mxu0
  %v5150 = vadd.f32 0.0, %v5149
  %5151 = vdwg.mxu0
  %5152 = vmatprep.subr.mxu0 %v5075
  %5153 = vmatpush1.msra.mxu0 %v5074
  %5154 = vmatprep.subr.mxu0 0.0
  %5155 = vmatpush1.msra.mxu0 0.0
  %5156 = vmatprep.subr.mxu0 0.0
  %5157 = vmatpush1.msra.mxu0 0.0
  %5158 = vmatprep.subr.mxu0 0.0
  %5159 = vmatpush1.msra.mxu0 0.0
  %5160 = vmatprep.subr.mxu0 0.0
  %5161 = vmatpush1.msra.mxu0 0.0
  %5162 = vmatprep.subr.mxu0 0.0
  %5163 = vmatpush1.msra.mxu0 0.0
  %5164 = vmatprep.subr.mxu0 0.0
  %5165 = vmatpush1.msra.mxu0 0.0
  %5166 = vmatprep.subr.mxu0 0.0
  %5167 = vmatpush1.msra.mxu0 0.0
  %5168 = vmatprep.subr.mxu0 0.0
  %5169 = vmatpush1.msra.mxu0 0.0
  %5170 = vmatprep.subr.mxu0 0.0
  %5171 = vmatpush1.msra.mxu0 0.0
  %5172 = vmatprep.subr.mxu0 0.0
  %5173 = vmatpush1.msra.mxu0 0.0
  %5174 = vmatprep.subr.mxu0 0.0
  %5175 = vmatpush1.msra.mxu0 0.0
  %5176 = vmatprep.subr.mxu0 0.0
  %5177 = vmatpush1.msra.mxu0 0.0
  %5178 = vmatprep.subr.mxu0 0.0
  %5179 = vmatpush1.msra.mxu0 0.0
  %5180 = vmatprep.subr.mxu0 0.0
  %5181 = vmatpush1.msra.mxu0 0.0
  %5182 = vmatprep.subr.mxu0 0.0
  %5183 = vmatpush1.msra.mxu0 0.0
  %5184 = vmatprep.subr.mxu0 0.0
  %5185 = vmatpush1.msra.mxu0 0.0
  %5186 = vmatprep.subr.mxu0 0.0
  %5187 = vmatpush1.msra.mxu0 0.0
  %5188 = vmatprep.subr.mxu0 0.0
  %5189 = vmatpush1.msra.mxu0 0.0
  %5190 = vmatprep.subr.mxu0 0.0
  %5191 = vmatpush1.msra.mxu0 0.0
  %5192 = vmatprep.subr.mxu0 0.0
  %5193 = vmatpush1.msra.mxu0 0.0
  %5194 = vmatprep.subr.mxu0 0.0
  %5195 = vmatpush1.msra.mxu0 0.0
  %5196 = vmatprep.subr.mxu0 0.0
  %5197 = vmatpush1.msra.mxu0 0.0
  %5198 = vmatprep.subr.mxu0 0.0
  %5199 = vmatpush1.msra.mxu0 0.0
  %5200 = vmatprep.subr.mxu0 0.0
  %5201 = vmatpush1.msra.mxu0 0.0
  %5202 = vmatprep.subr.mxu0 0.0
  %5203 = vmatpush1.msra.mxu0 0.0
  %5204 = vmatprep.subr.mxu0 0.0
  %5205 = vmatpush1.msra.mxu0 0.0
  %5206 = vmatprep.subr.mxu0 0.0
  %5207 = vmatpush1.msra.mxu0 0.0
  %5208 = vmatprep.subr.mxu0 0.0
  %5209 = vmatpush1.msra.mxu0 0.0
  %5210 = vmatprep.subr.mxu0 0.0
  %5211 = vmatpush1.msra.mxu0 0.0
  %5212 = vmatprep.subr.mxu0 0.0
  %5213 = vmatpush1.msra.mxu0 0.0
  %5214 = vmatprep.subr.mxu0 0.0
  %5215 = vmatpush1.msra.mxu0 0.0
  %5216 = vmatprep.mubr.f32.mxu0 0.0
  %5217 = vmatmul.mubr.f32.gmra.mrb[0].mxu0 %v5079
  %v5218 = vpop.f32.mrb[0].mxu0
  %v5219 = vadd.f32 0.0, %v5218
  %v5220 = vpop.f32.mrb[0].mxu0
  %v5221 = vadd.f32 0.0, %v5220
  %5222 = vdwg.mxu0
  %v5223 = vadd.f32 %v5056, %v5148
  %v5224 = vadd.f32 %v5057, %v5150
  %v5225 = vadd.f32 %v5058, %v5219
  %v5226 = vadd.f32 %v5059, %v5221
  %v5227 = vld [vmem:[%s12] sm:$0xff]
  %v5228 = vld [vmem:[%s13] sm:$0xff]
  %v5229 = vadd.f32 %v5223, %v5224
  %v5230 = vadd.f32 %v5229, %v5225
  %v5231 = vadd.f32 %v5230, %v5226
  %5232 = vadd.xlane.f32.xlu0 %v5231
  %v5233 = vpop.xlane.xlu0 %5232
  %v5234 = vmul.f32 %v5233, 0.001953125
  %v5235 = vmul.f32 %v5223, %v5223
  %v5236 = vmul.f32 %v5224, %v5224
  %v5237 = vmul.f32 %v5225, %v5225
  %v5238 = vmul.f32 %v5226, %v5226
  %v5239 = vadd.f32 %v5235, %v5236
  %v5240 = vadd.f32 %v5239, %v5237
  %v5241 = vadd.f32 %v5240, %v5238
  %5242 = vadd.xlane.f32.xlu0 %v5241
  %v5243 = vpop.xlane.xlu0 %5242
  %v5244 = vmul.f32 %v5243, 0.001953125
  %v5245 = vmul.f32 %v5234, %v5234
  %v5246 = vsub.f32 %v5244, %v5245
  %v5247 = vmax.f32 %v5246, 0.0
  %v5248 = vadd.f32 %v5247, 1e-05
  %v5249 = vrsqrt.pop %v5248
  %v5250 = vmul.f32 %v5227, %v5249
  %v5251 = vmul.f32 %v5234, %v5250
  %v5252 = vsub.f32 %v5228, %v5251
  %5254 = vset.pattern.permute.xlu0 0
  %5255 = vperm.xlu0 %5254, %v5250
  %v5256 = vpop.permute.xlu0 %5255
  %v5258 = vmul.f32 %v5223, %v5256
  %v5259 = vmul.f32 %v5224, %v5256
  %v5260 = vmul.f32 %v5225, %v5256
  %v5261 = vmul.f32 %v5226, %v5256
  %5263 = vset.pattern.permute.xlu0 0
  %5264 = vperm.xlu0 %5263, %v5252
  %v5265 = vpop.permute.xlu0 %5264
  %v5267 = vadd.f32 %v5258, %v5265
  %v5268 = vadd.f32 %v5259, %v5265
  %v5269 = vadd.f32 %v5260, %v5265
  %v5270 = vadd.f32 %v5261, %v5265
  %v5271 = vmax.f32 %v5267, 0.0
  %v5272 = vmax.f32 %v5268, 0.0
  %v5273 = vmax.f32 %v5269, 0.0
  %v5274 = vmax.f32 %v5270, 0.0
  %5277 = vrot.lane.b32.xlu0 %v56, 17
  %v5278 = vpop.permute.xlu0 %5277
  %5279 = vrot.lane.b32.xlu0 %v70, 17
  %v5280 = vpop.permute.xlu0 %5279
  %5281 = vrot.lane.b32.xlu0 %v57, 17
  %v5282 = vpop.permute.xlu0 %5281
  %5283 = vrot.lane.b32.xlu0 %v71, 17
  %v5284 = vpop.permute.xlu0 %5283
  %v5285 = vsel %vm348, %v5282, %v5284
  %v5286 = vsel %vm348, %v5280, %v5282
  %v5287 = vsel %vm348, %v5278, %v5280
  %v5288 = vsel %vm348, %v5284, %v5278
  %vm5289 = vcmp.gt.f32.partialorder %v58, 0.5
  %vm5290 = vcmp.gt.f32.partialorder %v59, 0.5
  %vm5291 = vcmp.gt.f32.partialorder %v60, 0.5
  %vm5292 = vcmp.gt.f32.partialorder %v61, 0.5
  %v5293 = vsel %vm5289, 1, 0
  %v5294 = vsel %vm5290, 1, 0
  %v5295 = vsel %vm5291, 1, 0
  %v5296 = vsel %vm5292, 1, 0
  %v5297 = vlaneseq
  %v5298 = vshrl.u32 %v5297, 7
  %v5299 = vsub.s32 0, %v5298
  %v5300 = vrot.slane %v5293, %v5299
  %v5301 = vlaneseq
  %v5302 = vshrl.u32 %v5301, 7
  %v5303 = vsub.s32 0, %v5302
  %v5304 = vrot.slane %v5294, %v5303
  %v5305 = vlaneseq
  %v5306 = vshrl.u32 %v5305, 7
  %v5307 = vsub.s32 0, %v5306
  %v5308 = vrot.slane %v5295, %v5307
  %v5309 = vlaneseq
  %v5310 = vshrl.u32 %v5309, 7
  %v5311 = vsub.s32 0, %v5310
  %v5312 = vrot.slane %v5296, %v5311
  %vm5313 = vcmp.eq.s32.totalorder %v5300, 1
  %vm5314 = vcmp.eq.s32.totalorder %v5304, 1
  %vm5315 = vcmp.eq.s32.totalorder %v5308, 1
  %vm5316 = vcmp.eq.s32.totalorder %v5312, 1
  %v5317 = vsel %vm5313, %v5288, -inf
  %v5318 = vsel %vm5314, %v5287, -inf
  %v5319 = vsel %vm5315, %v5286, -inf
  %v5320 = vsel %vm5316, %v5285, -inf
  %v5325 = vcombine.low %v5317, %v5318
  %v5326 = vcombine.low %v5319, %v5320
  %v5329 = vmax.f32 %v56, %v5325
  %v5330 = vmax.f32 %v57, %v5326
  %5331 = vrot.lane.b32.xlu0 %v56, 16
  %v5332 = vpop.permute.xlu0 %5331
  %5333 = vrot.lane.b32.xlu0 %v70, 16
  %v5334 = vpop.permute.xlu0 %5333
  %5335 = vrot.lane.b32.xlu0 %v57, 16
  %v5336 = vpop.permute.xlu0 %5335
  %5337 = vrot.lane.b32.xlu0 %v71, 16
  %v5338 = vpop.permute.xlu0 %5337
  %v5339 = vsel %vm382, %v5336, %v5338
  %v5340 = vsel %vm382, %v5334, %v5336
  %v5341 = vsel %vm382, %v5332, %v5334
  %v5342 = vsel %vm382, %v5338, %v5332
  %v5343 = vlaneseq
  %v5344 = vshrl.u32 %v5343, 7
  %v5345 = vsub.s32 1, %v5344
  %v5346 = vrot.slane %v5293, %v5345
  %v5347 = vlaneseq
  %v5348 = vshrl.u32 %v5347, 7
  %v5349 = vsub.s32 1, %v5348
  %v5350 = vrot.slane %v5294, %v5349
  %v5351 = vlaneseq
  %v5352 = vshrl.u32 %v5351, 7
  %v5353 = vsub.s32 1, %v5352
  %v5354 = vrot.slane %v5295, %v5353
  %v5355 = vlaneseq
  %v5356 = vshrl.u32 %v5355, 7
  %v5357 = vsub.s32 1, %v5356
  %v5358 = vrot.slane %v5296, %v5357
  %vm5359 = vcmp.eq.s32.totalorder %v5346, 1
  %vm5360 = vcmp.eq.s32.totalorder %v5350, 1
  %vm5361 = vcmp.eq.s32.totalorder %v5354, 1
  %vm5362 = vcmp.eq.s32.totalorder %v5358, 1
  %v5363 = vsel %vm5359, %v5342, -inf
  %v5364 = vsel %vm5360, %v5341, -inf
  %v5365 = vsel %vm5361, %v5340, -inf
  %v5366 = vsel %vm5362, %v5339, -inf
  %v5371 = vcombine.low %v5363, %v5364
  %v5372 = vcombine.low %v5365, %v5366
  %v5375 = vmax.f32 %v5329, %v5371
  %v5376 = vmax.f32 %v5330, %v5372
  %5377 = vrot.lane.b32.xlu0 %v56, 15
  %v5378 = vpop.permute.xlu0 %5377
  %5379 = vrot.lane.b32.xlu0 %v70, 15
  %v5380 = vpop.permute.xlu0 %5379
  %5381 = vrot.lane.b32.xlu0 %v57, 15
  %v5382 = vpop.permute.xlu0 %5381
  %5383 = vrot.lane.b32.xlu0 %v71, 15
  %v5384 = vpop.permute.xlu0 %5383
  %v5385 = vsel %vm731, %v5382, %v5384
  %v5386 = vsel %vm731, %v5380, %v5382
  %v5387 = vsel %vm731, %v5378, %v5380
  %v5388 = vsel %vm731, %v5384, %v5378
  %v5389 = vlaneseq
  %v5390 = vshrl.u32 %v5389, 7
  %v5391 = vsub.s32 2, %v5390
  %v5392 = vrot.slane %v5293, %v5391
  %v5393 = vlaneseq
  %v5394 = vshrl.u32 %v5393, 7
  %v5395 = vsub.s32 2, %v5394
  %v5396 = vrot.slane %v5294, %v5395
  %v5397 = vlaneseq
  %v5398 = vshrl.u32 %v5397, 7
  %v5399 = vsub.s32 2, %v5398
  %v5400 = vrot.slane %v5295, %v5399
  %v5401 = vlaneseq
  %v5402 = vshrl.u32 %v5401, 7
  %v5403 = vsub.s32 2, %v5402
  %v5404 = vrot.slane %v5296, %v5403
  %vm5405 = vcmp.eq.s32.totalorder %v5392, 1
  %vm5406 = vcmp.eq.s32.totalorder %v5396, 1
  %vm5407 = vcmp.eq.s32.totalorder %v5400, 1
  %vm5408 = vcmp.eq.s32.totalorder %v5404, 1
  %v5409 = vsel %vm5405, %v5388, -inf
  %v5410 = vsel %vm5406, %v5387, -inf
  %v5411 = vsel %vm5407, %v5386, -inf
  %v5412 = vsel %vm5408, %v5385, -inf
  %v5417 = vcombine.low %v5409, %v5410
  %v5418 = vcombine.low %v5411, %v5412
  %v5421 = vmax.f32 %v5375, %v5417
  %v5422 = vmax.f32 %v5376, %v5418
  %5423 = vrot.lane.b32.xlu0 %v56, 1
  %v5424 = vpop.permute.xlu0 %5423
  %5425 = vrot.lane.b32.xlu0 %v70, 1
  %v5426 = vpop.permute.xlu0 %5425
  %5427 = vrot.lane.b32.xlu0 %v57, 1
  %v5428 = vpop.permute.xlu0 %5427
  %5429 = vrot.lane.b32.xlu0 %v71, 1
  %v5430 = vpop.permute.xlu0 %5429
  %v5431 = vsel %vm927, %v5428, %v5430
  %v5432 = vsel %vm927, %v5426, %v5428
  %v5433 = vsel %vm927, %v5424, %v5426
  %v5434 = vsel %vm927, %v5430, %v5424
  %v5435 = vlaneseq
  %v5436 = vshrl.u32 %v5435, 7
  %v5437 = vsub.s32 3, %v5436
  %v5438 = vrot.slane %v5293, %v5437
  %v5439 = vlaneseq
  %v5440 = vshrl.u32 %v5439, 7
  %v5441 = vsub.s32 3, %v5440
  %v5442 = vrot.slane %v5294, %v5441
  %v5443 = vlaneseq
  %v5444 = vshrl.u32 %v5443, 7
  %v5445 = vsub.s32 3, %v5444
  %v5446 = vrot.slane %v5295, %v5445
  %v5447 = vlaneseq
  %v5448 = vshrl.u32 %v5447, 7
  %v5449 = vsub.s32 3, %v5448
  %v5450 = vrot.slane %v5296, %v5449
  %vm5451 = vcmp.eq.s32.totalorder %v5438, 1
  %vm5452 = vcmp.eq.s32.totalorder %v5442, 1
  %vm5453 = vcmp.eq.s32.totalorder %v5446, 1
  %vm5454 = vcmp.eq.s32.totalorder %v5450, 1
  %v5455 = vsel %vm5451, %v5434, -inf
  %v5456 = vsel %vm5452, %v5433, -inf
  %v5457 = vsel %vm5453, %v5432, -inf
  %v5458 = vsel %vm5454, %v5431, -inf
  %v5463 = vcombine.low %v5455, %v5456
  %v5464 = vcombine.low %v5457, %v5458
  %v5467 = vmax.f32 %v5421, %v5463
  %v5468 = vmax.f32 %v5422, %v5464
  %5469 = vrot.lane.b32.xlu0 %v56, 127
  %v5470 = vpop.permute.xlu0 %5469
  %5471 = vrot.lane.b32.xlu0 %v70, 127
  %v5472 = vpop.permute.xlu0 %5471
  %5473 = vrot.lane.b32.xlu0 %v57, 127
  %v5474 = vpop.permute.xlu0 %5473
  %5475 = vrot.lane.b32.xlu0 %v71, 127
  %v5476 = vpop.permute.xlu0 %5475
  %v5477 = vsel %vm1286, %v5474, %v5476
  %v5478 = vsel %vm1286, %v5472, %v5474
  %v5479 = vsel %vm1286, %v5470, %v5472
  %v5480 = vsel %vm1286, %v5476, %v5470
  %v5481 = vlaneseq
  %v5482 = vshrl.u32 %v5481, 7
  %v5483 = vsub.s32 5, %v5482
  %v5484 = vrot.slane %v5293, %v5483
  %v5485 = vlaneseq
  %v5486 = vshrl.u32 %v5485, 7
  %v5487 = vsub.s32 5, %v5486
  %v5488 = vrot.slane %v5294, %v5487
  %v5489 = vlaneseq
  %v5490 = vshrl.u32 %v5489, 7
  %v5491 = vsub.s32 5, %v5490
  %v5492 = vrot.slane %v5295, %v5491
  %v5493 = vlaneseq
  %v5494 = vshrl.u32 %v5493, 7
  %v5495 = vsub.s32 5, %v5494
  %v5496 = vrot.slane %v5296, %v5495
  %vm5497 = vcmp.eq.s32.totalorder %v5484, 1
  %vm5498 = vcmp.eq.s32.totalorder %v5488, 1
  %vm5499 = vcmp.eq.s32.totalorder %v5492, 1
  %vm5500 = vcmp.eq.s32.totalorder %v5496, 1
  %v5501 = vsel %vm5497, %v5479, -inf
  %v5502 = vsel %vm5498, %v5478, -inf
  %v5503 = vsel %vm5499, %v5477, -inf
  %v5504 = vsel %vm5500, %v5480, -inf
  %v5509 = vcombine.low %v5501, %v5502
  %v5510 = vcombine.low %v5503, %v5504
  %v5513 = vmax.f32 %v5467, %v5509
  %v5514 = vmax.f32 %v5468, %v5510
  %5515 = vrot.lane.b32.xlu0 %v56, 113
  %v5516 = vpop.permute.xlu0 %5515
  %5517 = vrot.lane.b32.xlu0 %v70, 113
  %v5518 = vpop.permute.xlu0 %5517
  %5519 = vrot.lane.b32.xlu0 %v57, 113
  %v5520 = vpop.permute.xlu0 %5519
  %5521 = vrot.lane.b32.xlu0 %v71, 113
  %v5522 = vpop.permute.xlu0 %5521
  %v5523 = vsel %vm1482, %v5520, %v5522
  %v5524 = vsel %vm1482, %v5518, %v5520
  %v5525 = vsel %vm1482, %v5516, %v5518
  %v5526 = vsel %vm1482, %v5522, %v5516
  %v5527 = vlaneseq
  %v5528 = vshrl.u32 %v5527, 7
  %v5529 = vsub.s32 6, %v5528
  %v5530 = vrot.slane %v5293, %v5529
  %v5531 = vlaneseq
  %v5532 = vshrl.u32 %v5531, 7
  %v5533 = vsub.s32 6, %v5532
  %v5534 = vrot.slane %v5294, %v5533
  %v5535 = vlaneseq
  %v5536 = vshrl.u32 %v5535, 7
  %v5537 = vsub.s32 6, %v5536
  %v5538 = vrot.slane %v5295, %v5537
  %v5539 = vlaneseq
  %v5540 = vshrl.u32 %v5539, 7
  %v5541 = vsub.s32 6, %v5540
  %v5542 = vrot.slane %v5296, %v5541
  %vm5543 = vcmp.eq.s32.totalorder %v5530, 1
  %vm5544 = vcmp.eq.s32.totalorder %v5534, 1
  %vm5545 = vcmp.eq.s32.totalorder %v5538, 1
  %vm5546 = vcmp.eq.s32.totalorder %v5542, 1
  %v5547 = vsel %vm5543, %v5525, -inf
  %v5548 = vsel %vm5544, %v5524, -inf
  %v5549 = vsel %vm5545, %v5523, -inf
  %v5550 = vsel %vm5546, %v5526, -inf
  %v5555 = vcombine.low %v5547, %v5548
  %v5556 = vcombine.low %v5549, %v5550
  %v5559 = vmax.f32 %v5513, %v5555
  %v5560 = vmax.f32 %v5514, %v5556
  %5561 = vrot.lane.b32.xlu0 %v56, 112
  %v5562 = vpop.permute.xlu0 %5561
  %5563 = vrot.lane.b32.xlu0 %v70, 112
  %v5564 = vpop.permute.xlu0 %5563
  %5565 = vrot.lane.b32.xlu0 %v57, 112
  %v5566 = vpop.permute.xlu0 %5565
  %5567 = vrot.lane.b32.xlu0 %v71, 112
  %v5568 = vpop.permute.xlu0 %5567
  %v5569 = vsel %vm1678, %v5566, %v5568
  %v5570 = vsel %vm1678, %v5564, %v5566
  %v5571 = vsel %vm1678, %v5562, %v5564
  %v5572 = vsel %vm1678, %v5568, %v5562
  %v5573 = vlaneseq
  %v5574 = vshrl.u32 %v5573, 7
  %v5575 = vsub.s32 7, %v5574
  %v5576 = vrot.slane %v5293, %v5575
  %v5577 = vlaneseq
  %v5578 = vshrl.u32 %v5577, 7
  %v5579 = vsub.s32 7, %v5578
  %v5580 = vrot.slane %v5294, %v5579
  %v5581 = vlaneseq
  %v5582 = vshrl.u32 %v5581, 7
  %v5583 = vsub.s32 7, %v5582
  %v5584 = vrot.slane %v5295, %v5583
  %v5585 = vlaneseq
  %v5586 = vshrl.u32 %v5585, 7
  %v5587 = vsub.s32 7, %v5586
  %v5588 = vrot.slane %v5296, %v5587
  %vm5589 = vcmp.eq.s32.totalorder %v5576, 1
  %vm5590 = vcmp.eq.s32.totalorder %v5580, 1
  %vm5591 = vcmp.eq.s32.totalorder %v5584, 1
  %vm5592 = vcmp.eq.s32.totalorder %v5588, 1
  %v5593 = vsel %vm5589, %v5571, -inf
  %v5594 = vsel %vm5590, %v5570, -inf
  %v5595 = vsel %vm5591, %v5569, -inf
  %v5596 = vsel %vm5592, %v5572, -inf
  %v5601 = vcombine.low %v5593, %v5594
  %v5602 = vcombine.low %v5595, %v5596
  %v5605 = vmax.f32 %v5559, %v5601
  %v5606 = vmax.f32 %v5560, %v5602
  %5607 = vrot.lane.b32.xlu0 %v56, 111
  %v5608 = vpop.permute.xlu0 %5607
  %5609 = vrot.lane.b32.xlu0 %v70, 111
  %v5610 = vpop.permute.xlu0 %5609
  %5611 = vrot.lane.b32.xlu0 %v57, 111
  %v5612 = vpop.permute.xlu0 %5611
  %5613 = vrot.lane.b32.xlu0 %v71, 111
  %v5614 = vpop.permute.xlu0 %5613
  %v5615 = vsel %vm1874, %v5612, %v5614
  %v5616 = vsel %vm1874, %v5610, %v5612
  %v5617 = vsel %vm1874, %v5608, %v5610
  %v5618 = vsel %vm1874, %v5614, %v5608
  %vm5619 = vcmp.gt.f32.partialorder %v62, 0.5
  %vm5620 = vcmp.gt.f32.partialorder %v63, 0.5
  %vm5621 = vcmp.gt.f32.partialorder %v64, 0.5
  %vm5622 = vcmp.gt.f32.partialorder %v65, 0.5
  %v5623 = vsel %vm5619, 1, 0
  %v5624 = vsel %vm5620, 1, 0
  %v5625 = vsel %vm5621, 1, 0
  %v5626 = vsel %vm5622, 1, 0
  %v5627 = vlaneseq
  %v5628 = vshrl.u32 %v5627, 7
  %v5629 = vsub.s32 0, %v5628
  %v5630 = vrot.slane %v5623, %v5629
  %v5631 = vlaneseq
  %v5632 = vshrl.u32 %v5631, 7
  %v5633 = vsub.s32 0, %v5632
  %v5634 = vrot.slane %v5624, %v5633
  %v5635 = vlaneseq
  %v5636 = vshrl.u32 %v5635, 7
  %v5637 = vsub.s32 0, %v5636
  %v5638 = vrot.slane %v5625, %v5637
  %v5639 = vlaneseq
  %v5640 = vshrl.u32 %v5639, 7
  %v5641 = vsub.s32 0, %v5640
  %v5642 = vrot.slane %v5626, %v5641
  %vm5643 = vcmp.eq.s32.totalorder %v5630, 1
  %vm5644 = vcmp.eq.s32.totalorder %v5634, 1
  %vm5645 = vcmp.eq.s32.totalorder %v5638, 1
  %vm5646 = vcmp.eq.s32.totalorder %v5642, 1
  %v5647 = vsel %vm5643, %v5617, -inf
  %v5648 = vsel %vm5644, %v5616, -inf
  %v5649 = vsel %vm5645, %v5615, -inf
  %v5650 = vsel %vm5646, %v5618, -inf
  %v5655 = vcombine.low %v5647, %v5648
  %v5656 = vcombine.low %v5649, %v5650
  %v5659 = vmax.f32 %v5605, %v5655
  %v5660 = vmax.f32 %v5606, %v5656
  %v5661 = vld [vmem:[%s14] sm:$0xff]
  %v5664 = vcombine.high %v5659, %v5659
  %v5665 = vcombine.high %v5660, %v5660
  %v5667 = vsel %vm72, %v5661, 0
  %v5669 = vsel %vm79, %v5659, 0
  %v5671 = vsel %vm79, %v5664, 0
  %v5673 = vsel %vm79, %v5660, 0
  %v5675 = vsel %vm79, %v5665, 0
  %5677 = vmatprep.subr.mxu0 %v5671
  %5678 = vmatpush1.msra.mxu0 %v5669
  %5679 = vmatprep.subr.mxu0 0.0
  %5680 = vmatpush1.msra.mxu0 0.0
  %5681 = vmatprep.subr.mxu0 0.0
  %5682 = vmatpush1.msra.mxu0 0.0
  %5683 = vmatprep.subr.mxu0 0.0
  %5684 = vmatpush1.msra.mxu0 0.0
  %5685 = vmatprep.subr.mxu0 0.0
  %5686 = vmatpush1.msra.mxu0 0.0
  %5687 = vmatprep.subr.mxu0 0.0
  %5688 = vmatpush1.msra.mxu0 0.0
  %5689 = vmatprep.subr.mxu0 0.0
  %5690 = vmatpush1.msra.mxu0 0.0
  %5691 = vmatprep.subr.mxu0 0.0
  %5692 = vmatpush1.msra.mxu0 0.0
  %5693 = vmatprep.subr.mxu0 0.0
  %5694 = vmatpush1.msra.mxu0 0.0
  %5695 = vmatprep.subr.mxu0 0.0
  %5696 = vmatpush1.msra.mxu0 0.0
  %5697 = vmatprep.subr.mxu0 0.0
  %5698 = vmatpush1.msra.mxu0 0.0
  %5699 = vmatprep.subr.mxu0 0.0
  %5700 = vmatpush1.msra.mxu0 0.0
  %5701 = vmatprep.subr.mxu0 0.0
  %5702 = vmatpush1.msra.mxu0 0.0
  %5703 = vmatprep.subr.mxu0 0.0
  %5704 = vmatpush1.msra.mxu0 0.0
  %5705 = vmatprep.subr.mxu0 0.0
  %5706 = vmatpush1.msra.mxu0 0.0
  %5707 = vmatprep.subr.mxu0 0.0
  %5708 = vmatpush1.msra.mxu0 0.0
  %5709 = vmatprep.subr.mxu0 0.0
  %5710 = vmatpush1.msra.mxu0 0.0
  %5711 = vmatprep.subr.mxu0 0.0
  %5712 = vmatpush1.msra.mxu0 0.0
  %5713 = vmatprep.subr.mxu0 0.0
  %5714 = vmatpush1.msra.mxu0 0.0
  %5715 = vmatprep.subr.mxu0 0.0
  %5716 = vmatpush1.msra.mxu0 0.0
  %5717 = vmatprep.subr.mxu0 0.0
  %5718 = vmatpush1.msra.mxu0 0.0
  %5719 = vmatprep.subr.mxu0 0.0
  %5720 = vmatpush1.msra.mxu0 0.0
  %5721 = vmatprep.subr.mxu0 0.0
  %5722 = vmatpush1.msra.mxu0 0.0
  %5723 = vmatprep.subr.mxu0 0.0
  %5724 = vmatpush1.msra.mxu0 0.0
  %5725 = vmatprep.subr.mxu0 0.0
  %5726 = vmatpush1.msra.mxu0 0.0
  %5727 = vmatprep.subr.mxu0 0.0
  %5728 = vmatpush1.msra.mxu0 0.0
  %5729 = vmatprep.subr.mxu0 0.0
  %5730 = vmatpush1.msra.mxu0 0.0
  %5731 = vmatprep.subr.mxu0 0.0
  %5732 = vmatpush1.msra.mxu0 0.0
  %5733 = vmatprep.subr.mxu0 0.0
  %5734 = vmatpush1.msra.mxu0 0.0
  %5735 = vmatprep.subr.mxu0 0.0
  %5736 = vmatpush1.msra.mxu0 0.0
  %5737 = vmatprep.subr.mxu0 0.0
  %5738 = vmatpush1.msra.mxu0 0.0
  %5739 = vmatprep.subr.mxu0 0.0
  %5740 = vmatpush1.msra.mxu0 0.0
  %5741 = vmatprep.mubr.f32.mxu0 0.0
  %5742 = vmatmul.mubr.f32.gmra.mrb[0].mxu0 %v5667
  %v5743 = vpop.f32.mrb[0].mxu0
  %v5744 = vadd.f32 0.0, %v5743
  %v5745 = vpop.f32.mrb[0].mxu0
  %v5746 = vadd.f32 0.0, %v5745
  %5747 = vdwg.mxu0
  %5748 = vmatprep.subr.mxu0 %v5675
  %5749 = vmatpush1.msra.mxu0 %v5673
  %5750 = vmatprep.subr.mxu0 0.0
  %5751 = vmatpush1.msra.mxu0 0.0
  %5752 = vmatprep.subr.mxu0 0.0
  %5753 = vmatpush1.msra.mxu0 0.0
  %5754 = vmatprep.subr.mxu0 0.0
  %5755 = vmatpush1.msra.mxu0 0.0
  %5756 = vmatprep.subr.mxu0 0.0
  %5757 = vmatpush1.msra.mxu0 0.0
  %5758 = vmatprep.subr.mxu0 0.0
  %5759 = vmatpush1.msra.mxu0 0.0
  %5760 = vmatprep.subr.mxu0 0.0
  %5761 = vmatpush1.msra.mxu0 0.0
  %5762 = vmatprep.subr.mxu0 0.0
  %5763 = vmatpush1.msra.mxu0 0.0
  %5764 = vmatprep.subr.mxu0 0.0
  %5765 = vmatpush1.msra.mxu0 0.0
  %5766 = vmatprep.subr.mxu0 0.0
  %5767 = vmatpush1.msra.mxu0 0.0
  %5768 = vmatprep.subr.mxu0 0.0
  %5769 = vmatpush1.msra.mxu0 0.0
  %5770 = vmatprep.subr.mxu0 0.0
  %5771 = vmatpush1.msra.mxu0 0.0
  %5772 = vmatprep.subr.mxu0 0.0
  %5773 = vmatpush1.msra.mxu0 0.0
  %5774 = vmatprep.subr.mxu0 0.0
  %5775 = vmatpush1.msra.mxu0 0.0
  %5776 = vmatprep.subr.mxu0 0.0
  %5777 = vmatpush1.msra.mxu0 0.0
  %5778 = vmatprep.subr.mxu0 0.0
  %5779 = vmatpush1.msra.mxu0 0.0
  %5780 = vmatprep.subr.mxu0 0.0
  %5781 = vmatpush1.msra.mxu0 0.0
  %5782 = vmatprep.subr.mxu0 0.0
  %5783 = vmatpush1.msra.mxu0 0.0
  %5784 = vmatprep.subr.mxu0 0.0
  %5785 = vmatpush1.msra.mxu0 0.0
  %5786 = vmatprep.subr.mxu0 0.0
  %5787 = vmatpush1.msra.mxu0 0.0
  %5788 = vmatprep.subr.mxu0 0.0
  %5789 = vmatpush1.msra.mxu0 0.0
  %5790 = vmatprep.subr.mxu0 0.0
  %5791 = vmatpush1.msra.mxu0 0.0
  %5792 = vmatprep.subr.mxu0 0.0
  %5793 = vmatpush1.msra.mxu0 0.0
  %5794 = vmatprep.subr.mxu0 0.0
  %5795 = vmatpush1.msra.mxu0 0.0
  %5796 = vmatprep.subr.mxu0 0.0
  %5797 = vmatpush1.msra.mxu0 0.0
  %5798 = vmatprep.subr.mxu0 0.0
  %5799 = vmatpush1.msra.mxu0 0.0
  %5800 = vmatprep.subr.mxu0 0.0
  %5801 = vmatpush1.msra.mxu0 0.0
  %5802 = vmatprep.subr.mxu0 0.0
  %5803 = vmatpush1.msra.mxu0 0.0
  %5804 = vmatprep.subr.mxu0 0.0
  %5805 = vmatpush1.msra.mxu0 0.0
  %5806 = vmatprep.subr.mxu0 0.0
  %5807 = vmatpush1.msra.mxu0 0.0
  %5808 = vmatprep.subr.mxu0 0.0
  %5809 = vmatpush1.msra.mxu0 0.0
  %5810 = vmatprep.subr.mxu0 0.0
  %5811 = vmatpush1.msra.mxu0 0.0
  %5812 = vmatprep.mubr.f32.mxu0 0.0
  %5813 = vmatmul.mubr.f32.gmra.mrb[0].mxu0 %v5667
  %v5814 = vpop.f32.mrb[0].mxu0
  %v5815 = vadd.f32 0.0, %v5814
  %v5816 = vpop.f32.mrb[0].mxu0
  %v5817 = vadd.f32 0.0, %v5816
  %5818 = vdwg.mxu0
  %v5819 = vld [vmem:[%s15] sm:$0xff]
  %v5820 = vld [vmem:[%s16] sm:$0xff]
  %v5821 = vadd.f32 %v5744, %v5746
  %v5822 = vadd.f32 %v5821, %v5815
  %v5823 = vadd.f32 %v5822, %v5817
  %5824 = vadd.xlane.f32.xlu0 %v5823
  %v5825 = vpop.xlane.xlu0 %5824
  %v5826 = vmul.f32 %v5825, 0.001953125
  %v5827 = vmul.f32 %v5744, %v5744
  %v5828 = vmul.f32 %v5746, %v5746
  %v5829 = vmul.f32 %v5815, %v5815
  %v5830 = vmul.f32 %v5817, %v5817
  %v5831 = vadd.f32 %v5827, %v5828
  %v5832 = vadd.f32 %v5831, %v5829
  %v5833 = vadd.f32 %v5832, %v5830
  %5834 = vadd.xlane.f32.xlu0 %v5833
  %v5835 = vpop.xlane.xlu0 %5834
  %v5836 = vmul.f32 %v5835, 0.001953125
  %v5837 = vmul.f32 %v5826, %v5826
  %v5838 = vsub.f32 %v5836, %v5837
  %v5839 = vmax.f32 %v5838, 0.0
  %v5840 = vadd.f32 %v5839, 1e-05
  %v5841 = vrsqrt.pop %v5840
  %v5842 = vmul.f32 %v5819, %v5841
  %v5843 = vmul.f32 %v5826, %v5842
  %v5844 = vsub.f32 %v5820, %v5843
  %5846 = vset.pattern.permute.xlu0 0
  %5847 = vperm.xlu0 %5846, %v5842
  %v5848 = vpop.permute.xlu0 %5847
  %v5850 = vmul.f32 %v5744, %v5848
  %v5851 = vmul.f32 %v5746, %v5848
  %v5852 = vmul.f32 %v5815, %v5848
  %v5853 = vmul.f32 %v5817, %v5848
  %5855 = vset.pattern.permute.xlu0 0
  %5856 = vperm.xlu0 %5855, %v5844
  %v5857 = vpop.permute.xlu0 %5856
  %v5859 = vadd.f32 %v5850, %v5857
  %v5860 = vadd.f32 %v5851, %v5857
  %v5861 = vadd.f32 %v5852, %v5857
  %v5862 = vadd.f32 %v5853, %v5857
  %v5863 = vmax.f32 %v5859, 0.0
  %v5864 = vmax.f32 %v5860, 0.0
  %v5865 = vmax.f32 %v5861, 0.0
  %v5866 = vmax.f32 %v5862, 0.0
  %5867 = vst [vmem:[%s17] sm:$0xff] %v330
  %5868 = vst [vmem:[%s17 + $0x8] sm:$0xff] %v331
  %5869 = vst [vmem:[%s17 + $0x10] sm:$0xff] %v332
  %5870 = vst [vmem:[%s17 + $0x18] sm:$0xff] %v333
  %5871 = vst [vmem:[%s17 + $0x20] sm:$0xff] %v2106
  %5872 = vst [vmem:[%s17 + $0x28] sm:$0xff] %v2107
  %5873 = vst [vmem:[%s17 + $0x30] sm:$0xff] %v2108
  %5874 = vst [vmem:[%s17 + $0x38] sm:$0xff] %v2109
  %5875 = vst [vmem:[%s17 + $0x40] sm:$0xff] %v5271
  %5876 = vst [vmem:[%s17 + $0x48] sm:$0xff] %v5272
  %5877 = vst [vmem:[%s17 + $0x50] sm:$0xff] %v5273
  %5878 = vst [vmem:[%s17 + $0x58] sm:$0xff] %v5274
  %5879 = vst [vmem:[%s17 + $0x60] sm:$0xff] %v5863
  %5880 = vst [vmem:[%s17 + $0x68] sm:$0xff] %v5864
  %5881 = vst [vmem:[%s17 + $0x70] sm:$0xff] %v5865
  %5882 = vst [vmem:[%s17 + $0x78] sm:$0xff] %v5866
  // Predicated region
  $region70: #{inception_forward.1} parent=0 // pred_check
    _
  $region71: #{inception_forward.1} parent=0 // pred_check_branch
    %5884 = sbr.rel (0) target = $region73
  $region72: #{inception_forward.1} parent=0 // pred_region
    _
  $region73: #{inception_forward.1} parent=0 // pred_fallthru
    _
  // Predicated region
  $region74: #{inception_forward.1} parent=0 // pred_check
    _
  $region75: #{inception_forward.1} parent=0 // pred_check_branch
    %5886 = sbr.rel (0) target = $region77
  $region76: #{inception_forward.1} parent=0 // pred_region
    _
  $region77: #{inception_forward.1} parent=0 // pred_fallthru
    _

</llo_original>
